<compile_context>
chip_gen: v6e
topology: v6e:2x2x1
jax: 0.10.0
libtpu: 0.0.40
codegen_flags: <defaults>
</compile_context>

<pallas_src>
import math
import functools

import jax
import jax.numpy as jnp
from jax import lax
from jax.experimental import pallas as pl
from jax.experimental.pallas import tpu as pltpu

EMB = 512       # emb_dim hardcoded in Block.__init__
HEAD_N = 8      # head_n  (v head-pairs)
HEAD_D = 32     # head_dim
DEPTH = 1
SCALING = HEAD_D ** (-0.5)


def lambda_init_fn(depth):
    return 0.8 - 0.6 * math.exp(-0.3 * depth)


# ------------------------- hardware-aware config ----------------------------

def _query_tpu_config():
    """Generation-aware tiling/VMEM configuration, queried once at import."""
    try:
        vmem = int(getattr(pltpu.get_tpu_info(), "vmem_capacity_bytes"))
    except Exception:
        vmem = None
    if vmem is None:
        # unknown chip: previous known-safe settings
        return dict(multi_core=False, target_m=256,
                    vmem_limit=32 << 20, vmem_budget=24 << 20)
    if vmem <= (64 << 20):
        # v7x-class: 2 TensorCores/chip, 64 MiB VMEM -> conservative limit
        lim = min(48 << 20, (vmem * 3) // 4)
        return dict(multi_core=True, target_m=256,
                    vmem_limit=lim, vmem_budget=(lim * 3) // 4)
    # v5e / v6e class: single TensorCore, 128 MiB VMEM
    lim = 64 << 20
    return dict(multi_core=False, target_m=256,
                vmem_limit=lim, vmem_budget=(lim * 3) // 4)


_TPU_CFG = _query_tpu_config()


def _vmem_estimate_bytes(bt, T):
    """Rough per-grid-step VMEM footprint for the kernel at block batch bt."""
    m = bt * T
    scores = 4 * (2 * HEAD_N) * bt * T * T * 4   # all-head score/softmax/diff temps
    acts = 12 * m * EMB * 4                      # qkv / attn / h / ffn temporaries
    io = 4 * m * EMB * 4                         # double-buffered x and out blocks
    weights = 2 * 2 * (7 * EMB * EMB)            # fused bf16 weights, double-buffered
    return scores + acts + io + weights


def _choose_block_batch(B, T, *, target_m, multi_core, vmem_budget):
    """Pick bt (a divisor of B) processed per grid step.

    Aim for >= target_m MXU rows per step, cap by the VMEM estimate, keep the
    >=2-grid-step preference only on multi-TensorCore chips (the grid is a
    serial loop on 1-TC chips), and fall back to bt = B (one big step) rather
    than an M-starved bt = 1."""
    divisors = [d for d in range(1, B + 1) if B % d == 0]
    fits = [d for d in divisors if _vmem_estimate_bytes(d, T) <= vmem_budget] or [1]
    good = [d for d in fits if d * T >= target_m]
    if multi_core and good:
        split = [d for d in good if B // d >= 2]
        if split:
            return split[0]
    if good:
        return good[0]
    return fits[-1]


# ----------------------------- kernel helpers -------------------------------

def _softmax(x):
    m = jnp.max(x, axis=-1, keepdims=True)
    e = jnp.exp(x - m)
    return e * pl.reciprocal(jnp.sum(e, axis=-1, keepdims=True), approx=True)


def _rmsnorm(x, w, eps):
    ms = jnp.mean(x * x, axis=-1, keepdims=True)
    return x * lax.rsqrt(ms + eps) * w


def _silu(x):
    return x * pl.reciprocal(1.0 + jnp.exp(-x), approx=True)


# --------------------------------- kernel -----------------------------------

def block_kernel(lam_ref, x_ref, wqkv_ref, wo_ref, subln_ref, w13_ref,
                 w2_ref, ffn_w_ref, o_ref, *, bt, t):
    lambda_full = lam_ref[0]            # SMEM scalar (scalar prefetch)
    m = bt * t
    nh = 2 * HEAD_N                     # 16 q/k heads

    x = x_ref[...].reshape(m, EMB)      # (M, E) f32
    xb = x.astype(jnp.bfloat16)

    # ---- fused QKV projection (bf16 in, f32 accumulate; q scaling folded) ----
    qkv = jnp.dot(xb, wqkv_ref[...], preferred_element_type=jnp.float32)
    q = qkv[:, :EMB]
    k = qkv[:, EMB:2 * EMB]
    v = qkv[:, 2 * EMB:]

    # ---- QK^T batched over all 16 heads in ONE dot_general ----
    # stack order: first-of-pair heads (0,2,..,14) then second-of-pair heads.
    head_order = list(range(0, nh, 2)) + list(range(1, nh, 2))
    qh = jnp.stack([q[:, h * HEAD_D:(h + 1) * HEAD_D].reshape(bt, t, HEAD_D)
                    for h in head_order], axis=0)
    kh = jnp.stack([k[:, h * HEAD_D:(h + 1) * HEAD_D].reshape(bt, t, HEAD_D)
                    for h in head_order], axis=0)
    qh = qh.reshape(nh * bt, t, HEAD_D).astype(jnp.bfloat16)
    kh = kh.reshape(nh * bt, t, HEAD_D).astype(jnp.bfloat16)

    s = lax.dot_general(qh, kh, (((2,), (2,)), ((0,), (0,))),
                        preferred_element_type=jnp.float32)      # (16*bt, t, t)
    # scores are finite for finite inputs, so torch.nan_to_num is a no-op
    p = _softmax(s)

    # differential attention: first half of the batch are the "1" heads,
    # second half the "2" heads, both pair-major -> one elementwise diff.
    d = p[:HEAD_N * bt] - lambda_full * p[HEAD_N * bt:]           # (8*bt, t, t)

    # ---- PV batched over all 8 pairs in ONE dot_general ----
    vh = jnp.stack([v[:, hp * 2 * HEAD_D:(hp + 1) * 2 * HEAD_D].reshape(bt, t, 2 * HEAD_D)
                    for hp in range(HEAD_N)], axis=0)
    vh = vh.reshape(HEAD_N * bt, t, 2 * HEAD_D).astype(jnp.bfloat16)
    a = lax.dot_general(d.astype(jnp.bfloat16), vh, (((2,), (1,)), ((0,), (0,))),
                        preferred_element_type=jnp.float32)       # (8*bt, t, 64)

    # sub-layer RMSNorm; (1 - lambda_init) is folded into subln weight.
    a = _rmsnorm(a, subln_ref[...], 1e-5)
    a = a.reshape(HEAD_N, m, 2 * HEAD_D)
    attn = jnp.concatenate([a[hp] for hp in range(HEAD_N)],
                           axis=-1).astype(jnp.bfloat16)          # (M, E) bf16

    # ---- output projection + residual 1 ----
    attn_out = jnp.dot(attn, wo_ref[...], preferred_element_type=jnp.float32)
    h = attn_out + x                                              # (M, E) f32

    # ---- FFN: norm(w2(silu(w1(h) * w3(h)))) + residual 2 ----
    hb = h.astype(jnp.bfloat16)
    ab = jnp.dot(hb, w13_ref[...], preferred_element_type=jnp.float32)   # (M, 2E)
    g = _silu(ab[:, :EMB] * ab[:, EMB:])
    f = jnp.dot(g.astype(jnp.bfloat16), w2_ref[...],
                preferred_element_type=jnp.float32)
    f = _rmsnorm(f, ffn_w_ref[...], 1e-5)

    o_ref[...] = (f + h).reshape(bt, t, EMB).astype(o_ref.dtype)


# ------------------------- one-time weight preparation -----------------------

def prepare_params(params, depth=DEPTH):
    """Fuse / cast / fold weights ONCE (outside the per-forward path)."""
    li = lambda_init_fn(depth)
    l1 = jnp.exp(jnp.sum(params["lambda_q1"] * params["lambda_k1"]))
    l2 = jnp.exp(jnp.sum(params["lambda_q2"] * params["lambda_k2"]))
    lambda_full = (l1 - l2 + li).astype(jnp.float32).reshape(1)

    wqkv = jnp.concatenate([params["wq"] * SCALING,      # fold q scaling
                            params["wk"], params["wv"]],
                           axis=1).astype(jnp.bfloat16)           # (E, 3E)
    w13 = jnp.concatenate([params["w1"], params["w3"]],
                          axis=1).astype(jnp.bfloat16)            # (E, 2E)
    return dict(
        lambda_full=lambda_full,
        wqkv=wqkv,
        wo=params["wo"].astype(jnp.bfloat16),                     # (E, E)
        subln_w=(params["subln_w"] * (1.0 - li)).astype(jnp.float32),  # fold (1-li)
        w13=w13,
        w2=params["w2"].astype(jnp.bfloat16),                     # (E, E)
        ffn_w=params["ffn_w"].astype(jnp.float32),
    )


# ------------------------------- wrapper -------------------------------------

@jax.jit
def block_forward(x, prep):
    B, T, E = x.shape
    assert E == EMB

    bt = _choose_block_batch(B, T,
                             target_m=_TPU_CFG["target_m"],
                             multi_core=_TPU_CFG["multi_core"],
                             vmem_budget=_TPU_CFG["vmem_budget"])
    assert B % bt == 0
    grid = (B // bt,)

    kernel = functools.partial(block_kernel, bt=bt, t=T)

    def full(shape):   # whole-array blocks for the shared parameters
        return pl.BlockSpec(shape, lambda b, s: (0,) * len(shape))

    grid_spec = pltpu.PrefetchScalarGridSpec(
        num_scalar_prefetch=1,                                   # lambda -> SMEM
        grid=grid,
        in_specs=[
            pl.BlockSpec((bt, T, E), lambda b, s: (b, 0, 0)),    # x
            full((E, 3 * E)),                                    # wqkv (bf16)
            full((E, E)),                                        # wo   (bf16)
            full((1, 2 * HEAD_D)),                               # subln weight (f32)
            full((E, 2 * E)),                                    # w1|w3 (bf16)
            full((E, E)),                                        # w2   (bf16)
            full((1, E)),                                        # ffn norm weight (f32)
        ],
        out_specs=pl.BlockSpec((bt, T, E), lambda b, s: (b, 0, 0)),
    )

    return pl.pallas_call(
        kernel,
        out_shape=jax.ShapeDtypeStruct((B, T, E), x.dtype),
        grid_spec=grid_spec,
        compiler_params=pltpu.CompilerParams(
            dimension_semantics=("parallel",),
            vmem_limit_bytes=_TPU_CFG["vmem_limit"],
        ),
    )(prep["lambda_full"], x, prep["wqkv"], prep["wo"], prep["subln_w"],
      prep["w13"], prep["w2"], prep["ffn_w"])


# -------------------------- deterministic params -----------------------------

def make_params(key):
    ks = jax.random.split(key, 11)

    def lin(k, fan_in, fan_out):   # nn.Linear-style uniform init, stored (in, out)
        bound = 1.0 / math.sqrt(fan_in)
        return jax.random.uniform(k, (fan_in, fan_out), jnp.float32, -bound, bound)

    return dict(
        wq=lin(ks[0], EMB, 2 * HEAD_N * HEAD_D),
        wk=lin(ks[1], EMB, 2 * HEAD_N * HEAD_D),
        wv=lin(ks[2], EMB, 2 * HEAD_N * HEAD_D),
        wo=lin(ks[3], 2 * HEAD_N * HEAD_D, EMB),
        lambda_q1=0.1 * jax.random.normal(ks[4], (HEAD_D,), jnp.float32),
        lambda_k1=0.1 * jax.random.normal(ks[5], (HEAD_D,), jnp.float32),
        lambda_q2=0.1 * jax.random.normal(ks[6], (HEAD_D,), jnp.float32),
        lambda_k2=0.1 * jax.random.normal(ks[7], (HEAD_D,), jnp.float32),
        subln_w=jnp.ones((1, 2 * HEAD_D), jnp.float32),
        w1=lin(ks[8], EMB, EMB),
        w2=lin(ks[9], EMB, EMB),
        w3=lin(ks[10], EMB, EMB),
        ffn_w=jnp.ones((1, EMB), jnp.float32),
    )


# ---------------------------- pure-JAX reference -----------------------------

def _ref_rmsnorm(x, w, eps):
    ms = jnp.mean(x * x, axis=-1, keepdims=True)
    return x * lax.rsqrt(ms + eps) * w


def ref_forward(x, params, depth=DEPTH):
    B, T, E = x.shape
    li = lambda_init_fn(depth)
    scaling = HEAD_D ** (-0.5)

    q = (x @ params["wq"]).reshape(B, T, 2 * HEAD_N, HEAD_D).transpose(0, 2, 1, 3) * scaling
    k = (x @ params["wk"]).reshape(B, T, 2 * HEAD_N, HEAD_D).transpose(0, 2, 1, 3)
    v = (x @ params["wv"]).reshape(B, T, HEAD_N, 2 * HEAD_D).transpose(0, 2, 1, 3)

    score = jnp.nan_to_num(q @ jnp.swapaxes(k, -1, -2))
    score = jax.nn.softmax(score.astype(jnp.float32), axis=-1)

    l1 = jnp.exp(jnp.sum(params["lambda_q1"] * params["lambda_k1"]))
    l2 = jnp.exp(jnp.sum(params["lambda_q2"] * params["lambda_k2"]))
    lf = l1 - l2 + li

    score = score.reshape(B, HEAD_N, 2, T, T)
    score = score[:, :, 0] - lf * score[:, :, 1]

    attn = score @ v
    attn = _ref_rmsnorm(attn, params["subln_w"][0], 1e-5) * (1.0 - li)
    attn = attn.transpose(0, 2, 1, 3).reshape(B, T, HEAD_N * 2 * HEAD_D)
    h = attn @ params["wo"] + x

    g = jax.nn.silu((h @ params["w1"]) * (h @ params["w3"]))
    f = _ref_rmsnorm(g @ params["w2"], params["ffn_w"][0], 1e-5)
    return f + h


# ----------------------------------- main ------------------------------------

if __name__ == "__main__":
    key = jax.random.PRNGKey(0)
    pkey, xkey = jax.random.split(key)
    params = make_params(pkey)
    prepared = prepare_params(params)          # one-time weight fusion / casting

    B, T = 2, 8
    x = jax.random.normal(xkey, (B, T, EMB), jnp.float32)

    out = block_forward(x, prepared)
    out = jax.block_until_ready(out)

    assert out.shape == (B, T, EMB)
    assert bool(jnp.all(jnp.isfinite(out)))

    with jax.default_matmul_precision("highest"):     # f32 ground truth
        ref = ref_forward(x, params)
    max_err = float(jnp.max(jnp.abs(out - ref)))
    if max_err > 5e-2:
        raise AssertionError(f"kernel/reference mismatch, max |err| = {max_err}")

    print("KERNEL_OK")
</pallas_src>

<mosaic_0001>
module attributes {stable_mosaic.version = 11 : i64} {
  func.func @block_kernel(%arg0: i32, %arg1: memref<1xf32, #tpu.memory_space<smem>>, %arg2: memref<2x8x512xf32, #tpu.memory_space<vmem>>, %arg3: memref<512x1536xbf16, #tpu.memory_space<vmem>>, %arg4: memref<512x512xbf16, #tpu.memory_space<vmem>>, %arg5: memref<1x64xf32, #tpu.memory_space<vmem>>, %arg6: memref<512x1024xbf16, #tpu.memory_space<vmem>>, %arg7: memref<512x512xbf16, #tpu.memory_space<vmem>>, %arg8: memref<1x512xf32, #tpu.memory_space<vmem>>, %arg9: memref<2x8x512xf32, #tpu.memory_space<vmem>>) attributes {dimension_semantics = [#tpu.dimension_semantics<parallel>], iteration_bounds = array<i64: 1>, scalar_prefetch = 1 : i64, scratch_operands = 0 : i64, tpu.core_type = #tpu.core_type<tc>, window_params = [{transform_indices = @transform_0, window_bounds = array<i64: 2, 8, 512>}, {pipeline_mode = #tpu.pipeline_mode<synchronous>, transform_indices = @transform_1, window_bounds = array<i64: 512, 1536>}, {pipeline_mode = #tpu.pipeline_mode<synchronous>, transform_indices = @transform_2, window_bounds = array<i64: 512, 512>}, {pipeline_mode = #tpu.pipeline_mode<synchronous>, transform_indices = @transform_3, window_bounds = array<i64: 1, 64>}, {pipeline_mode = #tpu.pipeline_mode<synchronous>, transform_indices = @transform_4, window_bounds = array<i64: 512, 1024>}, {pipeline_mode = #tpu.pipeline_mode<synchronous>, transform_indices = @transform_5, window_bounds = array<i64: 512, 512>}, {pipeline_mode = #tpu.pipeline_mode<synchronous>, transform_indices = @transform_6, window_bounds = array<i64: 1, 512>}, {transform_indices = @transform_7, window_bounds = array<i64: 2, 8, 512>}]} {
    %c0 = arith.constant 0 : index
    %0 = memref.load %arg1[%c0] : memref<1xf32, #tpu.memory_space<smem>>
    %c0_0 = arith.constant 0 : index
    %c0_1 = arith.constant 0 : index
    %c0_2 = arith.constant 0 : index
    %1 = vector.load %arg2[%c0_0, %c0_1, %c0_2] : memref<2x8x512xf32, #tpu.memory_space<vmem>>, vector<2x8x512xf32>
    %2 = vector.shape_cast %1 : vector<2x8x512xf32> to vector<16x512xf32>
    %3 = arith.truncf %2 : vector<16x512xf32> to vector<16x512xbf16>
    %c0_3 = arith.constant 0 : index
    %c0_4 = arith.constant 0 : index
    %4 = vector.load %arg3[%c0_3, %c0_4] : memref<512x1536xbf16, #tpu.memory_space<vmem>>, vector<512x1536xbf16>
    %cst = arith.constant dense<0.000000e+00> : vector<16x1536xf32>
    %5 = tpu.matmul %3, %4, %cst {dimension_numbers = #tpu.dot_dimension_numbers<[1], [0], [0], [1], [0, 0, 1, 1], [], []>} : vector<16x512xbf16>, vector<512x1536xbf16>, vector<16x1536xf32> -> vector<16x1536xf32>
    %6 = vector.extract_strided_slice %5 {offsets = [0, 0], sizes = [16, 512], strides = [1, 1]} : vector<16x1536xf32> to vector<16x512xf32>
    %7 = vector.extract_strided_slice %5 {offsets = [0, 512], sizes = [16, 512], strides = [1, 1]} : vector<16x1536xf32> to vector<16x512xf32>
    %8 = vector.extract_strided_slice %5 {offsets = [0, 1024], sizes = [16, 512], strides = [1, 1]} : vector<16x1536xf32> to vector<16x512xf32>
    %9 = vector.extract_strided_slice %6 {offsets = [0, 0], sizes = [16, 32], strides = [1, 1]} : vector<16x512xf32> to vector<16x32xf32>
    %10 = vector.shape_cast %9 : vector<16x32xf32> to vector<2x8x32xf32>
    %11 = vector.extract_strided_slice %6 {offsets = [0, 64], sizes = [16, 32], strides = [1, 1]} : vector<16x512xf32> to vector<16x32xf32>
    %12 = vector.shape_cast %11 : vector<16x32xf32> to vector<2x8x32xf32>
    %13 = vector.extract_strided_slice %6 {offsets = [0, 128], sizes = [16, 32], strides = [1, 1]} : vector<16x512xf32> to vector<16x32xf32>
    %14 = vector.shape_cast %13 : vector<16x32xf32> to vector<2x8x32xf32>
    %15 = vector.extract_strided_slice %6 {offsets = [0, 192], sizes = [16, 32], strides = [1, 1]} : vector<16x512xf32> to vector<16x32xf32>
    %16 = vector.shape_cast %15 : vector<16x32xf32> to vector<2x8x32xf32>
    %17 = vector.extract_strided_slice %6 {offsets = [0, 256], sizes = [16, 32], strides = [1, 1]} : vector<16x512xf32> to vector<16x32xf32>
    %18 = vector.shape_cast %17 : vector<16x32xf32> to vector<2x8x32xf32>
    %19 = vector.extract_strided_slice %6 {offsets = [0, 320], sizes = [16, 32], strides = [1, 1]} : vector<16x512xf32> to vector<16x32xf32>
    %20 = vector.shape_cast %19 : vector<16x32xf32> to vector<2x8x32xf32>
    %21 = vector.extract_strided_slice %6 {offsets = [0, 384], sizes = [16, 32], strides = [1, 1]} : vector<16x512xf32> to vector<16x32xf32>
    %22 = vector.shape_cast %21 : vector<16x32xf32> to vector<2x8x32xf32>
    %23 = vector.extract_strided_slice %6 {offsets = [0, 448], sizes = [16, 32], strides = [1, 1]} : vector<16x512xf32> to vector<16x32xf32>
    %24 = vector.shape_cast %23 : vector<16x32xf32> to vector<2x8x32xf32>
    %25 = vector.extract_strided_slice %6 {offsets = [0, 32], sizes = [16, 32], strides = [1, 1]} : vector<16x512xf32> to vector<16x32xf32>
    %26 = vector.shape_cast %25 : vector<16x32xf32> to vector<2x8x32xf32>
    %27 = vector.extract_strided_slice %6 {offsets = [0, 96], sizes = [16, 32], strides = [1, 1]} : vector<16x512xf32> to vector<16x32xf32>
    %28 = vector.shape_cast %27 : vector<16x32xf32> to vector<2x8x32xf32>
    %29 = vector.extract_strided_slice %6 {offsets = [0, 160], sizes = [16, 32], strides = [1, 1]} : vector<16x512xf32> to vector<16x32xf32>
    %30 = vector.shape_cast %29 : vector<16x32xf32> to vector<2x8x32xf32>
    %31 = vector.extract_strided_slice %6 {offsets = [0, 224], sizes = [16, 32], strides = [1, 1]} : vector<16x512xf32> to vector<16x32xf32>
    %32 = vector.shape_cast %31 : vector<16x32xf32> to vector<2x8x32xf32>
    %33 = vector.extract_strided_slice %6 {offsets = [0, 288], sizes = [16, 32], strides = [1, 1]} : vector<16x512xf32> to vector<16x32xf32>
    %34 = vector.shape_cast %33 : vector<16x32xf32> to vector<2x8x32xf32>
    %35 = vector.extract_strided_slice %6 {offsets = [0, 352], sizes = [16, 32], strides = [1, 1]} : vector<16x512xf32> to vector<16x32xf32>
    %36 = vector.shape_cast %35 : vector<16x32xf32> to vector<2x8x32xf32>
    %37 = vector.extract_strided_slice %6 {offsets = [0, 416], sizes = [16, 32], strides = [1, 1]} : vector<16x512xf32> to vector<16x32xf32>
    %38 = vector.shape_cast %37 : vector<16x32xf32> to vector<2x8x32xf32>
    %39 = vector.extract_strided_slice %6 {offsets = [0, 480], sizes = [16, 32], strides = [1, 1]} : vector<16x512xf32> to vector<16x32xf32>
    %40 = vector.shape_cast %39 : vector<16x32xf32> to vector<2x8x32xf32>
    %41 = vector.shape_cast %10 : vector<2x8x32xf32> to vector<1x2x8x32xf32>
    %42 = vector.shape_cast %12 : vector<2x8x32xf32> to vector<1x2x8x32xf32>
    %43 = vector.shape_cast %14 : vector<2x8x32xf32> to vector<1x2x8x32xf32>
    %44 = vector.shape_cast %16 : vector<2x8x32xf32> to vector<1x2x8x32xf32>
    %45 = vector.shape_cast %18 : vector<2x8x32xf32> to vector<1x2x8x32xf32>
    %46 = vector.shape_cast %20 : vector<2x8x32xf32> to vector<1x2x8x32xf32>
    %47 = vector.shape_cast %22 : vector<2x8x32xf32> to vector<1x2x8x32xf32>
    %48 = vector.shape_cast %24 : vector<2x8x32xf32> to vector<1x2x8x32xf32>
    %49 = vector.shape_cast %26 : vector<2x8x32xf32> to vector<1x2x8x32xf32>
    %50 = vector.shape_cast %28 : vector<2x8x32xf32> to vector<1x2x8x32xf32>
    %51 = vector.shape_cast %30 : vector<2x8x32xf32> to vector<1x2x8x32xf32>
    %52 = vector.shape_cast %32 : vector<2x8x32xf32> to vector<1x2x8x32xf32>
    %53 = vector.shape_cast %34 : vector<2x8x32xf32> to vector<1x2x8x32xf32>
    %54 = vector.shape_cast %36 : vector<2x8x32xf32> to vector<1x2x8x32xf32>
    %55 = vector.shape_cast %38 : vector<2x8x32xf32> to vector<1x2x8x32xf32>
    %56 = vector.shape_cast %40 : vector<2x8x32xf32> to vector<1x2x8x32xf32>
    %57 = tpu.concatenate %41, %42, %43, %44, %45, %46, %47, %48, %49, %50, %51, %52, %53, %54, %55, %56 in 0 : vector<1x2x8x32xf32>, vector<1x2x8x32xf32>, vector<1x2x8x32xf32>, vector<1x2x8x32xf32>, vector<1x2x8x32xf32>, vector<1x2x8x32xf32>, vector<1x2x8x32xf32>, vector<1x2x8x32xf32>, vector<1x2x8x32xf32>, vector<1x2x8x32xf32>, vector<1x2x8x32xf32>, vector<1x2x8x32xf32>, vector<1x2x8x32xf32>, vector<1x2x8x32xf32>, vector<1x2x8x32xf32>, vector<1x2x8x32xf32> -> vector<16x2x8x32xf32>
    %58 = vector.extract_strided_slice %7 {offsets = [0, 0], sizes = [16, 32], strides = [1, 1]} : vector<16x512xf32> to vector<16x32xf32>
    %59 = vector.shape_cast %58 : vector<16x32xf32> to vector<2x8x32xf32>
    %60 = vector.extract_strided_slice %7 {offsets = [0, 64], sizes = [16, 32], strides = [1, 1]} : vector<16x512xf32> to vector<16x32xf32>
    %61 = vector.shape_cast %60 : vector<16x32xf32> to vector<2x8x32xf32>
    %62 = vector.extract_strided_slice %7 {offsets = [0, 128], sizes = [16, 32], strides = [1, 1]} : vector<16x512xf32> to vector<16x32xf32>
    %63 = vector.shape_cast %62 : vector<16x32xf32> to vector<2x8x32xf32>
    %64 = vector.extract_strided_slice %7 {offsets = [0, 192], sizes = [16, 32], strides = [1, 1]} : vector<16x512xf32> to vector<16x32xf32>
    %65 = vector.shape_cast %64 : vector<16x32xf32> to vector<2x8x32xf32>
    %66 = vector.extract_strided_slice %7 {offsets = [0, 256], sizes = [16, 32], strides = [1, 1]} : vector<16x512xf32> to vector<16x32xf32>
    %67 = vector.shape_cast %66 : vector<16x32xf32> to vector<2x8x32xf32>
    %68 = vector.extract_strided_slice %7 {offsets = [0, 320], sizes = [16, 32], strides = [1, 1]} : vector<16x512xf32> to vector<16x32xf32>
    %69 = vector.shape_cast %68 : vector<16x32xf32> to vector<2x8x32xf32>
    %70 = vector.extract_strided_slice %7 {offsets = [0, 384], sizes = [16, 32], strides = [1, 1]} : vector<16x512xf32> to vector<16x32xf32>
    %71 = vector.shape_cast %70 : vector<16x32xf32> to vector<2x8x32xf32>
    %72 = vector.extract_strided_slice %7 {offsets = [0, 448], sizes = [16, 32], strides = [1, 1]} : vector<16x512xf32> to vector<16x32xf32>
    %73 = vector.shape_cast %72 : vector<16x32xf32> to vector<2x8x32xf32>
    %74 = vector.extract_strided_slice %7 {offsets = [0, 32], sizes = [16, 32], strides = [1, 1]} : vector<16x512xf32> to vector<16x32xf32>
    %75 = vector.shape_cast %74 : vector<16x32xf32> to vector<2x8x32xf32>
    %76 = vector.extract_strided_slice %7 {offsets = [0, 96], sizes = [16, 32], strides = [1, 1]} : vector<16x512xf32> to vector<16x32xf32>
    %77 = vector.shape_cast %76 : vector<16x32xf32> to vector<2x8x32xf32>
    %78 = vector.extract_strided_slice %7 {offsets = [0, 160], sizes = [16, 32], strides = [1, 1]} : vector<16x512xf32> to vector<16x32xf32>
    %79 = vector.shape_cast %78 : vector<16x32xf32> to vector<2x8x32xf32>
    %80 = vector.extract_strided_slice %7 {offsets = [0, 224], sizes = [16, 32], strides = [1, 1]} : vector<16x512xf32> to vector<16x32xf32>
    %81 = vector.shape_cast %80 : vector<16x32xf32> to vector<2x8x32xf32>
    %82 = vector.extract_strided_slice %7 {offsets = [0, 288], sizes = [16, 32], strides = [1, 1]} : vector<16x512xf32> to vector<16x32xf32>
    %83 = vector.shape_cast %82 : vector<16x32xf32> to vector<2x8x32xf32>
    %84 = vector.extract_strided_slice %7 {offsets = [0, 352], sizes = [16, 32], strides = [1, 1]} : vector<16x512xf32> to vector<16x32xf32>
    %85 = vector.shape_cast %84 : vector<16x32xf32> to vector<2x8x32xf32>
    %86 = vector.extract_strided_slice %7 {offsets = [0, 416], sizes = [16, 32], strides = [1, 1]} : vector<16x512xf32> to vector<16x32xf32>
    %87 = vector.shape_cast %86 : vector<16x32xf32> to vector<2x8x32xf32>
    %88 = vector.extract_strided_slice %7 {offsets = [0, 480], sizes = [16, 32], strides = [1, 1]} : vector<16x512xf32> to vector<16x32xf32>
    %89 = vector.shape_cast %88 : vector<16x32xf32> to vector<2x8x32xf32>
    %90 = vector.shape_cast %59 : vector<2x8x32xf32> to vector<1x2x8x32xf32>
    %91 = vector.shape_cast %61 : vector<2x8x32xf32> to vector<1x2x8x32xf32>
    %92 = vector.shape_cast %63 : vector<2x8x32xf32> to vector<1x2x8x32xf32>
    %93 = vector.shape_cast %65 : vector<2x8x32xf32> to vector<1x2x8x32xf32>
    %94 = vector.shape_cast %67 : vector<2x8x32xf32> to vector<1x2x8x32xf32>
    %95 = vector.shape_cast %69 : vector<2x8x32xf32> to vector<1x2x8x32xf32>
    %96 = vector.shape_cast %71 : vector<2x8x32xf32> to vector<1x2x8x32xf32>
    %97 = vector.shape_cast %73 : vector<2x8x32xf32> to vector<1x2x8x32xf32>
    %98 = vector.shape_cast %75 : vector<2x8x32xf32> to vector<1x2x8x32xf32>
    %99 = vector.shape_cast %77 : vector<2x8x32xf32> to vector<1x2x8x32xf32>
    %100 = vector.shape_cast %79 : vector<2x8x32xf32> to vector<1x2x8x32xf32>
    %101 = vector.shape_cast %81 : vector<2x8x32xf32> to vector<1x2x8x32xf32>
    %102 = vector.shape_cast %83 : vector<2x8x32xf32> to vector<1x2x8x32xf32>
    %103 = vector.shape_cast %85 : vector<2x8x32xf32> to vector<1x2x8x32xf32>
    %104 = vector.shape_cast %87 : vector<2x8x32xf32> to vector<1x2x8x32xf32>
    %105 = vector.shape_cast %89 : vector<2x8x32xf32> to vector<1x2x8x32xf32>
    %106 = tpu.concatenate %90, %91, %92, %93, %94, %95, %96, %97, %98, %99, %100, %101, %102, %103, %104, %105 in 0 : vector<1x2x8x32xf32>, vector<1x2x8x32xf32>, vector<1x2x8x32xf32>, vector<1x2x8x32xf32>, vector<1x2x8x32xf32>, vector<1x2x8x32xf32>, vector<1x2x8x32xf32>, vector<1x2x8x32xf32>, vector<1x2x8x32xf32>, vector<1x2x8x32xf32>, vector<1x2x8x32xf32>, vector<1x2x8x32xf32>, vector<1x2x8x32xf32>, vector<1x2x8x32xf32>, vector<1x2x8x32xf32>, vector<1x2x8x32xf32> -> vector<16x2x8x32xf32>
    %107 = vector.shape_cast %57 : vector<16x2x8x32xf32> to vector<32x8x32xf32>
    %108 = arith.truncf %107 : vector<32x8x32xf32> to vector<32x8x32xbf16>
    %109 = vector.shape_cast %106 : vector<16x2x8x32xf32> to vector<32x8x32xf32>
    %110 = arith.truncf %109 : vector<32x8x32xf32> to vector<32x8x32xbf16>
    %cst_5 = arith.constant dense<0.000000e+00> : vector<32x8x8xf32>
    %111 = tpu.matmul %108, %110, %cst_5 {dimension_numbers = #tpu.dot_dimension_numbers<[2], [2], [1], [1], [0, 0, 0, 1, 1, 1], [0], [0]>} : vector<32x8x32xbf16>, vector<32x8x32xbf16>, vector<32x8x8xf32> -> vector<32x8x8xf32>
    %cst_6 = arith.constant dense<0xFF800000> : vector<32x8xf32>
    %112 = vector.multi_reduction <maximumf>, %111, %cst_6 [2] : vector<32x8x8xf32> to vector<32x8xf32>
    %113 = vector.shape_cast %112 : vector<32x8xf32> to vector<32x8x1xf32>
    %114 = vector.broadcast %113 : vector<32x8x1xf32> to vector<32x8x8xf32>
    %115 = arith.subf %111, %114 : vector<32x8x8xf32>
    %116 = math.exp %115 : vector<32x8x8xf32>
    %cst_7 = arith.constant dense<0.000000e+00> : vector<32x8xf32>
    %117 = vector.multi_reduction <add>, %116, %cst_7 [2] : vector<32x8x8xf32> to vector<32x8xf32>
    %118 = vector.shape_cast %117 : vector<32x8xf32> to vector<32x8x1xf32>
    %119 = tpu.reciprocal %118 {approx = true} : vector<32x8x1xf32> -> vector<32x8x1xf32>
    %120 = vector.broadcast %119 : vector<32x8x1xf32> to vector<32x8x8xf32>
    %121 = arith.mulf %116, %120 : vector<32x8x8xf32>
    %122 = vector.extract_strided_slice %121 {offsets = [0, 0, 0], sizes = [16, 8, 8], strides = [1, 1, 1]} : vector<32x8x8xf32> to vector<16x8x8xf32>
    %123 = vector.extract_strided_slice %121 {offsets = [16, 0, 0], sizes = [16, 8, 8], strides = [1, 1, 1]} : vector<32x8x8xf32> to vector<16x8x8xf32>
    %124 = vector.broadcast %0 : f32 to vector<16x8x8xf32>
    %125 = arith.mulf %124, %123 : vector<16x8x8xf32>
    %126 = arith.subf %122, %125 : vector<16x8x8xf32>
    %127 = vector.extract_strided_slice %8 {offsets = [0, 0], sizes = [16, 64], strides = [1, 1]} : vector<16x512xf32> to vector<16x64xf32>
    %128 = vector.shape_cast %127 : vector<16x64xf32> to vector<2x8x64xf32>
    %129 = vector.extract_strided_slice %8 {offsets = [0, 64], sizes = [16, 64], strides = [1, 1]} : vector<16x512xf32> to vector<16x64xf32>
    %130 = vector.shape_cast %129 : vector<16x64xf32> to vector<2x8x64xf32>
    %131 = vector.extract_strided_slice %8 {offsets = [0, 128], sizes = [16, 64], strides = [1, 1]} : vector<16x512xf32> to vector<16x64xf32>
    %132 = vector.shape_cast %131 : vector<16x64xf32> to vector<2x8x64xf32>
    %133 = vector.extract_strided_slice %8 {offsets = [0, 192], sizes = [16, 64], strides = [1, 1]} : vector<16x512xf32> to vector<16x64xf32>
    %134 = vector.shape_cast %133 : vector<16x64xf32> to vector<2x8x64xf32>
    %135 = vector.extract_strided_slice %8 {offsets = [0, 256], sizes = [16, 64], strides = [1, 1]} : vector<16x512xf32> to vector<16x64xf32>
    %136 = vector.shape_cast %135 : vector<16x64xf32> to vector<2x8x64xf32>
    %137 = vector.extract_strided_slice %8 {offsets = [0, 320], sizes = [16, 64], strides = [1, 1]} : vector<16x512xf32> to vector<16x64xf32>
    %138 = vector.shape_cast %137 : vector<16x64xf32> to vector<2x8x64xf32>
    %139 = vector.extract_strided_slice %8 {offsets = [0, 384], sizes = [16, 64], strides = [1, 1]} : vector<16x512xf32> to vector<16x64xf32>
    %140 = vector.shape_cast %139 : vector<16x64xf32> to vector<2x8x64xf32>
    %141 = vector.extract_strided_slice %8 {offsets = [0, 448], sizes = [16, 64], strides = [1, 1]} : vector<16x512xf32> to vector<16x64xf32>
    %142 = vector.shape_cast %141 : vector<16x64xf32> to vector<2x8x64xf32>
    %143 = vector.shape_cast %128 : vector<2x8x64xf32> to vector<1x2x8x64xf32>
    %144 = vector.shape_cast %130 : vector<2x8x64xf32> to vector<1x2x8x64xf32>
    %145 = vector.shape_cast %132 : vector<2x8x64xf32> to vector<1x2x8x64xf32>
    %146 = vector.shape_cast %134 : vector<2x8x64xf32> to vector<1x2x8x64xf32>
    %147 = vector.shape_cast %136 : vector<2x8x64xf32> to vector<1x2x8x64xf32>
    %148 = vector.shape_cast %138 : vector<2x8x64xf32> to vector<1x2x8x64xf32>
    %149 = vector.shape_cast %140 : vector<2x8x64xf32> to vector<1x2x8x64xf32>
    %150 = vector.shape_cast %142 : vector<2x8x64xf32> to vector<1x2x8x64xf32>
    %151 = tpu.concatenate %143, %144, %145, %146, %147, %148, %149, %150 in 0 : vector<1x2x8x64xf32>, vector<1x2x8x64xf32>, vector<1x2x8x64xf32>, vector<1x2x8x64xf32>, vector<1x2x8x64xf32>, vector<1x2x8x64xf32>, vector<1x2x8x64xf32>, vector<1x2x8x64xf32> -> vector<8x2x8x64xf32>
    %152 = vector.shape_cast %151 : vector<8x2x8x64xf32> to vector<16x8x64xf32>
    %153 = arith.truncf %152 : vector<16x8x64xf32> to vector<16x8x64xbf16>
    %154 = arith.truncf %126 : vector<16x8x8xf32> to vector<16x8x8xbf16>
    %cst_8 = arith.constant dense<0.000000e+00> : vector<16x8x64xf32>
    %155 = tpu.matmul %154, %153, %cst_8 {dimension_numbers = #tpu.dot_dimension_numbers<[2], [1], [1], [2], [0, 0, 0, 1, 1, 2], [0], [0]>} : vector<16x8x8xbf16>, vector<16x8x64xbf16>, vector<16x8x64xf32> -> vector<16x8x64xf32>
    %c0_9 = arith.constant 0 : index
    %c0_10 = arith.constant 0 : index
    %156 = vector.load %arg5[%c0_9, %c0_10] : memref<1x64xf32, #tpu.memory_space<vmem>>, vector<1x64xf32>
    %157 = arith.mulf %155, %155 : vector<16x8x64xf32>
    %cst_11 = arith.constant dense<0.000000e+00> : vector<16x8xf32>
    %158 = vector.multi_reduction <add>, %157, %cst_11 [2] : vector<16x8x64xf32> to vector<16x8xf32>
    %159 = vector.shape_cast %158 : vector<16x8xf32> to vector<16x8x1xf32>
    %cst_12 = arith.constant 6.400000e+01 : f32
    %160 = vector.broadcast %cst_12 : f32 to vector<16x8x1xf32>
    %161 = arith.divf %159, %160 : vector<16x8x1xf32>
    %cst_13 = arith.constant 9.99999974E-6 : f32
    %162 = vector.broadcast %cst_13 : f32 to vector<16x8x1xf32>
    %163 = arith.addf %161, %162 : vector<16x8x1xf32>
    %164 = math.rsqrt %163 : vector<16x8x1xf32>
    %165 = vector.broadcast %164 : vector<16x8x1xf32> to vector<16x8x64xf32>
    %166 = arith.mulf %155, %165 : vector<16x8x64xf32>
    %167 = vector.shape_cast %156 : vector<1x64xf32> to vector<1x1x64xf32>
    %168 = vector.broadcast %167 : vector<1x1x64xf32> to vector<16x8x64xf32>
    %169 = arith.mulf %166, %168 : vector<16x8x64xf32>
    %170 = vector.shape_cast %169 : vector<16x8x64xf32> to vector<8x16x64xf32>
    %171 = vector.extract_strided_slice %170 {offsets = [0, 0, 0], sizes = [1, 16, 64], strides = [1, 1, 1]} : vector<8x16x64xf32> to vector<1x16x64xf32>
    %172 = vector.shape_cast %171 : vector<1x16x64xf32> to vector<16x64xf32>
    %173 = vector.extract_strided_slice %170 {offsets = [1, 0, 0], sizes = [1, 16, 64], strides = [1, 1, 1]} : vector<8x16x64xf32> to vector<1x16x64xf32>
    %174 = vector.shape_cast %173 : vector<1x16x64xf32> to vector<16x64xf32>
    %175 = vector.extract_strided_slice %170 {offsets = [2, 0, 0], sizes = [1, 16, 64], strides = [1, 1, 1]} : vector<8x16x64xf32> to vector<1x16x64xf32>
    %176 = vector.shape_cast %175 : vector<1x16x64xf32> to vector<16x64xf32>
    %177 = vector.extract_strided_slice %170 {offsets = [3, 0, 0], sizes = [1, 16, 64], strides = [1, 1, 1]} : vector<8x16x64xf32> to vector<1x16x64xf32>
    %178 = vector.shape_cast %177 : vector<1x16x64xf32> to vector<16x64xf32>
    %179 = vector.extract_strided_slice %170 {offsets = [4, 0, 0], sizes = [1, 16, 64], strides = [1, 1, 1]} : vector<8x16x64xf32> to vector<1x16x64xf32>
    %180 = vector.shape_cast %179 : vector<1x16x64xf32> to vector<16x64xf32>
    %181 = vector.extract_strided_slice %170 {offsets = [5, 0, 0], sizes = [1, 16, 64], strides = [1, 1, 1]} : vector<8x16x64xf32> to vector<1x16x64xf32>
    %182 = vector.shape_cast %181 : vector<1x16x64xf32> to vector<16x64xf32>
    %183 = vector.extract_strided_slice %170 {offsets = [6, 0, 0], sizes = [1, 16, 64], strides = [1, 1, 1]} : vector<8x16x64xf32> to vector<1x16x64xf32>
    %184 = vector.shape_cast %183 : vector<1x16x64xf32> to vector<16x64xf32>
    %185 = vector.extract_strided_slice %170 {offsets = [7, 0, 0], sizes = [1, 16, 64], strides = [1, 1, 1]} : vector<8x16x64xf32> to vector<1x16x64xf32>
    %186 = vector.shape_cast %185 : vector<1x16x64xf32> to vector<16x64xf32>
    %187 = tpu.concatenate %172, %174, %176, %178, %180, %182, %184, %186 in 1 : vector<16x64xf32>, vector<16x64xf32>, vector<16x64xf32>, vector<16x64xf32>, vector<16x64xf32>, vector<16x64xf32>, vector<16x64xf32>, vector<16x64xf32> -> vector<16x512xf32>
    %188 = arith.truncf %187 : vector<16x512xf32> to vector<16x512xbf16>
    %c0_14 = arith.constant 0 : index
    %c0_15 = arith.constant 0 : index
    %189 = vector.load %arg4[%c0_14, %c0_15] : memref<512x512xbf16, #tpu.memory_space<vmem>>, vector<512x512xbf16>
    %cst_16 = arith.constant dense<0.000000e+00> : vector<16x512xf32>
    %190 = tpu.matmul %188, %189, %cst_16 {dimension_numbers = #tpu.dot_dimension_numbers<[1], [0], [0], [1], [0, 0, 1, 1], [], []>} : vector<16x512xbf16>, vector<512x512xbf16>, vector<16x512xf32> -> vector<16x512xf32>
    %191 = arith.addf %190, %2 : vector<16x512xf32>
    %192 = arith.truncf %191 : vector<16x512xf32> to vector<16x512xbf16>
    %c0_17 = arith.constant 0 : index
    %c0_18 = arith.constant 0 : index
    %193 = vector.load %arg6[%c0_17, %c0_18] : memref<512x1024xbf16, #tpu.memory_space<vmem>>, vector<512x1024xbf16>
    %cst_19 = arith.constant dense<0.000000e+00> : vector<16x1024xf32>
    %194 = tpu.matmul %192, %193, %cst_19 {dimension_numbers = #tpu.dot_dimension_numbers<[1], [0], [0], [1], [0, 0, 1, 1], [], []>} : vector<16x512xbf16>, vector<512x1024xbf16>, vector<16x1024xf32> -> vector<16x1024xf32>
    %195 = vector.extract_strided_slice %194 {offsets = [0, 0], sizes = [16, 512], strides = [1, 1]} : vector<16x1024xf32> to vector<16x512xf32>
    %196 = vector.extract_strided_slice %194 {offsets = [0, 512], sizes = [16, 512], strides = [1, 1]} : vector<16x1024xf32> to vector<16x512xf32>
    %197 = arith.mulf %195, %196 : vector<16x512xf32>
    %cst_20 = arith.constant 0.000000e+00 : f32
    %198 = vector.broadcast %cst_20 : f32 to vector<16x512xf32>
    %199 = arith.subf %198, %197 : vector<16x512xf32>
    %200 = math.exp %199 : vector<16x512xf32>
    %cst_21 = arith.constant 1.000000e+00 : f32
    %201 = vector.broadcast %cst_21 : f32 to vector<16x512xf32>
    %202 = arith.addf %201, %200 : vector<16x512xf32>
    %203 = tpu.reciprocal %202 {approx = true} : vector<16x512xf32> -> vector<16x512xf32>
    %204 = arith.mulf %197, %203 : vector<16x512xf32>
    %205 = arith.truncf %204 : vector<16x512xf32> to vector<16x512xbf16>
    %c0_22 = arith.constant 0 : index
    %c0_23 = arith.constant 0 : index
    %206 = vector.load %arg7[%c0_22, %c0_23] : memref<512x512xbf16, #tpu.memory_space<vmem>>, vector<512x512xbf16>
    %cst_24 = arith.constant dense<0.000000e+00> : vector<16x512xf32>
    %207 = tpu.matmul %205, %206, %cst_24 {dimension_numbers = #tpu.dot_dimension_numbers<[1], [0], [0], [1], [0, 0, 1, 1], [], []>} : vector<16x512xbf16>, vector<512x512xbf16>, vector<16x512xf32> -> vector<16x512xf32>
    %c0_25 = arith.constant 0 : index
    %c0_26 = arith.constant 0 : index
    %208 = vector.load %arg8[%c0_25, %c0_26] : memref<1x512xf32, #tpu.memory_space<vmem>>, vector<1x512xf32>
    %209 = arith.mulf %207, %207 : vector<16x512xf32>
    %cst_27 = arith.constant dense<0.000000e+00> : vector<16xf32>
    %210 = vector.multi_reduction <add>, %209, %cst_27 [1] : vector<16x512xf32> to vector<16xf32>
    %211 = vector.shape_cast %210 : vector<16xf32> to vector<16x1xf32>
    %cst_28 = arith.constant 5.120000e+02 : f32
    %212 = vector.broadcast %cst_28 : f32 to vector<16x1xf32>
    %213 = arith.divf %211, %212 : vector<16x1xf32>
    %cst_29 = arith.constant 9.99999974E-6 : f32
    %214 = vector.broadcast %cst_29 : f32 to vector<16x1xf32>
    %215 = arith.addf %213, %214 : vector<16x1xf32>
    %216 = math.rsqrt %215 : vector<16x1xf32>
    %217 = vector.broadcast %216 : vector<16x1xf32> to vector<16x512xf32>
    %218 = arith.mulf %207, %217 : vector<16x512xf32>
    %219 = vector.broadcast %208 : vector<1x512xf32> to vector<16x512xf32>
    %220 = arith.mulf %218, %219 : vector<16x512xf32>
    %221 = arith.addf %220, %191 : vector<16x512xf32>
    %222 = vector.shape_cast %221 : vector<16x512xf32> to vector<2x8x512xf32>
    %c0_30 = arith.constant 0 : index
    %c0_31 = arith.constant 0 : index
    %c0_32 = arith.constant 0 : index
    %223 = vector.load %arg9[%c0_30, %c0_31, %c0_32] : memref<2x8x512xf32, #tpu.memory_space<vmem>>, vector<2x8x512xf32>
    tpu.vector_store %arg9[%c0_30, %c0_31, %c0_32], %222 {strides = array<i32>} : memref<2x8x512xf32, #tpu.memory_space<vmem>>, vector<2x8x512xf32>,
    return
  }
  func.func @transform_0(%arg0: i32, %arg1: memref<1xf32, #tpu.memory_space<smem>>) -> (i32, i32, i32) {
    %c0_i32 = arith.constant 0 : i32
    %c0_i32_0 = arith.constant 0 : i32
    %c0_i32_1 = arith.constant 0 : i32
    return %arg0, %c0_i32, %c0_i32_0 : i32, i32, i32
  }
  func.func @transform_1(%arg0: i32, %arg1: memref<1xf32, #tpu.memory_space<smem>>) -> (i32, i32) {
    %c0_i32 = arith.constant 0 : i32
    %c0_i32_0 = arith.constant 0 : i32
    %c0_i32_1 = arith.constant 0 : i32
    return %c0_i32, %c0_i32_0 : i32, i32
  }
  func.func @transform_2(%arg0: i32, %arg1: memref<1xf32, #tpu.memory_space<smem>>) -> (i32, i32) {
    %c0_i32 = arith.constant 0 : i32
    %c0_i32_0 = arith.constant 0 : i32
    %c0_i32_1 = arith.constant 0 : i32
    return %c0_i32, %c0_i32_0 : i32, i32
  }
  func.func @transform_3(%arg0: i32, %arg1: memref<1xf32, #tpu.memory_space<smem>>) -> (i32, i32) {
    %c0_i32 = arith.constant 0 : i32
    %c0_i32_0 = arith.constant 0 : i32
    %c0_i32_1 = arith.constant 0 : i32
    return %c0_i32, %c0_i32_0 : i32, i32
  }
  func.func @transform_4(%arg0: i32, %arg1: memref<1xf32, #tpu.memory_space<smem>>) -> (i32, i32) {
    %c0_i32 = arith.constant 0 : i32
    %c0_i32_0 = arith.constant 0 : i32
    %c0_i32_1 = arith.constant 0 : i32
    return %c0_i32, %c0_i32_0 : i32, i32
  }
  func.func @transform_5(%arg0: i32, %arg1: memref<1xf32, #tpu.memory_space<smem>>) -> (i32, i32) {
    %c0_i32 = arith.constant 0 : i32
    %c0_i32_0 = arith.constant 0 : i32
    %c0_i32_1 = arith.constant 0 : i32
    return %c0_i32, %c0_i32_0 : i32, i32
  }
  func.func @transform_6(%arg0: i32, %arg1: memref<1xf32, #tpu.memory_space<smem>>) -> (i32, i32) {
    %c0_i32 = arith.constant 0 : i32
    %c0_i32_0 = arith.constant 0 : i32
    %c0_i32_1 = arith.constant 0 : i32
    return %c0_i32, %c0_i32_0 : i32, i32
  }
  func.func @transform_7(%arg0: i32, %arg1: memref<1xf32, #tpu.memory_space<smem>>) -> (i32, i32, i32) {
    %c0_i32 = arith.constant 0 : i32
    %c0_i32_0 = arith.constant 0 : i32
    %c0_i32_1 = arith.constant 0 : i32
    return %arg0, %c0_i32, %c0_i32_0 : i32, i32, i32
  }
}

</mosaic_0001>

<llo_original>
// kernel: block_forward.1
$region0: #{block_forward.1}
  #allocation0 [shape = 'u32[]', space=smem, size = 0x4, offset = 0x4, fixed_abs, tag = 'smem constant byte address 0x4 - core index']
  #allocation1 [shape = 'u32[144,128]{1,0:T(1,128)}', space=vmem, size = 0x12000, scoped, tag = 'internal scratch']
  #allocation2 [shape = 's32[1]{0}', space=sflag, size = 0x4, scoped, tag = 'scoped memory for block_forward.1']
  #allocation3 [shape = 'f32[1]{0:T(128)S(6)}', space=smem, size = 0x200, scoped, tag = 'prefetched SMEM operand 0']
  %s0 = inlined_call_operand.<no memory space> [shape: f32[1], index: 0, kind: input, shape index: {}]
  %s1 = inlined_call_operand.hbm [shape: f32[2,8,512], index: 1, kind: input, shape index: {}]
  %s2 = inlined_call_operand.hbm [shape: bf16[512,1536], index: 2, kind: input, shape index: {}]
  %s3 = inlined_call_operand.hbm [shape: bf16[512,512], index: 3, kind: input, shape index: {}]
  %s4 = inlined_call_operand.hbm [shape: f32[1,64], index: 4, kind: input, shape index: {}]
  %s5 = inlined_call_operand.hbm [shape: bf16[512,1024], index: 5, kind: input, shape index: {}]
  %s6 = inlined_call_operand.hbm [shape: bf16[512,512], index: 6, kind: input, shape index: {}]
  %s7 = inlined_call_operand.hbm [shape: f32[1,512], index: 7, kind: input, shape index: {}]
  %s8 = inlined_call_operand.hbm [shape: f32[2,8,512], index: 8, kind: output, shape index: {}]
  %s9 = sld [smem:[#allocation0]]
  $region66: #{block_forward.1} parent=0
    _
  %s11 = ssub.s32 1, %s9
  %s12 = scalar_select 0, %s11, %s9
  %13 = sst [smem:[#allocation3]] %s0
  $region1: #{block_forward.1} parent=0
    #allocation4 [shape = 'u8[32768]{0}', space=vmem, size = 0x8000, scoped, tag = 'input window, operand 1, single buffered']
    #allocation5 [shape = 's32[1]{0}', space=sflag, size = 0x4, scoped, tag = 'scoped memory for block_forward.1']
    #allocation6 [shape = 's32[1]{0}', space=sflag, size = 0x4, scoped, tag = 'scoped memory for block_forward.1']
    #allocation7 [shape = 'u8[1572864]{0}', space=vmem, size = 0x180000, scoped, tag = 'input window, operand 2, single buffered']
    #allocation8 [shape = 's32[1]{0}', space=sflag, size = 0x4, scoped, tag = 'scoped memory for block_forward.1']
    #allocation9 [shape = 'u8[524288]{0}', space=vmem, size = 0x80000, scoped, tag = 'input window, operand 3, single buffered']
    #allocation10 [shape = 'u8[512]{0}', space=vmem, size = 0x400, scoped, tag = 'input window, operand 4, single buffered']
    #allocation11 [shape = 's32[1]{0}', space=sflag, size = 0x4, scoped, tag = 'scoped memory for block_forward.1']
    #allocation12 [shape = 'u8[1048576]{0}', space=vmem, size = 0x100000, scoped, tag = 'input window, operand 5, single buffered']
    #allocation13 [shape = 'u8[524288]{0}', space=vmem, size = 0x80000, scoped, tag = 'input window, operand 6, single buffered']
    #allocation14 [shape = 's32[1]{0}', space=sflag, size = 0x4, scoped, tag = 'scoped memory for block_forward.1']
    #allocation15 [shape = 'u8[2048]{0}', space=vmem, size = 0x800, scoped, tag = 'input window, operand 7, single buffered']
    #allocation16 [shape = 'u8[32768]{0}', space=vmem, size = 0x8000, scoped, tag = 'output window, operand 0, single buffered']
    %14 = vsyncpa [#allocation5], 0
    %15 = vsyncpa [#allocation8], 0
    %16 = vsyncpa [#allocation11], 0
    %17 = vsyncpa [#allocation14], 0
    %18 = vsyncpa [#allocation6], 0
    // Predicated region
    $region2: #{block_forward.1} parent=1 // pred_check
      _
    $region3: #{block_forward.1} parent=1 // pred_check_branch
      %20 = sbr.rel (0) target = $region5
    $region4: #{block_forward.1} parent=1 // pred_region
      %s22 = ssub.s32 1024, 1024
      %23 = vsyncadd [#allocation5], %s22
      %s24 = sshll.u32 [#allocation4], 4
      %s25 = int_to_ptr.vmem [resolvable:$true] %s24
      %30 = dma.hbm_to_vmem [thread:$0]  %s1, 1024, %s25, [#allocation5], 512, 512, 32
    $region5: #{block_forward.1} parent=1 // pred_fallthru
      _
    // Predicated region
    $region6: #{block_forward.1} parent=1 // pred_check
      _
    $region7: #{block_forward.1} parent=1 // pred_check_branch
      %32 = sbr.rel (0) target = $region9
    $region8: #{block_forward.1} parent=1 // pred_region
      %s34 = ssub.s32 49152, 49152
      %35 = vsyncadd [#allocation8], %s34
      %s36 = sshll.u32 [#allocation7], 4
      %s37 = int_to_ptr.vmem [resolvable:$true] %s36
      %42 = dma.hbm_to_vmem [thread:$0]  %s2, 49152, %s37, [#allocation8], 768, 768, 48
    $region9: #{block_forward.1} parent=1 // pred_fallthru
      _
    // Predicated region
    $region10: #{block_forward.1} parent=1 // pred_check
      _
    $region11: #{block_forward.1} parent=1 // pred_check_branch
      %44 = sbr.rel (0) target = $region13
    $region12: #{block_forward.1} parent=1 // pred_region
      %s46 = ssub.s32 16384, 16384
      %47 = vsyncadd [#allocation8], %s46
      %s48 = sshll.u32 [#allocation9], 4
      %s49 = int_to_ptr.vmem [resolvable:$true] %s48
      %54 = dma.hbm_to_vmem [thread:$0]  %s3, 16384, %s49, [#allocation8], 256, 256, 16
    $region13: #{block_forward.1} parent=1 // pred_fallthru
      _
    // Predicated region
    $region14: #{block_forward.1} parent=1 // pred_check
      _
    $region15: #{block_forward.1} parent=1 // pred_check_branch
      %56 = sbr.rel (0) target = $region17
    $region16: #{block_forward.1} parent=1 // pred_region
      %s58 = ssub.s32 16, 16
      %59 = vsyncadd [#allocation11], %s58
      %s61 = sshll.u32 [#allocation10], 4
      %s62 = int_to_ptr.vmem [resolvable:$true] %s61
      %64 = dma.hbm_to_vmem [thread:$0]  %s4, 16, %s62, [#allocation11]
    $region17: #{block_forward.1} parent=1 // pred_fallthru
      _
    // Predicated region
    $region18: #{block_forward.1} parent=1 // pred_check
      _
    $region19: #{block_forward.1} parent=1 // pred_check_branch
      %66 = sbr.rel (0) target = $region21
    $region20: #{block_forward.1} parent=1 // pred_region
      %s68 = ssub.s32 32768, 32768
      %69 = vsyncadd [#allocation11], %s68
      %s70 = sshll.u32 [#allocation12], 4
      %s71 = int_to_ptr.vmem [resolvable:$true] %s70
      %76 = dma.hbm_to_vmem [thread:$0]  %s5, 32768, %s71, [#allocation11], 512, 512, 32
    $region21: #{block_forward.1} parent=1 // pred_fallthru
      _
    // Predicated region
    $region22: #{block_forward.1} parent=1 // pred_check
      _
    $region23: #{block_forward.1} parent=1 // pred_check_branch
      %78 = sbr.rel (0) target = $region25
    $region24: #{block_forward.1} parent=1 // pred_region
      %s80 = ssub.s32 16384, 16384
      %81 = vsyncadd [#allocation14], %s80
      %s82 = sshll.u32 [#allocation13], 4
      %s83 = int_to_ptr.vmem [resolvable:$true] %s82
      %88 = dma.hbm_to_vmem [thread:$0]  %s6, 16384, %s83, [#allocation14], 256, 256, 16
    $region25: #{block_forward.1} parent=1 // pred_fallthru
      _
    // Predicated region
    $region26: #{block_forward.1} parent=1 // pred_check
      _
    $region27: #{block_forward.1} parent=1 // pred_check_branch
      %90 = sbr.rel (0) target = $region29
    $region28: #{block_forward.1} parent=1 // pred_region
      %s92 = ssub.s32 64, 64
      %93 = vsyncadd [#allocation14], %s92
      %s95 = sshll.u32 [#allocation15], 4
      %s96 = int_to_ptr.vmem [resolvable:$true] %s95
      %98 = dma.hbm_to_vmem [thread:$0]  %s7, 64, %s96, [#allocation14]
    $region29: #{block_forward.1} parent=1 // pred_fallthru
      _
    // Predicated region
    $region30: #{block_forward.1} parent=1 // pred_check
      _
    $region31: #{block_forward.1} parent=1 // pred_check_branch
      %100 = sbr.rel (0) target = $region33
    $region32: #{block_forward.1} parent=1 // pred_region
      %101 = dma.done [#allocation5], 1024
    $region33: #{block_forward.1} parent=1 // pred_fallthru
      _
    // Predicated region
    $region34: #{block_forward.1} parent=1 // pred_check
      _
    $region35: #{block_forward.1} parent=1 // pred_check_branch
      %103 = sbr.rel (0) target = $region37
    $region36: #{block_forward.1} parent=1 // pred_region
      %104 = dma.done [#allocation8], 49152
    $region37: #{block_forward.1} parent=1 // pred_fallthru
      _
    // Predicated region
    $region38: #{block_forward.1} parent=1 // pred_check
      _
    $region39: #{block_forward.1} parent=1 // pred_check_branch
      %106 = sbr.rel (0) target = $region41
    $region40: #{block_forward.1} parent=1 // pred_region
      %107 = dma.done [#allocation8], 16384
    $region41: #{block_forward.1} parent=1 // pred_fallthru
      _
    // Predicated region
    $region42: #{block_forward.1} parent=1 // pred_check
      _
    $region43: #{block_forward.1} parent=1 // pred_check_branch
      %109 = sbr.rel (0) target = $region45
    $region44: #{block_forward.1} parent=1 // pred_region
      %110 = dma.done [#allocation11], 16
    $region45: #{block_forward.1} parent=1 // pred_fallthru
      _
    // Predicated region
    $region46: #{block_forward.1} parent=1 // pred_check
      _
    $region47: #{block_forward.1} parent=1 // pred_check_branch
      %112 = sbr.rel (0) target = $region49
    $region48: #{block_forward.1} parent=1 // pred_region
      %113 = dma.done [#allocation11], 32768
    $region49: #{block_forward.1} parent=1 // pred_fallthru
      _
    // Predicated region
    $region50: #{block_forward.1} parent=1 // pred_check
      _
    $region51: #{block_forward.1} parent=1 // pred_check_branch
      %115 = sbr.rel (0) target = $region53
    $region52: #{block_forward.1} parent=1 // pred_region
      %116 = dma.done [#allocation14], 16384
    $region53: #{block_forward.1} parent=1 // pred_fallthru
      _
    // Predicated region
    $region54: #{block_forward.1} parent=1 // pred_check
      _
    $region55: #{block_forward.1} parent=1 // pred_check_branch
      %118 = sbr.rel (0) target = $region57
    $region56: #{block_forward.1} parent=1 // pred_region
      %119 = dma.done [#allocation14], 64
    $region57: #{block_forward.1} parent=1 // pred_fallthru
      _
    %s121 = sld [smem:[#allocation3]]
    %v122 = vld [vmem:[#allocation4] sm:$0xff]
    %v123 = vld [vmem:[#allocation4 + $0x8] sm:$0xff]
    %v124 = vld [vmem:[#allocation4 + $0x10] sm:$0xff]
    %v125 = vld [vmem:[#allocation4 + $0x18] sm:$0xff]
    %v126 = vld [vmem:[#allocation4 + $0x20] sm:$0xff]
    %v127 = vld [vmem:[#allocation4 + $0x28] sm:$0xff]
    %v128 = vld [vmem:[#allocation4 + $0x30] sm:$0xff]
    %v129 = vld [vmem:[#allocation4 + $0x38] sm:$0xff]
    %v130 = vpack.c.bf16 %v126, %v122
    %v131 = vpack.c.bf16 %v127, %v123
    %v132 = vpack.c.bf16 %v128, %v124
    %v133 = vpack.c.bf16 %v129, %v125
    %v134 = vld [vmem:[#allocation7] sm:$0xff]
    %v135 = vld [vmem:[#allocation7 + $0x8] sm:$0xff]
    %v136 = vld [vmem:[#allocation7 + $0x10] sm:$0xff]
    %v137 = vld [vmem:[#allocation7 + $0x18] sm:$0xff]
    %v138 = vld [vmem:[#allocation7 + $0x20] sm:$0xff]
    %v139 = vld [vmem:[#allocation7 + $0x28] sm:$0xff]
    %v140 = vld [vmem:[#allocation7 + $0x30] sm:$0xff]
    %v141 = vld [vmem:[#allocation7 + $0x38] sm:$0xff]
    %v142 = vld [vmem:[#allocation7 + $0x40] sm:$0xff]
    %v143 = vld [vmem:[#allocation7 + $0x48] sm:$0xff]
    %v144 = vld [vmem:[#allocation7 + $0x50] sm:$0xff]
    %v145 = vld [vmem:[#allocation7 + $0x58] sm:$0xff]
    %v146 = vld [vmem:[#allocation7 + $0x60] sm:$0xff]
    %v147 = vld [vmem:[#allocation7 + $0x68] sm:$0xff]
    %v148 = vld [vmem:[#allocation7 + $0x70] sm:$0xff]
    %v149 = vld [vmem:[#allocation7 + $0x78] sm:$0xff]
    %v150 = vld [vmem:[#allocation7 + $0x80] sm:$0xff]
    %v151 = vld [vmem:[#allocation7 + $0x88] sm:$0xff]
    %v152 = vld [vmem:[#allocation7 + $0x90] sm:$0xff]
    %v153 = vld [vmem:[#allocation7 + $0x98] sm:$0xff]
    %v154 = vld [vmem:[#allocation7 + $0xa0] sm:$0xff]
    %v155 = vld [vmem:[#allocation7 + $0xa8] sm:$0xff]
    %v156 = vld [vmem:[#allocation7 + $0xb0] sm:$0xff]
    %v157 = vld [vmem:[#allocation7 + $0xb8] sm:$0xff]
    %v158 = vld [vmem:[#allocation7 + $0xc0] sm:$0xff]
    %v159 = vld [vmem:[#allocation7 + $0xc8] sm:$0xff]
    %v160 = vld [vmem:[#allocation7 + $0xd0] sm:$0xff]
    %v161 = vld [vmem:[#allocation7 + $0xd8] sm:$0xff]
    %v162 = vld [vmem:[#allocation7 + $0xe0] sm:$0xff]
    %v163 = vld [vmem:[#allocation7 + $0xe8] sm:$0xff]
    %v164 = vld [vmem:[#allocation7 + $0xf0] sm:$0xff]
    %v165 = vld [vmem:[#allocation7 + $0xf8] sm:$0xff]
    %v166 = vld [vmem:[#allocation7 + $0x100] sm:$0xff]
    %v167 = vld [vmem:[#allocation7 + $0x108] sm:$0xff]
    %v168 = vld [vmem:[#allocation7 + $0x110] sm:$0xff]
    %v169 = vld [vmem:[#allocation7 + $0x118] sm:$0xff]
    %v170 = vld [vmem:[#allocation7 + $0x120] sm:$0xff]
    %v171 = vld [vmem:[#allocation7 + $0x128] sm:$0xff]
    %v172 = vld [vmem:[#allocation7 + $0x130] sm:$0xff]
    %v173 = vld [vmem:[#allocation7 + $0x138] sm:$0xff]
    %v174 = vld [vmem:[#allocation7 + $0x140] sm:$0xff]
    %v175 = vld [vmem:[#allocation7 + $0x148] sm:$0xff]
    %v176 = vld [vmem:[#allocation7 + $0x150] sm:$0xff]
    %v177 = vld [vmem:[#allocation7 + $0x158] sm:$0xff]
    %v178 = vld [vmem:[#allocation7 + $0x160] sm:$0xff]
    %v179 = vld [vmem:[#allocation7 + $0x168] sm:$0xff]
    %v180 = vld [vmem:[#allocation7 + $0x170] sm:$0xff]
    %v181 = vld [vmem:[#allocation7 + $0x178] sm:$0xff]
    %v182 = vld [vmem:[#allocation7 + $0x180] sm:$0xff]
    %v183 = vld [vmem:[#allocation7 + $0x188] sm:$0xff]
    %v184 = vld [vmem:[#allocation7 + $0x190] sm:$0xff]
    %v185 = vld [vmem:[#allocation7 + $0x198] sm:$0xff]
    %v186 = vld [vmem:[#allocation7 + $0x1a0] sm:$0xff]
    %v187 = vld [vmem:[#allocation7 + $0x1a8] sm:$0xff]
    %v188 = vld [vmem:[#allocation7 + $0x1b0] sm:$0xff]
    %v189 = vld [vmem:[#allocation7 + $0x1b8] sm:$0xff]
    %v190 = vld [vmem:[#allocation7 + $0x1c0] sm:$0xff]
    %v191 = vld [vmem:[#allocation7 + $0x1c8] sm:$0xff]
    %v192 = vld [vmem:[#allocation7 + $0x1d0] sm:$0xff]
    %v193 = vld [vmem:[#allocation7 + $0x1d8] sm:$0xff]
    %v194 = vld [vmem:[#allocation7 + $0x1e0] sm:$0xff]
    %v195 = vld [vmem:[#allocation7 + $0x1e8] sm:$0xff]
    %v196 = vld [vmem:[#allocation7 + $0x1f0] sm:$0xff]
    %v197 = vld [vmem:[#allocation7 + $0x1f8] sm:$0xff]
    %v198 = vld [vmem:[#allocation7 + $0x200] sm:$0xff]
    %v199 = vld [vmem:[#allocation7 + $0x208] sm:$0xff]
    %v200 = vld [vmem:[#allocation7 + $0x210] sm:$0xff]
    %v201 = vld [vmem:[#allocation7 + $0x218] sm:$0xff]
    %v202 = vld [vmem:[#allocation7 + $0x220] sm:$0xff]
    %v203 = vld [vmem:[#allocation7 + $0x228] sm:$0xff]
    %v204 = vld [vmem:[#allocation7 + $0x230] sm:$0xff]
    %v205 = vld [vmem:[#allocation7 + $0x238] sm:$0xff]
    %v206 = vld [vmem:[#allocation7 + $0x240] sm:$0xff]
    %v207 = vld [vmem:[#allocation7 + $0x248] sm:$0xff]
    %v208 = vld [vmem:[#allocation7 + $0x250] sm:$0xff]
    %v209 = vld [vmem:[#allocation7 + $0x258] sm:$0xff]
    %v210 = vld [vmem:[#allocation7 + $0x260] sm:$0xff]
    %v211 = vld [vmem:[#allocation7 + $0x268] sm:$0xff]
    %v212 = vld [vmem:[#allocation7 + $0x270] sm:$0xff]
    %v213 = vld [vmem:[#allocation7 + $0x278] sm:$0xff]
    %v214 = vld [vmem:[#allocation7 + $0x280] sm:$0xff]
    %v215 = vld [vmem:[#allocation7 + $0x288] sm:$0xff]
    %v216 = vld [vmem:[#allocation7 + $0x290] sm:$0xff]
    %v217 = vld [vmem:[#allocation7 + $0x298] sm:$0xff]
    %v218 = vld [vmem:[#allocation7 + $0x2a0] sm:$0xff]
    %v219 = vld [vmem:[#allocation7 + $0x2a8] sm:$0xff]
    %v220 = vld [vmem:[#allocation7 + $0x2b0] sm:$0xff]
    %v221 = vld [vmem:[#allocation7 + $0x2b8] sm:$0xff]
    %v222 = vld [vmem:[#allocation7 + $0x2c0] sm:$0xff]
    %v223 = vld [vmem:[#allocation7 + $0x2c8] sm:$0xff]
    %v224 = vld [vmem:[#allocation7 + $0x2d0] sm:$0xff]
    %v225 = vld [vmem:[#allocation7 + $0x2d8] sm:$0xff]
    %v226 = vld [vmem:[#allocation7 + $0x2e0] sm:$0xff]
    %v227 = vld [vmem:[#allocation7 + $0x2e8] sm:$0xff]
    %v228 = vld [vmem:[#allocation7 + $0x2f0] sm:$0xff]
    %v229 = vld [vmem:[#allocation7 + $0x2f8] sm:$0xff]
    %v230 = vld [vmem:[#allocation7 + $0x300] sm:$0xff]
    %v231 = vld [vmem:[#allocation7 + $0x308] sm:$0xff]
    %v232 = vld [vmem:[#allocation7 + $0x310] sm:$0xff]
    %v233 = vld [vmem:[#allocation7 + $0x318] sm:$0xff]
    %v234 = vld [vmem:[#allocation7 + $0x320] sm:$0xff]
    %v235 = vld [vmem:[#allocation7 + $0x328] sm:$0xff]
    %v236 = vld [vmem:[#allocation7 + $0x330] sm:$0xff]
    %v237 = vld [vmem:[#allocation7 + $0x338] sm:$0xff]
    %v238 = vld [vmem:[#allocation7 + $0x340] sm:$0xff]
    %v239 = vld [vmem:[#allocation7 + $0x348] sm:$0xff]
    %v240 = vld [vmem:[#allocation7 + $0x350] sm:$0xff]
    %v241 = vld [vmem:[#allocation7 + $0x358] sm:$0xff]
    %v242 = vld [vmem:[#allocation7 + $0x360] sm:$0xff]
    %v243 = vld [vmem:[#allocation7 + $0x368] sm:$0xff]
    %v244 = vld [vmem:[#allocation7 + $0x370] sm:$0xff]
    %v245 = vld [vmem:[#allocation7 + $0x378] sm:$0xff]
    %v246 = vld [vmem:[#allocation7 + $0x380] sm:$0xff]
    %v247 = vld [vmem:[#allocation7 + $0x388] sm:$0xff]
    %v248 = vld [vmem:[#allocation7 + $0x390] sm:$0xff]
    %v249 = vld [vmem:[#allocation7 + $0x398] sm:$0xff]
    %v250 = vld [vmem:[#allocation7 + $0x3a0] sm:$0xff]
    %v251 = vld [vmem:[#allocation7 + $0x3a8] sm:$0xff]
    %v252 = vld [vmem:[#allocation7 + $0x3b0] sm:$0xff]
    %v253 = vld [vmem:[#allocation7 + $0x3b8] sm:$0xff]
    %v254 = vld [vmem:[#allocation7 + $0x3c0] sm:$0xff]
    %v255 = vld [vmem:[#allocation7 + $0x3c8] sm:$0xff]
    %v256 = vld [vmem:[#allocation7 + $0x3d0] sm:$0xff]
    %v257 = vld [vmem:[#allocation7 + $0x3d8] sm:$0xff]
    %v258 = vld [vmem:[#allocation7 + $0x3e0] sm:$0xff]
    %v259 = vld [vmem:[#allocation7 + $0x3e8] sm:$0xff]
    %v260 = vld [vmem:[#allocation7 + $0x3f0] sm:$0xff]
    %v261 = vld [vmem:[#allocation7 + $0x3f8] sm:$0xff]
    %v262 = vld [vmem:[#allocation7 + $0x400] sm:$0xff]
    %v263 = vld [vmem:[#allocation7 + $0x408] sm:$0xff]
    %v264 = vld [vmem:[#allocation7 + $0x410] sm:$0xff]
    %v265 = vld [vmem:[#allocation7 + $0x418] sm:$0xff]
    %v266 = vld [vmem:[#allocation7 + $0x420] sm:$0xff]
    %v267 = vld [vmem:[#allocation7 + $0x428] sm:$0xff]
    %v268 = vld [vmem:[#allocation7 + $0x430] sm:$0xff]
    %v269 = vld [vmem:[#allocation7 + $0x438] sm:$0xff]
    %v270 = vld [vmem:[#allocation7 + $0x440] sm:$0xff]
    %v271 = vld [vmem:[#allocation7 + $0x448] sm:$0xff]
    %v272 = vld [vmem:[#allocation7 + $0x450] sm:$0xff]
    %v273 = vld [vmem:[#allocation7 + $0x458] sm:$0xff]
    %v274 = vld [vmem:[#allocation7 + $0x460] sm:$0xff]
    %v275 = vld [vmem:[#allocation7 + $0x468] sm:$0xff]
    %v276 = vld [vmem:[#allocation7 + $0x470] sm:$0xff]
    %v277 = vld [vmem:[#allocation7 + $0x478] sm:$0xff]
    %v278 = vld [vmem:[#allocation7 + $0x480] sm:$0xff]
    %v279 = vld [vmem:[#allocation7 + $0x488] sm:$0xff]
    %v280 = vld [vmem:[#allocation7 + $0x490] sm:$0xff]
    %v281 = vld [vmem:[#allocation7 + $0x498] sm:$0xff]
    %v282 = vld [vmem:[#allocation7 + $0x4a0] sm:$0xff]
    %v283 = vld [vmem:[#allocation7 + $0x4a8] sm:$0xff]
    %v284 = vld [vmem:[#allocation7 + $0x4b0] sm:$0xff]
    %v285 = vld [vmem:[#allocation7 + $0x4b8] sm:$0xff]
    %v286 = vld [vmem:[#allocation7 + $0x4c0] sm:$0xff]
    %v287 = vld [vmem:[#allocation7 + $0x4c8] sm:$0xff]
    %v288 = vld [vmem:[#allocation7 + $0x4d0] sm:$0xff]
    %v289 = vld [vmem:[#allocation7 + $0x4d8] sm:$0xff]
    %v290 = vld [vmem:[#allocation7 + $0x4e0] sm:$0xff]
    %v291 = vld [vmem:[#allocation7 + $0x4e8] sm:$0xff]
    %v292 = vld [vmem:[#allocation7 + $0x4f0] sm:$0xff]
    %v293 = vld [vmem:[#allocation7 + $0x4f8] sm:$0xff]
    %v294 = vld [vmem:[#allocation7 + $0x500] sm:$0xff]
    %v295 = vld [vmem:[#allocation7 + $0x508] sm:$0xff]
    %v296 = vld [vmem:[#allocation7 + $0x510] sm:$0xff]
    %v297 = vld [vmem:[#allocation7 + $0x518] sm:$0xff]
    %v298 = vld [vmem:[#allocation7 + $0x520] sm:$0xff]
    %v299 = vld [vmem:[#allocation7 + $0x528] sm:$0xff]
    %v300 = vld [vmem:[#allocation7 + $0x530] sm:$0xff]
    %v301 = vld [vmem:[#allocation7 + $0x538] sm:$0xff]
    %v302 = vld [vmem:[#allocation7 + $0x540] sm:$0xff]
    %v303 = vld [vmem:[#allocation7 + $0x548] sm:$0xff]
    %v304 = vld [vmem:[#allocation7 + $0x550] sm:$0xff]
    %v305 = vld [vmem:[#allocation7 + $0x558] sm:$0xff]
    %v306 = vld [vmem:[#allocation7 + $0x560] sm:$0xff]
    %v307 = vld [vmem:[#allocation7 + $0x568] sm:$0xff]
    %v308 = vld [vmem:[#allocation7 + $0x570] sm:$0xff]
    %v309 = vld [vmem:[#allocation7 + $0x578] sm:$0xff]
    %v310 = vld [vmem:[#allocation7 + $0x580] sm:$0xff]
    %v311 = vld [vmem:[#allocation7 + $0x588] sm:$0xff]
    %v312 = vld [vmem:[#allocation7 + $0x590] sm:$0xff]
    %v313 = vld [vmem:[#allocation7 + $0x598] sm:$0xff]
    %v314 = vld [vmem:[#allocation7 + $0x5a0] sm:$0xff]
    %v315 = vld [vmem:[#allocation7 + $0x5a8] sm:$0xff]
    %v316 = vld [vmem:[#allocation7 + $0x5b0] sm:$0xff]
    %v317 = vld [vmem:[#allocation7 + $0x5b8] sm:$0xff]
    %v318 = vld [vmem:[#allocation7 + $0x5c0] sm:$0xff]
    %v319 = vld [vmem:[#allocation7 + $0x5c8] sm:$0xff]
    %v320 = vld [vmem:[#allocation7 + $0x5d0] sm:$0xff]
    %v321 = vld [vmem:[#allocation7 + $0x5d8] sm:$0xff]
    %v322 = vld [vmem:[#allocation7 + $0x5e0] sm:$0xff]
    %v323 = vld [vmem:[#allocation7 + $0x5e8] sm:$0xff]
    %v324 = vld [vmem:[#allocation7 + $0x5f0] sm:$0xff]
    %v325 = vld [vmem:[#allocation7 + $0x5f8] sm:$0xff]
    %v326 = vld [vmem:[#allocation7 + $0x600] sm:$0xff]
    %v327 = vld [vmem:[#allocation7 + $0x608] sm:$0xff]
    %v328 = vld [vmem:[#allocation7 + $0x610] sm:$0xff]
    %v329 = vld [vmem:[#allocation7 + $0x618] sm:$0xff]
    %v330 = vld [vmem:[#allocation7 + $0x620] sm:$0xff]
    %v331 = vld [vmem:[#allocation7 + $0x628] sm:$0xff]
    %v332 = vld [vmem:[#allocation7 + $0x630] sm:$0xff]
    %v333 = vld [vmem:[#allocation7 + $0x638] sm:$0xff]
    %v334 = vld [vmem:[#allocation7 + $0x640] sm:$0xff]
    %v335 = vld [vmem:[#allocation7 + $0x648] sm:$0xff]
    %v336 = vld [vmem:[#allocation7 + $0x650] sm:$0xff]
    %v337 = vld [vmem:[#allocation7 + $0x658] sm:$0xff]
    %v338 = vld [vmem:[#allocation7 + $0x660] sm:$0xff]
    %v339 = vld [vmem:[#allocation7 + $0x668] sm:$0xff]
    %v340 = vld [vmem:[#allocation7 + $0x670] sm:$0xff]
    %v341 = vld [vmem:[#allocation7 + $0x678] sm:$0xff]
    %v342 = vld [vmem:[#allocation7 + $0x680] sm:$0xff]
    %v343 = vld [vmem:[#allocation7 + $0x688] sm:$0xff]
    %v344 = vld [vmem:[#allocation7 + $0x690] sm:$0xff]
    %v345 = vld [vmem:[#allocation7 + $0x698] sm:$0xff]
    %v346 = vld [vmem:[#allocation7 + $0x6a0] sm:$0xff]
    %v347 = vld [vmem:[#allocation7 + $0x6a8] sm:$0xff]
    %v348 = vld [vmem:[#allocation7 + $0x6b0] sm:$0xff]
    %v349 = vld [vmem:[#allocation7 + $0x6b8] sm:$0xff]
    %v350 = vld [vmem:[#allocation7 + $0x6c0] sm:$0xff]
    %v351 = vld [vmem:[#allocation7 + $0x6c8] sm:$0xff]
    %v352 = vld [vmem:[#allocation7 + $0x6d0] sm:$0xff]
    %v353 = vld [vmem:[#allocation7 + $0x6d8] sm:$0xff]
    %v354 = vld [vmem:[#allocation7 + $0x6e0] sm:$0xff]
    %v355 = vld [vmem:[#allocation7 + $0x6e8] sm:$0xff]
    %v356 = vld [vmem:[#allocation7 + $0x6f0] sm:$0xff]
    %v357 = vld [vmem:[#allocation7 + $0x6f8] sm:$0xff]
    %v358 = vld [vmem:[#allocation7 + $0x700] sm:$0xff]
    %v359 = vld [vmem:[#allocation7 + $0x708] sm:$0xff]
    %v360 = vld [vmem:[#allocation7 + $0x710] sm:$0xff]
    %v361 = vld [vmem:[#allocation7 + $0x718] sm:$0xff]
    %v362 = vld [vmem:[#allocation7 + $0x720] sm:$0xff]
    %v363 = vld [vmem:[#allocation7 + $0x728] sm:$0xff]
    %v364 = vld [vmem:[#allocation7 + $0x730] sm:$0xff]
    %v365 = vld [vmem:[#allocation7 + $0x738] sm:$0xff]
    %v366 = vld [vmem:[#allocation7 + $0x740] sm:$0xff]
    %v367 = vld [vmem:[#allocation7 + $0x748] sm:$0xff]
    %v368 = vld [vmem:[#allocation7 + $0x750] sm:$0xff]
    %v369 = vld [vmem:[#allocation7 + $0x758] sm:$0xff]
    %v370 = vld [vmem:[#allocation7 + $0x760] sm:$0xff]
    %v371 = vld [vmem:[#allocation7 + $0x768] sm:$0xff]
    %v372 = vld [vmem:[#allocation7 + $0x770] sm:$0xff]
    %v373 = vld [vmem:[#allocation7 + $0x778] sm:$0xff]
    %v374 = vld [vmem:[#allocation7 + $0x780] sm:$0xff]
    %v375 = vld [vmem:[#allocation7 + $0x788] sm:$0xff]
    %v376 = vld [vmem:[#allocation7 + $0x790] sm:$0xff]
    %v377 = vld [vmem:[#allocation7 + $0x798] sm:$0xff]
    %v378 = vld [vmem:[#allocation7 + $0x7a0] sm:$0xff]
    %v379 = vld [vmem:[#allocation7 + $0x7a8] sm:$0xff]
    %v380 = vld [vmem:[#allocation7 + $0x7b0] sm:$0xff]
    %v381 = vld [vmem:[#allocation7 + $0x7b8] sm:$0xff]
    %v382 = vld [vmem:[#allocation7 + $0x7c0] sm:$0xff]
    %v383 = vld [vmem:[#allocation7 + $0x7c8] sm:$0xff]
    %v384 = vld [vmem:[#allocation7 + $0x7d0] sm:$0xff]
    %v385 = vld [vmem:[#allocation7 + $0x7d8] sm:$0xff]
    %v386 = vld [vmem:[#allocation7 + $0x7e0] sm:$0xff]
    %v387 = vld [vmem:[#allocation7 + $0x7e8] sm:$0xff]
    %v388 = vld [vmem:[#allocation7 + $0x7f0] sm:$0xff]
    %v389 = vld [vmem:[#allocation7 + $0x7f8] sm:$0xff]
    %v390 = vld [vmem:[#allocation7 + $0x800] sm:$0xff]
    %v391 = vld [vmem:[#allocation7 + $0x808] sm:$0xff]
    %v392 = vld [vmem:[#allocation7 + $0x810] sm:$0xff]
    %v393 = vld [vmem:[#allocation7 + $0x818] sm:$0xff]
    %v394 = vld [vmem:[#allocation7 + $0x820] sm:$0xff]
    %v395 = vld [vmem:[#allocation7 + $0x828] sm:$0xff]
    %v396 = vld [vmem:[#allocation7 + $0x830] sm:$0xff]
    %v397 = vld [vmem:[#allocation7 + $0x838] sm:$0xff]
    %v398 = vld [vmem:[#allocation7 + $0x840] sm:$0xff]
    %v399 = vld [vmem:[#allocation7 + $0x848] sm:$0xff]
    %v400 = vld [vmem:[#allocation7 + $0x850] sm:$0xff]
    %v401 = vld [vmem:[#allocation7 + $0x858] sm:$0xff]
    %v402 = vld [vmem:[#allocation7 + $0x860] sm:$0xff]
    %v403 = vld [vmem:[#allocation7 + $0x868] sm:$0xff]
    %v404 = vld [vmem:[#allocation7 + $0x870] sm:$0xff]
    %v405 = vld [vmem:[#allocation7 + $0x878] sm:$0xff]
    %v406 = vld [vmem:[#allocation7 + $0x880] sm:$0xff]
    %v407 = vld [vmem:[#allocation7 + $0x888] sm:$0xff]
    %v408 = vld [vmem:[#allocation7 + $0x890] sm:$0xff]
    %v409 = vld [vmem:[#allocation7 + $0x898] sm:$0xff]
    %v410 = vld [vmem:[#allocation7 + $0x8a0] sm:$0xff]
    %v411 = vld [vmem:[#allocation7 + $0x8a8] sm:$0xff]
    %v412 = vld [vmem:[#allocation7 + $0x8b0] sm:$0xff]
    %v413 = vld [vmem:[#allocation7 + $0x8b8] sm:$0xff]
    %v414 = vld [vmem:[#allocation7 + $0x8c0] sm:$0xff]
    %v415 = vld [vmem:[#allocation7 + $0x8c8] sm:$0xff]
    %v416 = vld [vmem:[#allocation7 + $0x8d0] sm:$0xff]
    %v417 = vld [vmem:[#allocation7 + $0x8d8] sm:$0xff]
    %v418 = vld [vmem:[#allocation7 + $0x8e0] sm:$0xff]
    %v419 = vld [vmem:[#allocation7 + $0x8e8] sm:$0xff]
    %v420 = vld [vmem:[#allocation7 + $0x8f0] sm:$0xff]
    %v421 = vld [vmem:[#allocation7 + $0x8f8] sm:$0xff]
    %v422 = vld [vmem:[#allocation7 + $0x900] sm:$0xff]
    %v423 = vld [vmem:[#allocation7 + $0x908] sm:$0xff]
    %v424 = vld [vmem:[#allocation7 + $0x910] sm:$0xff]
    %v425 = vld [vmem:[#allocation7 + $0x918] sm:$0xff]
    %v426 = vld [vmem:[#allocation7 + $0x920] sm:$0xff]
    %v427 = vld [vmem:[#allocation7 + $0x928] sm:$0xff]
    %v428 = vld [vmem:[#allocation7 + $0x930] sm:$0xff]
    %v429 = vld [vmem:[#allocation7 + $0x938] sm:$0xff]
    %v430 = vld [vmem:[#allocation7 + $0x940] sm:$0xff]
    %v431 = vld [vmem:[#allocation7 + $0x948] sm:$0xff]
    %v432 = vld [vmem:[#allocation7 + $0x950] sm:$0xff]
    %v433 = vld [vmem:[#allocation7 + $0x958] sm:$0xff]
    %v434 = vld [vmem:[#allocation7 + $0x960] sm:$0xff]
    %v435 = vld [vmem:[#allocation7 + $0x968] sm:$0xff]
    %v436 = vld [vmem:[#allocation7 + $0x970] sm:$0xff]
    %v437 = vld [vmem:[#allocation7 + $0x978] sm:$0xff]
    %v438 = vld [vmem:[#allocation7 + $0x980] sm:$0xff]
    %v439 = vld [vmem:[#allocation7 + $0x988] sm:$0xff]
    %v440 = vld [vmem:[#allocation7 + $0x990] sm:$0xff]
    %v441 = vld [vmem:[#allocation7 + $0x998] sm:$0xff]
    %v442 = vld [vmem:[#allocation7 + $0x9a0] sm:$0xff]
    %v443 = vld [vmem:[#allocation7 + $0x9a8] sm:$0xff]
    %v444 = vld [vmem:[#allocation7 + $0x9b0] sm:$0xff]
    %v445 = vld [vmem:[#allocation7 + $0x9b8] sm:$0xff]
    %v446 = vld [vmem:[#allocation7 + $0x9c0] sm:$0xff]
    %v447 = vld [vmem:[#allocation7 + $0x9c8] sm:$0xff]
    %v448 = vld [vmem:[#allocation7 + $0x9d0] sm:$0xff]
    %v449 = vld [vmem:[#allocation7 + $0x9d8] sm:$0xff]
    %v450 = vld [vmem:[#allocation7 + $0x9e0] sm:$0xff]
    %v451 = vld [vmem:[#allocation7 + $0x9e8] sm:$0xff]
    %v452 = vld [vmem:[#allocation7 + $0x9f0] sm:$0xff]
    %v453 = vld [vmem:[#allocation7 + $0x9f8] sm:$0xff]
    %v454 = vld [vmem:[#allocation7 + $0xa00] sm:$0xff]
    %v455 = vld [vmem:[#allocation7 + $0xa08] sm:$0xff]
    %v456 = vld [vmem:[#allocation7 + $0xa10] sm:$0xff]
    %v457 = vld [vmem:[#allocation7 + $0xa18] sm:$0xff]
    %v458 = vld [vmem:[#allocation7 + $0xa20] sm:$0xff]
    %v459 = vld [vmem:[#allocation7 + $0xa28] sm:$0xff]
    %v460 = vld [vmem:[#allocation7 + $0xa30] sm:$0xff]
    %v461 = vld [vmem:[#allocation7 + $0xa38] sm:$0xff]
    %v462 = vld [vmem:[#allocation7 + $0xa40] sm:$0xff]
    %v463 = vld [vmem:[#allocation7 + $0xa48] sm:$0xff]
    %v464 = vld [vmem:[#allocation7 + $0xa50] sm:$0xff]
    %v465 = vld [vmem:[#allocation7 + $0xa58] sm:$0xff]
    %v466 = vld [vmem:[#allocation7 + $0xa60] sm:$0xff]
    %v467 = vld [vmem:[#allocation7 + $0xa68] sm:$0xff]
    %v468 = vld [vmem:[#allocation7 + $0xa70] sm:$0xff]
    %v469 = vld [vmem:[#allocation7 + $0xa78] sm:$0xff]
    %v470 = vld [vmem:[#allocation7 + $0xa80] sm:$0xff]
    %v471 = vld [vmem:[#allocation7 + $0xa88] sm:$0xff]
    %v472 = vld [vmem:[#allocation7 + $0xa90] sm:$0xff]
    %v473 = vld [vmem:[#allocation7 + $0xa98] sm:$0xff]
    %v474 = vld [vmem:[#allocation7 + $0xaa0] sm:$0xff]
    %v475 = vld [vmem:[#allocation7 + $0xaa8] sm:$0xff]
    %v476 = vld [vmem:[#allocation7 + $0xab0] sm:$0xff]
    %v477 = vld [vmem:[#allocation7 + $0xab8] sm:$0xff]
    %v478 = vld [vmem:[#allocation7 + $0xac0] sm:$0xff]
    %v479 = vld [vmem:[#allocation7 + $0xac8] sm:$0xff]
    %v480 = vld [vmem:[#allocation7 + $0xad0] sm:$0xff]
    %v481 = vld [vmem:[#allocation7 + $0xad8] sm:$0xff]
    %v482 = vld [vmem:[#allocation7 + $0xae0] sm:$0xff]
    %v483 = vld [vmem:[#allocation7 + $0xae8] sm:$0xff]
    %v484 = vld [vmem:[#allocation7 + $0xaf0] sm:$0xff]
    %v485 = vld [vmem:[#allocation7 + $0xaf8] sm:$0xff]
    %v486 = vld [vmem:[#allocation7 + $0xb00] sm:$0xff]
    %v487 = vld [vmem:[#allocation7 + $0xb08] sm:$0xff]
    %v488 = vld [vmem:[#allocation7 + $0xb10] sm:$0xff]
    %v489 = vld [vmem:[#allocation7 + $0xb18] sm:$0xff]
    %v490 = vld [vmem:[#allocation7 + $0xb20] sm:$0xff]
    %v491 = vld [vmem:[#allocation7 + $0xb28] sm:$0xff]
    %v492 = vld [vmem:[#allocation7 + $0xb30] sm:$0xff]
    %v493 = vld [vmem:[#allocation7 + $0xb38] sm:$0xff]
    %v494 = vld [vmem:[#allocation7 + $0xb40] sm:$0xff]
    %v495 = vld [vmem:[#allocation7 + $0xb48] sm:$0xff]
    %v496 = vld [vmem:[#allocation7 + $0xb50] sm:$0xff]
    %v497 = vld [vmem:[#allocation7 + $0xb58] sm:$0xff]
    %v498 = vld [vmem:[#allocation7 + $0xb60] sm:$0xff]
    %v499 = vld [vmem:[#allocation7 + $0xb68] sm:$0xff]
    %v500 = vld [vmem:[#allocation7 + $0xb70] sm:$0xff]
    %v501 = vld [vmem:[#allocation7 + $0xb78] sm:$0xff]
    %v502 = vld [vmem:[#allocation7 + $0xb80] sm:$0xff]
    %v503 = vld [vmem:[#allocation7 + $0xb88] sm:$0xff]
    %v504 = vld [vmem:[#allocation7 + $0xb90] sm:$0xff]
    %v505 = vld [vmem:[#allocation7 + $0xb98] sm:$0xff]
    %v506 = vld [vmem:[#allocation7 + $0xba0] sm:$0xff]
    %v507 = vld [vmem:[#allocation7 + $0xba8] sm:$0xff]
    %v508 = vld [vmem:[#allocation7 + $0xbb0] sm:$0xff]
    %v509 = vld [vmem:[#allocation7 + $0xbb8] sm:$0xff]
    %v510 = vld [vmem:[#allocation7 + $0xbc0] sm:$0xff]
    %v511 = vld [vmem:[#allocation7 + $0xbc8] sm:$0xff]
    %v512 = vld [vmem:[#allocation7 + $0xbd0] sm:$0xff]
    %v513 = vld [vmem:[#allocation7 + $0xbd8] sm:$0xff]
    %v514 = vld [vmem:[#allocation7 + $0xbe0] sm:$0xff]
    %v515 = vld [vmem:[#allocation7 + $0xbe8] sm:$0xff]
    %v516 = vld [vmem:[#allocation7 + $0xbf0] sm:$0xff]
    %v517 = vld [vmem:[#allocation7 + $0xbf8] sm:$0xff]
    %v902 = vunpack.c.l.b16 %v134
    %v903 = vunpack.c.h.b16 %v134
    %v904 = vunpack.c.l.b16 %v135
    %v905 = vunpack.c.h.b16 %v135
    %v906 = vunpack.c.l.b16 %v136
    %v907 = vunpack.c.h.b16 %v136
    %v908 = vunpack.c.l.b16 %v137
    %v909 = vunpack.c.h.b16 %v137
    %v910 = vunpack.c.l.b16 %v138
    %v911 = vunpack.c.h.b16 %v138
    %v912 = vunpack.c.l.b16 %v139
    %v913 = vunpack.c.h.b16 %v139
    %v914 = vunpack.c.l.b16 %v140
    %v915 = vunpack.c.h.b16 %v140
    %v916 = vunpack.c.l.b16 %v141
    %v917 = vunpack.c.h.b16 %v141
    %v918 = vunpack.c.l.b16 %v142
    %v919 = vunpack.c.h.b16 %v142
    %v920 = vunpack.c.l.b16 %v143
    %v921 = vunpack.c.h.b16 %v143
    %v922 = vunpack.c.l.b16 %v144
    %v923 = vunpack.c.h.b16 %v144
    %v924 = vunpack.c.l.b16 %v145
    %v925 = vunpack.c.h.b16 %v145
    %v926 = vunpack.c.l.b16 %v146
    %v927 = vunpack.c.h.b16 %v146
    %v928 = vunpack.c.l.b16 %v147
    %v929 = vunpack.c.h.b16 %v147
    %v930 = vunpack.c.l.b16 %v148
    %v931 = vunpack.c.h.b16 %v148
    %v932 = vunpack.c.l.b16 %v149
    %v933 = vunpack.c.h.b16 %v149
    %v934 = vunpack.c.l.b16 %v150
    %v935 = vunpack.c.h.b16 %v150
    %v936 = vunpack.c.l.b16 %v151
    %v937 = vunpack.c.h.b16 %v151
    %v938 = vunpack.c.l.b16 %v152
    %v939 = vunpack.c.h.b16 %v152
    %v940 = vunpack.c.l.b16 %v153
    %v941 = vunpack.c.h.b16 %v153
    %v942 = vunpack.c.l.b16 %v154
    %v943 = vunpack.c.h.b16 %v154
    %v944 = vunpack.c.l.b16 %v155
    %v945 = vunpack.c.h.b16 %v155
    %v946 = vunpack.c.l.b16 %v156
    %v947 = vunpack.c.h.b16 %v156
    %v948 = vunpack.c.l.b16 %v157
    %v949 = vunpack.c.h.b16 %v157
    %v950 = vunpack.c.l.b16 %v158
    %v951 = vunpack.c.h.b16 %v158
    %v952 = vunpack.c.l.b16 %v159
    %v953 = vunpack.c.h.b16 %v159
    %v954 = vunpack.c.l.b16 %v160
    %v955 = vunpack.c.h.b16 %v160
    %v956 = vunpack.c.l.b16 %v161
    %v957 = vunpack.c.h.b16 %v161
    %v958 = vunpack.c.l.b16 %v162
    %v959 = vunpack.c.h.b16 %v162
    %v960 = vunpack.c.l.b16 %v163
    %v961 = vunpack.c.h.b16 %v163
    %v962 = vunpack.c.l.b16 %v164
    %v963 = vunpack.c.h.b16 %v164
    %v964 = vunpack.c.l.b16 %v165
    %v965 = vunpack.c.h.b16 %v165
    %v966 = vunpack.c.l.b16 %v166
    %v967 = vunpack.c.h.b16 %v166
    %v968 = vunpack.c.l.b16 %v167
    %v969 = vunpack.c.h.b16 %v167
    %v970 = vunpack.c.l.b16 %v168
    %v971 = vunpack.c.h.b16 %v168
    %v972 = vunpack.c.l.b16 %v169
    %v973 = vunpack.c.h.b16 %v169
    %v974 = vunpack.c.l.b16 %v170
    %v975 = vunpack.c.h.b16 %v170
    %v976 = vunpack.c.l.b16 %v171
    %v977 = vunpack.c.h.b16 %v171
    %v978 = vunpack.c.l.b16 %v172
    %v979 = vunpack.c.h.b16 %v172
    %v980 = vunpack.c.l.b16 %v173
    %v981 = vunpack.c.h.b16 %v173
    %v982 = vunpack.c.l.b16 %v174
    %v983 = vunpack.c.h.b16 %v174
    %v984 = vunpack.c.l.b16 %v175
    %v985 = vunpack.c.h.b16 %v175
    %v986 = vunpack.c.l.b16 %v176
    %v987 = vunpack.c.h.b16 %v176
    %v988 = vunpack.c.l.b16 %v177
    %v989 = vunpack.c.h.b16 %v177
    %v990 = vunpack.c.l.b16 %v178
    %v991 = vunpack.c.h.b16 %v178
    %v992 = vunpack.c.l.b16 %v179
    %v993 = vunpack.c.h.b16 %v179
    %v994 = vunpack.c.l.b16 %v180
    %v995 = vunpack.c.h.b16 %v180
    %v996 = vunpack.c.l.b16 %v181
    %v997 = vunpack.c.h.b16 %v181
    %v998 = vunpack.c.l.b16 %v182
    %v999 = vunpack.c.h.b16 %v182
    %v1000 = vunpack.c.l.b16 %v183
    %v1001 = vunpack.c.h.b16 %v183
    %v1002 = vunpack.c.l.b16 %v184
    %v1003 = vunpack.c.h.b16 %v184
    %v1004 = vunpack.c.l.b16 %v185
    %v1005 = vunpack.c.h.b16 %v185
    %v1006 = vunpack.c.l.b16 %v186
    %v1007 = vunpack.c.h.b16 %v186
    %v1008 = vunpack.c.l.b16 %v187
    %v1009 = vunpack.c.h.b16 %v187
    %v1010 = vunpack.c.l.b16 %v188
    %v1011 = vunpack.c.h.b16 %v188
    %v1012 = vunpack.c.l.b16 %v189
    %v1013 = vunpack.c.h.b16 %v189
    %v1014 = vunpack.c.l.b16 %v190
    %v1015 = vunpack.c.h.b16 %v190
    %v1016 = vunpack.c.l.b16 %v191
    %v1017 = vunpack.c.h.b16 %v191
    %v1018 = vunpack.c.l.b16 %v192
    %v1019 = vunpack.c.h.b16 %v192
    %v1020 = vunpack.c.l.b16 %v193
    %v1021 = vunpack.c.h.b16 %v193
    %v1022 = vunpack.c.l.b16 %v194
    %v1023 = vunpack.c.h.b16 %v194
    %v1024 = vunpack.c.l.b16 %v195
    %v1025 = vunpack.c.h.b16 %v195
    %v1026 = vunpack.c.l.b16 %v196
    %v1027 = vunpack.c.h.b16 %v196
    %v1028 = vunpack.c.l.b16 %v197
    %v1029 = vunpack.c.h.b16 %v197
    %v1030 = vunpack.c.l.b16 %v198
    %v1031 = vunpack.c.h.b16 %v198
    %v1032 = vunpack.c.l.b16 %v199
    %v1033 = vunpack.c.h.b16 %v199
    %v1034 = vunpack.c.l.b16 %v200
    %v1035 = vunpack.c.h.b16 %v200
    %v1036 = vunpack.c.l.b16 %v201
    %v1037 = vunpack.c.h.b16 %v201
    %v1038 = vunpack.c.l.b16 %v202
    %v1039 = vunpack.c.h.b16 %v202
    %v1040 = vunpack.c.l.b16 %v203
    %v1041 = vunpack.c.h.b16 %v203
    %v1042 = vunpack.c.l.b16 %v204
    %v1043 = vunpack.c.h.b16 %v204
    %v1044 = vunpack.c.l.b16 %v205
    %v1045 = vunpack.c.h.b16 %v205
    %v1046 = vunpack.c.l.b16 %v206
    %v1047 = vunpack.c.h.b16 %v206
    %v1048 = vunpack.c.l.b16 %v207
    %v1049 = vunpack.c.h.b16 %v207
    %v1050 = vunpack.c.l.b16 %v208
    %v1051 = vunpack.c.h.b16 %v208
    %v1052 = vunpack.c.l.b16 %v209
    %v1053 = vunpack.c.h.b16 %v209
    %v1054 = vunpack.c.l.b16 %v210
    %v1055 = vunpack.c.h.b16 %v210
    %v1056 = vunpack.c.l.b16 %v211
    %v1057 = vunpack.c.h.b16 %v211
    %v1058 = vunpack.c.l.b16 %v212
    %v1059 = vunpack.c.h.b16 %v212
    %v1060 = vunpack.c.l.b16 %v213
    %v1061 = vunpack.c.h.b16 %v213
    %v1062 = vunpack.c.l.b16 %v214
    %v1063 = vunpack.c.h.b16 %v214
    %v1064 = vunpack.c.l.b16 %v215
    %v1065 = vunpack.c.h.b16 %v215
    %v1066 = vunpack.c.l.b16 %v216
    %v1067 = vunpack.c.h.b16 %v216
    %v1068 = vunpack.c.l.b16 %v217
    %v1069 = vunpack.c.h.b16 %v217
    %v1070 = vunpack.c.l.b16 %v218
    %v1071 = vunpack.c.h.b16 %v218
    %v1072 = vunpack.c.l.b16 %v219
    %v1073 = vunpack.c.h.b16 %v219
    %v1074 = vunpack.c.l.b16 %v220
    %v1075 = vunpack.c.h.b16 %v220
    %v1076 = vunpack.c.l.b16 %v221
    %v1077 = vunpack.c.h.b16 %v221
    %v1078 = vunpack.c.l.b16 %v222
    %v1079 = vunpack.c.h.b16 %v222
    %v1080 = vunpack.c.l.b16 %v223
    %v1081 = vunpack.c.h.b16 %v223
    %v1082 = vunpack.c.l.b16 %v224
    %v1083 = vunpack.c.h.b16 %v224
    %v1084 = vunpack.c.l.b16 %v225
    %v1085 = vunpack.c.h.b16 %v225
    %v1086 = vunpack.c.l.b16 %v226
    %v1087 = vunpack.c.h.b16 %v226
    %v1088 = vunpack.c.l.b16 %v227
    %v1089 = vunpack.c.h.b16 %v227
    %v1090 = vunpack.c.l.b16 %v228
    %v1091 = vunpack.c.h.b16 %v228
    %v1092 = vunpack.c.l.b16 %v229
    %v1093 = vunpack.c.h.b16 %v229
    %v1094 = vunpack.c.l.b16 %v230
    %v1095 = vunpack.c.h.b16 %v230
    %v1096 = vunpack.c.l.b16 %v231
    %v1097 = vunpack.c.h.b16 %v231
    %v1098 = vunpack.c.l.b16 %v232
    %v1099 = vunpack.c.h.b16 %v232
    %v1100 = vunpack.c.l.b16 %v233
    %v1101 = vunpack.c.h.b16 %v233
    %v1102 = vunpack.c.l.b16 %v234
    %v1103 = vunpack.c.h.b16 %v234
    %v1104 = vunpack.c.l.b16 %v235
    %v1105 = vunpack.c.h.b16 %v235
    %v1106 = vunpack.c.l.b16 %v236
    %v1107 = vunpack.c.h.b16 %v236
    %v1108 = vunpack.c.l.b16 %v237
    %v1109 = vunpack.c.h.b16 %v237
    %v1110 = vunpack.c.l.b16 %v238
    %v1111 = vunpack.c.h.b16 %v238
    %v1112 = vunpack.c.l.b16 %v239
    %v1113 = vunpack.c.h.b16 %v239
    %v1114 = vunpack.c.l.b16 %v240
    %v1115 = vunpack.c.h.b16 %v240
    %v1116 = vunpack.c.l.b16 %v241
    %v1117 = vunpack.c.h.b16 %v241
    %v1118 = vunpack.c.l.b16 %v242
    %v1119 = vunpack.c.h.b16 %v242
    %v1120 = vunpack.c.l.b16 %v243
    %v1121 = vunpack.c.h.b16 %v243
    %v1122 = vunpack.c.l.b16 %v244
    %v1123 = vunpack.c.h.b16 %v244
    %v1124 = vunpack.c.l.b16 %v245
    %v1125 = vunpack.c.h.b16 %v245
    %v1126 = vunpack.c.l.b16 %v246
    %v1127 = vunpack.c.h.b16 %v246
    %v1128 = vunpack.c.l.b16 %v247
    %v1129 = vunpack.c.h.b16 %v247
    %v1130 = vunpack.c.l.b16 %v248
    %v1131 = vunpack.c.h.b16 %v248
    %v1132 = vunpack.c.l.b16 %v249
    %v1133 = vunpack.c.h.b16 %v249
    %v1134 = vunpack.c.l.b16 %v250
    %v1135 = vunpack.c.h.b16 %v250
    %v1136 = vunpack.c.l.b16 %v251
    %v1137 = vunpack.c.h.b16 %v251
    %v1138 = vunpack.c.l.b16 %v252
    %v1139 = vunpack.c.h.b16 %v252
    %v1140 = vunpack.c.l.b16 %v253
    %v1141 = vunpack.c.h.b16 %v253
    %v1142 = vunpack.c.l.b16 %v254
    %v1143 = vunpack.c.h.b16 %v254
    %v1144 = vunpack.c.l.b16 %v255
    %v1145 = vunpack.c.h.b16 %v255
    %v1146 = vunpack.c.l.b16 %v256
    %v1147 = vunpack.c.h.b16 %v256
    %v1148 = vunpack.c.l.b16 %v257
    %v1149 = vunpack.c.h.b16 %v257
    %v1150 = vunpack.c.l.b16 %v258
    %v1151 = vunpack.c.h.b16 %v258
    %v1152 = vunpack.c.l.b16 %v259
    %v1153 = vunpack.c.h.b16 %v259
    %v1154 = vunpack.c.l.b16 %v260
    %v1155 = vunpack.c.h.b16 %v260
    %v1156 = vunpack.c.l.b16 %v261
    %v1157 = vunpack.c.h.b16 %v261
    %v1158 = vunpack.c.l.b16 %v262
    %v1159 = vunpack.c.h.b16 %v262
    %v1160 = vunpack.c.l.b16 %v263
    %v1161 = vunpack.c.h.b16 %v263
    %v1162 = vunpack.c.l.b16 %v264
    %v1163 = vunpack.c.h.b16 %v264
    %v1164 = vunpack.c.l.b16 %v265
    %v1165 = vunpack.c.h.b16 %v265
    %v1166 = vunpack.c.l.b16 %v266
    %v1167 = vunpack.c.h.b16 %v266
    %v1168 = vunpack.c.l.b16 %v267
    %v1169 = vunpack.c.h.b16 %v267
    %v1170 = vunpack.c.l.b16 %v268
    %v1171 = vunpack.c.h.b16 %v268
    %v1172 = vunpack.c.l.b16 %v269
    %v1173 = vunpack.c.h.b16 %v269
    %v1174 = vunpack.c.l.b16 %v270
    %v1175 = vunpack.c.h.b16 %v270
    %v1176 = vunpack.c.l.b16 %v271
    %v1177 = vunpack.c.h.b16 %v271
    %v1178 = vunpack.c.l.b16 %v272
    %v1179 = vunpack.c.h.b16 %v272
    %v1180 = vunpack.c.l.b16 %v273
    %v1181 = vunpack.c.h.b16 %v273
    %v1182 = vunpack.c.l.b16 %v274
    %v1183 = vunpack.c.h.b16 %v274
    %v1184 = vunpack.c.l.b16 %v275
    %v1185 = vunpack.c.h.b16 %v275
    %v1186 = vunpack.c.l.b16 %v276
    %v1187 = vunpack.c.h.b16 %v276
    %v1188 = vunpack.c.l.b16 %v277
    %v1189 = vunpack.c.h.b16 %v277
    %v1190 = vunpack.c.l.b16 %v278
    %v1191 = vunpack.c.h.b16 %v278
    %v1192 = vunpack.c.l.b16 %v279
    %v1193 = vunpack.c.h.b16 %v279
    %v1194 = vunpack.c.l.b16 %v280
    %v1195 = vunpack.c.h.b16 %v280
    %v1196 = vunpack.c.l.b16 %v281
    %v1197 = vunpack.c.h.b16 %v281
    %v1198 = vunpack.c.l.b16 %v282
    %v1199 = vunpack.c.h.b16 %v282
    %v1200 = vunpack.c.l.b16 %v283
    %v1201 = vunpack.c.h.b16 %v283
    %v1202 = vunpack.c.l.b16 %v284
    %v1203 = vunpack.c.h.b16 %v284
    %v1204 = vunpack.c.l.b16 %v285
    %v1205 = vunpack.c.h.b16 %v285
    %v1206 = vunpack.c.l.b16 %v286
    %v1207 = vunpack.c.h.b16 %v286
    %v1208 = vunpack.c.l.b16 %v287
    %v1209 = vunpack.c.h.b16 %v287
    %v1210 = vunpack.c.l.b16 %v288
    %v1211 = vunpack.c.h.b16 %v288
    %v1212 = vunpack.c.l.b16 %v289
    %v1213 = vunpack.c.h.b16 %v289
    %v1214 = vunpack.c.l.b16 %v290
    %v1215 = vunpack.c.h.b16 %v290
    %v1216 = vunpack.c.l.b16 %v291
    %v1217 = vunpack.c.h.b16 %v291
    %v1218 = vunpack.c.l.b16 %v292
    %v1219 = vunpack.c.h.b16 %v292
    %v1220 = vunpack.c.l.b16 %v293
    %v1221 = vunpack.c.h.b16 %v293
    %v1222 = vunpack.c.l.b16 %v294
    %v1223 = vunpack.c.h.b16 %v294
    %v1224 = vunpack.c.l.b16 %v295
    %v1225 = vunpack.c.h.b16 %v295
    %v1226 = vunpack.c.l.b16 %v296
    %v1227 = vunpack.c.h.b16 %v296
    %v1228 = vunpack.c.l.b16 %v297
    %v1229 = vunpack.c.h.b16 %v297
    %v1230 = vunpack.c.l.b16 %v298
    %v1231 = vunpack.c.h.b16 %v298
    %v1232 = vunpack.c.l.b16 %v299
    %v1233 = vunpack.c.h.b16 %v299
    %v1234 = vunpack.c.l.b16 %v300
    %v1235 = vunpack.c.h.b16 %v300
    %v1236 = vunpack.c.l.b16 %v301
    %v1237 = vunpack.c.h.b16 %v301
    %v1238 = vunpack.c.l.b16 %v302
    %v1239 = vunpack.c.h.b16 %v302
    %v1240 = vunpack.c.l.b16 %v303
    %v1241 = vunpack.c.h.b16 %v303
    %v1242 = vunpack.c.l.b16 %v304
    %v1243 = vunpack.c.h.b16 %v304
    %v1244 = vunpack.c.l.b16 %v305
    %v1245 = vunpack.c.h.b16 %v305
    %v1246 = vunpack.c.l.b16 %v306
    %v1247 = vunpack.c.h.b16 %v306
    %v1248 = vunpack.c.l.b16 %v307
    %v1249 = vunpack.c.h.b16 %v307
    %v1250 = vunpack.c.l.b16 %v308
    %v1251 = vunpack.c.h.b16 %v308
    %v1252 = vunpack.c.l.b16 %v309
    %v1253 = vunpack.c.h.b16 %v309
    %v1254 = vunpack.c.l.b16 %v310
    %v1255 = vunpack.c.h.b16 %v310
    %v1256 = vunpack.c.l.b16 %v311
    %v1257 = vunpack.c.h.b16 %v311
    %v1258 = vunpack.c.l.b16 %v312
    %v1259 = vunpack.c.h.b16 %v312
    %v1260 = vunpack.c.l.b16 %v313
    %v1261 = vunpack.c.h.b16 %v313
    %v1262 = vunpack.c.l.b16 %v314
    %v1263 = vunpack.c.h.b16 %v314
    %v1264 = vunpack.c.l.b16 %v315
    %v1265 = vunpack.c.h.b16 %v315
    %v1266 = vunpack.c.l.b16 %v316
    %v1267 = vunpack.c.h.b16 %v316
    %v1268 = vunpack.c.l.b16 %v317
    %v1269 = vunpack.c.h.b16 %v317
    %v1270 = vunpack.c.l.b16 %v318
    %v1271 = vunpack.c.h.b16 %v318
    %v1272 = vunpack.c.l.b16 %v319
    %v1273 = vunpack.c.h.b16 %v319
    %v1274 = vunpack.c.l.b16 %v320
    %v1275 = vunpack.c.h.b16 %v320
    %v1276 = vunpack.c.l.b16 %v321
    %v1277 = vunpack.c.h.b16 %v321
    %v1278 = vunpack.c.l.b16 %v322
    %v1279 = vunpack.c.h.b16 %v322
    %v1280 = vunpack.c.l.b16 %v323
    %v1281 = vunpack.c.h.b16 %v323
    %v1282 = vunpack.c.l.b16 %v324
    %v1283 = vunpack.c.h.b16 %v324
    %v1284 = vunpack.c.l.b16 %v325
    %v1285 = vunpack.c.h.b16 %v325
    %v1286 = vunpack.c.l.b16 %v326
    %v1287 = vunpack.c.h.b16 %v326
    %v1288 = vunpack.c.l.b16 %v327
    %v1289 = vunpack.c.h.b16 %v327
    %v1290 = vunpack.c.l.b16 %v328
    %v1291 = vunpack.c.h.b16 %v328
    %v1292 = vunpack.c.l.b16 %v329
    %v1293 = vunpack.c.h.b16 %v329
    %v1294 = vunpack.c.l.b16 %v330
    %v1295 = vunpack.c.h.b16 %v330
    %v1296 = vunpack.c.l.b16 %v331
    %v1297 = vunpack.c.h.b16 %v331
    %v1298 = vunpack.c.l.b16 %v332
    %v1299 = vunpack.c.h.b16 %v332
    %v1300 = vunpack.c.l.b16 %v333
    %v1301 = vunpack.c.h.b16 %v333
    %v1302 = vunpack.c.l.b16 %v334
    %v1303 = vunpack.c.h.b16 %v334
    %v1304 = vunpack.c.l.b16 %v335
    %v1305 = vunpack.c.h.b16 %v335
    %v1306 = vunpack.c.l.b16 %v336
    %v1307 = vunpack.c.h.b16 %v336
    %v1308 = vunpack.c.l.b16 %v337
    %v1309 = vunpack.c.h.b16 %v337
    %v1310 = vunpack.c.l.b16 %v338
    %v1311 = vunpack.c.h.b16 %v338
    %v1312 = vunpack.c.l.b16 %v339
    %v1313 = vunpack.c.h.b16 %v339
    %v1314 = vunpack.c.l.b16 %v340
    %v1315 = vunpack.c.h.b16 %v340
    %v1316 = vunpack.c.l.b16 %v341
    %v1317 = vunpack.c.h.b16 %v341
    %v1318 = vunpack.c.l.b16 %v342
    %v1319 = vunpack.c.h.b16 %v342
    %v1320 = vunpack.c.l.b16 %v343
    %v1321 = vunpack.c.h.b16 %v343
    %v1322 = vunpack.c.l.b16 %v344
    %v1323 = vunpack.c.h.b16 %v344
    %v1324 = vunpack.c.l.b16 %v345
    %v1325 = vunpack.c.h.b16 %v345
    %v1326 = vunpack.c.l.b16 %v346
    %v1327 = vunpack.c.h.b16 %v346
    %v1328 = vunpack.c.l.b16 %v347
    %v1329 = vunpack.c.h.b16 %v347
    %v1330 = vunpack.c.l.b16 %v348
    %v1331 = vunpack.c.h.b16 %v348
    %v1332 = vunpack.c.l.b16 %v349
    %v1333 = vunpack.c.h.b16 %v349
    %v1334 = vunpack.c.l.b16 %v350
    %v1335 = vunpack.c.h.b16 %v350
    %v1336 = vunpack.c.l.b16 %v351
    %v1337 = vunpack.c.h.b16 %v351
    %v1338 = vunpack.c.l.b16 %v352
    %v1339 = vunpack.c.h.b16 %v352
    %v1340 = vunpack.c.l.b16 %v353
    %v1341 = vunpack.c.h.b16 %v353
    %v1342 = vunpack.c.l.b16 %v354
    %v1343 = vunpack.c.h.b16 %v354
    %v1344 = vunpack.c.l.b16 %v355
    %v1345 = vunpack.c.h.b16 %v355
    %v1346 = vunpack.c.l.b16 %v356
    %v1347 = vunpack.c.h.b16 %v356
    %v1348 = vunpack.c.l.b16 %v357
    %v1349 = vunpack.c.h.b16 %v357
    %v1350 = vunpack.c.l.b16 %v358
    %v1351 = vunpack.c.h.b16 %v358
    %v1352 = vunpack.c.l.b16 %v359
    %v1353 = vunpack.c.h.b16 %v359
    %v1354 = vunpack.c.l.b16 %v360
    %v1355 = vunpack.c.h.b16 %v360
    %v1356 = vunpack.c.l.b16 %v361
    %v1357 = vunpack.c.h.b16 %v361
    %v1358 = vunpack.c.l.b16 %v362
    %v1359 = vunpack.c.h.b16 %v362
    %v1360 = vunpack.c.l.b16 %v363
    %v1361 = vunpack.c.h.b16 %v363
    %v1362 = vunpack.c.l.b16 %v364
    %v1363 = vunpack.c.h.b16 %v364
    %v1364 = vunpack.c.l.b16 %v365
    %v1365 = vunpack.c.h.b16 %v365
    %v1366 = vunpack.c.l.b16 %v366
    %v1367 = vunpack.c.h.b16 %v366
    %v1368 = vunpack.c.l.b16 %v367
    %v1369 = vunpack.c.h.b16 %v367
    %v1370 = vunpack.c.l.b16 %v368
    %v1371 = vunpack.c.h.b16 %v368
    %v1372 = vunpack.c.l.b16 %v369
    %v1373 = vunpack.c.h.b16 %v369
    %v1374 = vunpack.c.l.b16 %v370
    %v1375 = vunpack.c.h.b16 %v370
    %v1376 = vunpack.c.l.b16 %v371
    %v1377 = vunpack.c.h.b16 %v371
    %v1378 = vunpack.c.l.b16 %v372
    %v1379 = vunpack.c.h.b16 %v372
    %v1380 = vunpack.c.l.b16 %v373
    %v1381 = vunpack.c.h.b16 %v373
    %v1382 = vunpack.c.l.b16 %v374
    %v1383 = vunpack.c.h.b16 %v374
    %v1384 = vunpack.c.l.b16 %v375
    %v1385 = vunpack.c.h.b16 %v375
    %v1386 = vunpack.c.l.b16 %v376
    %v1387 = vunpack.c.h.b16 %v376
    %v1388 = vunpack.c.l.b16 %v377
    %v1389 = vunpack.c.h.b16 %v377
    %v1390 = vunpack.c.l.b16 %v378
    %v1391 = vunpack.c.h.b16 %v378
    %v1392 = vunpack.c.l.b16 %v379
    %v1393 = vunpack.c.h.b16 %v379
    %v1394 = vunpack.c.l.b16 %v380
    %v1395 = vunpack.c.h.b16 %v380
    %v1396 = vunpack.c.l.b16 %v381
    %v1397 = vunpack.c.h.b16 %v381
    %v1398 = vunpack.c.l.b16 %v382
    %v1399 = vunpack.c.h.b16 %v382
    %v1400 = vunpack.c.l.b16 %v383
    %v1401 = vunpack.c.h.b16 %v383
    %v1402 = vunpack.c.l.b16 %v384
    %v1403 = vunpack.c.h.b16 %v384
    %v1404 = vunpack.c.l.b16 %v385
    %v1405 = vunpack.c.h.b16 %v385
    %v1406 = vunpack.c.l.b16 %v386
    %v1407 = vunpack.c.h.b16 %v386
    %v1408 = vunpack.c.l.b16 %v387
    %v1409 = vunpack.c.h.b16 %v387
    %v1410 = vunpack.c.l.b16 %v388
    %v1411 = vunpack.c.h.b16 %v388
    %v1412 = vunpack.c.l.b16 %v389
    %v1413 = vunpack.c.h.b16 %v389
    %v1414 = vunpack.c.l.b16 %v390
    %v1415 = vunpack.c.h.b16 %v390
    %v1416 = vunpack.c.l.b16 %v391
    %v1417 = vunpack.c.h.b16 %v391
    %v1418 = vunpack.c.l.b16 %v392
    %v1419 = vunpack.c.h.b16 %v392
    %v1420 = vunpack.c.l.b16 %v393
    %v1421 = vunpack.c.h.b16 %v393
    %v1422 = vunpack.c.l.b16 %v394
    %v1423 = vunpack.c.h.b16 %v394
    %v1424 = vunpack.c.l.b16 %v395
    %v1425 = vunpack.c.h.b16 %v395
    %v1426 = vunpack.c.l.b16 %v396
    %v1427 = vunpack.c.h.b16 %v396
    %v1428 = vunpack.c.l.b16 %v397
    %v1429 = vunpack.c.h.b16 %v397
    %v1430 = vunpack.c.l.b16 %v398
    %v1431 = vunpack.c.h.b16 %v398
    %v1432 = vunpack.c.l.b16 %v399
    %v1433 = vunpack.c.h.b16 %v399
    %v1434 = vunpack.c.l.b16 %v400
    %v1435 = vunpack.c.h.b16 %v400
    %v1436 = vunpack.c.l.b16 %v401
    %v1437 = vunpack.c.h.b16 %v401
    %v1438 = vunpack.c.l.b16 %v402
    %v1439 = vunpack.c.h.b16 %v402
    %v1440 = vunpack.c.l.b16 %v403
    %v1441 = vunpack.c.h.b16 %v403
    %v1442 = vunpack.c.l.b16 %v404
    %v1443 = vunpack.c.h.b16 %v404
    %v1444 = vunpack.c.l.b16 %v405
    %v1445 = vunpack.c.h.b16 %v405
    %v1446 = vunpack.c.l.b16 %v406
    %v1447 = vunpack.c.h.b16 %v406
    %v1448 = vunpack.c.l.b16 %v407
    %v1449 = vunpack.c.h.b16 %v407
    %v1450 = vunpack.c.l.b16 %v408
    %v1451 = vunpack.c.h.b16 %v408
    %v1452 = vunpack.c.l.b16 %v409
    %v1453 = vunpack.c.h.b16 %v409
    %v1454 = vunpack.c.l.b16 %v410
    %v1455 = vunpack.c.h.b16 %v410
    %v1456 = vunpack.c.l.b16 %v411
    %v1457 = vunpack.c.h.b16 %v411
    %v1458 = vunpack.c.l.b16 %v412
    %v1459 = vunpack.c.h.b16 %v412
    %v1460 = vunpack.c.l.b16 %v413
    %v1461 = vunpack.c.h.b16 %v413
    %v1462 = vunpack.c.l.b16 %v414
    %v1463 = vunpack.c.h.b16 %v414
    %v1464 = vunpack.c.l.b16 %v415
    %v1465 = vunpack.c.h.b16 %v415
    %v1466 = vunpack.c.l.b16 %v416
    %v1467 = vunpack.c.h.b16 %v416
    %v1468 = vunpack.c.l.b16 %v417
    %v1469 = vunpack.c.h.b16 %v417
    %v1470 = vunpack.c.l.b16 %v418
    %v1471 = vunpack.c.h.b16 %v418
    %v1472 = vunpack.c.l.b16 %v419
    %v1473 = vunpack.c.h.b16 %v419
    %v1474 = vunpack.c.l.b16 %v420
    %v1475 = vunpack.c.h.b16 %v420
    %v1476 = vunpack.c.l.b16 %v421
    %v1477 = vunpack.c.h.b16 %v421
    %v1478 = vunpack.c.l.b16 %v422
    %v1479 = vunpack.c.h.b16 %v422
    %v1480 = vunpack.c.l.b16 %v423
    %v1481 = vunpack.c.h.b16 %v423
    %v1482 = vunpack.c.l.b16 %v424
    %v1483 = vunpack.c.h.b16 %v424
    %v1484 = vunpack.c.l.b16 %v425
    %v1485 = vunpack.c.h.b16 %v425
    %v1486 = vunpack.c.l.b16 %v426
    %v1487 = vunpack.c.h.b16 %v426
    %v1488 = vunpack.c.l.b16 %v427
    %v1489 = vunpack.c.h.b16 %v427
    %v1490 = vunpack.c.l.b16 %v428
    %v1491 = vunpack.c.h.b16 %v428
    %v1492 = vunpack.c.l.b16 %v429
    %v1493 = vunpack.c.h.b16 %v429
    %v1494 = vunpack.c.l.b16 %v430
    %v1495 = vunpack.c.h.b16 %v430
    %v1496 = vunpack.c.l.b16 %v431
    %v1497 = vunpack.c.h.b16 %v431
    %v1498 = vunpack.c.l.b16 %v432
    %v1499 = vunpack.c.h.b16 %v432
    %v1500 = vunpack.c.l.b16 %v433
    %v1501 = vunpack.c.h.b16 %v433
    %v1502 = vunpack.c.l.b16 %v434
    %v1503 = vunpack.c.h.b16 %v434
    %v1504 = vunpack.c.l.b16 %v435
    %v1505 = vunpack.c.h.b16 %v435
    %v1506 = vunpack.c.l.b16 %v436
    %v1507 = vunpack.c.h.b16 %v436
    %v1508 = vunpack.c.l.b16 %v437
    %v1509 = vunpack.c.h.b16 %v437
    %v1510 = vunpack.c.l.b16 %v438
    %v1511 = vunpack.c.h.b16 %v438
    %v1512 = vunpack.c.l.b16 %v439
    %v1513 = vunpack.c.h.b16 %v439
    %v1514 = vunpack.c.l.b16 %v440
    %v1515 = vunpack.c.h.b16 %v440
    %v1516 = vunpack.c.l.b16 %v441
    %v1517 = vunpack.c.h.b16 %v441
    %v1518 = vunpack.c.l.b16 %v442
    %v1519 = vunpack.c.h.b16 %v442
    %v1520 = vunpack.c.l.b16 %v443
    %v1521 = vunpack.c.h.b16 %v443
    %v1522 = vunpack.c.l.b16 %v444
    %v1523 = vunpack.c.h.b16 %v444
    %v1524 = vunpack.c.l.b16 %v445
    %v1525 = vunpack.c.h.b16 %v445
    %v1526 = vunpack.c.l.b16 %v446
    %v1527 = vunpack.c.h.b16 %v446
    %v1528 = vunpack.c.l.b16 %v447
    %v1529 = vunpack.c.h.b16 %v447
    %v1530 = vunpack.c.l.b16 %v448
    %v1531 = vunpack.c.h.b16 %v448
    %v1532 = vunpack.c.l.b16 %v449
    %v1533 = vunpack.c.h.b16 %v449
    %v1534 = vunpack.c.l.b16 %v450
    %v1535 = vunpack.c.h.b16 %v450
    %v1536 = vunpack.c.l.b16 %v451
    %v1537 = vunpack.c.h.b16 %v451
    %v1538 = vunpack.c.l.b16 %v452
    %v1539 = vunpack.c.h.b16 %v452
    %v1540 = vunpack.c.l.b16 %v453
    %v1541 = vunpack.c.h.b16 %v453
    %v1542 = vunpack.c.l.b16 %v454
    %v1543 = vunpack.c.h.b16 %v454
    %v1544 = vunpack.c.l.b16 %v455
    %v1545 = vunpack.c.h.b16 %v455
    %v1546 = vunpack.c.l.b16 %v456
    %v1547 = vunpack.c.h.b16 %v456
    %v1548 = vunpack.c.l.b16 %v457
    %v1549 = vunpack.c.h.b16 %v457
    %v1550 = vunpack.c.l.b16 %v458
    %v1551 = vunpack.c.h.b16 %v458
    %v1552 = vunpack.c.l.b16 %v459
    %v1553 = vunpack.c.h.b16 %v459
    %v1554 = vunpack.c.l.b16 %v460
    %v1555 = vunpack.c.h.b16 %v460
    %v1556 = vunpack.c.l.b16 %v461
    %v1557 = vunpack.c.h.b16 %v461
    %v1558 = vunpack.c.l.b16 %v462
    %v1559 = vunpack.c.h.b16 %v462
    %v1560 = vunpack.c.l.b16 %v463
    %v1561 = vunpack.c.h.b16 %v463
    %v1562 = vunpack.c.l.b16 %v464
    %v1563 = vunpack.c.h.b16 %v464
    %v1564 = vunpack.c.l.b16 %v465
    %v1565 = vunpack.c.h.b16 %v465
    %v1566 = vunpack.c.l.b16 %v466
    %v1567 = vunpack.c.h.b16 %v466
    %v1568 = vunpack.c.l.b16 %v467
    %v1569 = vunpack.c.h.b16 %v467
    %v1570 = vunpack.c.l.b16 %v468
    %v1571 = vunpack.c.h.b16 %v468
    %v1572 = vunpack.c.l.b16 %v469
    %v1573 = vunpack.c.h.b16 %v469
    %v1574 = vunpack.c.l.b16 %v470
    %v1575 = vunpack.c.h.b16 %v470
    %v1576 = vunpack.c.l.b16 %v471
    %v1577 = vunpack.c.h.b16 %v471
    %v1578 = vunpack.c.l.b16 %v472
    %v1579 = vunpack.c.h.b16 %v472
    %v1580 = vunpack.c.l.b16 %v473
    %v1581 = vunpack.c.h.b16 %v473
    %v1582 = vunpack.c.l.b16 %v474
    %v1583 = vunpack.c.h.b16 %v474
    %v1584 = vunpack.c.l.b16 %v475
    %v1585 = vunpack.c.h.b16 %v475
    %v1586 = vunpack.c.l.b16 %v476
    %v1587 = vunpack.c.h.b16 %v476
    %v1588 = vunpack.c.l.b16 %v477
    %v1589 = vunpack.c.h.b16 %v477
    %v1590 = vunpack.c.l.b16 %v478
    %v1591 = vunpack.c.h.b16 %v478
    %v1592 = vunpack.c.l.b16 %v479
    %v1593 = vunpack.c.h.b16 %v479
    %v1594 = vunpack.c.l.b16 %v480
    %v1595 = vunpack.c.h.b16 %v480
    %v1596 = vunpack.c.l.b16 %v481
    %v1597 = vunpack.c.h.b16 %v481
    %v1598 = vunpack.c.l.b16 %v482
    %v1599 = vunpack.c.h.b16 %v482
    %v1600 = vunpack.c.l.b16 %v483
    %v1601 = vunpack.c.h.b16 %v483
    %v1602 = vunpack.c.l.b16 %v484
    %v1603 = vunpack.c.h.b16 %v484
    %v1604 = vunpack.c.l.b16 %v485
    %v1605 = vunpack.c.h.b16 %v485
    %v1606 = vunpack.c.l.b16 %v486
    %v1607 = vunpack.c.h.b16 %v486
    %v1608 = vunpack.c.l.b16 %v487
    %v1609 = vunpack.c.h.b16 %v487
    %v1610 = vunpack.c.l.b16 %v488
    %v1611 = vunpack.c.h.b16 %v488
    %v1612 = vunpack.c.l.b16 %v489
    %v1613 = vunpack.c.h.b16 %v489
    %v1614 = vunpack.c.l.b16 %v490
    %v1615 = vunpack.c.h.b16 %v490
    %v1616 = vunpack.c.l.b16 %v491
    %v1617 = vunpack.c.h.b16 %v491
    %v1618 = vunpack.c.l.b16 %v492
    %v1619 = vunpack.c.h.b16 %v492
    %v1620 = vunpack.c.l.b16 %v493
    %v1621 = vunpack.c.h.b16 %v493
    %v1622 = vunpack.c.l.b16 %v494
    %v1623 = vunpack.c.h.b16 %v494
    %v1624 = vunpack.c.l.b16 %v495
    %v1625 = vunpack.c.h.b16 %v495
    %v1626 = vunpack.c.l.b16 %v496
    %v1627 = vunpack.c.h.b16 %v496
    %v1628 = vunpack.c.l.b16 %v497
    %v1629 = vunpack.c.h.b16 %v497
    %v1630 = vunpack.c.l.b16 %v498
    %v1631 = vunpack.c.h.b16 %v498
    %v1632 = vunpack.c.l.b16 %v499
    %v1633 = vunpack.c.h.b16 %v499
    %v1634 = vunpack.c.l.b16 %v500
    %v1635 = vunpack.c.h.b16 %v500
    %v1636 = vunpack.c.l.b16 %v501
    %v1637 = vunpack.c.h.b16 %v501
    %v1638 = vunpack.c.l.b16 %v502
    %v1639 = vunpack.c.h.b16 %v502
    %v1640 = vunpack.c.l.b16 %v503
    %v1641 = vunpack.c.h.b16 %v503
    %v1642 = vunpack.c.l.b16 %v504
    %v1643 = vunpack.c.h.b16 %v504
    %v1644 = vunpack.c.l.b16 %v505
    %v1645 = vunpack.c.h.b16 %v505
    %v1646 = vunpack.c.l.b16 %v506
    %v1647 = vunpack.c.h.b16 %v506
    %v1648 = vunpack.c.l.b16 %v507
    %v1649 = vunpack.c.h.b16 %v507
    %v1650 = vunpack.c.l.b16 %v508
    %v1651 = vunpack.c.h.b16 %v508
    %v1652 = vunpack.c.l.b16 %v509
    %v1653 = vunpack.c.h.b16 %v509
    %v1654 = vunpack.c.l.b16 %v510
    %v1655 = vunpack.c.h.b16 %v510
    %v1656 = vunpack.c.l.b16 %v511
    %v1657 = vunpack.c.h.b16 %v511
    %v1658 = vunpack.c.l.b16 %v512
    %v1659 = vunpack.c.h.b16 %v512
    %v1660 = vunpack.c.l.b16 %v513
    %v1661 = vunpack.c.h.b16 %v513
    %v1662 = vunpack.c.l.b16 %v514
    %v1663 = vunpack.c.h.b16 %v514
    %v1664 = vunpack.c.l.b16 %v515
    %v1665 = vunpack.c.h.b16 %v515
    %v1666 = vunpack.c.l.b16 %v516
    %v1667 = vunpack.c.h.b16 %v516
    %v1668 = vunpack.c.l.b16 %v517
    %v1669 = vunpack.c.h.b16 %v517
    %v1670 = vpack.c.b16 %v914, %v902
    %v1671 = vpack.c.b16 %v915, %v903
    %v1672 = vpack.c.b16 %v916, %v904
    %v1673 = vpack.c.b16 %v917, %v905
    %v1674 = vpack.c.b16 %v918, %v906
    %v1675 = vpack.c.b16 %v919, %v907
    %v1676 = vpack.c.b16 %v920, %v908
    %v1677 = vpack.c.b16 %v921, %v909
    %v1678 = vpack.c.b16 %v922, %v910
    %v1679 = vpack.c.b16 %v923, %v911
    %v1680 = vpack.c.b16 %v924, %v912
    %v1681 = vpack.c.b16 %v925, %v913
    %v1682 = vpack.c.b16 %v938, %v926
    %v1683 = vpack.c.b16 %v939, %v927
    %v1684 = vpack.c.b16 %v940, %v928
    %v1685 = vpack.c.b16 %v941, %v929
    %v1686 = vpack.c.b16 %v942, %v930
    %v1687 = vpack.c.b16 %v943, %v931
    %v1688 = vpack.c.b16 %v944, %v932
    %v1689 = vpack.c.b16 %v945, %v933
    %v1690 = vpack.c.b16 %v946, %v934
    %v1691 = vpack.c.b16 %v947, %v935
    %v1692 = vpack.c.b16 %v948, %v936
    %v1693 = vpack.c.b16 %v949, %v937
    %v1694 = vpack.c.b16 %v962, %v950
    %v1695 = vpack.c.b16 %v963, %v951
    %v1696 = vpack.c.b16 %v964, %v952
    %v1697 = vpack.c.b16 %v965, %v953
    %v1698 = vpack.c.b16 %v966, %v954
    %v1699 = vpack.c.b16 %v967, %v955
    %v1700 = vpack.c.b16 %v968, %v956
    %v1701 = vpack.c.b16 %v969, %v957
    %v1702 = vpack.c.b16 %v970, %v958
    %v1703 = vpack.c.b16 %v971, %v959
    %v1704 = vpack.c.b16 %v972, %v960
    %v1705 = vpack.c.b16 %v973, %v961
    %v1706 = vpack.c.b16 %v986, %v974
    %v1707 = vpack.c.b16 %v987, %v975
    %v1708 = vpack.c.b16 %v988, %v976
    %v1709 = vpack.c.b16 %v989, %v977
    %v1710 = vpack.c.b16 %v990, %v978
    %v1711 = vpack.c.b16 %v991, %v979
    %v1712 = vpack.c.b16 %v992, %v980
    %v1713 = vpack.c.b16 %v993, %v981
    %v1714 = vpack.c.b16 %v994, %v982
    %v1715 = vpack.c.b16 %v995, %v983
    %v1716 = vpack.c.b16 %v996, %v984
    %v1717 = vpack.c.b16 %v997, %v985
    %v1718 = vpack.c.b16 %v1010, %v998
    %v1719 = vpack.c.b16 %v1011, %v999
    %v1720 = vpack.c.b16 %v1012, %v1000
    %v1721 = vpack.c.b16 %v1013, %v1001
    %v1722 = vpack.c.b16 %v1014, %v1002
    %v1723 = vpack.c.b16 %v1015, %v1003
    %v1724 = vpack.c.b16 %v1016, %v1004
    %v1725 = vpack.c.b16 %v1017, %v1005
    %v1726 = vpack.c.b16 %v1018, %v1006
    %v1727 = vpack.c.b16 %v1019, %v1007
    %v1728 = vpack.c.b16 %v1020, %v1008
    %v1729 = vpack.c.b16 %v1021, %v1009
    %v1730 = vpack.c.b16 %v1034, %v1022
    %v1731 = vpack.c.b16 %v1035, %v1023
    %v1732 = vpack.c.b16 %v1036, %v1024
    %v1733 = vpack.c.b16 %v1037, %v1025
    %v1734 = vpack.c.b16 %v1038, %v1026
    %v1735 = vpack.c.b16 %v1039, %v1027
    %v1736 = vpack.c.b16 %v1040, %v1028
    %v1737 = vpack.c.b16 %v1041, %v1029
    %v1738 = vpack.c.b16 %v1042, %v1030
    %v1739 = vpack.c.b16 %v1043, %v1031
    %v1740 = vpack.c.b16 %v1044, %v1032
    %v1741 = vpack.c.b16 %v1045, %v1033
    %v1742 = vpack.c.b16 %v1058, %v1046
    %v1743 = vpack.c.b16 %v1059, %v1047
    %v1744 = vpack.c.b16 %v1060, %v1048
    %v1745 = vpack.c.b16 %v1061, %v1049
    %v1746 = vpack.c.b16 %v1062, %v1050
    %v1747 = vpack.c.b16 %v1063, %v1051
    %v1748 = vpack.c.b16 %v1064, %v1052
    %v1749 = vpack.c.b16 %v1065, %v1053
    %v1750 = vpack.c.b16 %v1066, %v1054
    %v1751 = vpack.c.b16 %v1067, %v1055
    %v1752 = vpack.c.b16 %v1068, %v1056
    %v1753 = vpack.c.b16 %v1069, %v1057
    %v1754 = vpack.c.b16 %v1082, %v1070
    %v1755 = vpack.c.b16 %v1083, %v1071
    %v1756 = vpack.c.b16 %v1084, %v1072
    %v1757 = vpack.c.b16 %v1085, %v1073
    %v1758 = vpack.c.b16 %v1086, %v1074
    %v1759 = vpack.c.b16 %v1087, %v1075
    %v1760 = vpack.c.b16 %v1088, %v1076
    %v1761 = vpack.c.b16 %v1089, %v1077
    %v1762 = vpack.c.b16 %v1090, %v1078
    %v1763 = vpack.c.b16 %v1091, %v1079
    %v1764 = vpack.c.b16 %v1092, %v1080
    %v1765 = vpack.c.b16 %v1093, %v1081
    %v1766 = vpack.c.b16 %v1106, %v1094
    %v1767 = vpack.c.b16 %v1107, %v1095
    %v1768 = vpack.c.b16 %v1108, %v1096
    %v1769 = vpack.c.b16 %v1109, %v1097
    %v1770 = vpack.c.b16 %v1110, %v1098
    %v1771 = vpack.c.b16 %v1111, %v1099
    %v1772 = vpack.c.b16 %v1112, %v1100
    %v1773 = vpack.c.b16 %v1113, %v1101
    %v1774 = vpack.c.b16 %v1114, %v1102
    %v1775 = vpack.c.b16 %v1115, %v1103
    %v1776 = vpack.c.b16 %v1116, %v1104
    %v1777 = vpack.c.b16 %v1117, %v1105
    %v1778 = vpack.c.b16 %v1130, %v1118
    %v1779 = vpack.c.b16 %v1131, %v1119
    %v1780 = vpack.c.b16 %v1132, %v1120
    %v1781 = vpack.c.b16 %v1133, %v1121
    %v1782 = vpack.c.b16 %v1134, %v1122
    %v1783 = vpack.c.b16 %v1135, %v1123
    %v1784 = vpack.c.b16 %v1136, %v1124
    %v1785 = vpack.c.b16 %v1137, %v1125
    %v1786 = vpack.c.b16 %v1138, %v1126
    %v1787 = vpack.c.b16 %v1139, %v1127
    %v1788 = vpack.c.b16 %v1140, %v1128
    %v1789 = vpack.c.b16 %v1141, %v1129
    %v1790 = vpack.c.b16 %v1154, %v1142
    %v1791 = vpack.c.b16 %v1155, %v1143
    %v1792 = vpack.c.b16 %v1156, %v1144
    %v1793 = vpack.c.b16 %v1157, %v1145
    %v1794 = vpack.c.b16 %v1158, %v1146
    %v1795 = vpack.c.b16 %v1159, %v1147
    %v1796 = vpack.c.b16 %v1160, %v1148
    %v1797 = vpack.c.b16 %v1161, %v1149
    %v1798 = vpack.c.b16 %v1162, %v1150
    %v1799 = vpack.c.b16 %v1163, %v1151
    %v1800 = vpack.c.b16 %v1164, %v1152
    %v1801 = vpack.c.b16 %v1165, %v1153
    %v1802 = vpack.c.b16 %v1178, %v1166
    %v1803 = vpack.c.b16 %v1179, %v1167
    %v1804 = vpack.c.b16 %v1180, %v1168
    %v1805 = vpack.c.b16 %v1181, %v1169
    %v1806 = vpack.c.b16 %v1182, %v1170
    %v1807 = vpack.c.b16 %v1183, %v1171
    %v1808 = vpack.c.b16 %v1184, %v1172
    %v1809 = vpack.c.b16 %v1185, %v1173
    %v1810 = vpack.c.b16 %v1186, %v1174
    %v1811 = vpack.c.b16 %v1187, %v1175
    %v1812 = vpack.c.b16 %v1188, %v1176
    %v1813 = vpack.c.b16 %v1189, %v1177
    %v1814 = vpack.c.b16 %v1202, %v1190
    %v1815 = vpack.c.b16 %v1203, %v1191
    %v1816 = vpack.c.b16 %v1204, %v1192
    %v1817 = vpack.c.b16 %v1205, %v1193
    %v1818 = vpack.c.b16 %v1206, %v1194
    %v1819 = vpack.c.b16 %v1207, %v1195
    %v1820 = vpack.c.b16 %v1208, %v1196
    %v1821 = vpack.c.b16 %v1209, %v1197
    %v1822 = vpack.c.b16 %v1210, %v1198
    %v1823 = vpack.c.b16 %v1211, %v1199
    %v1824 = vpack.c.b16 %v1212, %v1200
    %v1825 = vpack.c.b16 %v1213, %v1201
    %v1826 = vpack.c.b16 %v1226, %v1214
    %v1827 = vpack.c.b16 %v1227, %v1215
    %v1828 = vpack.c.b16 %v1228, %v1216
    %v1829 = vpack.c.b16 %v1229, %v1217
    %v1830 = vpack.c.b16 %v1230, %v1218
    %v1831 = vpack.c.b16 %v1231, %v1219
    %v1832 = vpack.c.b16 %v1232, %v1220
    %v1833 = vpack.c.b16 %v1233, %v1221
    %v1834 = vpack.c.b16 %v1234, %v1222
    %v1835 = vpack.c.b16 %v1235, %v1223
    %v1836 = vpack.c.b16 %v1236, %v1224
    %v1837 = vpack.c.b16 %v1237, %v1225
    %v1838 = vpack.c.b16 %v1250, %v1238
    %v1839 = vpack.c.b16 %v1251, %v1239
    %v1840 = vpack.c.b16 %v1252, %v1240
    %v1841 = vpack.c.b16 %v1253, %v1241
    %v1842 = vpack.c.b16 %v1254, %v1242
    %v1843 = vpack.c.b16 %v1255, %v1243
    %v1844 = vpack.c.b16 %v1256, %v1244
    %v1845 = vpack.c.b16 %v1257, %v1245
    %v1846 = vpack.c.b16 %v1258, %v1246
    %v1847 = vpack.c.b16 %v1259, %v1247
    %v1848 = vpack.c.b16 %v1260, %v1248
    %v1849 = vpack.c.b16 %v1261, %v1249
    %v1850 = vpack.c.b16 %v1274, %v1262
    %v1851 = vpack.c.b16 %v1275, %v1263
    %v1852 = vpack.c.b16 %v1276, %v1264
    %v1853 = vpack.c.b16 %v1277, %v1265
    %v1854 = vpack.c.b16 %v1278, %v1266
    %v1855 = vpack.c.b16 %v1279, %v1267
    %v1856 = vpack.c.b16 %v1280, %v1268
    %v1857 = vpack.c.b16 %v1281, %v1269
    %v1858 = vpack.c.b16 %v1282, %v1270
    %v1859 = vpack.c.b16 %v1283, %v1271
    %v1860 = vpack.c.b16 %v1284, %v1272
    %v1861 = vpack.c.b16 %v1285, %v1273
    %v1862 = vpack.c.b16 %v1298, %v1286
    %v1863 = vpack.c.b16 %v1299, %v1287
    %v1864 = vpack.c.b16 %v1300, %v1288
    %v1865 = vpack.c.b16 %v1301, %v1289
    %v1866 = vpack.c.b16 %v1302, %v1290
    %v1867 = vpack.c.b16 %v1303, %v1291
    %v1868 = vpack.c.b16 %v1304, %v1292
    %v1869 = vpack.c.b16 %v1305, %v1293
    %v1870 = vpack.c.b16 %v1306, %v1294
    %v1871 = vpack.c.b16 %v1307, %v1295
    %v1872 = vpack.c.b16 %v1308, %v1296
    %v1873 = vpack.c.b16 %v1309, %v1297
    %v1874 = vpack.c.b16 %v1322, %v1310
    %v1875 = vpack.c.b16 %v1323, %v1311
    %v1876 = vpack.c.b16 %v1324, %v1312
    %v1877 = vpack.c.b16 %v1325, %v1313
    %v1878 = vpack.c.b16 %v1326, %v1314
    %v1879 = vpack.c.b16 %v1327, %v1315
    %v1880 = vpack.c.b16 %v1328, %v1316
    %v1881 = vpack.c.b16 %v1329, %v1317
    %v1882 = vpack.c.b16 %v1330, %v1318
    %v1883 = vpack.c.b16 %v1331, %v1319
    %v1884 = vpack.c.b16 %v1332, %v1320
    %v1885 = vpack.c.b16 %v1333, %v1321
    %v1886 = vpack.c.b16 %v1346, %v1334
    %v1887 = vpack.c.b16 %v1347, %v1335
    %v1888 = vpack.c.b16 %v1348, %v1336
    %v1889 = vpack.c.b16 %v1349, %v1337
    %v1890 = vpack.c.b16 %v1350, %v1338
    %v1891 = vpack.c.b16 %v1351, %v1339
    %v1892 = vpack.c.b16 %v1352, %v1340
    %v1893 = vpack.c.b16 %v1353, %v1341
    %v1894 = vpack.c.b16 %v1354, %v1342
    %v1895 = vpack.c.b16 %v1355, %v1343
    %v1896 = vpack.c.b16 %v1356, %v1344
    %v1897 = vpack.c.b16 %v1357, %v1345
    %v1898 = vpack.c.b16 %v1370, %v1358
    %v1899 = vpack.c.b16 %v1371, %v1359
    %v1900 = vpack.c.b16 %v1372, %v1360
    %v1901 = vpack.c.b16 %v1373, %v1361
    %v1902 = vpack.c.b16 %v1374, %v1362
    %v1903 = vpack.c.b16 %v1375, %v1363
    %v1904 = vpack.c.b16 %v1376, %v1364
    %v1905 = vpack.c.b16 %v1377, %v1365
    %v1906 = vpack.c.b16 %v1378, %v1366
    %v1907 = vpack.c.b16 %v1379, %v1367
    %v1908 = vpack.c.b16 %v1380, %v1368
    %v1909 = vpack.c.b16 %v1381, %v1369
    %v1910 = vpack.c.b16 %v1394, %v1382
    %v1911 = vpack.c.b16 %v1395, %v1383
    %v1912 = vpack.c.b16 %v1396, %v1384
    %v1913 = vpack.c.b16 %v1397, %v1385
    %v1914 = vpack.c.b16 %v1398, %v1386
    %v1915 = vpack.c.b16 %v1399, %v1387
    %v1916 = vpack.c.b16 %v1400, %v1388
    %v1917 = vpack.c.b16 %v1401, %v1389
    %v1918 = vpack.c.b16 %v1402, %v1390
    %v1919 = vpack.c.b16 %v1403, %v1391
    %v1920 = vpack.c.b16 %v1404, %v1392
    %v1921 = vpack.c.b16 %v1405, %v1393
    %v1922 = vpack.c.b16 %v1418, %v1406
    %v1923 = vpack.c.b16 %v1419, %v1407
    %v1924 = vpack.c.b16 %v1420, %v1408
    %v1925 = vpack.c.b16 %v1421, %v1409
    %v1926 = vpack.c.b16 %v1422, %v1410
    %v1927 = vpack.c.b16 %v1423, %v1411
    %v1928 = vpack.c.b16 %v1424, %v1412
    %v1929 = vpack.c.b16 %v1425, %v1413
    %v1930 = vpack.c.b16 %v1426, %v1414
    %v1931 = vpack.c.b16 %v1427, %v1415
    %v1932 = vpack.c.b16 %v1428, %v1416
    %v1933 = vpack.c.b16 %v1429, %v1417
    %v1934 = vpack.c.b16 %v1442, %v1430
    %v1935 = vpack.c.b16 %v1443, %v1431
    %v1936 = vpack.c.b16 %v1444, %v1432
    %v1937 = vpack.c.b16 %v1445, %v1433
    %v1938 = vpack.c.b16 %v1446, %v1434
    %v1939 = vpack.c.b16 %v1447, %v1435
    %v1940 = vpack.c.b16 %v1448, %v1436
    %v1941 = vpack.c.b16 %v1449, %v1437
    %v1942 = vpack.c.b16 %v1450, %v1438
    %v1943 = vpack.c.b16 %v1451, %v1439
    %v1944 = vpack.c.b16 %v1452, %v1440
    %v1945 = vpack.c.b16 %v1453, %v1441
    %v1946 = vpack.c.b16 %v1466, %v1454
    %v1947 = vpack.c.b16 %v1467, %v1455
    %v1948 = vpack.c.b16 %v1468, %v1456
    %v1949 = vpack.c.b16 %v1469, %v1457
    %v1950 = vpack.c.b16 %v1470, %v1458
    %v1951 = vpack.c.b16 %v1471, %v1459
    %v1952 = vpack.c.b16 %v1472, %v1460
    %v1953 = vpack.c.b16 %v1473, %v1461
    %v1954 = vpack.c.b16 %v1474, %v1462
    %v1955 = vpack.c.b16 %v1475, %v1463
    %v1956 = vpack.c.b16 %v1476, %v1464
    %v1957 = vpack.c.b16 %v1477, %v1465
    %v1958 = vpack.c.b16 %v1490, %v1478
    %v1959 = vpack.c.b16 %v1491, %v1479
    %v1960 = vpack.c.b16 %v1492, %v1480
    %v1961 = vpack.c.b16 %v1493, %v1481
    %v1962 = vpack.c.b16 %v1494, %v1482
    %v1963 = vpack.c.b16 %v1495, %v1483
    %v1964 = vpack.c.b16 %v1496, %v1484
    %v1965 = vpack.c.b16 %v1497, %v1485
    %v1966 = vpack.c.b16 %v1498, %v1486
    %v1967 = vpack.c.b16 %v1499, %v1487
    %v1968 = vpack.c.b16 %v1500, %v1488
    %v1969 = vpack.c.b16 %v1501, %v1489
    %v1970 = vpack.c.b16 %v1514, %v1502
    %v1971 = vpack.c.b16 %v1515, %v1503
    %v1972 = vpack.c.b16 %v1516, %v1504
    %v1973 = vpack.c.b16 %v1517, %v1505
    %v1974 = vpack.c.b16 %v1518, %v1506
    %v1975 = vpack.c.b16 %v1519, %v1507
    %v1976 = vpack.c.b16 %v1520, %v1508
    %v1977 = vpack.c.b16 %v1521, %v1509
    %v1978 = vpack.c.b16 %v1522, %v1510
    %v1979 = vpack.c.b16 %v1523, %v1511
    %v1980 = vpack.c.b16 %v1524, %v1512
    %v1981 = vpack.c.b16 %v1525, %v1513
    %v1982 = vpack.c.b16 %v1538, %v1526
    %v1983 = vpack.c.b16 %v1539, %v1527
    %v1984 = vpack.c.b16 %v1540, %v1528
    %v1985 = vpack.c.b16 %v1541, %v1529
    %v1986 = vpack.c.b16 %v1542, %v1530
    %v1987 = vpack.c.b16 %v1543, %v1531
    %v1988 = vpack.c.b16 %v1544, %v1532
    %v1989 = vpack.c.b16 %v1545, %v1533
    %v1990 = vpack.c.b16 %v1546, %v1534
    %v1991 = vpack.c.b16 %v1547, %v1535
    %v1992 = vpack.c.b16 %v1548, %v1536
    %v1993 = vpack.c.b16 %v1549, %v1537
    %v1994 = vpack.c.b16 %v1562, %v1550
    %v1995 = vpack.c.b16 %v1563, %v1551
    %v1996 = vpack.c.b16 %v1564, %v1552
    %v1997 = vpack.c.b16 %v1565, %v1553
    %v1998 = vpack.c.b16 %v1566, %v1554
    %v1999 = vpack.c.b16 %v1567, %v1555
    %v2000 = vpack.c.b16 %v1568, %v1556
    %v2001 = vpack.c.b16 %v1569, %v1557
    %v2002 = vpack.c.b16 %v1570, %v1558
    %v2003 = vpack.c.b16 %v1571, %v1559
    %v2004 = vpack.c.b16 %v1572, %v1560
    %v2005 = vpack.c.b16 %v1573, %v1561
    %v2006 = vpack.c.b16 %v1586, %v1574
    %v2007 = vpack.c.b16 %v1587, %v1575
    %v2008 = vpack.c.b16 %v1588, %v1576
    %v2009 = vpack.c.b16 %v1589, %v1577
    %v2010 = vpack.c.b16 %v1590, %v1578
    %v2011 = vpack.c.b16 %v1591, %v1579
    %v2012 = vpack.c.b16 %v1592, %v1580
    %v2013 = vpack.c.b16 %v1593, %v1581
    %v2014 = vpack.c.b16 %v1594, %v1582
    %v2015 = vpack.c.b16 %v1595, %v1583
    %v2016 = vpack.c.b16 %v1596, %v1584
    %v2017 = vpack.c.b16 %v1597, %v1585
    %v2018 = vpack.c.b16 %v1610, %v1598
    %v2019 = vpack.c.b16 %v1611, %v1599
    %v2020 = vpack.c.b16 %v1612, %v1600
    %v2021 = vpack.c.b16 %v1613, %v1601
    %v2022 = vpack.c.b16 %v1614, %v1602
    %v2023 = vpack.c.b16 %v1615, %v1603
    %v2024 = vpack.c.b16 %v1616, %v1604
    %v2025 = vpack.c.b16 %v1617, %v1605
    %v2026 = vpack.c.b16 %v1618, %v1606
    %v2027 = vpack.c.b16 %v1619, %v1607
    %v2028 = vpack.c.b16 %v1620, %v1608
    %v2029 = vpack.c.b16 %v1621, %v1609
    %v2030 = vpack.c.b16 %v1634, %v1622
    %v2031 = vpack.c.b16 %v1635, %v1623
    %v2032 = vpack.c.b16 %v1636, %v1624
    %v2033 = vpack.c.b16 %v1637, %v1625
    %v2034 = vpack.c.b16 %v1638, %v1626
    %v2035 = vpack.c.b16 %v1639, %v1627
    %v2036 = vpack.c.b16 %v1640, %v1628
    %v2037 = vpack.c.b16 %v1641, %v1629
    %v2038 = vpack.c.b16 %v1642, %v1630
    %v2039 = vpack.c.b16 %v1643, %v1631
    %v2040 = vpack.c.b16 %v1644, %v1632
    %v2041 = vpack.c.b16 %v1645, %v1633
    %v2042 = vpack.c.b16 %v1658, %v1646
    %v2043 = vpack.c.b16 %v1659, %v1647
    %v2044 = vpack.c.b16 %v1660, %v1648
    %v2045 = vpack.c.b16 %v1661, %v1649
    %v2046 = vpack.c.b16 %v1662, %v1650
    %v2047 = vpack.c.b16 %v1663, %v1651
    %v2048 = vpack.c.b16 %v1664, %v1652
    %v2049 = vpack.c.b16 %v1665, %v1653
    %v2050 = vpack.c.b16 %v1666, %v1654
    %v2051 = vpack.c.b16 %v1667, %v1655
    %v2052 = vpack.c.b16 %v1668, %v1656
    %v2053 = vpack.c.b16 %v1669, %v1657
    %2438 = vmatprep.subr.bf16.mxu0 %v1755
    %2439 = vmatpush1.bf16.msra.mxu0 %v1754
    %2440 = vmatprep.subr.bf16.mxu0 %v1743
    %2441 = vmatpush1.bf16.msra.mxu0 %v1742
    %2442 = vmatprep.subr.bf16.mxu0 %v1731
    %2443 = vmatpush1.bf16.msra.mxu0 %v1730
    %2444 = vmatprep.subr.bf16.mxu0 %v1719
    %2445 = vmatpush1.bf16.msra.mxu0 %v1718
    %2446 = vmatprep.subr.bf16.mxu0 %v1707
    %2447 = vmatpush1.bf16.msra.mxu0 %v1706
    %2448 = vmatprep.subr.bf16.mxu0 %v1695
    %2449 = vmatpush1.bf16.msra.mxu0 %v1694
    %2450 = vmatprep.subr.bf16.mxu0 %v1683
    %2451 = vmatpush1.bf16.msra.mxu0 %v1682
    %2452 = vmatprep.subr.bf16.mxu0 %v1671
    %2453 = vmatpush1.bf16.msra.mxu0 %v1670
    %2454 = vmatprep.subr.bf16.mxu0 %v1851
    %2455 = vmatpush2.bf16.msra.mxu0 %v1850
    %2456 = vmatprep.subr.bf16.mxu0 %v1839
    %2457 = vmatpush2.bf16.msra.mxu0 %v1838
    %2458 = vmatprep.subr.bf16.mxu0 %v1827
    %2459 = vmatpush2.bf16.msra.mxu0 %v1826
    %2460 = vmatprep.subr.bf16.mxu0 %v1815
    %2461 = vmatpush2.bf16.msra.mxu0 %v1814
    %2462 = vmatprep.subr.bf16.mxu0 %v1803
    %2463 = vmatpush2.bf16.msra.mxu0 %v1802
    %2464 = vmatprep.subr.bf16.mxu0 %v1791
    %2465 = vmatpush2.bf16.msra.mxu0 %v1790
    %2466 = vmatprep.subr.bf16.mxu0 %v1779
    %2467 = vmatpush2.bf16.msra.mxu0 %v1778
    %2468 = vmatprep.subr.bf16.mxu0 %v1767
    %2469 = vmatpush2.bf16.msra.mxu0 %v1766
    %2470 = vmatprep.mubr.bf16.mxu0 %v131
    %2471 = vmatmul.mubr.bf16.gmra.mxu0 %v130
    %v2472 = vpop.f32.mrf.mxu0
    %v2473 = vadd.f32 0.0, %v2472
    %v2474 = vpop.f32.mrf.mxu0
    %v2475 = vadd.f32 0.0, %v2474
    %v2476 = vpop.f32.mrf.mxu0
    %v2477 = vadd.f32 0.0, %v2476
    %v2478 = vpop.f32.mrf.mxu0
    %v2479 = vadd.f32 0.0, %v2478
    %2480 = vdwg.mxu0
    %2481 = vmatprep.subr.bf16.mxu0 %v1947
    %2482 = vmatpush1.bf16.msra.mxu0 %v1946
    %2483 = vmatprep.subr.bf16.mxu0 %v1935
    %2484 = vmatpush1.bf16.msra.mxu0 %v1934
    %2485 = vmatprep.subr.bf16.mxu0 %v1923
    %2486 = vmatpush1.bf16.msra.mxu0 %v1922
    %2487 = vmatprep.subr.bf16.mxu0 %v1911
    %2488 = vmatpush1.bf16.msra.mxu0 %v1910
    %2489 = vmatprep.subr.bf16.mxu0 %v1899
    %2490 = vmatpush1.bf16.msra.mxu0 %v1898
    %2491 = vmatprep.subr.bf16.mxu0 %v1887
    %2492 = vmatpush1.bf16.msra.mxu0 %v1886
    %2493 = vmatprep.subr.bf16.mxu0 %v1875
    %2494 = vmatpush1.bf16.msra.mxu0 %v1874
    %2495 = vmatprep.subr.bf16.mxu0 %v1863
    %2496 = vmatpush1.bf16.msra.mxu0 %v1862
    %2497 = vmatprep.subr.bf16.mxu0 %v2043
    %2498 = vmatpush2.bf16.msra.mxu0 %v2042
    %2499 = vmatprep.subr.bf16.mxu0 %v2031
    %2500 = vmatpush2.bf16.msra.mxu0 %v2030
    %2501 = vmatprep.subr.bf16.mxu0 %v2019
    %2502 = vmatpush2.bf16.msra.mxu0 %v2018
    %2503 = vmatprep.subr.bf16.mxu0 %v2007
    %2504 = vmatpush2.bf16.msra.mxu0 %v2006
    %2505 = vmatprep.subr.bf16.mxu0 %v1995
    %2506 = vmatpush2.bf16.msra.mxu0 %v1994
    %2507 = vmatprep.subr.bf16.mxu0 %v1983
    %2508 = vmatpush2.bf16.msra.mxu0 %v1982
    %2509 = vmatprep.subr.bf16.mxu0 %v1971
    %2510 = vmatpush2.bf16.msra.mxu0 %v1970
    %2511 = vmatprep.subr.bf16.mxu0 %v1959
    %2512 = vmatpush2.bf16.msra.mxu0 %v1958
    %2513 = vmatprep.mubr.bf16.mxu0 %v133
    %2514 = vmatmul.mubr.bf16.gmra.mxu0 %v132
    %v2515 = vpop.f32.mrf.mxu0
    %v2516 = vadd.f32 %v2473, %v2515
    %v2517 = vpop.f32.mrf.mxu0
    %v2518 = vadd.f32 %v2475, %v2517
    %v2519 = vpop.f32.mrf.mxu0
    %v2520 = vadd.f32 %v2477, %v2519
    %v2521 = vpop.f32.mrf.mxu0
    %v2522 = vadd.f32 %v2479, %v2521
    %2523 = vdwg.mxu0
    %2524 = vmatprep.subr.bf16.mxu0 %v1757
    %2525 = vmatpush1.bf16.msra.mxu0 %v1756
    %2526 = vmatprep.subr.bf16.mxu0 %v1745
    %2527 = vmatpush1.bf16.msra.mxu0 %v1744
    %2528 = vmatprep.subr.bf16.mxu0 %v1733
    %2529 = vmatpush1.bf16.msra.mxu0 %v1732
    %2530 = vmatprep.subr.bf16.mxu0 %v1721
    %2531 = vmatpush1.bf16.msra.mxu0 %v1720
    %2532 = vmatprep.subr.bf16.mxu0 %v1709
    %2533 = vmatpush1.bf16.msra.mxu0 %v1708
    %2534 = vmatprep.subr.bf16.mxu0 %v1697
    %2535 = vmatpush1.bf16.msra.mxu0 %v1696
    %2536 = vmatprep.subr.bf16.mxu0 %v1685
    %2537 = vmatpush1.bf16.msra.mxu0 %v1684
    %2538 = vmatprep.subr.bf16.mxu0 %v1673
    %2539 = vmatpush1.bf16.msra.mxu0 %v1672
    %2540 = vmatprep.subr.bf16.mxu0 %v1853
    %2541 = vmatpush2.bf16.msra.mxu0 %v1852
    %2542 = vmatprep.subr.bf16.mxu0 %v1841
    %2543 = vmatpush2.bf16.msra.mxu0 %v1840
    %2544 = vmatprep.subr.bf16.mxu0 %v1829
    %2545 = vmatpush2.bf16.msra.mxu0 %v1828
    %2546 = vmatprep.subr.bf16.mxu0 %v1817
    %2547 = vmatpush2.bf16.msra.mxu0 %v1816
    %2548 = vmatprep.subr.bf16.mxu0 %v1805
    %2549 = vmatpush2.bf16.msra.mxu0 %v1804
    %2550 = vmatprep.subr.bf16.mxu0 %v1793
    %2551 = vmatpush2.bf16.msra.mxu0 %v1792
    %2552 = vmatprep.subr.bf16.mxu0 %v1781
    %2553 = vmatpush2.bf16.msra.mxu0 %v1780
    %2554 = vmatprep.subr.bf16.mxu0 %v1769
    %2555 = vmatpush2.bf16.msra.mxu0 %v1768
    %2556 = vmatprep.mubr.bf16.mxu0 %v131
    %2557 = vmatmul.mubr.bf16.gmra.mxu0 %v130
    %v2558 = vpop.f32.mrf.mxu0
    %v2559 = vadd.f32 0.0, %v2558
    %v2560 = vpop.f32.mrf.mxu0
    %v2561 = vadd.f32 0.0, %v2560
    %v2562 = vpop.f32.mrf.mxu0
    %v2563 = vadd.f32 0.0, %v2562
    %v2564 = vpop.f32.mrf.mxu0
    %v2565 = vadd.f32 0.0, %v2564
    %2566 = vdwg.mxu0
    %2567 = vmatprep.subr.bf16.mxu0 %v1949
    %2568 = vmatpush1.bf16.msra.mxu0 %v1948
    %2569 = vmatprep.subr.bf16.mxu0 %v1937
    %2570 = vmatpush1.bf16.msra.mxu0 %v1936
    %2571 = vmatprep.subr.bf16.mxu0 %v1925
    %2572 = vmatpush1.bf16.msra.mxu0 %v1924
    %2573 = vmatprep.subr.bf16.mxu0 %v1913
    %2574 = vmatpush1.bf16.msra.mxu0 %v1912
    %2575 = vmatprep.subr.bf16.mxu0 %v1901
    %2576 = vmatpush1.bf16.msra.mxu0 %v1900
    %2577 = vmatprep.subr.bf16.mxu0 %v1889
    %2578 = vmatpush1.bf16.msra.mxu0 %v1888
    %2579 = vmatprep.subr.bf16.mxu0 %v1877
    %2580 = vmatpush1.bf16.msra.mxu0 %v1876
    %2581 = vmatprep.subr.bf16.mxu0 %v1865
    %2582 = vmatpush1.bf16.msra.mxu0 %v1864
    %2583 = vmatprep.subr.bf16.mxu0 %v2045
    %2584 = vmatpush2.bf16.msra.mxu0 %v2044
    %2585 = vmatprep.subr.bf16.mxu0 %v2033
    %2586 = vmatpush2.bf16.msra.mxu0 %v2032
    %2587 = vmatprep.subr.bf16.mxu0 %v2021
    %2588 = vmatpush2.bf16.msra.mxu0 %v2020
    %2589 = vmatprep.subr.bf16.mxu0 %v2009
    %2590 = vmatpush2.bf16.msra.mxu0 %v2008
    %2591 = vmatprep.subr.bf16.mxu0 %v1997
    %2592 = vmatpush2.bf16.msra.mxu0 %v1996
    %2593 = vmatprep.subr.bf16.mxu0 %v1985
    %2594 = vmatpush2.bf16.msra.mxu0 %v1984
    %2595 = vmatprep.subr.bf16.mxu0 %v1973
    %2596 = vmatpush2.bf16.msra.mxu0 %v1972
    %2597 = vmatprep.subr.bf16.mxu0 %v1961
    %2598 = vmatpush2.bf16.msra.mxu0 %v1960
    %2599 = vmatprep.mubr.bf16.mxu0 %v133
    %2600 = vmatmul.mubr.bf16.gmra.mxu0 %v132
    %v2601 = vpop.f32.mrf.mxu0
    %v2602 = vadd.f32 %v2559, %v2601
    %v2603 = vpop.f32.mrf.mxu0
    %v2604 = vadd.f32 %v2561, %v2603
    %v2605 = vpop.f32.mrf.mxu0
    %v2606 = vadd.f32 %v2563, %v2605
    %v2607 = vpop.f32.mrf.mxu0
    %v2608 = vadd.f32 %v2565, %v2607
    %2609 = vdwg.mxu0
    %2610 = vmatprep.subr.bf16.mxu0 %v1759
    %2611 = vmatpush1.bf16.msra.mxu0 %v1758
    %2612 = vmatprep.subr.bf16.mxu0 %v1747
    %2613 = vmatpush1.bf16.msra.mxu0 %v1746
    %2614 = vmatprep.subr.bf16.mxu0 %v1735
    %2615 = vmatpush1.bf16.msra.mxu0 %v1734
    %2616 = vmatprep.subr.bf16.mxu0 %v1723
    %2617 = vmatpush1.bf16.msra.mxu0 %v1722
    %2618 = vmatprep.subr.bf16.mxu0 %v1711
    %2619 = vmatpush1.bf16.msra.mxu0 %v1710
    %2620 = vmatprep.subr.bf16.mxu0 %v1699
    %2621 = vmatpush1.bf16.msra.mxu0 %v1698
    %2622 = vmatprep.subr.bf16.mxu0 %v1687
    %2623 = vmatpush1.bf16.msra.mxu0 %v1686
    %2624 = vmatprep.subr.bf16.mxu0 %v1675
    %2625 = vmatpush1.bf16.msra.mxu0 %v1674
    %2626 = vmatprep.subr.bf16.mxu0 %v1855
    %2627 = vmatpush2.bf16.msra.mxu0 %v1854
    %2628 = vmatprep.subr.bf16.mxu0 %v1843
    %2629 = vmatpush2.bf16.msra.mxu0 %v1842
    %2630 = vmatprep.subr.bf16.mxu0 %v1831
    %2631 = vmatpush2.bf16.msra.mxu0 %v1830
    %2632 = vmatprep.subr.bf16.mxu0 %v1819
    %2633 = vmatpush2.bf16.msra.mxu0 %v1818
    %2634 = vmatprep.subr.bf16.mxu0 %v1807
    %2635 = vmatpush2.bf16.msra.mxu0 %v1806
    %2636 = vmatprep.subr.bf16.mxu0 %v1795
    %2637 = vmatpush2.bf16.msra.mxu0 %v1794
    %2638 = vmatprep.subr.bf16.mxu0 %v1783
    %2639 = vmatpush2.bf16.msra.mxu0 %v1782
    %2640 = vmatprep.subr.bf16.mxu0 %v1771
    %2641 = vmatpush2.bf16.msra.mxu0 %v1770
    %2642 = vmatprep.mubr.bf16.mxu0 %v131
    %2643 = vmatmul.mubr.bf16.gmra.mxu0 %v130
    %v2644 = vpop.f32.mrf.mxu0
    %v2645 = vadd.f32 0.0, %v2644
    %v2646 = vpop.f32.mrf.mxu0
    %v2647 = vadd.f32 0.0, %v2646
    %v2648 = vpop.f32.mrf.mxu0
    %v2649 = vadd.f32 0.0, %v2648
    %v2650 = vpop.f32.mrf.mxu0
    %v2651 = vadd.f32 0.0, %v2650
    %2652 = vdwg.mxu0
    %2653 = vmatprep.subr.bf16.mxu0 %v1951
    %2654 = vmatpush1.bf16.msra.mxu0 %v1950
    %2655 = vmatprep.subr.bf16.mxu0 %v1939
    %2656 = vmatpush1.bf16.msra.mxu0 %v1938
    %2657 = vmatprep.subr.bf16.mxu0 %v1927
    %2658 = vmatpush1.bf16.msra.mxu0 %v1926
    %2659 = vmatprep.subr.bf16.mxu0 %v1915
    %2660 = vmatpush1.bf16.msra.mxu0 %v1914
    %2661 = vmatprep.subr.bf16.mxu0 %v1903
    %2662 = vmatpush1.bf16.msra.mxu0 %v1902
    %2663 = vmatprep.subr.bf16.mxu0 %v1891
    %2664 = vmatpush1.bf16.msra.mxu0 %v1890
    %2665 = vmatprep.subr.bf16.mxu0 %v1879
    %2666 = vmatpush1.bf16.msra.mxu0 %v1878
    %2667 = vmatprep.subr.bf16.mxu0 %v1867
    %2668 = vmatpush1.bf16.msra.mxu0 %v1866
    %2669 = vmatprep.subr.bf16.mxu0 %v2047
    %2670 = vmatpush2.bf16.msra.mxu0 %v2046
    %2671 = vmatprep.subr.bf16.mxu0 %v2035
    %2672 = vmatpush2.bf16.msra.mxu0 %v2034
    %2673 = vmatprep.subr.bf16.mxu0 %v2023
    %2674 = vmatpush2.bf16.msra.mxu0 %v2022
    %2675 = vmatprep.subr.bf16.mxu0 %v2011
    %2676 = vmatpush2.bf16.msra.mxu0 %v2010
    %2677 = vmatprep.subr.bf16.mxu0 %v1999
    %2678 = vmatpush2.bf16.msra.mxu0 %v1998
    %2679 = vmatprep.subr.bf16.mxu0 %v1987
    %2680 = vmatpush2.bf16.msra.mxu0 %v1986
    %2681 = vmatprep.subr.bf16.mxu0 %v1975
    %2682 = vmatpush2.bf16.msra.mxu0 %v1974
    %2683 = vmatprep.subr.bf16.mxu0 %v1963
    %2684 = vmatpush2.bf16.msra.mxu0 %v1962
    %2685 = vmatprep.mubr.bf16.mxu0 %v133
    %2686 = vmatmul.mubr.bf16.gmra.mxu0 %v132
    %v2687 = vpop.f32.mrf.mxu0
    %v2688 = vadd.f32 %v2645, %v2687
    %v2689 = vpop.f32.mrf.mxu0
    %v2690 = vadd.f32 %v2647, %v2689
    %v2691 = vpop.f32.mrf.mxu0
    %v2692 = vadd.f32 %v2649, %v2691
    %v2693 = vpop.f32.mrf.mxu0
    %v2694 = vadd.f32 %v2651, %v2693
    %2695 = vdwg.mxu0
    %2696 = vmatprep.subr.bf16.mxu0 %v1761
    %2697 = vmatpush1.bf16.msra.mxu0 %v1760
    %2698 = vmatprep.subr.bf16.mxu0 %v1749
    %2699 = vmatpush1.bf16.msra.mxu0 %v1748
    %2700 = vmatprep.subr.bf16.mxu0 %v1737
    %2701 = vmatpush1.bf16.msra.mxu0 %v1736
    %2702 = vmatprep.subr.bf16.mxu0 %v1725
    %2703 = vmatpush1.bf16.msra.mxu0 %v1724
    %2704 = vmatprep.subr.bf16.mxu0 %v1713
    %2705 = vmatpush1.bf16.msra.mxu0 %v1712
    %2706 = vmatprep.subr.bf16.mxu0 %v1701
    %2707 = vmatpush1.bf16.msra.mxu0 %v1700
    %2708 = vmatprep.subr.bf16.mxu0 %v1689
    %2709 = vmatpush1.bf16.msra.mxu0 %v1688
    %2710 = vmatprep.subr.bf16.mxu0 %v1677
    %2711 = vmatpush1.bf16.msra.mxu0 %v1676
    %2712 = vmatprep.subr.bf16.mxu0 %v1857
    %2713 = vmatpush2.bf16.msra.mxu0 %v1856
    %2714 = vmatprep.subr.bf16.mxu0 %v1845
    %2715 = vmatpush2.bf16.msra.mxu0 %v1844
    %2716 = vmatprep.subr.bf16.mxu0 %v1833
    %2717 = vmatpush2.bf16.msra.mxu0 %v1832
    %2718 = vmatprep.subr.bf16.mxu0 %v1821
    %2719 = vmatpush2.bf16.msra.mxu0 %v1820
    %2720 = vmatprep.subr.bf16.mxu0 %v1809
    %2721 = vmatpush2.bf16.msra.mxu0 %v1808
    %2722 = vmatprep.subr.bf16.mxu0 %v1797
    %2723 = vmatpush2.bf16.msra.mxu0 %v1796
    %2724 = vmatprep.subr.bf16.mxu0 %v1785
    %2725 = vmatpush2.bf16.msra.mxu0 %v1784
    %2726 = vmatprep.subr.bf16.mxu0 %v1773
    %2727 = vmatpush2.bf16.msra.mxu0 %v1772
    %2728 = vmatprep.mubr.bf16.mxu0 %v131
    %2729 = vmatmul.mubr.bf16.gmra.mxu0 %v130
    %v2730 = vpop.f32.mrf.mxu0
    %v2731 = vadd.f32 0.0, %v2730
    %v2732 = vpop.f32.mrf.mxu0
    %v2733 = vadd.f32 0.0, %v2732
    %v2734 = vpop.f32.mrf.mxu0
    %v2735 = vadd.f32 0.0, %v2734
    %v2736 = vpop.f32.mrf.mxu0
    %v2737 = vadd.f32 0.0, %v2736
    %2738 = vdwg.mxu0
    %2739 = vmatprep.subr.bf16.mxu0 %v1953
    %2740 = vmatpush1.bf16.msra.mxu0 %v1952
    %2741 = vmatprep.subr.bf16.mxu0 %v1941
    %2742 = vmatpush1.bf16.msra.mxu0 %v1940
    %2743 = vmatprep.subr.bf16.mxu0 %v1929
    %2744 = vmatpush1.bf16.msra.mxu0 %v1928
    %2745 = vmatprep.subr.bf16.mxu0 %v1917
    %2746 = vmatpush1.bf16.msra.mxu0 %v1916
    %2747 = vmatprep.subr.bf16.mxu0 %v1905
    %2748 = vmatpush1.bf16.msra.mxu0 %v1904
    %2749 = vmatprep.subr.bf16.mxu0 %v1893
    %2750 = vmatpush1.bf16.msra.mxu0 %v1892
    %2751 = vmatprep.subr.bf16.mxu0 %v1881
    %2752 = vmatpush1.bf16.msra.mxu0 %v1880
    %2753 = vmatprep.subr.bf16.mxu0 %v1869
    %2754 = vmatpush1.bf16.msra.mxu0 %v1868
    %2755 = vmatprep.subr.bf16.mxu0 %v2049
    %2756 = vmatpush2.bf16.msra.mxu0 %v2048
    %2757 = vmatprep.subr.bf16.mxu0 %v2037
    %2758 = vmatpush2.bf16.msra.mxu0 %v2036
    %2759 = vmatprep.subr.bf16.mxu0 %v2025
    %2760 = vmatpush2.bf16.msra.mxu0 %v2024
    %2761 = vmatprep.subr.bf16.mxu0 %v2013
    %2762 = vmatpush2.bf16.msra.mxu0 %v2012
    %2763 = vmatprep.subr.bf16.mxu0 %v2001
    %2764 = vmatpush2.bf16.msra.mxu0 %v2000
    %2765 = vmatprep.subr.bf16.mxu0 %v1989
    %2766 = vmatpush2.bf16.msra.mxu0 %v1988
    %2767 = vmatprep.subr.bf16.mxu0 %v1977
    %2768 = vmatpush2.bf16.msra.mxu0 %v1976
    %2769 = vmatprep.subr.bf16.mxu0 %v1965
    %2770 = vmatpush2.bf16.msra.mxu0 %v1964
    %2771 = vmatprep.mubr.bf16.mxu0 %v133
    %2772 = vmatmul.mubr.bf16.gmra.mxu0 %v132
    %v2773 = vpop.f32.mrf.mxu0
    %v2774 = vadd.f32 %v2731, %v2773
    %v2775 = vpop.f32.mrf.mxu0
    %v2776 = vadd.f32 %v2733, %v2775
    %v2777 = vpop.f32.mrf.mxu0
    %v2778 = vadd.f32 %v2735, %v2777
    %v2779 = vpop.f32.mrf.mxu0
    %v2780 = vadd.f32 %v2737, %v2779
    %2781 = vdwg.mxu0
    %2782 = vmatprep.subr.bf16.mxu0 %v1763
    %2783 = vmatpush1.bf16.msra.mxu0 %v1762
    %2784 = vmatprep.subr.bf16.mxu0 %v1751
    %2785 = vmatpush1.bf16.msra.mxu0 %v1750
    %2786 = vmatprep.subr.bf16.mxu0 %v1739
    %2787 = vmatpush1.bf16.msra.mxu0 %v1738
    %2788 = vmatprep.subr.bf16.mxu0 %v1727
    %2789 = vmatpush1.bf16.msra.mxu0 %v1726
    %2790 = vmatprep.subr.bf16.mxu0 %v1715
    %2791 = vmatpush1.bf16.msra.mxu0 %v1714
    %2792 = vmatprep.subr.bf16.mxu0 %v1703
    %2793 = vmatpush1.bf16.msra.mxu0 %v1702
    %2794 = vmatprep.subr.bf16.mxu0 %v1691
    %2795 = vmatpush1.bf16.msra.mxu0 %v1690
    %2796 = vmatprep.subr.bf16.mxu0 %v1679
    %2797 = vmatpush1.bf16.msra.mxu0 %v1678
    %2798 = vmatprep.subr.bf16.mxu0 %v1859
    %2799 = vmatpush2.bf16.msra.mxu0 %v1858
    %2800 = vmatprep.subr.bf16.mxu0 %v1847
    %2801 = vmatpush2.bf16.msra.mxu0 %v1846
    %2802 = vmatprep.subr.bf16.mxu0 %v1835
    %2803 = vmatpush2.bf16.msra.mxu0 %v1834
    %2804 = vmatprep.subr.bf16.mxu0 %v1823
    %2805 = vmatpush2.bf16.msra.mxu0 %v1822
    %2806 = vmatprep.subr.bf16.mxu0 %v1811
    %2807 = vmatpush2.bf16.msra.mxu0 %v1810
    %2808 = vmatprep.subr.bf16.mxu0 %v1799
    %2809 = vmatpush2.bf16.msra.mxu0 %v1798
    %2810 = vmatprep.subr.bf16.mxu0 %v1787
    %2811 = vmatpush2.bf16.msra.mxu0 %v1786
    %2812 = vmatprep.subr.bf16.mxu0 %v1775
    %2813 = vmatpush2.bf16.msra.mxu0 %v1774
    %2814 = vmatprep.mubr.bf16.mxu0 %v131
    %2815 = vmatmul.mubr.bf16.gmra.mxu0 %v130
    %v2816 = vpop.f32.mrf.mxu0
    %v2817 = vadd.f32 0.0, %v2816
    %v2818 = vpop.f32.mrf.mxu0
    %v2819 = vadd.f32 0.0, %v2818
    %v2820 = vpop.f32.mrf.mxu0
    %v2821 = vadd.f32 0.0, %v2820
    %v2822 = vpop.f32.mrf.mxu0
    %v2823 = vadd.f32 0.0, %v2822
    %2824 = vdwg.mxu0
    %2825 = vmatprep.subr.bf16.mxu0 %v1955
    %2826 = vmatpush1.bf16.msra.mxu0 %v1954
    %2827 = vmatprep.subr.bf16.mxu0 %v1943
    %2828 = vmatpush1.bf16.msra.mxu0 %v1942
    %2829 = vmatprep.subr.bf16.mxu0 %v1931
    %2830 = vmatpush1.bf16.msra.mxu0 %v1930
    %2831 = vmatprep.subr.bf16.mxu0 %v1919
    %2832 = vmatpush1.bf16.msra.mxu0 %v1918
    %2833 = vmatprep.subr.bf16.mxu0 %v1907
    %2834 = vmatpush1.bf16.msra.mxu0 %v1906
    %2835 = vmatprep.subr.bf16.mxu0 %v1895
    %2836 = vmatpush1.bf16.msra.mxu0 %v1894
    %2837 = vmatprep.subr.bf16.mxu0 %v1883
    %2838 = vmatpush1.bf16.msra.mxu0 %v1882
    %2839 = vmatprep.subr.bf16.mxu0 %v1871
    %2840 = vmatpush1.bf16.msra.mxu0 %v1870
    %2841 = vmatprep.subr.bf16.mxu0 %v2051
    %2842 = vmatpush2.bf16.msra.mxu0 %v2050
    %2843 = vmatprep.subr.bf16.mxu0 %v2039
    %2844 = vmatpush2.bf16.msra.mxu0 %v2038
    %2845 = vmatprep.subr.bf16.mxu0 %v2027
    %2846 = vmatpush2.bf16.msra.mxu0 %v2026
    %2847 = vmatprep.subr.bf16.mxu0 %v2015
    %2848 = vmatpush2.bf16.msra.mxu0 %v2014
    %2849 = vmatprep.subr.bf16.mxu0 %v2003
    %2850 = vmatpush2.bf16.msra.mxu0 %v2002
    %2851 = vmatprep.subr.bf16.mxu0 %v1991
    %2852 = vmatpush2.bf16.msra.mxu0 %v1990
    %2853 = vmatprep.subr.bf16.mxu0 %v1979
    %2854 = vmatpush2.bf16.msra.mxu0 %v1978
    %2855 = vmatprep.subr.bf16.mxu0 %v1967
    %2856 = vmatpush2.bf16.msra.mxu0 %v1966
    %2857 = vmatprep.mubr.bf16.mxu0 %v133
    %2858 = vmatmul.mubr.bf16.gmra.mxu0 %v132
    %v2859 = vpop.f32.mrf.mxu0
    %v2860 = vadd.f32 %v2817, %v2859
    %v2861 = vpop.f32.mrf.mxu0
    %v2862 = vadd.f32 %v2819, %v2861
    %v2863 = vpop.f32.mrf.mxu0
    %v2864 = vadd.f32 %v2821, %v2863
    %v2865 = vpop.f32.mrf.mxu0
    %v2866 = vadd.f32 %v2823, %v2865
    %2867 = vdwg.mxu0
    %2868 = vmatprep.subr.bf16.mxu0 %v1765
    %2869 = vmatpush1.bf16.msra.mxu0 %v1764
    %2870 = vmatprep.subr.bf16.mxu0 %v1753
    %2871 = vmatpush1.bf16.msra.mxu0 %v1752
    %2872 = vmatprep.subr.bf16.mxu0 %v1741
    %2873 = vmatpush1.bf16.msra.mxu0 %v1740
    %2874 = vmatprep.subr.bf16.mxu0 %v1729
    %2875 = vmatpush1.bf16.msra.mxu0 %v1728
    %2876 = vmatprep.subr.bf16.mxu0 %v1717
    %2877 = vmatpush1.bf16.msra.mxu0 %v1716
    %2878 = vmatprep.subr.bf16.mxu0 %v1705
    %2879 = vmatpush1.bf16.msra.mxu0 %v1704
    %2880 = vmatprep.subr.bf16.mxu0 %v1693
    %2881 = vmatpush1.bf16.msra.mxu0 %v1692
    %2882 = vmatprep.subr.bf16.mxu0 %v1681
    %2883 = vmatpush1.bf16.msra.mxu0 %v1680
    %2884 = vmatprep.subr.bf16.mxu0 %v1861
    %2885 = vmatpush2.bf16.msra.mxu0 %v1860
    %2886 = vmatprep.subr.bf16.mxu0 %v1849
    %2887 = vmatpush2.bf16.msra.mxu0 %v1848
    %2888 = vmatprep.subr.bf16.mxu0 %v1837
    %2889 = vmatpush2.bf16.msra.mxu0 %v1836
    %2890 = vmatprep.subr.bf16.mxu0 %v1825
    %2891 = vmatpush2.bf16.msra.mxu0 %v1824
    %2892 = vmatprep.subr.bf16.mxu0 %v1813
    %2893 = vmatpush2.bf16.msra.mxu0 %v1812
    %2894 = vmatprep.subr.bf16.mxu0 %v1801
    %2895 = vmatpush2.bf16.msra.mxu0 %v1800
    %2896 = vmatprep.subr.bf16.mxu0 %v1789
    %2897 = vmatpush2.bf16.msra.mxu0 %v1788
    %2898 = vmatprep.subr.bf16.mxu0 %v1777
    %2899 = vmatpush2.bf16.msra.mxu0 %v1776
    %2900 = vmatprep.mubr.bf16.mxu0 %v131
    %2901 = vmatmul.mubr.bf16.gmra.mxu0 %v130
    %v2902 = vpop.f32.mrf.mxu0
    %v2903 = vadd.f32 0.0, %v2902
    %v2904 = vpop.f32.mrf.mxu0
    %v2905 = vadd.f32 0.0, %v2904
    %v2906 = vpop.f32.mrf.mxu0
    %v2907 = vadd.f32 0.0, %v2906
    %v2908 = vpop.f32.mrf.mxu0
    %v2909 = vadd.f32 0.0, %v2908
    %2910 = vdwg.mxu0
    %2911 = vmatprep.subr.bf16.mxu0 %v1957
    %2912 = vmatpush1.bf16.msra.mxu0 %v1956
    %2913 = vmatprep.subr.bf16.mxu0 %v1945
    %2914 = vmatpush1.bf16.msra.mxu0 %v1944
    %2915 = vmatprep.subr.bf16.mxu0 %v1933
    %2916 = vmatpush1.bf16.msra.mxu0 %v1932
    %2917 = vmatprep.subr.bf16.mxu0 %v1921
    %2918 = vmatpush1.bf16.msra.mxu0 %v1920
    %2919 = vmatprep.subr.bf16.mxu0 %v1909
    %2920 = vmatpush1.bf16.msra.mxu0 %v1908
    %2921 = vmatprep.subr.bf16.mxu0 %v1897
    %2922 = vmatpush1.bf16.msra.mxu0 %v1896
    %2923 = vmatprep.subr.bf16.mxu0 %v1885
    %2924 = vmatpush1.bf16.msra.mxu0 %v1884
    %2925 = vmatprep.subr.bf16.mxu0 %v1873
    %2926 = vmatpush1.bf16.msra.mxu0 %v1872
    %2927 = vmatprep.subr.bf16.mxu0 %v2053
    %2928 = vmatpush2.bf16.msra.mxu0 %v2052
    %2929 = vmatprep.subr.bf16.mxu0 %v2041
    %2930 = vmatpush2.bf16.msra.mxu0 %v2040
    %2931 = vmatprep.subr.bf16.mxu0 %v2029
    %2932 = vmatpush2.bf16.msra.mxu0 %v2028
    %2933 = vmatprep.subr.bf16.mxu0 %v2017
    %2934 = vmatpush2.bf16.msra.mxu0 %v2016
    %2935 = vmatprep.subr.bf16.mxu0 %v2005
    %2936 = vmatpush2.bf16.msra.mxu0 %v2004
    %2937 = vmatprep.subr.bf16.mxu0 %v1993
    %2938 = vmatpush2.bf16.msra.mxu0 %v1992
    %2939 = vmatprep.subr.bf16.mxu0 %v1981
    %2940 = vmatpush2.bf16.msra.mxu0 %v1980
    %2941 = vmatprep.subr.bf16.mxu0 %v1969
    %2942 = vmatpush2.bf16.msra.mxu0 %v1968
    %2943 = vmatprep.mubr.bf16.mxu0 %v133
    %2944 = vmatmul.mubr.bf16.gmra.mxu0 %v132
    %v2945 = vpop.f32.mrf.mxu0
    %v2946 = vadd.f32 %v2903, %v2945
    %v2947 = vpop.f32.mrf.mxu0
    %v2948 = vadd.f32 %v2905, %v2947
    %v2949 = vpop.f32.mrf.mxu0
    %v2950 = vadd.f32 %v2907, %v2949
    %v2951 = vpop.f32.mrf.mxu0
    %v2952 = vadd.f32 %v2909, %v2951
    %2953 = vdwg.mxu0
    %2956 = vrot.lane.b32.xlu0 %v2516, 64
    %v2957 = vpop.permute.xlu0 %2956
    %2958 = vrot.lane.b32.xlu0 %v2520, 64
    %v2959 = vpop.permute.xlu0 %2958
    %2964 = vrot.lane.b32.xlu0 %v2518, 64
    %v2965 = vpop.permute.xlu0 %2964
    %2966 = vrot.lane.b32.xlu0 %v2522, 64
    %v2967 = vpop.permute.xlu0 %2966
    %2972 = vrot.lane.b32.xlu0 %v2602, 64
    %v2973 = vpop.permute.xlu0 %2972
    %2974 = vrot.lane.b32.xlu0 %v2606, 64
    %v2975 = vpop.permute.xlu0 %2974
    %2980 = vrot.lane.b32.xlu0 %v2604, 64
    %v2981 = vpop.permute.xlu0 %2980
    %2982 = vrot.lane.b32.xlu0 %v2608, 64
    %v2983 = vpop.permute.xlu0 %2982
    %2986 = vrot.lane.b32.xlu0 %v2516, 96
    %v2987 = vpop.permute.xlu0 %2986
    %2988 = vrot.lane.b32.xlu0 %v2520, 96
    %v2989 = vpop.permute.xlu0 %2988
    %2992 = vrot.lane.b32.xlu0 %v2516, 32
    %v2993 = vpop.permute.xlu0 %2992
    %2994 = vrot.lane.b32.xlu0 %v2520, 32
    %v2995 = vpop.permute.xlu0 %2994
    %2998 = vrot.lane.b32.xlu0 %v2518, 96
    %v2999 = vpop.permute.xlu0 %2998
    %3000 = vrot.lane.b32.xlu0 %v2522, 96
    %v3001 = vpop.permute.xlu0 %3000
    %3004 = vrot.lane.b32.xlu0 %v2518, 32
    %v3005 = vpop.permute.xlu0 %3004
    %3006 = vrot.lane.b32.xlu0 %v2522, 32
    %v3007 = vpop.permute.xlu0 %3006
    %3010 = vrot.lane.b32.xlu0 %v2602, 96
    %v3011 = vpop.permute.xlu0 %3010
    %3012 = vrot.lane.b32.xlu0 %v2606, 96
    %v3013 = vpop.permute.xlu0 %3012
    %3016 = vrot.lane.b32.xlu0 %v2602, 32
    %v3017 = vpop.permute.xlu0 %3016
    %3018 = vrot.lane.b32.xlu0 %v2606, 32
    %v3019 = vpop.permute.xlu0 %3018
    %3022 = vrot.lane.b32.xlu0 %v2604, 96
    %v3023 = vpop.permute.xlu0 %3022
    %3024 = vrot.lane.b32.xlu0 %v2608, 96
    %v3025 = vpop.permute.xlu0 %3024
    %3028 = vrot.lane.b32.xlu0 %v2604, 32
    %v3029 = vpop.permute.xlu0 %3028
    %3030 = vrot.lane.b32.xlu0 %v2608, 32
    %v3031 = vpop.permute.xlu0 %3030
    %3036 = vrot.lane.b32.xlu0 %v2688, 64
    %v3037 = vpop.permute.xlu0 %3036
    %3038 = vrot.lane.b32.xlu0 %v2692, 64
    %v3039 = vpop.permute.xlu0 %3038
    %3044 = vrot.lane.b32.xlu0 %v2690, 64
    %v3045 = vpop.permute.xlu0 %3044
    %3046 = vrot.lane.b32.xlu0 %v2694, 64
    %v3047 = vpop.permute.xlu0 %3046
    %3052 = vrot.lane.b32.xlu0 %v2774, 64
    %v3053 = vpop.permute.xlu0 %3052
    %3054 = vrot.lane.b32.xlu0 %v2778, 64
    %v3055 = vpop.permute.xlu0 %3054
    %3060 = vrot.lane.b32.xlu0 %v2776, 64
    %v3061 = vpop.permute.xlu0 %3060
    %3062 = vrot.lane.b32.xlu0 %v2780, 64
    %v3063 = vpop.permute.xlu0 %3062
    %3066 = vrot.lane.b32.xlu0 %v2688, 96
    %v3067 = vpop.permute.xlu0 %3066
    %3068 = vrot.lane.b32.xlu0 %v2692, 96
    %v3069 = vpop.permute.xlu0 %3068
    %3072 = vrot.lane.b32.xlu0 %v2688, 32
    %v3073 = vpop.permute.xlu0 %3072
    %3074 = vrot.lane.b32.xlu0 %v2692, 32
    %v3075 = vpop.permute.xlu0 %3074
    %3078 = vrot.lane.b32.xlu0 %v2690, 96
    %v3079 = vpop.permute.xlu0 %3078
    %3080 = vrot.lane.b32.xlu0 %v2694, 96
    %v3081 = vpop.permute.xlu0 %3080
    %3084 = vrot.lane.b32.xlu0 %v2690, 32
    %v3085 = vpop.permute.xlu0 %3084
    %3086 = vrot.lane.b32.xlu0 %v2694, 32
    %v3087 = vpop.permute.xlu0 %3086
    %3090 = vrot.lane.b32.xlu0 %v2774, 96
    %v3091 = vpop.permute.xlu0 %3090
    %3092 = vrot.lane.b32.xlu0 %v2778, 96
    %v3093 = vpop.permute.xlu0 %3092
    %3096 = vrot.lane.b32.xlu0 %v2774, 32
    %v3097 = vpop.permute.xlu0 %3096
    %3098 = vrot.lane.b32.xlu0 %v2778, 32
    %v3099 = vpop.permute.xlu0 %3098
    %3102 = vrot.lane.b32.xlu0 %v2776, 96
    %v3103 = vpop.permute.xlu0 %3102
    %3104 = vrot.lane.b32.xlu0 %v2780, 96
    %v3105 = vpop.permute.xlu0 %3104
    %3108 = vrot.lane.b32.xlu0 %v2776, 32
    %v3109 = vpop.permute.xlu0 %3108
    %3110 = vrot.lane.b32.xlu0 %v2780, 32
    %v3111 = vpop.permute.xlu0 %3110
    %v3114 = vpack.c.bf16 %v2516, %v2516
    %v3115 = vpack.c.bf16 %v2520, %v2520
    %v3116 = vpack.c.bf16 %v2957, %v2957
    %v3117 = vpack.c.bf16 %v2959, %v2959
    %v3118 = vpack.c.bf16 %v2518, %v2518
    %v3119 = vpack.c.bf16 %v2522, %v2522
    %v3120 = vpack.c.bf16 %v2965, %v2965
    %v3121 = vpack.c.bf16 %v2967, %v2967
    %v3122 = vpack.c.bf16 %v2602, %v2602
    %v3123 = vpack.c.bf16 %v2606, %v2606
    %v3124 = vpack.c.bf16 %v2973, %v2973
    %v3125 = vpack.c.bf16 %v2975, %v2975
    %v3126 = vpack.c.bf16 %v2604, %v2604
    %v3127 = vpack.c.bf16 %v2608, %v2608
    %v3128 = vpack.c.bf16 %v2981, %v2981
    %v3129 = vpack.c.bf16 %v2983, %v2983
    %v3130 = vpack.c.bf16 %v2987, %v2987
    %v3131 = vpack.c.bf16 %v2989, %v2989
    %v3132 = vpack.c.bf16 %v2993, %v2993
    %v3133 = vpack.c.bf16 %v2995, %v2995
    %v3134 = vpack.c.bf16 %v2999, %v2999
    %v3135 = vpack.c.bf16 %v3001, %v3001
    %v3136 = vpack.c.bf16 %v3005, %v3005
    %v3137 = vpack.c.bf16 %v3007, %v3007
    %v3138 = vpack.c.bf16 %v3011, %v3011
    %v3139 = vpack.c.bf16 %v3013, %v3013
    %v3140 = vpack.c.bf16 %v3017, %v3017
    %v3141 = vpack.c.bf16 %v3019, %v3019
    %v3142 = vpack.c.bf16 %v3023, %v3023
    %v3143 = vpack.c.bf16 %v3025, %v3025
    %v3144 = vpack.c.bf16 %v3029, %v3029
    %v3145 = vpack.c.bf16 %v3031, %v3031
    %v3146 = vpack.c.bf16 %v2688, %v2688
    %v3147 = vpack.c.bf16 %v2692, %v2692
    %v3148 = vpack.c.bf16 %v3037, %v3037
    %v3149 = vpack.c.bf16 %v3039, %v3039
    %v3150 = vpack.c.bf16 %v2690, %v2690
    %v3151 = vpack.c.bf16 %v2694, %v2694
    %v3152 = vpack.c.bf16 %v3045, %v3045
    %v3153 = vpack.c.bf16 %v3047, %v3047
    %v3154 = vpack.c.bf16 %v2774, %v2774
    %v3155 = vpack.c.bf16 %v2778, %v2778
    %v3156 = vpack.c.bf16 %v3053, %v3053
    %v3157 = vpack.c.bf16 %v3055, %v3055
    %v3158 = vpack.c.bf16 %v2776, %v2776
    %v3159 = vpack.c.bf16 %v2780, %v2780
    %v3160 = vpack.c.bf16 %v3061, %v3061
    %v3161 = vpack.c.bf16 %v3063, %v3063
    %v3162 = vpack.c.bf16 %v3067, %v3067
    %v3163 = vpack.c.bf16 %v3069, %v3069
    %v3164 = vpack.c.bf16 %v3073, %v3073
    %v3165 = vpack.c.bf16 %v3075, %v3075
    %v3166 = vpack.c.bf16 %v3079, %v3079
    %v3167 = vpack.c.bf16 %v3081, %v3081
    %v3168 = vpack.c.bf16 %v3085, %v3085
    %v3169 = vpack.c.bf16 %v3087, %v3087
    %v3170 = vpack.c.bf16 %v3091, %v3091
    %v3171 = vpack.c.bf16 %v3093, %v3093
    %v3172 = vpack.c.bf16 %v3097, %v3097
    %v3173 = vpack.c.bf16 %v3099, %v3099
    %v3174 = vpack.c.bf16 %v3103, %v3103
    %v3175 = vpack.c.bf16 %v3105, %v3105
    %v3176 = vpack.c.bf16 %v3109, %v3109
    %v3177 = vpack.c.bf16 %v3111, %v3111
    %vm3178 = vcmask 261120
    %v3180 = vsel %vm3178, %v3114, 0
    %v3183 = vsel %vm3178, %v3146, 0
    %3185 = vmatprep.subr.bf16.mxu0 0
    %3186 = vmatpush1.bf16.xpose.msra.mxu0 0
    %3187 = vmatprep.subr.bf16.mxu0 0
    %3188 = vmatpush1.bf16.xpose.msra.mxu0 0
    %3189 = vmatprep.subr.bf16.mxu0 0
    %3190 = vmatpush1.bf16.xpose.msra.mxu0 0
    %3191 = vmatprep.subr.bf16.mxu0 0
    %3192 = vmatpush1.bf16.xpose.msra.mxu0 0
    %3193 = vmatprep.subr.bf16.mxu0 0
    %3194 = vmatpush1.bf16.xpose.msra.mxu0 0
    %3195 = vmatprep.subr.bf16.mxu0 0
    %3196 = vmatpush1.bf16.xpose.msra.mxu0 0
    %3197 = vmatprep.subr.bf16.mxu0 0
    %3198 = vmatpush1.bf16.xpose.msra.mxu0 0
    %3199 = vmatprep.subr.bf16.mxu0 0
    %3200 = vmatpush1.bf16.xpose.msra.mxu0 %v3183
    %3201 = vmatprep.subr.bf16.mxu0 0
    %3202 = vmatpush2.bf16.xpose.msra.mxu0 0
    %3203 = vmatprep.subr.bf16.mxu0 0
    %3204 = vmatpush2.bf16.xpose.msra.mxu0 0
    %3205 = vmatprep.subr.bf16.mxu0 0
    %3206 = vmatpush2.bf16.xpose.msra.mxu0 0
    %3207 = vmatprep.subr.bf16.mxu0 0
    %3208 = vmatpush2.bf16.xpose.msra.mxu0 0
    %3209 = vmatprep.subr.bf16.mxu0 0
    %3210 = vmatpush2.bf16.xpose.msra.mxu0 0
    %3211 = vmatprep.subr.bf16.mxu0 0
    %3212 = vmatpush2.bf16.xpose.msra.mxu0 0
    %3213 = vmatprep.subr.bf16.mxu0 0
    %3214 = vmatpush2.bf16.xpose.msra.mxu0 0
    %3215 = vmatprep.subr.bf16.mxu0 0
    %3216 = vmatpush2.bf16.xpose.msra.mxu0 0
    %3217 = vmatprep.mubr.bf16.mxu0 0
    %3218 = vmatmul.mubr.bf16.gmra.mxu0 %v3180
    %v3219 = vpop.f32.mrf.mxu0
    %v3220 = vadd.f32 0.0, %v3219
    %v3221 = vpop.f32.mrf.mxu0
    %v3222 = vpop.f32.mrf.mxu0
    %v3223 = vpop.f32.mrf.mxu0
    %3224 = vdwg.mxu0
    %v3226 = vsel %vm3178, %v3115, 0
    %v3229 = vsel %vm3178, %v3147, 0
    %3231 = vmatprep.subr.bf16.mxu0 0
    %3232 = vmatpush1.bf16.xpose.msra.mxu0 0
    %3233 = vmatprep.subr.bf16.mxu0 0
    %3234 = vmatpush1.bf16.xpose.msra.mxu0 0
    %3235 = vmatprep.subr.bf16.mxu0 0
    %3236 = vmatpush1.bf16.xpose.msra.mxu0 0
    %3237 = vmatprep.subr.bf16.mxu0 0
    %3238 = vmatpush1.bf16.xpose.msra.mxu0 0
    %3239 = vmatprep.subr.bf16.mxu0 0
    %3240 = vmatpush1.bf16.xpose.msra.mxu0 0
    %3241 = vmatprep.subr.bf16.mxu0 0
    %3242 = vmatpush1.bf16.xpose.msra.mxu0 0
    %3243 = vmatprep.subr.bf16.mxu0 0
    %3244 = vmatpush1.bf16.xpose.msra.mxu0 0
    %3245 = vmatprep.subr.bf16.mxu0 0
    %3246 = vmatpush1.bf16.xpose.msra.mxu0 %v3229
    %3247 = vmatprep.subr.bf16.mxu0 0
    %3248 = vmatpush2.bf16.xpose.msra.mxu0 0
    %3249 = vmatprep.subr.bf16.mxu0 0
    %3250 = vmatpush2.bf16.xpose.msra.mxu0 0
    %3251 = vmatprep.subr.bf16.mxu0 0
    %3252 = vmatpush2.bf16.xpose.msra.mxu0 0
    %3253 = vmatprep.subr.bf16.mxu0 0
    %3254 = vmatpush2.bf16.xpose.msra.mxu0 0
    %3255 = vmatprep.subr.bf16.mxu0 0
    %3256 = vmatpush2.bf16.xpose.msra.mxu0 0
    %3257 = vmatprep.subr.bf16.mxu0 0
    %3258 = vmatpush2.bf16.xpose.msra.mxu0 0
    %3259 = vmatprep.subr.bf16.mxu0 0
    %3260 = vmatpush2.bf16.xpose.msra.mxu0 0
    %3261 = vmatprep.subr.bf16.mxu0 0
    %3262 = vmatpush2.bf16.xpose.msra.mxu0 0
    %3263 = vmatprep.mubr.bf16.mxu0 0
    %3264 = vmatmul.mubr.bf16.gmra.mxu0 %v3226
    %v3265 = vpop.f32.mrf.mxu0
    %v3266 = vadd.f32 0.0, %v3265
    %v3267 = vpop.f32.mrf.mxu0
    %v3268 = vpop.f32.mrf.mxu0
    %v3269 = vpop.f32.mrf.mxu0
    %3270 = vdwg.mxu0
    %v3272 = vsel %vm3178, %v3116, 0
    %v3275 = vsel %vm3178, %v3148, 0
    %3277 = vmatprep.subr.bf16.mxu0 0
    %3278 = vmatpush1.bf16.xpose.msra.mxu0 0
    %3279 = vmatprep.subr.bf16.mxu0 0
    %3280 = vmatpush1.bf16.xpose.msra.mxu0 0
    %3281 = vmatprep.subr.bf16.mxu0 0
    %3282 = vmatpush1.bf16.xpose.msra.mxu0 0
    %3283 = vmatprep.subr.bf16.mxu0 0
    %3284 = vmatpush1.bf16.xpose.msra.mxu0 0
    %3285 = vmatprep.subr.bf16.mxu0 0
    %3286 = vmatpush1.bf16.xpose.msra.mxu0 0
    %3287 = vmatprep.subr.bf16.mxu0 0
    %3288 = vmatpush1.bf16.xpose.msra.mxu0 0
    %3289 = vmatprep.subr.bf16.mxu0 0
    %3290 = vmatpush1.bf16.xpose.msra.mxu0 0
    %3291 = vmatprep.subr.bf16.mxu0 0
    %3292 = vmatpush1.bf16.xpose.msra.mxu0 %v3275
    %3293 = vmatprep.subr.bf16.mxu0 0
    %3294 = vmatpush2.bf16.xpose.msra.mxu0 0
    %3295 = vmatprep.subr.bf16.mxu0 0
    %3296 = vmatpush2.bf16.xpose.msra.mxu0 0
    %3297 = vmatprep.subr.bf16.mxu0 0
    %3298 = vmatpush2.bf16.xpose.msra.mxu0 0
    %3299 = vmatprep.subr.bf16.mxu0 0
    %3300 = vmatpush2.bf16.xpose.msra.mxu0 0
    %3301 = vmatprep.subr.bf16.mxu0 0
    %3302 = vmatpush2.bf16.xpose.msra.mxu0 0
    %3303 = vmatprep.subr.bf16.mxu0 0
    %3304 = vmatpush2.bf16.xpose.msra.mxu0 0
    %3305 = vmatprep.subr.bf16.mxu0 0
    %3306 = vmatpush2.bf16.xpose.msra.mxu0 0
    %3307 = vmatprep.subr.bf16.mxu0 0
    %3308 = vmatpush2.bf16.xpose.msra.mxu0 0
    %3309 = vmatprep.mubr.bf16.mxu0 0
    %3310 = vmatmul.mubr.bf16.gmra.mxu0 %v3272
    %v3311 = vpop.f32.mrf.mxu0
    %v3312 = vadd.f32 0.0, %v3311
    %v3313 = vpop.f32.mrf.mxu0
    %v3314 = vpop.f32.mrf.mxu0
    %v3315 = vpop.f32.mrf.mxu0
    %3316 = vdwg.mxu0
    %v3318 = vsel %vm3178, %v3117, 0
    %v3321 = vsel %vm3178, %v3149, 0
    %3323 = vmatprep.subr.bf16.mxu0 0
    %3324 = vmatpush1.bf16.xpose.msra.mxu0 0
    %3325 = vmatprep.subr.bf16.mxu0 0
    %3326 = vmatpush1.bf16.xpose.msra.mxu0 0
    %3327 = vmatprep.subr.bf16.mxu0 0
    %3328 = vmatpush1.bf16.xpose.msra.mxu0 0
    %3329 = vmatprep.subr.bf16.mxu0 0
    %3330 = vmatpush1.bf16.xpose.msra.mxu0 0
    %3331 = vmatprep.subr.bf16.mxu0 0
    %3332 = vmatpush1.bf16.xpose.msra.mxu0 0
    %3333 = vmatprep.subr.bf16.mxu0 0
    %3334 = vmatpush1.bf16.xpose.msra.mxu0 0
    %3335 = vmatprep.subr.bf16.mxu0 0
    %3336 = vmatpush1.bf16.xpose.msra.mxu0 0
    %3337 = vmatprep.subr.bf16.mxu0 0
    %3338 = vmatpush1.bf16.xpose.msra.mxu0 %v3321
    %3339 = vmatprep.subr.bf16.mxu0 0
    %3340 = vmatpush2.bf16.xpose.msra.mxu0 0
    %3341 = vmatprep.subr.bf16.mxu0 0
    %3342 = vmatpush2.bf16.xpose.msra.mxu0 0
    %3343 = vmatprep.subr.bf16.mxu0 0
    %3344 = vmatpush2.bf16.xpose.msra.mxu0 0
    %3345 = vmatprep.subr.bf16.mxu0 0
    %3346 = vmatpush2.bf16.xpose.msra.mxu0 0
    %3347 = vmatprep.subr.bf16.mxu0 0
    %3348 = vmatpush2.bf16.xpose.msra.mxu0 0
    %3349 = vmatprep.subr.bf16.mxu0 0
    %3350 = vmatpush2.bf16.xpose.msra.mxu0 0
    %3351 = vmatprep.subr.bf16.mxu0 0
    %3352 = vmatpush2.bf16.xpose.msra.mxu0 0
    %3353 = vmatprep.subr.bf16.mxu0 0
    %3354 = vmatpush2.bf16.xpose.msra.mxu0 0
    %3355 = vmatprep.mubr.bf16.mxu0 0
    %3356 = vmatmul.mubr.bf16.gmra.mxu0 %v3318
    %v3357 = vpop.f32.mrf.mxu0
    %v3358 = vadd.f32 0.0, %v3357
    %v3359 = vpop.f32.mrf.mxu0
    %v3360 = vpop.f32.mrf.mxu0
    %v3361 = vpop.f32.mrf.mxu0
    %3362 = vdwg.mxu0
    %v3364 = vsel %vm3178, %v3118, 0
    %v3367 = vsel %vm3178, %v3150, 0
    %3369 = vmatprep.subr.bf16.mxu0 0
    %3370 = vmatpush1.bf16.xpose.msra.mxu0 0
    %3371 = vmatprep.subr.bf16.mxu0 0
    %3372 = vmatpush1.bf16.xpose.msra.mxu0 0
    %3373 = vmatprep.subr.bf16.mxu0 0
    %3374 = vmatpush1.bf16.xpose.msra.mxu0 0
    %3375 = vmatprep.subr.bf16.mxu0 0
    %3376 = vmatpush1.bf16.xpose.msra.mxu0 0
    %3377 = vmatprep.subr.bf16.mxu0 0
    %3378 = vmatpush1.bf16.xpose.msra.mxu0 0
    %3379 = vmatprep.subr.bf16.mxu0 0
    %3380 = vmatpush1.bf16.xpose.msra.mxu0 0
    %3381 = vmatprep.subr.bf16.mxu0 0
    %3382 = vmatpush1.bf16.xpose.msra.mxu0 0
    %3383 = vmatprep.subr.bf16.mxu0 0
    %3384 = vmatpush1.bf16.xpose.msra.mxu0 %v3367
    %3385 = vmatprep.subr.bf16.mxu0 0
    %3386 = vmatpush2.bf16.xpose.msra.mxu0 0
    %3387 = vmatprep.subr.bf16.mxu0 0
    %3388 = vmatpush2.bf16.xpose.msra.mxu0 0
    %3389 = vmatprep.subr.bf16.mxu0 0
    %3390 = vmatpush2.bf16.xpose.msra.mxu0 0
    %3391 = vmatprep.subr.bf16.mxu0 0
    %3392 = vmatpush2.bf16.xpose.msra.mxu0 0
    %3393 = vmatprep.subr.bf16.mxu0 0
    %3394 = vmatpush2.bf16.xpose.msra.mxu0 0
    %3395 = vmatprep.subr.bf16.mxu0 0
    %3396 = vmatpush2.bf16.xpose.msra.mxu0 0
    %3397 = vmatprep.subr.bf16.mxu0 0
    %3398 = vmatpush2.bf16.xpose.msra.mxu0 0
    %3399 = vmatprep.subr.bf16.mxu0 0
    %3400 = vmatpush2.bf16.xpose.msra.mxu0 0
    %3401 = vmatprep.mubr.bf16.mxu0 0
    %3402 = vmatmul.mubr.bf16.gmra.mxu0 %v3364
    %v3403 = vpop.f32.mrf.mxu0
    %v3404 = vadd.f32 0.0, %v3403
    %v3405 = vpop.f32.mrf.mxu0
    %v3406 = vpop.f32.mrf.mxu0
    %v3407 = vpop.f32.mrf.mxu0
    %3408 = vdwg.mxu0
    %v3410 = vsel %vm3178, %v3119, 0
    %v3413 = vsel %vm3178, %v3151, 0
    %3415 = vmatprep.subr.bf16.mxu0 0
    %3416 = vmatpush1.bf16.xpose.msra.mxu0 0
    %3417 = vmatprep.subr.bf16.mxu0 0
    %3418 = vmatpush1.bf16.xpose.msra.mxu0 0
    %3419 = vmatprep.subr.bf16.mxu0 0
    %3420 = vmatpush1.bf16.xpose.msra.mxu0 0
    %3421 = vmatprep.subr.bf16.mxu0 0
    %3422 = vmatpush1.bf16.xpose.msra.mxu0 0
    %3423 = vmatprep.subr.bf16.mxu0 0
    %3424 = vmatpush1.bf16.xpose.msra.mxu0 0
    %3425 = vmatprep.subr.bf16.mxu0 0
    %3426 = vmatpush1.bf16.xpose.msra.mxu0 0
    %3427 = vmatprep.subr.bf16.mxu0 0
    %3428 = vmatpush1.bf16.xpose.msra.mxu0 0
    %3429 = vmatprep.subr.bf16.mxu0 0
    %3430 = vmatpush1.bf16.xpose.msra.mxu0 %v3413
    %3431 = vmatprep.subr.bf16.mxu0 0
    %3432 = vmatpush2.bf16.xpose.msra.mxu0 0
    %3433 = vmatprep.subr.bf16.mxu0 0
    %3434 = vmatpush2.bf16.xpose.msra.mxu0 0
    %3435 = vmatprep.subr.bf16.mxu0 0
    %3436 = vmatpush2.bf16.xpose.msra.mxu0 0
    %3437 = vmatprep.subr.bf16.mxu0 0
    %3438 = vmatpush2.bf16.xpose.msra.mxu0 0
    %3439 = vmatprep.subr.bf16.mxu0 0
    %3440 = vmatpush2.bf16.xpose.msra.mxu0 0
    %3441 = vmatprep.subr.bf16.mxu0 0
    %3442 = vmatpush2.bf16.xpose.msra.mxu0 0
    %3443 = vmatprep.subr.bf16.mxu0 0
    %3444 = vmatpush2.bf16.xpose.msra.mxu0 0
    %3445 = vmatprep.subr.bf16.mxu0 0
    %3446 = vmatpush2.bf16.xpose.msra.mxu0 0
    %3447 = vmatprep.mubr.bf16.mxu0 0
    %3448 = vmatmul.mubr.bf16.gmra.mxu0 %v3410
    %v3449 = vpop.f32.mrf.mxu0
    %v3450 = vadd.f32 0.0, %v3449
    %v3451 = vpop.f32.mrf.mxu0
    %v3452 = vpop.f32.mrf.mxu0
    %v3453 = vpop.f32.mrf.mxu0
    %3454 = vdwg.mxu0
    %v3456 = vsel %vm3178, %v3120, 0
    %v3459 = vsel %vm3178, %v3152, 0
    %3461 = vmatprep.subr.bf16.mxu0 0
    %3462 = vmatpush1.bf16.xpose.msra.mxu0 0
    %3463 = vmatprep.subr.bf16.mxu0 0
    %3464 = vmatpush1.bf16.xpose.msra.mxu0 0
    %3465 = vmatprep.subr.bf16.mxu0 0
    %3466 = vmatpush1.bf16.xpose.msra.mxu0 0
    %3467 = vmatprep.subr.bf16.mxu0 0
    %3468 = vmatpush1.bf16.xpose.msra.mxu0 0
    %3469 = vmatprep.subr.bf16.mxu0 0
    %3470 = vmatpush1.bf16.xpose.msra.mxu0 0
    %3471 = vmatprep.subr.bf16.mxu0 0
    %3472 = vmatpush1.bf16.xpose.msra.mxu0 0
    %3473 = vmatprep.subr.bf16.mxu0 0
    %3474 = vmatpush1.bf16.xpose.msra.mxu0 0
    %3475 = vmatprep.subr.bf16.mxu0 0
    %3476 = vmatpush1.bf16.xpose.msra.mxu0 %v3459
    %3477 = vmatprep.subr.bf16.mxu0 0
    %3478 = vmatpush2.bf16.xpose.msra.mxu0 0
    %3479 = vmatprep.subr.bf16.mxu0 0
    %3480 = vmatpush2.bf16.xpose.msra.mxu0 0
    %3481 = vmatprep.subr.bf16.mxu0 0
    %3482 = vmatpush2.bf16.xpose.msra.mxu0 0
    %3483 = vmatprep.subr.bf16.mxu0 0
    %3484 = vmatpush2.bf16.xpose.msra.mxu0 0
    %3485 = vmatprep.subr.bf16.mxu0 0
    %3486 = vmatpush2.bf16.xpose.msra.mxu0 0
    %3487 = vmatprep.subr.bf16.mxu0 0
    %3488 = vmatpush2.bf16.xpose.msra.mxu0 0
    %3489 = vmatprep.subr.bf16.mxu0 0
    %3490 = vmatpush2.bf16.xpose.msra.mxu0 0
    %3491 = vmatprep.subr.bf16.mxu0 0
    %3492 = vmatpush2.bf16.xpose.msra.mxu0 0
    %3493 = vmatprep.mubr.bf16.mxu0 0
    %3494 = vmatmul.mubr.bf16.gmra.mxu0 %v3456
    %v3495 = vpop.f32.mrf.mxu0
    %v3496 = vadd.f32 0.0, %v3495
    %v3497 = vpop.f32.mrf.mxu0
    %v3498 = vpop.f32.mrf.mxu0
    %v3499 = vpop.f32.mrf.mxu0
    %3500 = vdwg.mxu0
    %v3502 = vsel %vm3178, %v3121, 0
    %v3505 = vsel %vm3178, %v3153, 0
    %3507 = vmatprep.subr.bf16.mxu0 0
    %3508 = vmatpush1.bf16.xpose.msra.mxu0 0
    %3509 = vmatprep.subr.bf16.mxu0 0
    %3510 = vmatpush1.bf16.xpose.msra.mxu0 0
    %3511 = vmatprep.subr.bf16.mxu0 0
    %3512 = vmatpush1.bf16.xpose.msra.mxu0 0
    %3513 = vmatprep.subr.bf16.mxu0 0
    %3514 = vmatpush1.bf16.xpose.msra.mxu0 0
    %3515 = vmatprep.subr.bf16.mxu0 0
    %3516 = vmatpush1.bf16.xpose.msra.mxu0 0
    %3517 = vmatprep.subr.bf16.mxu0 0
    %3518 = vmatpush1.bf16.xpose.msra.mxu0 0
    %3519 = vmatprep.subr.bf16.mxu0 0
    %3520 = vmatpush1.bf16.xpose.msra.mxu0 0
    %3521 = vmatprep.subr.bf16.mxu0 0
    %3522 = vmatpush1.bf16.xpose.msra.mxu0 %v3505
    %3523 = vmatprep.subr.bf16.mxu0 0
    %3524 = vmatpush2.bf16.xpose.msra.mxu0 0
    %3525 = vmatprep.subr.bf16.mxu0 0
    %3526 = vmatpush2.bf16.xpose.msra.mxu0 0
    %3527 = vmatprep.subr.bf16.mxu0 0
    %3528 = vmatpush2.bf16.xpose.msra.mxu0 0
    %3529 = vmatprep.subr.bf16.mxu0 0
    %3530 = vmatpush2.bf16.xpose.msra.mxu0 0
    %3531 = vmatprep.subr.bf16.mxu0 0
    %3532 = vmatpush2.bf16.xpose.msra.mxu0 0
    %3533 = vmatprep.subr.bf16.mxu0 0
    %3534 = vmatpush2.bf16.xpose.msra.mxu0 0
    %3535 = vmatprep.subr.bf16.mxu0 0
    %3536 = vmatpush2.bf16.xpose.msra.mxu0 0
    %3537 = vmatprep.subr.bf16.mxu0 0
    %3538 = vmatpush2.bf16.xpose.msra.mxu0 0
    %3539 = vmatprep.mubr.bf16.mxu0 0
    %3540 = vmatmul.mubr.bf16.gmra.mxu0 %v3502
    %v3541 = vpop.f32.mrf.mxu0
    %v3542 = vadd.f32 0.0, %v3541
    %v3543 = vpop.f32.mrf.mxu0
    %v3544 = vpop.f32.mrf.mxu0
    %v3545 = vpop.f32.mrf.mxu0
    %3546 = vdwg.mxu0
    %v3548 = vsel %vm3178, %v3122, 0
    %v3551 = vsel %vm3178, %v3154, 0
    %3553 = vmatprep.subr.bf16.mxu0 0
    %3554 = vmatpush1.bf16.xpose.msra.mxu0 0
    %3555 = vmatprep.subr.bf16.mxu0 0
    %3556 = vmatpush1.bf16.xpose.msra.mxu0 0
    %3557 = vmatprep.subr.bf16.mxu0 0
    %3558 = vmatpush1.bf16.xpose.msra.mxu0 0
    %3559 = vmatprep.subr.bf16.mxu0 0
    %3560 = vmatpush1.bf16.xpose.msra.mxu0 0
    %3561 = vmatprep.subr.bf16.mxu0 0
    %3562 = vmatpush1.bf16.xpose.msra.mxu0 0
    %3563 = vmatprep.subr.bf16.mxu0 0
    %3564 = vmatpush1.bf16.xpose.msra.mxu0 0
    %3565 = vmatprep.subr.bf16.mxu0 0
    %3566 = vmatpush1.bf16.xpose.msra.mxu0 0
    %3567 = vmatprep.subr.bf16.mxu0 0
    %3568 = vmatpush1.bf16.xpose.msra.mxu0 %v3551
    %3569 = vmatprep.subr.bf16.mxu0 0
    %3570 = vmatpush2.bf16.xpose.msra.mxu0 0
    %3571 = vmatprep.subr.bf16.mxu0 0
    %3572 = vmatpush2.bf16.xpose.msra.mxu0 0
    %3573 = vmatprep.subr.bf16.mxu0 0
    %3574 = vmatpush2.bf16.xpose.msra.mxu0 0
    %3575 = vmatprep.subr.bf16.mxu0 0
    %3576 = vmatpush2.bf16.xpose.msra.mxu0 0
    %3577 = vmatprep.subr.bf16.mxu0 0
    %3578 = vmatpush2.bf16.xpose.msra.mxu0 0
    %3579 = vmatprep.subr.bf16.mxu0 0
    %3580 = vmatpush2.bf16.xpose.msra.mxu0 0
    %3581 = vmatprep.subr.bf16.mxu0 0
    %3582 = vmatpush2.bf16.xpose.msra.mxu0 0
    %3583 = vmatprep.subr.bf16.mxu0 0
    %3584 = vmatpush2.bf16.xpose.msra.mxu0 0
    %3585 = vmatprep.mubr.bf16.mxu0 0
    %3586 = vmatmul.mubr.bf16.gmra.mxu0 %v3548
    %v3587 = vpop.f32.mrf.mxu0
    %v3588 = vadd.f32 0.0, %v3587
    %v3589 = vpop.f32.mrf.mxu0
    %v3590 = vpop.f32.mrf.mxu0
    %v3591 = vpop.f32.mrf.mxu0
    %3592 = vdwg.mxu0
    %v3594 = vsel %vm3178, %v3123, 0
    %v3597 = vsel %vm3178, %v3155, 0
    %3599 = vmatprep.subr.bf16.mxu0 0
    %3600 = vmatpush1.bf16.xpose.msra.mxu0 0
    %3601 = vmatprep.subr.bf16.mxu0 0
    %3602 = vmatpush1.bf16.xpose.msra.mxu0 0
    %3603 = vmatprep.subr.bf16.mxu0 0
    %3604 = vmatpush1.bf16.xpose.msra.mxu0 0
    %3605 = vmatprep.subr.bf16.mxu0 0
    %3606 = vmatpush1.bf16.xpose.msra.mxu0 0
    %3607 = vmatprep.subr.bf16.mxu0 0
    %3608 = vmatpush1.bf16.xpose.msra.mxu0 0
    %3609 = vmatprep.subr.bf16.mxu0 0
    %3610 = vmatpush1.bf16.xpose.msra.mxu0 0
    %3611 = vmatprep.subr.bf16.mxu0 0
    %3612 = vmatpush1.bf16.xpose.msra.mxu0 0
    %3613 = vmatprep.subr.bf16.mxu0 0
    %3614 = vmatpush1.bf16.xpose.msra.mxu0 %v3597
    %3615 = vmatprep.subr.bf16.mxu0 0
    %3616 = vmatpush2.bf16.xpose.msra.mxu0 0
    %3617 = vmatprep.subr.bf16.mxu0 0
    %3618 = vmatpush2.bf16.xpose.msra.mxu0 0
    %3619 = vmatprep.subr.bf16.mxu0 0
    %3620 = vmatpush2.bf16.xpose.msra.mxu0 0
    %3621 = vmatprep.subr.bf16.mxu0 0
    %3622 = vmatpush2.bf16.xpose.msra.mxu0 0
    %3623 = vmatprep.subr.bf16.mxu0 0
    %3624 = vmatpush2.bf16.xpose.msra.mxu0 0
    %3625 = vmatprep.subr.bf16.mxu0 0
    %3626 = vmatpush2.bf16.xpose.msra.mxu0 0
    %3627 = vmatprep.subr.bf16.mxu0 0
    %3628 = vmatpush2.bf16.xpose.msra.mxu0 0
    %3629 = vmatprep.subr.bf16.mxu0 0
    %3630 = vmatpush2.bf16.xpose.msra.mxu0 0
    %3631 = vmatprep.mubr.bf16.mxu0 0
    %3632 = vmatmul.mubr.bf16.gmra.mxu0 %v3594
    %v3633 = vpop.f32.mrf.mxu0
    %v3634 = vadd.f32 0.0, %v3633
    %v3635 = vpop.f32.mrf.mxu0
    %v3636 = vpop.f32.mrf.mxu0
    %v3637 = vpop.f32.mrf.mxu0
    %3638 = vdwg.mxu0
    %v3640 = vsel %vm3178, %v3124, 0
    %v3643 = vsel %vm3178, %v3156, 0
    %3645 = vmatprep.subr.bf16.mxu0 0
    %3646 = vmatpush1.bf16.xpose.msra.mxu0 0
    %3647 = vmatprep.subr.bf16.mxu0 0
    %3648 = vmatpush1.bf16.xpose.msra.mxu0 0
    %3649 = vmatprep.subr.bf16.mxu0 0
    %3650 = vmatpush1.bf16.xpose.msra.mxu0 0
    %3651 = vmatprep.subr.bf16.mxu0 0
    %3652 = vmatpush1.bf16.xpose.msra.mxu0 0
    %3653 = vmatprep.subr.bf16.mxu0 0
    %3654 = vmatpush1.bf16.xpose.msra.mxu0 0
    %3655 = vmatprep.subr.bf16.mxu0 0
    %3656 = vmatpush1.bf16.xpose.msra.mxu0 0
    %3657 = vmatprep.subr.bf16.mxu0 0
    %3658 = vmatpush1.bf16.xpose.msra.mxu0 0
    %3659 = vmatprep.subr.bf16.mxu0 0
    %3660 = vmatpush1.bf16.xpose.msra.mxu0 %v3643
    %3661 = vmatprep.subr.bf16.mxu0 0
    %3662 = vmatpush2.bf16.xpose.msra.mxu0 0
    %3663 = vmatprep.subr.bf16.mxu0 0
    %3664 = vmatpush2.bf16.xpose.msra.mxu0 0
    %3665 = vmatprep.subr.bf16.mxu0 0
    %3666 = vmatpush2.bf16.xpose.msra.mxu0 0
    %3667 = vmatprep.subr.bf16.mxu0 0
    %3668 = vmatpush2.bf16.xpose.msra.mxu0 0
    %3669 = vmatprep.subr.bf16.mxu0 0
    %3670 = vmatpush2.bf16.xpose.msra.mxu0 0
    %3671 = vmatprep.subr.bf16.mxu0 0
    %3672 = vmatpush2.bf16.xpose.msra.mxu0 0
    %3673 = vmatprep.subr.bf16.mxu0 0
    %3674 = vmatpush2.bf16.xpose.msra.mxu0 0
    %3675 = vmatprep.subr.bf16.mxu0 0
    %3676 = vmatpush2.bf16.xpose.msra.mxu0 0
    %3677 = vmatprep.mubr.bf16.mxu0 0
    %3678 = vmatmul.mubr.bf16.gmra.mxu0 %v3640
    %v3679 = vpop.f32.mrf.mxu0
    %v3680 = vadd.f32 0.0, %v3679
    %v3681 = vpop.f32.mrf.mxu0
    %v3682 = vpop.f32.mrf.mxu0
    %v3683 = vpop.f32.mrf.mxu0
    %3684 = vdwg.mxu0
    %v3686 = vsel %vm3178, %v3125, 0
    %v3689 = vsel %vm3178, %v3157, 0
    %3691 = vmatprep.subr.bf16.mxu0 0
    %3692 = vmatpush1.bf16.xpose.msra.mxu0 0
    %3693 = vmatprep.subr.bf16.mxu0 0
    %3694 = vmatpush1.bf16.xpose.msra.mxu0 0
    %3695 = vmatprep.subr.bf16.mxu0 0
    %3696 = vmatpush1.bf16.xpose.msra.mxu0 0
    %3697 = vmatprep.subr.bf16.mxu0 0
    %3698 = vmatpush1.bf16.xpose.msra.mxu0 0
    %3699 = vmatprep.subr.bf16.mxu0 0
    %3700 = vmatpush1.bf16.xpose.msra.mxu0 0
    %3701 = vmatprep.subr.bf16.mxu0 0
    %3702 = vmatpush1.bf16.xpose.msra.mxu0 0
    %3703 = vmatprep.subr.bf16.mxu0 0
    %3704 = vmatpush1.bf16.xpose.msra.mxu0 0
    %3705 = vmatprep.subr.bf16.mxu0 0
    %3706 = vmatpush1.bf16.xpose.msra.mxu0 %v3689
    %3707 = vmatprep.subr.bf16.mxu0 0
    %3708 = vmatpush2.bf16.xpose.msra.mxu0 0
    %3709 = vmatprep.subr.bf16.mxu0 0
    %3710 = vmatpush2.bf16.xpose.msra.mxu0 0
    %3711 = vmatprep.subr.bf16.mxu0 0
    %3712 = vmatpush2.bf16.xpose.msra.mxu0 0
    %3713 = vmatprep.subr.bf16.mxu0 0
    %3714 = vmatpush2.bf16.xpose.msra.mxu0 0
    %3715 = vmatprep.subr.bf16.mxu0 0
    %3716 = vmatpush2.bf16.xpose.msra.mxu0 0
    %3717 = vmatprep.subr.bf16.mxu0 0
    %3718 = vmatpush2.bf16.xpose.msra.mxu0 0
    %3719 = vmatprep.subr.bf16.mxu0 0
    %3720 = vmatpush2.bf16.xpose.msra.mxu0 0
    %3721 = vmatprep.subr.bf16.mxu0 0
    %3722 = vmatpush2.bf16.xpose.msra.mxu0 0
    %3723 = vmatprep.mubr.bf16.mxu0 0
    %3724 = vmatmul.mubr.bf16.gmra.mxu0 %v3686
    %v3725 = vpop.f32.mrf.mxu0
    %v3726 = vadd.f32 0.0, %v3725
    %v3727 = vpop.f32.mrf.mxu0
    %v3728 = vpop.f32.mrf.mxu0
    %v3729 = vpop.f32.mrf.mxu0
    %3730 = vdwg.mxu0
    %v3732 = vsel %vm3178, %v3126, 0
    %v3735 = vsel %vm3178, %v3158, 0
    %3737 = vmatprep.subr.bf16.mxu0 0
    %3738 = vmatpush1.bf16.xpose.msra.mxu0 0
    %3739 = vmatprep.subr.bf16.mxu0 0
    %3740 = vmatpush1.bf16.xpose.msra.mxu0 0
    %3741 = vmatprep.subr.bf16.mxu0 0
    %3742 = vmatpush1.bf16.xpose.msra.mxu0 0
    %3743 = vmatprep.subr.bf16.mxu0 0
    %3744 = vmatpush1.bf16.xpose.msra.mxu0 0
    %3745 = vmatprep.subr.bf16.mxu0 0
    %3746 = vmatpush1.bf16.xpose.msra.mxu0 0
    %3747 = vmatprep.subr.bf16.mxu0 0
    %3748 = vmatpush1.bf16.xpose.msra.mxu0 0
    %3749 = vmatprep.subr.bf16.mxu0 0
    %3750 = vmatpush1.bf16.xpose.msra.mxu0 0
    %3751 = vmatprep.subr.bf16.mxu0 0
    %3752 = vmatpush1.bf16.xpose.msra.mxu0 %v3735
    %3753 = vmatprep.subr.bf16.mxu0 0
    %3754 = vmatpush2.bf16.xpose.msra.mxu0 0
    %3755 = vmatprep.subr.bf16.mxu0 0
    %3756 = vmatpush2.bf16.xpose.msra.mxu0 0
    %3757 = vmatprep.subr.bf16.mxu0 0
    %3758 = vmatpush2.bf16.xpose.msra.mxu0 0
    %3759 = vmatprep.subr.bf16.mxu0 0
    %3760 = vmatpush2.bf16.xpose.msra.mxu0 0
    %3761 = vmatprep.subr.bf16.mxu0 0
    %3762 = vmatpush2.bf16.xpose.msra.mxu0 0
    %3763 = vmatprep.subr.bf16.mxu0 0
    %3764 = vmatpush2.bf16.xpose.msra.mxu0 0
    %3765 = vmatprep.subr.bf16.mxu0 0
    %3766 = vmatpush2.bf16.xpose.msra.mxu0 0
    %3767 = vmatprep.subr.bf16.mxu0 0
    %3768 = vmatpush2.bf16.xpose.msra.mxu0 0
    %3769 = vmatprep.mubr.bf16.mxu0 0
    %3770 = vmatmul.mubr.bf16.gmra.mxu0 %v3732
    %v3771 = vpop.f32.mrf.mxu0
    %v3772 = vadd.f32 0.0, %v3771
    %v3773 = vpop.f32.mrf.mxu0
    %v3774 = vpop.f32.mrf.mxu0
    %v3775 = vpop.f32.mrf.mxu0
    %3776 = vdwg.mxu0
    %v3778 = vsel %vm3178, %v3127, 0
    %v3781 = vsel %vm3178, %v3159, 0
    %3783 = vmatprep.subr.bf16.mxu0 0
    %3784 = vmatpush1.bf16.xpose.msra.mxu0 0
    %3785 = vmatprep.subr.bf16.mxu0 0
    %3786 = vmatpush1.bf16.xpose.msra.mxu0 0
    %3787 = vmatprep.subr.bf16.mxu0 0
    %3788 = vmatpush1.bf16.xpose.msra.mxu0 0
    %3789 = vmatprep.subr.bf16.mxu0 0
    %3790 = vmatpush1.bf16.xpose.msra.mxu0 0
    %3791 = vmatprep.subr.bf16.mxu0 0
    %3792 = vmatpush1.bf16.xpose.msra.mxu0 0
    %3793 = vmatprep.subr.bf16.mxu0 0
    %3794 = vmatpush1.bf16.xpose.msra.mxu0 0
    %3795 = vmatprep.subr.bf16.mxu0 0
    %3796 = vmatpush1.bf16.xpose.msra.mxu0 0
    %3797 = vmatprep.subr.bf16.mxu0 0
    %3798 = vmatpush1.bf16.xpose.msra.mxu0 %v3781
    %3799 = vmatprep.subr.bf16.mxu0 0
    %3800 = vmatpush2.bf16.xpose.msra.mxu0 0
    %3801 = vmatprep.subr.bf16.mxu0 0
    %3802 = vmatpush2.bf16.xpose.msra.mxu0 0
    %3803 = vmatprep.subr.bf16.mxu0 0
    %3804 = vmatpush2.bf16.xpose.msra.mxu0 0
    %3805 = vmatprep.subr.bf16.mxu0 0
    %3806 = vmatpush2.bf16.xpose.msra.mxu0 0
    %3807 = vmatprep.subr.bf16.mxu0 0
    %3808 = vmatpush2.bf16.xpose.msra.mxu0 0
    %3809 = vmatprep.subr.bf16.mxu0 0
    %3810 = vmatpush2.bf16.xpose.msra.mxu0 0
    %3811 = vmatprep.subr.bf16.mxu0 0
    %3812 = vmatpush2.bf16.xpose.msra.mxu0 0
    %3813 = vmatprep.subr.bf16.mxu0 0
    %3814 = vmatpush2.bf16.xpose.msra.mxu0 0
    %3815 = vmatprep.mubr.bf16.mxu0 0
    %3816 = vmatmul.mubr.bf16.gmra.mxu0 %v3778
    %v3817 = vpop.f32.mrf.mxu0
    %v3818 = vadd.f32 0.0, %v3817
    %v3819 = vpop.f32.mrf.mxu0
    %v3820 = vpop.f32.mrf.mxu0
    %v3821 = vpop.f32.mrf.mxu0
    %3822 = vdwg.mxu0
    %v3824 = vsel %vm3178, %v3128, 0
    %v3827 = vsel %vm3178, %v3160, 0
    %3829 = vmatprep.subr.bf16.mxu0 0
    %3830 = vmatpush1.bf16.xpose.msra.mxu0 0
    %3831 = vmatprep.subr.bf16.mxu0 0
    %3832 = vmatpush1.bf16.xpose.msra.mxu0 0
    %3833 = vmatprep.subr.bf16.mxu0 0
    %3834 = vmatpush1.bf16.xpose.msra.mxu0 0
    %3835 = vmatprep.subr.bf16.mxu0 0
    %3836 = vmatpush1.bf16.xpose.msra.mxu0 0
    %3837 = vmatprep.subr.bf16.mxu0 0
    %3838 = vmatpush1.bf16.xpose.msra.mxu0 0
    %3839 = vmatprep.subr.bf16.mxu0 0
    %3840 = vmatpush1.bf16.xpose.msra.mxu0 0
    %3841 = vmatprep.subr.bf16.mxu0 0
    %3842 = vmatpush1.bf16.xpose.msra.mxu0 0
    %3843 = vmatprep.subr.bf16.mxu0 0
    %3844 = vmatpush1.bf16.xpose.msra.mxu0 %v3827
    %3845 = vmatprep.subr.bf16.mxu0 0
    %3846 = vmatpush2.bf16.xpose.msra.mxu0 0
    %3847 = vmatprep.subr.bf16.mxu0 0
    %3848 = vmatpush2.bf16.xpose.msra.mxu0 0
    %3849 = vmatprep.subr.bf16.mxu0 0
    %3850 = vmatpush2.bf16.xpose.msra.mxu0 0
    %3851 = vmatprep.subr.bf16.mxu0 0
    %3852 = vmatpush2.bf16.xpose.msra.mxu0 0
    %3853 = vmatprep.subr.bf16.mxu0 0
    %3854 = vmatpush2.bf16.xpose.msra.mxu0 0
    %3855 = vmatprep.subr.bf16.mxu0 0
    %3856 = vmatpush2.bf16.xpose.msra.mxu0 0
    %3857 = vmatprep.subr.bf16.mxu0 0
    %3858 = vmatpush2.bf16.xpose.msra.mxu0 0
    %3859 = vmatprep.subr.bf16.mxu0 0
    %3860 = vmatpush2.bf16.xpose.msra.mxu0 0
    %3861 = vmatprep.mubr.bf16.mxu0 0
    %3862 = vmatmul.mubr.bf16.gmra.mxu0 %v3824
    %v3863 = vpop.f32.mrf.mxu0
    %v3864 = vadd.f32 0.0, %v3863
    %v3865 = vpop.f32.mrf.mxu0
    %v3866 = vpop.f32.mrf.mxu0
    %v3867 = vpop.f32.mrf.mxu0
    %3868 = vdwg.mxu0
    %v3870 = vsel %vm3178, %v3129, 0
    %v3873 = vsel %vm3178, %v3161, 0
    %3875 = vmatprep.subr.bf16.mxu0 0
    %3876 = vmatpush1.bf16.xpose.msra.mxu0 0
    %3877 = vmatprep.subr.bf16.mxu0 0
    %3878 = vmatpush1.bf16.xpose.msra.mxu0 0
    %3879 = vmatprep.subr.bf16.mxu0 0
    %3880 = vmatpush1.bf16.xpose.msra.mxu0 0
    %3881 = vmatprep.subr.bf16.mxu0 0
    %3882 = vmatpush1.bf16.xpose.msra.mxu0 0
    %3883 = vmatprep.subr.bf16.mxu0 0
    %3884 = vmatpush1.bf16.xpose.msra.mxu0 0
    %3885 = vmatprep.subr.bf16.mxu0 0
    %3886 = vmatpush1.bf16.xpose.msra.mxu0 0
    %3887 = vmatprep.subr.bf16.mxu0 0
    %3888 = vmatpush1.bf16.xpose.msra.mxu0 0
    %3889 = vmatprep.subr.bf16.mxu0 0
    %3890 = vmatpush1.bf16.xpose.msra.mxu0 %v3873
    %3891 = vmatprep.subr.bf16.mxu0 0
    %3892 = vmatpush2.bf16.xpose.msra.mxu0 0
    %3893 = vmatprep.subr.bf16.mxu0 0
    %3894 = vmatpush2.bf16.xpose.msra.mxu0 0
    %3895 = vmatprep.subr.bf16.mxu0 0
    %3896 = vmatpush2.bf16.xpose.msra.mxu0 0
    %3897 = vmatprep.subr.bf16.mxu0 0
    %3898 = vmatpush2.bf16.xpose.msra.mxu0 0
    %3899 = vmatprep.subr.bf16.mxu0 0
    %3900 = vmatpush2.bf16.xpose.msra.mxu0 0
    %3901 = vmatprep.subr.bf16.mxu0 0
    %3902 = vmatpush2.bf16.xpose.msra.mxu0 0
    %3903 = vmatprep.subr.bf16.mxu0 0
    %3904 = vmatpush2.bf16.xpose.msra.mxu0 0
    %3905 = vmatprep.subr.bf16.mxu0 0
    %3906 = vmatpush2.bf16.xpose.msra.mxu0 0
    %3907 = vmatprep.mubr.bf16.mxu0 0
    %3908 = vmatmul.mubr.bf16.gmra.mxu0 %v3870
    %v3909 = vpop.f32.mrf.mxu0
    %v3910 = vadd.f32 0.0, %v3909
    %v3911 = vpop.f32.mrf.mxu0
    %v3912 = vpop.f32.mrf.mxu0
    %v3913 = vpop.f32.mrf.mxu0
    %3914 = vdwg.mxu0
    %v3916 = vsel %vm3178, %v3130, 0
    %v3919 = vsel %vm3178, %v3162, 0
    %3921 = vmatprep.subr.bf16.mxu0 0
    %3922 = vmatpush1.bf16.xpose.msra.mxu0 0
    %3923 = vmatprep.subr.bf16.mxu0 0
    %3924 = vmatpush1.bf16.xpose.msra.mxu0 0
    %3925 = vmatprep.subr.bf16.mxu0 0
    %3926 = vmatpush1.bf16.xpose.msra.mxu0 0
    %3927 = vmatprep.subr.bf16.mxu0 0
    %3928 = vmatpush1.bf16.xpose.msra.mxu0 0
    %3929 = vmatprep.subr.bf16.mxu0 0
    %3930 = vmatpush1.bf16.xpose.msra.mxu0 0
    %3931 = vmatprep.subr.bf16.mxu0 0
    %3932 = vmatpush1.bf16.xpose.msra.mxu0 0
    %3933 = vmatprep.subr.bf16.mxu0 0
    %3934 = vmatpush1.bf16.xpose.msra.mxu0 0
    %3935 = vmatprep.subr.bf16.mxu0 0
    %3936 = vmatpush1.bf16.xpose.msra.mxu0 %v3919
    %3937 = vmatprep.subr.bf16.mxu0 0
    %3938 = vmatpush2.bf16.xpose.msra.mxu0 0
    %3939 = vmatprep.subr.bf16.mxu0 0
    %3940 = vmatpush2.bf16.xpose.msra.mxu0 0
    %3941 = vmatprep.subr.bf16.mxu0 0
    %3942 = vmatpush2.bf16.xpose.msra.mxu0 0
    %3943 = vmatprep.subr.bf16.mxu0 0
    %3944 = vmatpush2.bf16.xpose.msra.mxu0 0
    %3945 = vmatprep.subr.bf16.mxu0 0
    %3946 = vmatpush2.bf16.xpose.msra.mxu0 0
    %3947 = vmatprep.subr.bf16.mxu0 0
    %3948 = vmatpush2.bf16.xpose.msra.mxu0 0
    %3949 = vmatprep.subr.bf16.mxu0 0
    %3950 = vmatpush2.bf16.xpose.msra.mxu0 0
    %3951 = vmatprep.subr.bf16.mxu0 0
    %3952 = vmatpush2.bf16.xpose.msra.mxu0 0
    %3953 = vmatprep.mubr.bf16.mxu0 0
    %3954 = vmatmul.mubr.bf16.gmra.mxu0 %v3916
    %v3955 = vpop.f32.mrf.mxu0
    %v3956 = vadd.f32 0.0, %v3955
    %v3957 = vpop.f32.mrf.mxu0
    %v3958 = vpop.f32.mrf.mxu0
    %v3959 = vpop.f32.mrf.mxu0
    %3960 = vdwg.mxu0
    %v3962 = vsel %vm3178, %v3131, 0
    %v3965 = vsel %vm3178, %v3163, 0
    %3967 = vmatprep.subr.bf16.mxu0 0
    %3968 = vmatpush1.bf16.xpose.msra.mxu0 0
    %3969 = vmatprep.subr.bf16.mxu0 0
    %3970 = vmatpush1.bf16.xpose.msra.mxu0 0
    %3971 = vmatprep.subr.bf16.mxu0 0
    %3972 = vmatpush1.bf16.xpose.msra.mxu0 0
    %3973 = vmatprep.subr.bf16.mxu0 0
    %3974 = vmatpush1.bf16.xpose.msra.mxu0 0
    %3975 = vmatprep.subr.bf16.mxu0 0
    %3976 = vmatpush1.bf16.xpose.msra.mxu0 0
    %3977 = vmatprep.subr.bf16.mxu0 0
    %3978 = vmatpush1.bf16.xpose.msra.mxu0 0
    %3979 = vmatprep.subr.bf16.mxu0 0
    %3980 = vmatpush1.bf16.xpose.msra.mxu0 0
    %3981 = vmatprep.subr.bf16.mxu0 0
    %3982 = vmatpush1.bf16.xpose.msra.mxu0 %v3965
    %3983 = vmatprep.subr.bf16.mxu0 0
    %3984 = vmatpush2.bf16.xpose.msra.mxu0 0
    %3985 = vmatprep.subr.bf16.mxu0 0
    %3986 = vmatpush2.bf16.xpose.msra.mxu0 0
    %3987 = vmatprep.subr.bf16.mxu0 0
    %3988 = vmatpush2.bf16.xpose.msra.mxu0 0
    %3989 = vmatprep.subr.bf16.mxu0 0
    %3990 = vmatpush2.bf16.xpose.msra.mxu0 0
    %3991 = vmatprep.subr.bf16.mxu0 0
    %3992 = vmatpush2.bf16.xpose.msra.mxu0 0
    %3993 = vmatprep.subr.bf16.mxu0 0
    %3994 = vmatpush2.bf16.xpose.msra.mxu0 0
    %3995 = vmatprep.subr.bf16.mxu0 0
    %3996 = vmatpush2.bf16.xpose.msra.mxu0 0
    %3997 = vmatprep.subr.bf16.mxu0 0
    %3998 = vmatpush2.bf16.xpose.msra.mxu0 0
    %3999 = vmatprep.mubr.bf16.mxu0 0
    %4000 = vmatmul.mubr.bf16.gmra.mxu0 %v3962
    %v4001 = vpop.f32.mrf.mxu0
    %v4002 = vadd.f32 0.0, %v4001
    %v4003 = vpop.f32.mrf.mxu0
    %v4004 = vpop.f32.mrf.mxu0
    %v4005 = vpop.f32.mrf.mxu0
    %4006 = vdwg.mxu0
    %v4008 = vsel %vm3178, %v3132, 0
    %v4011 = vsel %vm3178, %v3164, 0
    %4013 = vmatprep.subr.bf16.mxu0 0
    %4014 = vmatpush1.bf16.xpose.msra.mxu0 0
    %4015 = vmatprep.subr.bf16.mxu0 0
    %4016 = vmatpush1.bf16.xpose.msra.mxu0 0
    %4017 = vmatprep.subr.bf16.mxu0 0
    %4018 = vmatpush1.bf16.xpose.msra.mxu0 0
    %4019 = vmatprep.subr.bf16.mxu0 0
    %4020 = vmatpush1.bf16.xpose.msra.mxu0 0
    %4021 = vmatprep.subr.bf16.mxu0 0
    %4022 = vmatpush1.bf16.xpose.msra.mxu0 0
    %4023 = vmatprep.subr.bf16.mxu0 0
    %4024 = vmatpush1.bf16.xpose.msra.mxu0 0
    %4025 = vmatprep.subr.bf16.mxu0 0
    %4026 = vmatpush1.bf16.xpose.msra.mxu0 0
    %4027 = vmatprep.subr.bf16.mxu0 0
    %4028 = vmatpush1.bf16.xpose.msra.mxu0 %v4011
    %4029 = vmatprep.subr.bf16.mxu0 0
    %4030 = vmatpush2.bf16.xpose.msra.mxu0 0
    %4031 = vmatprep.subr.bf16.mxu0 0
    %4032 = vmatpush2.bf16.xpose.msra.mxu0 0
    %4033 = vmatprep.subr.bf16.mxu0 0
    %4034 = vmatpush2.bf16.xpose.msra.mxu0 0
    %4035 = vmatprep.subr.bf16.mxu0 0
    %4036 = vmatpush2.bf16.xpose.msra.mxu0 0
    %4037 = vmatprep.subr.bf16.mxu0 0
    %4038 = vmatpush2.bf16.xpose.msra.mxu0 0
    %4039 = vmatprep.subr.bf16.mxu0 0
    %4040 = vmatpush2.bf16.xpose.msra.mxu0 0
    %4041 = vmatprep.subr.bf16.mxu0 0
    %4042 = vmatpush2.bf16.xpose.msra.mxu0 0
    %4043 = vmatprep.subr.bf16.mxu0 0
    %4044 = vmatpush2.bf16.xpose.msra.mxu0 0
    %4045 = vmatprep.mubr.bf16.mxu0 0
    %4046 = vmatmul.mubr.bf16.gmra.mxu0 %v4008
    %v4047 = vpop.f32.mrf.mxu0
    %v4048 = vadd.f32 0.0, %v4047
    %v4049 = vpop.f32.mrf.mxu0
    %v4050 = vpop.f32.mrf.mxu0
    %v4051 = vpop.f32.mrf.mxu0
    %4052 = vdwg.mxu0
    %v4054 = vsel %vm3178, %v3133, 0
    %v4057 = vsel %vm3178, %v3165, 0
    %4059 = vmatprep.subr.bf16.mxu0 0
    %4060 = vmatpush1.bf16.xpose.msra.mxu0 0
    %4061 = vmatprep.subr.bf16.mxu0 0
    %4062 = vmatpush1.bf16.xpose.msra.mxu0 0
    %4063 = vmatprep.subr.bf16.mxu0 0
    %4064 = vmatpush1.bf16.xpose.msra.mxu0 0
    %4065 = vmatprep.subr.bf16.mxu0 0
    %4066 = vmatpush1.bf16.xpose.msra.mxu0 0
    %4067 = vmatprep.subr.bf16.mxu0 0
    %4068 = vmatpush1.bf16.xpose.msra.mxu0 0
    %4069 = vmatprep.subr.bf16.mxu0 0
    %4070 = vmatpush1.bf16.xpose.msra.mxu0 0
    %4071 = vmatprep.subr.bf16.mxu0 0
    %4072 = vmatpush1.bf16.xpose.msra.mxu0 0
    %4073 = vmatprep.subr.bf16.mxu0 0
    %4074 = vmatpush1.bf16.xpose.msra.mxu0 %v4057
    %4075 = vmatprep.subr.bf16.mxu0 0
    %4076 = vmatpush2.bf16.xpose.msra.mxu0 0
    %4077 = vmatprep.subr.bf16.mxu0 0
    %4078 = vmatpush2.bf16.xpose.msra.mxu0 0
    %4079 = vmatprep.subr.bf16.mxu0 0
    %4080 = vmatpush2.bf16.xpose.msra.mxu0 0
    %4081 = vmatprep.subr.bf16.mxu0 0
    %4082 = vmatpush2.bf16.xpose.msra.mxu0 0
    %4083 = vmatprep.subr.bf16.mxu0 0
    %4084 = vmatpush2.bf16.xpose.msra.mxu0 0
    %4085 = vmatprep.subr.bf16.mxu0 0
    %4086 = vmatpush2.bf16.xpose.msra.mxu0 0
    %4087 = vmatprep.subr.bf16.mxu0 0
    %4088 = vmatpush2.bf16.xpose.msra.mxu0 0
    %4089 = vmatprep.subr.bf16.mxu0 0
    %4090 = vmatpush2.bf16.xpose.msra.mxu0 0
    %4091 = vmatprep.mubr.bf16.mxu0 0
    %4092 = vmatmul.mubr.bf16.gmra.mxu0 %v4054
    %v4093 = vpop.f32.mrf.mxu0
    %v4094 = vadd.f32 0.0, %v4093
    %v4095 = vpop.f32.mrf.mxu0
    %v4096 = vpop.f32.mrf.mxu0
    %v4097 = vpop.f32.mrf.mxu0
    %4098 = vdwg.mxu0
    %v4100 = vsel %vm3178, %v3134, 0
    %v4103 = vsel %vm3178, %v3166, 0
    %4105 = vmatprep.subr.bf16.mxu0 0
    %4106 = vmatpush1.bf16.xpose.msra.mxu0 0
    %4107 = vmatprep.subr.bf16.mxu0 0
    %4108 = vmatpush1.bf16.xpose.msra.mxu0 0
    %4109 = vmatprep.subr.bf16.mxu0 0
    %4110 = vmatpush1.bf16.xpose.msra.mxu0 0
    %4111 = vmatprep.subr.bf16.mxu0 0
    %4112 = vmatpush1.bf16.xpose.msra.mxu0 0
    %4113 = vmatprep.subr.bf16.mxu0 0
    %4114 = vmatpush1.bf16.xpose.msra.mxu0 0
    %4115 = vmatprep.subr.bf16.mxu0 0
    %4116 = vmatpush1.bf16.xpose.msra.mxu0 0
    %4117 = vmatprep.subr.bf16.mxu0 0
    %4118 = vmatpush1.bf16.xpose.msra.mxu0 0
    %4119 = vmatprep.subr.bf16.mxu0 0
    %4120 = vmatpush1.bf16.xpose.msra.mxu0 %v4103
    %4121 = vmatprep.subr.bf16.mxu0 0
    %4122 = vmatpush2.bf16.xpose.msra.mxu0 0
    %4123 = vmatprep.subr.bf16.mxu0 0
    %4124 = vmatpush2.bf16.xpose.msra.mxu0 0
    %4125 = vmatprep.subr.bf16.mxu0 0
    %4126 = vmatpush2.bf16.xpose.msra.mxu0 0
    %4127 = vmatprep.subr.bf16.mxu0 0
    %4128 = vmatpush2.bf16.xpose.msra.mxu0 0
    %4129 = vmatprep.subr.bf16.mxu0 0
    %4130 = vmatpush2.bf16.xpose.msra.mxu0 0
    %4131 = vmatprep.subr.bf16.mxu0 0
    %4132 = vmatpush2.bf16.xpose.msra.mxu0 0
    %4133 = vmatprep.subr.bf16.mxu0 0
    %4134 = vmatpush2.bf16.xpose.msra.mxu0 0
    %4135 = vmatprep.subr.bf16.mxu0 0
    %4136 = vmatpush2.bf16.xpose.msra.mxu0 0
    %4137 = vmatprep.mubr.bf16.mxu0 0
    %4138 = vmatmul.mubr.bf16.gmra.mxu0 %v4100
    %v4139 = vpop.f32.mrf.mxu0
    %v4140 = vadd.f32 0.0, %v4139
    %v4141 = vpop.f32.mrf.mxu0
    %v4142 = vpop.f32.mrf.mxu0
    %v4143 = vpop.f32.mrf.mxu0
    %4144 = vdwg.mxu0
    %v4146 = vsel %vm3178, %v3135, 0
    %v4149 = vsel %vm3178, %v3167, 0
    %4151 = vmatprep.subr.bf16.mxu0 0
    %4152 = vmatpush1.bf16.xpose.msra.mxu0 0
    %4153 = vmatprep.subr.bf16.mxu0 0
    %4154 = vmatpush1.bf16.xpose.msra.mxu0 0
    %4155 = vmatprep.subr.bf16.mxu0 0
    %4156 = vmatpush1.bf16.xpose.msra.mxu0 0
    %4157 = vmatprep.subr.bf16.mxu0 0
    %4158 = vmatpush1.bf16.xpose.msra.mxu0 0
    %4159 = vmatprep.subr.bf16.mxu0 0
    %4160 = vmatpush1.bf16.xpose.msra.mxu0 0
    %4161 = vmatprep.subr.bf16.mxu0 0
    %4162 = vmatpush1.bf16.xpose.msra.mxu0 0
    %4163 = vmatprep.subr.bf16.mxu0 0
    %4164 = vmatpush1.bf16.xpose.msra.mxu0 0
    %4165 = vmatprep.subr.bf16.mxu0 0
    %4166 = vmatpush1.bf16.xpose.msra.mxu0 %v4149
    %4167 = vmatprep.subr.bf16.mxu0 0
    %4168 = vmatpush2.bf16.xpose.msra.mxu0 0
    %4169 = vmatprep.subr.bf16.mxu0 0
    %4170 = vmatpush2.bf16.xpose.msra.mxu0 0
    %4171 = vmatprep.subr.bf16.mxu0 0
    %4172 = vmatpush2.bf16.xpose.msra.mxu0 0
    %4173 = vmatprep.subr.bf16.mxu0 0
    %4174 = vmatpush2.bf16.xpose.msra.mxu0 0
    %4175 = vmatprep.subr.bf16.mxu0 0
    %4176 = vmatpush2.bf16.xpose.msra.mxu0 0
    %4177 = vmatprep.subr.bf16.mxu0 0
    %4178 = vmatpush2.bf16.xpose.msra.mxu0 0
    %4179 = vmatprep.subr.bf16.mxu0 0
    %4180 = vmatpush2.bf16.xpose.msra.mxu0 0
    %4181 = vmatprep.subr.bf16.mxu0 0
    %4182 = vmatpush2.bf16.xpose.msra.mxu0 0
    %4183 = vmatprep.mubr.bf16.mxu0 0
    %4184 = vmatmul.mubr.bf16.gmra.mxu0 %v4146
    %v4185 = vpop.f32.mrf.mxu0
    %v4186 = vadd.f32 0.0, %v4185
    %v4187 = vpop.f32.mrf.mxu0
    %v4188 = vpop.f32.mrf.mxu0
    %v4189 = vpop.f32.mrf.mxu0
    %4190 = vdwg.mxu0
    %v4192 = vsel %vm3178, %v3136, 0
    %v4195 = vsel %vm3178, %v3168, 0
    %4197 = vmatprep.subr.bf16.mxu0 0
    %4198 = vmatpush1.bf16.xpose.msra.mxu0 0
    %4199 = vmatprep.subr.bf16.mxu0 0
    %4200 = vmatpush1.bf16.xpose.msra.mxu0 0
    %4201 = vmatprep.subr.bf16.mxu0 0
    %4202 = vmatpush1.bf16.xpose.msra.mxu0 0
    %4203 = vmatprep.subr.bf16.mxu0 0
    %4204 = vmatpush1.bf16.xpose.msra.mxu0 0
    %4205 = vmatprep.subr.bf16.mxu0 0
    %4206 = vmatpush1.bf16.xpose.msra.mxu0 0
    %4207 = vmatprep.subr.bf16.mxu0 0
    %4208 = vmatpush1.bf16.xpose.msra.mxu0 0
    %4209 = vmatprep.subr.bf16.mxu0 0
    %4210 = vmatpush1.bf16.xpose.msra.mxu0 0
    %4211 = vmatprep.subr.bf16.mxu0 0
    %4212 = vmatpush1.bf16.xpose.msra.mxu0 %v4195
    %4213 = vmatprep.subr.bf16.mxu0 0
    %4214 = vmatpush2.bf16.xpose.msra.mxu0 0
    %4215 = vmatprep.subr.bf16.mxu0 0
    %4216 = vmatpush2.bf16.xpose.msra.mxu0 0
    %4217 = vmatprep.subr.bf16.mxu0 0
    %4218 = vmatpush2.bf16.xpose.msra.mxu0 0
    %4219 = vmatprep.subr.bf16.mxu0 0
    %4220 = vmatpush2.bf16.xpose.msra.mxu0 0
    %4221 = vmatprep.subr.bf16.mxu0 0
    %4222 = vmatpush2.bf16.xpose.msra.mxu0 0
    %4223 = vmatprep.subr.bf16.mxu0 0
    %4224 = vmatpush2.bf16.xpose.msra.mxu0 0
    %4225 = vmatprep.subr.bf16.mxu0 0
    %4226 = vmatpush2.bf16.xpose.msra.mxu0 0
    %4227 = vmatprep.subr.bf16.mxu0 0
    %4228 = vmatpush2.bf16.xpose.msra.mxu0 0
    %4229 = vmatprep.mubr.bf16.mxu0 0
    %4230 = vmatmul.mubr.bf16.gmra.mxu0 %v4192
    %v4231 = vpop.f32.mrf.mxu0
    %v4232 = vadd.f32 0.0, %v4231
    %v4233 = vpop.f32.mrf.mxu0
    %v4234 = vpop.f32.mrf.mxu0
    %v4235 = vpop.f32.mrf.mxu0
    %4236 = vdwg.mxu0
    %v4238 = vsel %vm3178, %v3137, 0
    %v4241 = vsel %vm3178, %v3169, 0
    %4243 = vmatprep.subr.bf16.mxu0 0
    %4244 = vmatpush1.bf16.xpose.msra.mxu0 0
    %4245 = vmatprep.subr.bf16.mxu0 0
    %4246 = vmatpush1.bf16.xpose.msra.mxu0 0
    %4247 = vmatprep.subr.bf16.mxu0 0
    %4248 = vmatpush1.bf16.xpose.msra.mxu0 0
    %4249 = vmatprep.subr.bf16.mxu0 0
    %4250 = vmatpush1.bf16.xpose.msra.mxu0 0
    %4251 = vmatprep.subr.bf16.mxu0 0
    %4252 = vmatpush1.bf16.xpose.msra.mxu0 0
    %4253 = vmatprep.subr.bf16.mxu0 0
    %4254 = vmatpush1.bf16.xpose.msra.mxu0 0
    %4255 = vmatprep.subr.bf16.mxu0 0
    %4256 = vmatpush1.bf16.xpose.msra.mxu0 0
    %4257 = vmatprep.subr.bf16.mxu0 0
    %4258 = vmatpush1.bf16.xpose.msra.mxu0 %v4241
    %4259 = vmatprep.subr.bf16.mxu0 0
    %4260 = vmatpush2.bf16.xpose.msra.mxu0 0
    %4261 = vmatprep.subr.bf16.mxu0 0
    %4262 = vmatpush2.bf16.xpose.msra.mxu0 0
    %4263 = vmatprep.subr.bf16.mxu0 0
    %4264 = vmatpush2.bf16.xpose.msra.mxu0 0
    %4265 = vmatprep.subr.bf16.mxu0 0
    %4266 = vmatpush2.bf16.xpose.msra.mxu0 0
    %4267 = vmatprep.subr.bf16.mxu0 0
    %4268 = vmatpush2.bf16.xpose.msra.mxu0 0
    %4269 = vmatprep.subr.bf16.mxu0 0
    %4270 = vmatpush2.bf16.xpose.msra.mxu0 0
    %4271 = vmatprep.subr.bf16.mxu0 0
    %4272 = vmatpush2.bf16.xpose.msra.mxu0 0
    %4273 = vmatprep.subr.bf16.mxu0 0
    %4274 = vmatpush2.bf16.xpose.msra.mxu0 0
    %4275 = vmatprep.mubr.bf16.mxu0 0
    %4276 = vmatmul.mubr.bf16.gmra.mxu0 %v4238
    %v4277 = vpop.f32.mrf.mxu0
    %v4278 = vadd.f32 0.0, %v4277
    %v4279 = vpop.f32.mrf.mxu0
    %v4280 = vpop.f32.mrf.mxu0
    %v4281 = vpop.f32.mrf.mxu0
    %4282 = vdwg.mxu0
    %v4284 = vsel %vm3178, %v3138, 0
    %v4287 = vsel %vm3178, %v3170, 0
    %4289 = vmatprep.subr.bf16.mxu0 0
    %4290 = vmatpush1.bf16.xpose.msra.mxu0 0
    %4291 = vmatprep.subr.bf16.mxu0 0
    %4292 = vmatpush1.bf16.xpose.msra.mxu0 0
    %4293 = vmatprep.subr.bf16.mxu0 0
    %4294 = vmatpush1.bf16.xpose.msra.mxu0 0
    %4295 = vmatprep.subr.bf16.mxu0 0
    %4296 = vmatpush1.bf16.xpose.msra.mxu0 0
    %4297 = vmatprep.subr.bf16.mxu0 0
    %4298 = vmatpush1.bf16.xpose.msra.mxu0 0
    %4299 = vmatprep.subr.bf16.mxu0 0
    %4300 = vmatpush1.bf16.xpose.msra.mxu0 0
    %4301 = vmatprep.subr.bf16.mxu0 0
    %4302 = vmatpush1.bf16.xpose.msra.mxu0 0
    %4303 = vmatprep.subr.bf16.mxu0 0
    %4304 = vmatpush1.bf16.xpose.msra.mxu0 %v4287
    %4305 = vmatprep.subr.bf16.mxu0 0
    %4306 = vmatpush2.bf16.xpose.msra.mxu0 0
    %4307 = vmatprep.subr.bf16.mxu0 0
    %4308 = vmatpush2.bf16.xpose.msra.mxu0 0
    %4309 = vmatprep.subr.bf16.mxu0 0
    %4310 = vmatpush2.bf16.xpose.msra.mxu0 0
    %4311 = vmatprep.subr.bf16.mxu0 0
    %4312 = vmatpush2.bf16.xpose.msra.mxu0 0
    %4313 = vmatprep.subr.bf16.mxu0 0
    %4314 = vmatpush2.bf16.xpose.msra.mxu0 0
    %4315 = vmatprep.subr.bf16.mxu0 0
    %4316 = vmatpush2.bf16.xpose.msra.mxu0 0
    %4317 = vmatprep.subr.bf16.mxu0 0
    %4318 = vmatpush2.bf16.xpose.msra.mxu0 0
    %4319 = vmatprep.subr.bf16.mxu0 0
    %4320 = vmatpush2.bf16.xpose.msra.mxu0 0
    %4321 = vmatprep.mubr.bf16.mxu0 0
    %4322 = vmatmul.mubr.bf16.gmra.mxu0 %v4284
    %v4323 = vpop.f32.mrf.mxu0
    %v4324 = vadd.f32 0.0, %v4323
    %v4325 = vpop.f32.mrf.mxu0
    %v4326 = vpop.f32.mrf.mxu0
    %v4327 = vpop.f32.mrf.mxu0
    %4328 = vdwg.mxu0
    %v4330 = vsel %vm3178, %v3139, 0
    %v4333 = vsel %vm3178, %v3171, 0
    %4335 = vmatprep.subr.bf16.mxu0 0
    %4336 = vmatpush1.bf16.xpose.msra.mxu0 0
    %4337 = vmatprep.subr.bf16.mxu0 0
    %4338 = vmatpush1.bf16.xpose.msra.mxu0 0
    %4339 = vmatprep.subr.bf16.mxu0 0
    %4340 = vmatpush1.bf16.xpose.msra.mxu0 0
    %4341 = vmatprep.subr.bf16.mxu0 0
    %4342 = vmatpush1.bf16.xpose.msra.mxu0 0
    %4343 = vmatprep.subr.bf16.mxu0 0
    %4344 = vmatpush1.bf16.xpose.msra.mxu0 0
    %4345 = vmatprep.subr.bf16.mxu0 0
    %4346 = vmatpush1.bf16.xpose.msra.mxu0 0
    %4347 = vmatprep.subr.bf16.mxu0 0
    %4348 = vmatpush1.bf16.xpose.msra.mxu0 0
    %4349 = vmatprep.subr.bf16.mxu0 0
    %4350 = vmatpush1.bf16.xpose.msra.mxu0 %v4333
    %4351 = vmatprep.subr.bf16.mxu0 0
    %4352 = vmatpush2.bf16.xpose.msra.mxu0 0
    %4353 = vmatprep.subr.bf16.mxu0 0
    %4354 = vmatpush2.bf16.xpose.msra.mxu0 0
    %4355 = vmatprep.subr.bf16.mxu0 0
    %4356 = vmatpush2.bf16.xpose.msra.mxu0 0
    %4357 = vmatprep.subr.bf16.mxu0 0
    %4358 = vmatpush2.bf16.xpose.msra.mxu0 0
    %4359 = vmatprep.subr.bf16.mxu0 0
    %4360 = vmatpush2.bf16.xpose.msra.mxu0 0
    %4361 = vmatprep.subr.bf16.mxu0 0
    %4362 = vmatpush2.bf16.xpose.msra.mxu0 0
    %4363 = vmatprep.subr.bf16.mxu0 0
    %4364 = vmatpush2.bf16.xpose.msra.mxu0 0
    %4365 = vmatprep.subr.bf16.mxu0 0
    %4366 = vmatpush2.bf16.xpose.msra.mxu0 0
    %4367 = vmatprep.mubr.bf16.mxu0 0
    %4368 = vmatmul.mubr.bf16.gmra.mxu0 %v4330
    %v4369 = vpop.f32.mrf.mxu0
    %v4370 = vadd.f32 0.0, %v4369
    %v4371 = vpop.f32.mrf.mxu0
    %v4372 = vpop.f32.mrf.mxu0
    %v4373 = vpop.f32.mrf.mxu0
    %4374 = vdwg.mxu0
    %v4376 = vsel %vm3178, %v3140, 0
    %v4379 = vsel %vm3178, %v3172, 0
    %4381 = vmatprep.subr.bf16.mxu0 0
    %4382 = vmatpush1.bf16.xpose.msra.mxu0 0
    %4383 = vmatprep.subr.bf16.mxu0 0
    %4384 = vmatpush1.bf16.xpose.msra.mxu0 0
    %4385 = vmatprep.subr.bf16.mxu0 0
    %4386 = vmatpush1.bf16.xpose.msra.mxu0 0
    %4387 = vmatprep.subr.bf16.mxu0 0
    %4388 = vmatpush1.bf16.xpose.msra.mxu0 0
    %4389 = vmatprep.subr.bf16.mxu0 0
    %4390 = vmatpush1.bf16.xpose.msra.mxu0 0
    %4391 = vmatprep.subr.bf16.mxu0 0
    %4392 = vmatpush1.bf16.xpose.msra.mxu0 0
    %4393 = vmatprep.subr.bf16.mxu0 0
    %4394 = vmatpush1.bf16.xpose.msra.mxu0 0
    %4395 = vmatprep.subr.bf16.mxu0 0
    %4396 = vmatpush1.bf16.xpose.msra.mxu0 %v4379
    %4397 = vmatprep.subr.bf16.mxu0 0
    %4398 = vmatpush2.bf16.xpose.msra.mxu0 0
    %4399 = vmatprep.subr.bf16.mxu0 0
    %4400 = vmatpush2.bf16.xpose.msra.mxu0 0
    %4401 = vmatprep.subr.bf16.mxu0 0
    %4402 = vmatpush2.bf16.xpose.msra.mxu0 0
    %4403 = vmatprep.subr.bf16.mxu0 0
    %4404 = vmatpush2.bf16.xpose.msra.mxu0 0
    %4405 = vmatprep.subr.bf16.mxu0 0
    %4406 = vmatpush2.bf16.xpose.msra.mxu0 0
    %4407 = vmatprep.subr.bf16.mxu0 0
    %4408 = vmatpush2.bf16.xpose.msra.mxu0 0
    %4409 = vmatprep.subr.bf16.mxu0 0
    %4410 = vmatpush2.bf16.xpose.msra.mxu0 0
    %4411 = vmatprep.subr.bf16.mxu0 0
    %4412 = vmatpush2.bf16.xpose.msra.mxu0 0
    %4413 = vmatprep.mubr.bf16.mxu0 0
    %4414 = vmatmul.mubr.bf16.gmra.mxu0 %v4376
    %v4415 = vpop.f32.mrf.mxu0
    %v4416 = vadd.f32 0.0, %v4415
    %v4417 = vpop.f32.mrf.mxu0
    %v4418 = vpop.f32.mrf.mxu0
    %v4419 = vpop.f32.mrf.mxu0
    %4420 = vdwg.mxu0
    %v4422 = vsel %vm3178, %v3141, 0
    %v4425 = vsel %vm3178, %v3173, 0
    %4427 = vmatprep.subr.bf16.mxu0 0
    %4428 = vmatpush1.bf16.xpose.msra.mxu0 0
    %4429 = vmatprep.subr.bf16.mxu0 0
    %4430 = vmatpush1.bf16.xpose.msra.mxu0 0
    %4431 = vmatprep.subr.bf16.mxu0 0
    %4432 = vmatpush1.bf16.xpose.msra.mxu0 0
    %4433 = vmatprep.subr.bf16.mxu0 0
    %4434 = vmatpush1.bf16.xpose.msra.mxu0 0
    %4435 = vmatprep.subr.bf16.mxu0 0
    %4436 = vmatpush1.bf16.xpose.msra.mxu0 0
    %4437 = vmatprep.subr.bf16.mxu0 0
    %4438 = vmatpush1.bf16.xpose.msra.mxu0 0
    %4439 = vmatprep.subr.bf16.mxu0 0
    %4440 = vmatpush1.bf16.xpose.msra.mxu0 0
    %4441 = vmatprep.subr.bf16.mxu0 0
    %4442 = vmatpush1.bf16.xpose.msra.mxu0 %v4425
    %4443 = vmatprep.subr.bf16.mxu0 0
    %4444 = vmatpush2.bf16.xpose.msra.mxu0 0
    %4445 = vmatprep.subr.bf16.mxu0 0
    %4446 = vmatpush2.bf16.xpose.msra.mxu0 0
    %4447 = vmatprep.subr.bf16.mxu0 0
    %4448 = vmatpush2.bf16.xpose.msra.mxu0 0
    %4449 = vmatprep.subr.bf16.mxu0 0
    %4450 = vmatpush2.bf16.xpose.msra.mxu0 0
    %4451 = vmatprep.subr.bf16.mxu0 0
    %4452 = vmatpush2.bf16.xpose.msra.mxu0 0
    %4453 = vmatprep.subr.bf16.mxu0 0
    %4454 = vmatpush2.bf16.xpose.msra.mxu0 0
    %4455 = vmatprep.subr.bf16.mxu0 0
    %4456 = vmatpush2.bf16.xpose.msra.mxu0 0
    %4457 = vmatprep.subr.bf16.mxu0 0
    %4458 = vmatpush2.bf16.xpose.msra.mxu0 0
    %4459 = vmatprep.mubr.bf16.mxu0 0
    %4460 = vmatmul.mubr.bf16.gmra.mxu0 %v4422
    %v4461 = vpop.f32.mrf.mxu0
    %v4462 = vadd.f32 0.0, %v4461
    %v4463 = vpop.f32.mrf.mxu0
    %v4464 = vpop.f32.mrf.mxu0
    %v4465 = vpop.f32.mrf.mxu0
    %4466 = vdwg.mxu0
    %v4468 = vsel %vm3178, %v3142, 0
    %v4471 = vsel %vm3178, %v3174, 0
    %4473 = vmatprep.subr.bf16.mxu0 0
    %4474 = vmatpush1.bf16.xpose.msra.mxu0 0
    %4475 = vmatprep.subr.bf16.mxu0 0
    %4476 = vmatpush1.bf16.xpose.msra.mxu0 0
    %4477 = vmatprep.subr.bf16.mxu0 0
    %4478 = vmatpush1.bf16.xpose.msra.mxu0 0
    %4479 = vmatprep.subr.bf16.mxu0 0
    %4480 = vmatpush1.bf16.xpose.msra.mxu0 0
    %4481 = vmatprep.subr.bf16.mxu0 0
    %4482 = vmatpush1.bf16.xpose.msra.mxu0 0
    %4483 = vmatprep.subr.bf16.mxu0 0
    %4484 = vmatpush1.bf16.xpose.msra.mxu0 0
    %4485 = vmatprep.subr.bf16.mxu0 0
    %4486 = vmatpush1.bf16.xpose.msra.mxu0 0
    %4487 = vmatprep.subr.bf16.mxu0 0
    %4488 = vmatpush1.bf16.xpose.msra.mxu0 %v4471
    %4489 = vmatprep.subr.bf16.mxu0 0
    %4490 = vmatpush2.bf16.xpose.msra.mxu0 0
    %4491 = vmatprep.subr.bf16.mxu0 0
    %4492 = vmatpush2.bf16.xpose.msra.mxu0 0
    %4493 = vmatprep.subr.bf16.mxu0 0
    %4494 = vmatpush2.bf16.xpose.msra.mxu0 0
    %4495 = vmatprep.subr.bf16.mxu0 0
    %4496 = vmatpush2.bf16.xpose.msra.mxu0 0
    %4497 = vmatprep.subr.bf16.mxu0 0
    %4498 = vmatpush2.bf16.xpose.msra.mxu0 0
    %4499 = vmatprep.subr.bf16.mxu0 0
    %4500 = vmatpush2.bf16.xpose.msra.mxu0 0
    %4501 = vmatprep.subr.bf16.mxu0 0
    %4502 = vmatpush2.bf16.xpose.msra.mxu0 0
    %4503 = vmatprep.subr.bf16.mxu0 0
    %4504 = vmatpush2.bf16.xpose.msra.mxu0 0
    %4505 = vmatprep.mubr.bf16.mxu0 0
    %4506 = vmatmul.mubr.bf16.gmra.mxu0 %v4468
    %v4507 = vpop.f32.mrf.mxu0
    %v4508 = vadd.f32 0.0, %v4507
    %v4509 = vpop.f32.mrf.mxu0
    %v4510 = vpop.f32.mrf.mxu0
    %v4511 = vpop.f32.mrf.mxu0
    %4512 = vdwg.mxu0
    %v4514 = vsel %vm3178, %v3143, 0
    %v4517 = vsel %vm3178, %v3175, 0
    %4519 = vmatprep.subr.bf16.mxu0 0
    %4520 = vmatpush1.bf16.xpose.msra.mxu0 0
    %4521 = vmatprep.subr.bf16.mxu0 0
    %4522 = vmatpush1.bf16.xpose.msra.mxu0 0
    %4523 = vmatprep.subr.bf16.mxu0 0
    %4524 = vmatpush1.bf16.xpose.msra.mxu0 0
    %4525 = vmatprep.subr.bf16.mxu0 0
    %4526 = vmatpush1.bf16.xpose.msra.mxu0 0
    %4527 = vmatprep.subr.bf16.mxu0 0
    %4528 = vmatpush1.bf16.xpose.msra.mxu0 0
    %4529 = vmatprep.subr.bf16.mxu0 0
    %4530 = vmatpush1.bf16.xpose.msra.mxu0 0
    %4531 = vmatprep.subr.bf16.mxu0 0
    %4532 = vmatpush1.bf16.xpose.msra.mxu0 0
    %4533 = vmatprep.subr.bf16.mxu0 0
    %4534 = vmatpush1.bf16.xpose.msra.mxu0 %v4517
    %4535 = vmatprep.subr.bf16.mxu0 0
    %4536 = vmatpush2.bf16.xpose.msra.mxu0 0
    %4537 = vmatprep.subr.bf16.mxu0 0
    %4538 = vmatpush2.bf16.xpose.msra.mxu0 0
    %4539 = vmatprep.subr.bf16.mxu0 0
    %4540 = vmatpush2.bf16.xpose.msra.mxu0 0
    %4541 = vmatprep.subr.bf16.mxu0 0
    %4542 = vmatpush2.bf16.xpose.msra.mxu0 0
    %4543 = vmatprep.subr.bf16.mxu0 0
    %4544 = vmatpush2.bf16.xpose.msra.mxu0 0
    %4545 = vmatprep.subr.bf16.mxu0 0
    %4546 = vmatpush2.bf16.xpose.msra.mxu0 0
    %4547 = vmatprep.subr.bf16.mxu0 0
    %4548 = vmatpush2.bf16.xpose.msra.mxu0 0
    %4549 = vmatprep.subr.bf16.mxu0 0
    %4550 = vmatpush2.bf16.xpose.msra.mxu0 0
    %4551 = vmatprep.mubr.bf16.mxu0 0
    %4552 = vmatmul.mubr.bf16.gmra.mxu0 %v4514
    %v4553 = vpop.f32.mrf.mxu0
    %v4554 = vadd.f32 0.0, %v4553
    %v4555 = vpop.f32.mrf.mxu0
    %v4556 = vpop.f32.mrf.mxu0
    %v4557 = vpop.f32.mrf.mxu0
    %4558 = vdwg.mxu0
    %v4560 = vsel %vm3178, %v3144, 0
    %v4563 = vsel %vm3178, %v3176, 0
    %4565 = vmatprep.subr.bf16.mxu0 0
    %4566 = vmatpush1.bf16.xpose.msra.mxu0 0
    %4567 = vmatprep.subr.bf16.mxu0 0
    %4568 = vmatpush1.bf16.xpose.msra.mxu0 0
    %4569 = vmatprep.subr.bf16.mxu0 0
    %4570 = vmatpush1.bf16.xpose.msra.mxu0 0
    %4571 = vmatprep.subr.bf16.mxu0 0
    %4572 = vmatpush1.bf16.xpose.msra.mxu0 0
    %4573 = vmatprep.subr.bf16.mxu0 0
    %4574 = vmatpush1.bf16.xpose.msra.mxu0 0
    %4575 = vmatprep.subr.bf16.mxu0 0
    %4576 = vmatpush1.bf16.xpose.msra.mxu0 0
    %4577 = vmatprep.subr.bf16.mxu0 0
    %4578 = vmatpush1.bf16.xpose.msra.mxu0 0
    %4579 = vmatprep.subr.bf16.mxu0 0
    %4580 = vmatpush1.bf16.xpose.msra.mxu0 %v4563
    %4581 = vmatprep.subr.bf16.mxu0 0
    %4582 = vmatpush2.bf16.xpose.msra.mxu0 0
    %4583 = vmatprep.subr.bf16.mxu0 0
    %4584 = vmatpush2.bf16.xpose.msra.mxu0 0
    %4585 = vmatprep.subr.bf16.mxu0 0
    %4586 = vmatpush2.bf16.xpose.msra.mxu0 0
    %4587 = vmatprep.subr.bf16.mxu0 0
    %4588 = vmatpush2.bf16.xpose.msra.mxu0 0
    %4589 = vmatprep.subr.bf16.mxu0 0
    %4590 = vmatpush2.bf16.xpose.msra.mxu0 0
    %4591 = vmatprep.subr.bf16.mxu0 0
    %4592 = vmatpush2.bf16.xpose.msra.mxu0 0
    %4593 = vmatprep.subr.bf16.mxu0 0
    %4594 = vmatpush2.bf16.xpose.msra.mxu0 0
    %4595 = vmatprep.subr.bf16.mxu0 0
    %4596 = vmatpush2.bf16.xpose.msra.mxu0 0
    %4597 = vmatprep.mubr.bf16.mxu0 0
    %4598 = vmatmul.mubr.bf16.gmra.mxu0 %v4560
    %v4599 = vpop.f32.mrf.mxu0
    %v4600 = vadd.f32 0.0, %v4599
    %v4601 = vpop.f32.mrf.mxu0
    %v4602 = vpop.f32.mrf.mxu0
    %v4603 = vpop.f32.mrf.mxu0
    %4604 = vdwg.mxu0
    %v4606 = vsel %vm3178, %v3145, 0
    %v4609 = vsel %vm3178, %v3177, 0
    %4611 = vmatprep.subr.bf16.mxu0 0
    %4612 = vmatpush1.bf16.xpose.msra.mxu0 0
    %4613 = vmatprep.subr.bf16.mxu0 0
    %4614 = vmatpush1.bf16.xpose.msra.mxu0 0
    %4615 = vmatprep.subr.bf16.mxu0 0
    %4616 = vmatpush1.bf16.xpose.msra.mxu0 0
    %4617 = vmatprep.subr.bf16.mxu0 0
    %4618 = vmatpush1.bf16.xpose.msra.mxu0 0
    %4619 = vmatprep.subr.bf16.mxu0 0
    %4620 = vmatpush1.bf16.xpose.msra.mxu0 0
    %4621 = vmatprep.subr.bf16.mxu0 0
    %4622 = vmatpush1.bf16.xpose.msra.mxu0 0
    %4623 = vmatprep.subr.bf16.mxu0 0
    %4624 = vmatpush1.bf16.xpose.msra.mxu0 0
    %4625 = vmatprep.subr.bf16.mxu0 0
    %4626 = vmatpush1.bf16.xpose.msra.mxu0 %v4609
    %4627 = vmatprep.subr.bf16.mxu0 0
    %4628 = vmatpush2.bf16.xpose.msra.mxu0 0
    %4629 = vmatprep.subr.bf16.mxu0 0
    %4630 = vmatpush2.bf16.xpose.msra.mxu0 0
    %4631 = vmatprep.subr.bf16.mxu0 0
    %4632 = vmatpush2.bf16.xpose.msra.mxu0 0
    %4633 = vmatprep.subr.bf16.mxu0 0
    %4634 = vmatpush2.bf16.xpose.msra.mxu0 0
    %4635 = vmatprep.subr.bf16.mxu0 0
    %4636 = vmatpush2.bf16.xpose.msra.mxu0 0
    %4637 = vmatprep.subr.bf16.mxu0 0
    %4638 = vmatpush2.bf16.xpose.msra.mxu0 0
    %4639 = vmatprep.subr.bf16.mxu0 0
    %4640 = vmatpush2.bf16.xpose.msra.mxu0 0
    %4641 = vmatprep.subr.bf16.mxu0 0
    %4642 = vmatpush2.bf16.xpose.msra.mxu0 0
    %4643 = vmatprep.mubr.bf16.mxu0 0
    %4644 = vmatmul.mubr.bf16.gmra.mxu0 %v4606
    %v4645 = vpop.f32.mrf.mxu0
    %v4646 = vadd.f32 0.0, %v4645
    %v4647 = vpop.f32.mrf.mxu0
    %v4648 = vpop.f32.mrf.mxu0
    %v4649 = vpop.f32.mrf.mxu0
    %4650 = vdwg.mxu0
    %vm4651 = vcmask 64512
    %v4652 = vsel %vm4651, %v3220, -inf
    %4653 = vmax.xlane.f32.xlu0 %v4652
    %v4654 = vpop.xlane.xlu0 %4653
    %v4655 = vsel %vm4651, %v3266, -inf
    %4656 = vmax.xlane.f32.xlu0 %v4655
    %v4657 = vpop.xlane.xlu0 %4656
    %v4658 = vsel %vm4651, %v3312, -inf
    %4659 = vmax.xlane.f32.xlu0 %v4658
    %v4660 = vpop.xlane.xlu0 %4659
    %v4661 = vsel %vm4651, %v3358, -inf
    %4662 = vmax.xlane.f32.xlu0 %v4661
    %v4663 = vpop.xlane.xlu0 %4662
    %v4664 = vsel %vm4651, %v3404, -inf
    %4665 = vmax.xlane.f32.xlu0 %v4664
    %v4666 = vpop.xlane.xlu0 %4665
    %v4667 = vsel %vm4651, %v3450, -inf
    %4668 = vmax.xlane.f32.xlu0 %v4667
    %v4669 = vpop.xlane.xlu0 %4668
    %v4670 = vsel %vm4651, %v3496, -inf
    %4671 = vmax.xlane.f32.xlu0 %v4670
    %v4672 = vpop.xlane.xlu0 %4671
    %v4673 = vsel %vm4651, %v3542, -inf
    %4674 = vmax.xlane.f32.xlu0 %v4673
    %v4675 = vpop.xlane.xlu0 %4674
    %v4676 = vsel %vm4651, %v3588, -inf
    %4677 = vmax.xlane.f32.xlu0 %v4676
    %v4678 = vpop.xlane.xlu0 %4677
    %v4679 = vsel %vm4651, %v3634, -inf
    %4680 = vmax.xlane.f32.xlu0 %v4679
    %v4681 = vpop.xlane.xlu0 %4680
    %v4682 = vsel %vm4651, %v3680, -inf
    %4683 = vmax.xlane.f32.xlu0 %v4682
    %v4684 = vpop.xlane.xlu0 %4683
    %v4685 = vsel %vm4651, %v3726, -inf
    %4686 = vmax.xlane.f32.xlu0 %v4685
    %v4687 = vpop.xlane.xlu0 %4686
    %v4688 = vsel %vm4651, %v3772, -inf
    %4689 = vmax.xlane.f32.xlu0 %v4688
    %v4690 = vpop.xlane.xlu0 %4689
    %v4691 = vsel %vm4651, %v3818, -inf
    %4692 = vmax.xlane.f32.xlu0 %v4691
    %v4693 = vpop.xlane.xlu0 %4692
    %v4694 = vsel %vm4651, %v3864, -inf
    %4695 = vmax.xlane.f32.xlu0 %v4694
    %v4696 = vpop.xlane.xlu0 %4695
    %v4697 = vsel %vm4651, %v3910, -inf
    %4698 = vmax.xlane.f32.xlu0 %v4697
    %v4699 = vpop.xlane.xlu0 %4698
    %v4700 = vsel %vm4651, %v3956, -inf
    %4701 = vmax.xlane.f32.xlu0 %v4700
    %v4702 = vpop.xlane.xlu0 %4701
    %v4703 = vsel %vm4651, %v4002, -inf
    %4704 = vmax.xlane.f32.xlu0 %v4703
    %v4705 = vpop.xlane.xlu0 %4704
    %v4706 = vsel %vm4651, %v4048, -inf
    %4707 = vmax.xlane.f32.xlu0 %v4706
    %v4708 = vpop.xlane.xlu0 %4707
    %v4709 = vsel %vm4651, %v4094, -inf
    %4710 = vmax.xlane.f32.xlu0 %v4709
    %v4711 = vpop.xlane.xlu0 %4710
    %v4712 = vsel %vm4651, %v4140, -inf
    %4713 = vmax.xlane.f32.xlu0 %v4712
    %v4714 = vpop.xlane.xlu0 %4713
    %v4715 = vsel %vm4651, %v4186, -inf
    %4716 = vmax.xlane.f32.xlu0 %v4715
    %v4717 = vpop.xlane.xlu0 %4716
    %v4718 = vsel %vm4651, %v4232, -inf
    %4719 = vmax.xlane.f32.xlu0 %v4718
    %v4720 = vpop.xlane.xlu0 %4719
    %v4721 = vsel %vm4651, %v4278, -inf
    %4722 = vmax.xlane.f32.xlu0 %v4721
    %v4723 = vpop.xlane.xlu0 %4722
    %v4724 = vsel %vm4651, %v4324, -inf
    %4725 = vmax.xlane.f32.xlu0 %v4724
    %v4726 = vpop.xlane.xlu0 %4725
    %v4727 = vsel %vm4651, %v4370, -inf
    %4728 = vmax.xlane.f32.xlu0 %v4727
    %v4729 = vpop.xlane.xlu0 %4728
    %v4730 = vsel %vm4651, %v4416, -inf
    %4731 = vmax.xlane.f32.xlu0 %v4730
    %v4732 = vpop.xlane.xlu0 %4731
    %v4733 = vsel %vm4651, %v4462, -inf
    %4734 = vmax.xlane.f32.xlu0 %v4733
    %v4735 = vpop.xlane.xlu0 %4734
    %v4736 = vsel %vm4651, %v4508, -inf
    %4737 = vmax.xlane.f32.xlu0 %v4736
    %v4738 = vpop.xlane.xlu0 %4737
    %v4739 = vsel %vm4651, %v4554, -inf
    %4740 = vmax.xlane.f32.xlu0 %v4739
    %v4741 = vpop.xlane.xlu0 %4740
    %v4742 = vsel %vm4651, %v4600, -inf
    %4743 = vmax.xlane.f32.xlu0 %v4742
    %v4744 = vpop.xlane.xlu0 %4743
    %v4745 = vsel %vm4651, %v4646, -inf
    %4746 = vmax.xlane.f32.xlu0 %v4745
    %v4747 = vpop.xlane.xlu0 %4746
    %v4748 = vsub.f32 %v3220, %v4654
    %v4749 = vsub.f32 %v3266, %v4657
    %v4750 = vsub.f32 %v3312, %v4660
    %v4751 = vsub.f32 %v3358, %v4663
    %v4752 = vsub.f32 %v3404, %v4666
    %v4753 = vsub.f32 %v3450, %v4669
    %v4754 = vsub.f32 %v3496, %v4672
    %v4755 = vsub.f32 %v3542, %v4675
    %v4756 = vsub.f32 %v3588, %v4678
    %v4757 = vsub.f32 %v3634, %v4681
    %v4758 = vsub.f32 %v3680, %v4684
    %v4759 = vsub.f32 %v3726, %v4687
    %v4760 = vsub.f32 %v3772, %v4690
    %v4761 = vsub.f32 %v3818, %v4693
    %v4762 = vsub.f32 %v3864, %v4696
    %v4763 = vsub.f32 %v3910, %v4699
    %v4764 = vsub.f32 %v3956, %v4702
    %v4765 = vsub.f32 %v4002, %v4705
    %v4766 = vsub.f32 %v4048, %v4708
    %v4767 = vsub.f32 %v4094, %v4711
    %v4768 = vsub.f32 %v4140, %v4714
    %v4769 = vsub.f32 %v4186, %v4717
    %v4770 = vsub.f32 %v4232, %v4720
    %v4771 = vsub.f32 %v4278, %v4723
    %v4772 = vsub.f32 %v4324, %v4726
    %v4773 = vsub.f32 %v4370, %v4729
    %v4774 = vsub.f32 %v4416, %v4732
    %v4775 = vsub.f32 %v4462, %v4735
    %v4776 = vsub.f32 %v4508, %v4738
    %v4777 = vsub.f32 %v4554, %v4741
    %v4778 = vsub.f32 %v4600, %v4744
    %v4779 = vsub.f32 %v4646, %v4747
    %v4780 = vmul.f32 %v4748, 1.442695
    %v4781 = vpow.pop %v4780
    %v4782 = vmul.f32 %v4749, 1.442695
    %v4783 = vpow.pop %v4782
    %v4784 = vmul.f32 %v4750, 1.442695
    %v4785 = vpow.pop %v4784
    %v4786 = vmul.f32 %v4751, 1.442695
    %v4787 = vpow.pop %v4786
    %v4788 = vmul.f32 %v4752, 1.442695
    %v4789 = vpow.pop %v4788
    %v4790 = vmul.f32 %v4753, 1.442695
    %v4791 = vpow.pop %v4790
    %v4792 = vmul.f32 %v4754, 1.442695
    %v4793 = vpow.pop %v4792
    %v4794 = vmul.f32 %v4755, 1.442695
    %v4795 = vpow.pop %v4794
    %v4796 = vmul.f32 %v4756, 1.442695
    %v4797 = vpow.pop %v4796
    %v4798 = vmul.f32 %v4757, 1.442695
    %v4799 = vpow.pop %v4798
    %v4800 = vmul.f32 %v4758, 1.442695
    %v4801 = vpow.pop %v4800
    %v4802 = vmul.f32 %v4759, 1.442695
    %v4803 = vpow.pop %v4802
    %v4804 = vmul.f32 %v4760, 1.442695
    %v4805 = vpow.pop %v4804
    %v4806 = vmul.f32 %v4761, 1.442695
    %v4807 = vpow.pop %v4806
    %v4808 = vmul.f32 %v4762, 1.442695
    %v4809 = vpow.pop %v4808
    %v4810 = vmul.f32 %v4763, 1.442695
    %v4811 = vpow.pop %v4810
    %v4812 = vmul.f32 %v4764, 1.442695
    %v4813 = vpow.pop %v4812
    %v4814 = vmul.f32 %v4765, 1.442695
    %v4815 = vpow.pop %v4814
    %v4816 = vmul.f32 %v4766, 1.442695
    %v4817 = vpow.pop %v4816
    %v4818 = vmul.f32 %v4767, 1.442695
    %v4819 = vpow.pop %v4818
    %v4820 = vmul.f32 %v4768, 1.442695
    %v4821 = vpow.pop %v4820
    %v4822 = vmul.f32 %v4769, 1.442695
    %v4823 = vpow.pop %v4822
    %v4824 = vmul.f32 %v4770, 1.442695
    %v4825 = vpow.pop %v4824
    %v4826 = vmul.f32 %v4771, 1.442695
    %v4827 = vpow.pop %v4826
    %v4828 = vmul.f32 %v4772, 1.442695
    %v4829 = vpow.pop %v4828
    %v4830 = vmul.f32 %v4773, 1.442695
    %v4831 = vpow.pop %v4830
    %v4832 = vmul.f32 %v4774, 1.442695
    %v4833 = vpow.pop %v4832
    %v4834 = vmul.f32 %v4775, 1.442695
    %v4835 = vpow.pop %v4834
    %v4836 = vmul.f32 %v4776, 1.442695
    %v4837 = vpow.pop %v4836
    %v4838 = vmul.f32 %v4777, 1.442695
    %v4839 = vpow.pop %v4838
    %v4840 = vmul.f32 %v4778, 1.442695
    %v4841 = vpow.pop %v4840
    %v4842 = vmul.f32 %v4779, 1.442695
    %v4843 = vpow.pop %v4842
    %v4844 = vsel %vm4651, %v4781, 0.0
    %4845 = vadd.xlane.f32.xlu0 %v4844
    %v4846 = vpop.xlane.xlu0 %4845
    %v4847 = vsel %vm4651, %v4783, 0.0
    %4848 = vadd.xlane.f32.xlu0 %v4847
    %v4849 = vpop.xlane.xlu0 %4848
    %v4850 = vsel %vm4651, %v4785, 0.0
    %4851 = vadd.xlane.f32.xlu0 %v4850
    %v4852 = vpop.xlane.xlu0 %4851
    %v4853 = vsel %vm4651, %v4787, 0.0
    %4854 = vadd.xlane.f32.xlu0 %v4853
    %v4855 = vpop.xlane.xlu0 %4854
    %v4856 = vsel %vm4651, %v4789, 0.0
    %4857 = vadd.xlane.f32.xlu0 %v4856
    %v4858 = vpop.xlane.xlu0 %4857
    %v4859 = vsel %vm4651, %v4791, 0.0
    %4860 = vadd.xlane.f32.xlu0 %v4859
    %v4861 = vpop.xlane.xlu0 %4860
    %v4862 = vsel %vm4651, %v4793, 0.0
    %4863 = vadd.xlane.f32.xlu0 %v4862
    %v4864 = vpop.xlane.xlu0 %4863
    %v4865 = vsel %vm4651, %v4795, 0.0
    %4866 = vadd.xlane.f32.xlu0 %v4865
    %v4867 = vpop.xlane.xlu0 %4866
    %v4868 = vsel %vm4651, %v4797, 0.0
    %4869 = vadd.xlane.f32.xlu0 %v4868
    %v4870 = vpop.xlane.xlu0 %4869
    %v4871 = vsel %vm4651, %v4799, 0.0
    %4872 = vadd.xlane.f32.xlu0 %v4871
    %v4873 = vpop.xlane.xlu0 %4872
    %v4874 = vsel %vm4651, %v4801, 0.0
    %4875 = vadd.xlane.f32.xlu0 %v4874
    %v4876 = vpop.xlane.xlu0 %4875
    %v4877 = vsel %vm4651, %v4803, 0.0
    %4878 = vadd.xlane.f32.xlu0 %v4877
    %v4879 = vpop.xlane.xlu0 %4878
    %v4880 = vsel %vm4651, %v4805, 0.0
    %4881 = vadd.xlane.f32.xlu0 %v4880
    %v4882 = vpop.xlane.xlu0 %4881
    %v4883 = vsel %vm4651, %v4807, 0.0
    %4884 = vadd.xlane.f32.xlu0 %v4883
    %v4885 = vpop.xlane.xlu0 %4884
    %v4886 = vsel %vm4651, %v4809, 0.0
    %4887 = vadd.xlane.f32.xlu0 %v4886
    %v4888 = vpop.xlane.xlu0 %4887
    %v4889 = vsel %vm4651, %v4811, 0.0
    %4890 = vadd.xlane.f32.xlu0 %v4889
    %v4891 = vpop.xlane.xlu0 %4890
    %v4892 = vsel %vm4651, %v4813, 0.0
    %4893 = vadd.xlane.f32.xlu0 %v4892
    %v4894 = vpop.xlane.xlu0 %4893
    %v4895 = vsel %vm4651, %v4815, 0.0
    %4896 = vadd.xlane.f32.xlu0 %v4895
    %v4897 = vpop.xlane.xlu0 %4896
    %v4898 = vsel %vm4651, %v4817, 0.0
    %4899 = vadd.xlane.f32.xlu0 %v4898
    %v4900 = vpop.xlane.xlu0 %4899
    %v4901 = vsel %vm4651, %v4819, 0.0
    %4902 = vadd.xlane.f32.xlu0 %v4901
    %v4903 = vpop.xlane.xlu0 %4902
    %v4904 = vsel %vm4651, %v4821, 0.0
    %4905 = vadd.xlane.f32.xlu0 %v4904
    %v4906 = vpop.xlane.xlu0 %4905
    %v4907 = vsel %vm4651, %v4823, 0.0
    %4908 = vadd.xlane.f32.xlu0 %v4907
    %v4909 = vpop.xlane.xlu0 %4908
    %v4910 = vsel %vm4651, %v4825, 0.0
    %4911 = vadd.xlane.f32.xlu0 %v4910
    %v4912 = vpop.xlane.xlu0 %4911
    %v4913 = vsel %vm4651, %v4827, 0.0
    %4914 = vadd.xlane.f32.xlu0 %v4913
    %v4915 = vpop.xlane.xlu0 %4914
    %v4916 = vsel %vm4651, %v4829, 0.0
    %4917 = vadd.xlane.f32.xlu0 %v4916
    %v4918 = vpop.xlane.xlu0 %4917
    %v4919 = vsel %vm4651, %v4831, 0.0
    %4920 = vadd.xlane.f32.xlu0 %v4919
    %v4921 = vpop.xlane.xlu0 %4920
    %v4922 = vsel %vm4651, %v4833, 0.0
    %4923 = vadd.xlane.f32.xlu0 %v4922
    %v4924 = vpop.xlane.xlu0 %4923
    %v4925 = vsel %vm4651, %v4835, 0.0
    %4926 = vadd.xlane.f32.xlu0 %v4925
    %v4927 = vpop.xlane.xlu0 %4926
    %v4928 = vsel %vm4651, %v4837, 0.0
    %4929 = vadd.xlane.f32.xlu0 %v4928
    %v4930 = vpop.xlane.xlu0 %4929
    %v4931 = vsel %vm4651, %v4839, 0.0
    %4932 = vadd.xlane.f32.xlu0 %v4931
    %v4933 = vpop.xlane.xlu0 %4932
    %v4934 = vsel %vm4651, %v4841, 0.0
    %4935 = vadd.xlane.f32.xlu0 %v4934
    %v4936 = vpop.xlane.xlu0 %4935
    %v4937 = vsel %vm4651, %v4843, 0.0
    %4938 = vadd.xlane.f32.xlu0 %v4937
    %v4939 = vpop.xlane.xlu0 %4938
    %v4940 = vrcp.pop %v4846
    %v4941 = vrcp.pop %v4849
    %v4942 = vrcp.pop %v4852
    %v4943 = vrcp.pop %v4855
    %v4944 = vrcp.pop %v4858
    %v4945 = vrcp.pop %v4861
    %v4946 = vrcp.pop %v4864
    %v4947 = vrcp.pop %v4867
    %v4948 = vrcp.pop %v4870
    %v4949 = vrcp.pop %v4873
    %v4950 = vrcp.pop %v4876
    %v4951 = vrcp.pop %v4879
    %v4952 = vrcp.pop %v4882
    %v4953 = vrcp.pop %v4885
    %v4954 = vrcp.pop %v4888
    %v4955 = vrcp.pop %v4891
    %v4956 = vrcp.pop %v4894
    %v4957 = vrcp.pop %v4897
    %v4958 = vrcp.pop %v4900
    %v4959 = vrcp.pop %v4903
    %v4960 = vrcp.pop %v4906
    %v4961 = vrcp.pop %v4909
    %v4962 = vrcp.pop %v4912
    %v4963 = vrcp.pop %v4915
    %v4964 = vrcp.pop %v4918
    %v4965 = vrcp.pop %v4921
    %v4966 = vrcp.pop %v4924
    %v4967 = vrcp.pop %v4927
    %v4968 = vrcp.pop %v4930
    %v4969 = vrcp.pop %v4933
    %v4970 = vrcp.pop %v4936
    %v4971 = vrcp.pop %v4939
    %v4972 = vmul.f32 %v4781, %v4940
    %v4973 = vmul.f32 %v4783, %v4941
    %v4974 = vmul.f32 %v4785, %v4942
    %v4975 = vmul.f32 %v4787, %v4943
    %v4976 = vmul.f32 %v4789, %v4944
    %v4977 = vmul.f32 %v4791, %v4945
    %v4978 = vmul.f32 %v4793, %v4946
    %v4979 = vmul.f32 %v4795, %v4947
    %v4980 = vmul.f32 %v4797, %v4948
    %v4981 = vmul.f32 %v4799, %v4949
    %v4982 = vmul.f32 %v4801, %v4950
    %v4983 = vmul.f32 %v4803, %v4951
    %v4984 = vmul.f32 %v4805, %v4952
    %v4985 = vmul.f32 %v4807, %v4953
    %v4986 = vmul.f32 %v4809, %v4954
    %v4987 = vmul.f32 %v4811, %v4955
    %v4988 = vmul.f32 %v4813, %v4956
    %v4989 = vmul.f32 %v4815, %v4957
    %v4990 = vmul.f32 %v4817, %v4958
    %v4991 = vmul.f32 %v4819, %v4959
    %v4992 = vmul.f32 %v4821, %v4960
    %v4993 = vmul.f32 %v4823, %v4961
    %v4994 = vmul.f32 %v4825, %v4962
    %v4995 = vmul.f32 %v4827, %v4963
    %v4996 = vmul.f32 %v4829, %v4964
    %v4997 = vmul.f32 %v4831, %v4965
    %v4998 = vmul.f32 %v4833, %v4966
    %v4999 = vmul.f32 %v4835, %v4967
    %v5000 = vmul.f32 %v4837, %v4968
    %v5001 = vmul.f32 %v4839, %v4969
    %v5002 = vmul.f32 %v4841, %v4970
    %v5003 = vmul.f32 %v4843, %v4971
    %v5004 = vstv %s121
    %v5005 = vmul.f32 %v5004, %v4988
    %v5006 = vmul.f32 %v5004, %v4989
    %v5007 = vmul.f32 %v5004, %v4990
    %v5008 = vmul.f32 %v5004, %v4991
    %v5009 = vmul.f32 %v5004, %v4992
    %v5010 = vmul.f32 %v5004, %v4993
    %v5011 = vmul.f32 %v5004, %v4994
    %v5012 = vmul.f32 %v5004, %v4995
    %v5013 = vmul.f32 %v5004, %v4996
    %v5014 = vmul.f32 %v5004, %v4997
    %v5015 = vmul.f32 %v5004, %v4998
    %v5016 = vmul.f32 %v5004, %v4999
    %v5017 = vmul.f32 %v5004, %v5000
    %v5018 = vmul.f32 %v5004, %v5001
    %v5019 = vmul.f32 %v5004, %v5002
    %v5020 = vmul.f32 %v5004, %v5003
    %v5021 = vsub.f32 %v4972, %v5005
    %v5022 = vsub.f32 %v4973, %v5006
    %v5023 = vsub.f32 %v4974, %v5007
    %v5024 = vsub.f32 %v4975, %v5008
    %v5025 = vsub.f32 %v4976, %v5009
    %v5026 = vsub.f32 %v4977, %v5010
    %v5027 = vsub.f32 %v4978, %v5011
    %v5028 = vsub.f32 %v4979, %v5012
    %v5029 = vsub.f32 %v4980, %v5013
    %v5030 = vsub.f32 %v4981, %v5014
    %v5031 = vsub.f32 %v4982, %v5015
    %v5032 = vsub.f32 %v4983, %v5016
    %v5033 = vsub.f32 %v4984, %v5017
    %v5034 = vsub.f32 %v4985, %v5018
    %v5035 = vsub.f32 %v4986, %v5019
    %v5036 = vsub.f32 %v4987, %v5020
    %5039 = vrot.lane.b32.xlu0 %v2860, 64
    %v5040 = vpop.permute.xlu0 %5039
    %5041 = vrot.lane.b32.xlu0 %v2864, 64
    %v5042 = vpop.permute.xlu0 %5041
    %5047 = vrot.lane.b32.xlu0 %v2862, 64
    %v5048 = vpop.permute.xlu0 %5047
    %5049 = vrot.lane.b32.xlu0 %v2866, 64
    %v5050 = vpop.permute.xlu0 %5049
    %5055 = vrot.lane.b32.xlu0 %v2946, 64
    %v5056 = vpop.permute.xlu0 %5055
    %5057 = vrot.lane.b32.xlu0 %v2950, 64
    %v5058 = vpop.permute.xlu0 %5057
    %5063 = vrot.lane.b32.xlu0 %v2948, 64
    %v5064 = vpop.permute.xlu0 %5063
    %5065 = vrot.lane.b32.xlu0 %v2952, 64
    %v5066 = vpop.permute.xlu0 %5065
    %v5069 = vpack.c.bf16 %v2860, %v2860
    %v5070 = vpack.c.bf16 %v2864, %v2864
    %v5071 = vpack.c.bf16 %v5040, %v5040
    %v5072 = vpack.c.bf16 %v5042, %v5042
    %v5073 = vpack.c.bf16 %v2862, %v2862
    %v5074 = vpack.c.bf16 %v2866, %v2866
    %v5075 = vpack.c.bf16 %v5048, %v5048
    %v5076 = vpack.c.bf16 %v5050, %v5050
    %v5077 = vpack.c.bf16 %v2946, %v2946
    %v5078 = vpack.c.bf16 %v2950, %v2950
    %v5079 = vpack.c.bf16 %v5056, %v5056
    %v5080 = vpack.c.bf16 %v5058, %v5058
    %v5081 = vpack.c.bf16 %v2948, %v2948
    %v5082 = vpack.c.bf16 %v2952, %v2952
    %v5083 = vpack.c.bf16 %v5064, %v5064
    %v5084 = vpack.c.bf16 %v5066, %v5066
    %v5085 = vpack.c.bf16 %v5021, %v5021
    %v5086 = vpack.c.bf16 %v5022, %v5022
    %v5087 = vpack.c.bf16 %v5023, %v5023
    %v5088 = vpack.c.bf16 %v5024, %v5024
    %v5089 = vpack.c.bf16 %v5025, %v5025
    %v5090 = vpack.c.bf16 %v5026, %v5026
    %v5091 = vpack.c.bf16 %v5027, %v5027
    %v5092 = vpack.c.bf16 %v5028, %v5028
    %v5093 = vpack.c.bf16 %v5029, %v5029
    %v5094 = vpack.c.bf16 %v5030, %v5030
    %v5095 = vpack.c.bf16 %v5031, %v5031
    %v5096 = vpack.c.bf16 %v5032, %v5032
    %v5097 = vpack.c.bf16 %v5033, %v5033
    %v5098 = vpack.c.bf16 %v5034, %v5034
    %v5099 = vpack.c.bf16 %v5035, %v5035
    %v5100 = vpack.c.bf16 %v5036, %v5036
    %v5102 = vsel %vm4651, %v5085, 0
    %vm5104 = vcmask 1043456
    %v5106 = vsel %vm5104, %v5069, 0
    %5108 = vmatprep.subr.bf16.mxu0 0
    %5109 = vmatpush1.bf16.msra.mxu0 0
    %5110 = vmatprep.subr.bf16.mxu0 0
    %5111 = vmatpush1.bf16.msra.mxu0 0
    %5112 = vmatprep.subr.bf16.mxu0 0
    %5113 = vmatpush1.bf16.msra.mxu0 0
    %5114 = vmatprep.subr.bf16.mxu0 0
    %5115 = vmatpush1.bf16.msra.mxu0 0
    %5116 = vmatprep.subr.bf16.mxu0 0
    %5117 = vmatpush1.bf16.msra.mxu0 0
    %5118 = vmatprep.subr.bf16.mxu0 0
    %5119 = vmatpush1.bf16.msra.mxu0 0
    %5120 = vmatprep.subr.bf16.mxu0 0
    %5121 = vmatpush1.bf16.msra.mxu0 0
    %5122 = vmatprep.subr.bf16.mxu0 0
    %5123 = vmatpush1.bf16.msra.mxu0 %v5106
    %5124 = vmatprep.subr.bf16.mxu0 0
    %5125 = vmatpush2.bf16.msra.mxu0 0
    %5126 = vmatprep.subr.bf16.mxu0 0
    %5127 = vmatpush2.bf16.msra.mxu0 0
    %5128 = vmatprep.subr.bf16.mxu0 0
    %5129 = vmatpush2.bf16.msra.mxu0 0
    %5130 = vmatprep.subr.bf16.mxu0 0
    %5131 = vmatpush2.bf16.msra.mxu0 0
    %5132 = vmatprep.subr.bf16.mxu0 0
    %5133 = vmatpush2.bf16.msra.mxu0 0
    %5134 = vmatprep.subr.bf16.mxu0 0
    %5135 = vmatpush2.bf16.msra.mxu0 0
    %5136 = vmatprep.subr.bf16.mxu0 0
    %5137 = vmatpush2.bf16.msra.mxu0 0
    %5138 = vmatprep.subr.bf16.mxu0 0
    %5139 = vmatpush2.bf16.msra.mxu0 0
    %5140 = vmatprep.mubr.bf16.mxu0 0
    %5141 = vmatmul.mubr.bf16.gmra.mxu0 %v5102
    %v5142 = vpop.f32.mrf.mxu0
    %v5143 = vadd.f32 0.0, %v5142
    %v5144 = vpop.f32.mrf.mxu0
    %v5145 = vpop.f32.mrf.mxu0
    %v5146 = vpop.f32.mrf.mxu0
    %5147 = vdwg.mxu0
    %v5149 = vsel %vm4651, %v5086, 0
    %v5152 = vsel %vm5104, %v5070, 0
    %5154 = vmatprep.subr.bf16.mxu0 0
    %5155 = vmatpush1.bf16.msra.mxu0 0
    %5156 = vmatprep.subr.bf16.mxu0 0
    %5157 = vmatpush1.bf16.msra.mxu0 0
    %5158 = vmatprep.subr.bf16.mxu0 0
    %5159 = vmatpush1.bf16.msra.mxu0 0
    %5160 = vmatprep.subr.bf16.mxu0 0
    %5161 = vmatpush1.bf16.msra.mxu0 0
    %5162 = vmatprep.subr.bf16.mxu0 0
    %5163 = vmatpush1.bf16.msra.mxu0 0
    %5164 = vmatprep.subr.bf16.mxu0 0
    %5165 = vmatpush1.bf16.msra.mxu0 0
    %5166 = vmatprep.subr.bf16.mxu0 0
    %5167 = vmatpush1.bf16.msra.mxu0 0
    %5168 = vmatprep.subr.bf16.mxu0 0
    %5169 = vmatpush1.bf16.msra.mxu0 %v5152
    %5170 = vmatprep.subr.bf16.mxu0 0
    %5171 = vmatpush2.bf16.msra.mxu0 0
    %5172 = vmatprep.subr.bf16.mxu0 0
    %5173 = vmatpush2.bf16.msra.mxu0 0
    %5174 = vmatprep.subr.bf16.mxu0 0
    %5175 = vmatpush2.bf16.msra.mxu0 0
    %5176 = vmatprep.subr.bf16.mxu0 0
    %5177 = vmatpush2.bf16.msra.mxu0 0
    %5178 = vmatprep.subr.bf16.mxu0 0
    %5179 = vmatpush2.bf16.msra.mxu0 0
    %5180 = vmatprep.subr.bf16.mxu0 0
    %5181 = vmatpush2.bf16.msra.mxu0 0
    %5182 = vmatprep.subr.bf16.mxu0 0
    %5183 = vmatpush2.bf16.msra.mxu0 0
    %5184 = vmatprep.subr.bf16.mxu0 0
    %5185 = vmatpush2.bf16.msra.mxu0 0
    %5186 = vmatprep.mubr.bf16.mxu0 0
    %5187 = vmatmul.mubr.bf16.gmra.mxu0 %v5149
    %v5188 = vpop.f32.mrf.mxu0
    %v5189 = vadd.f32 0.0, %v5188
    %v5190 = vpop.f32.mrf.mxu0
    %v5191 = vpop.f32.mrf.mxu0
    %v5192 = vpop.f32.mrf.mxu0
    %5193 = vdwg.mxu0
    %v5195 = vsel %vm4651, %v5087, 0
    %v5198 = vsel %vm5104, %v5071, 0
    %5200 = vmatprep.subr.bf16.mxu0 0
    %5201 = vmatpush1.bf16.msra.mxu0 0
    %5202 = vmatprep.subr.bf16.mxu0 0
    %5203 = vmatpush1.bf16.msra.mxu0 0
    %5204 = vmatprep.subr.bf16.mxu0 0
    %5205 = vmatpush1.bf16.msra.mxu0 0
    %5206 = vmatprep.subr.bf16.mxu0 0
    %5207 = vmatpush1.bf16.msra.mxu0 0
    %5208 = vmatprep.subr.bf16.mxu0 0
    %5209 = vmatpush1.bf16.msra.mxu0 0
    %5210 = vmatprep.subr.bf16.mxu0 0
    %5211 = vmatpush1.bf16.msra.mxu0 0
    %5212 = vmatprep.subr.bf16.mxu0 0
    %5213 = vmatpush1.bf16.msra.mxu0 0
    %5214 = vmatprep.subr.bf16.mxu0 0
    %5215 = vmatpush1.bf16.msra.mxu0 %v5198
    %5216 = vmatprep.subr.bf16.mxu0 0
    %5217 = vmatpush2.bf16.msra.mxu0 0
    %5218 = vmatprep.subr.bf16.mxu0 0
    %5219 = vmatpush2.bf16.msra.mxu0 0
    %5220 = vmatprep.subr.bf16.mxu0 0
    %5221 = vmatpush2.bf16.msra.mxu0 0
    %5222 = vmatprep.subr.bf16.mxu0 0
    %5223 = vmatpush2.bf16.msra.mxu0 0
    %5224 = vmatprep.subr.bf16.mxu0 0
    %5225 = vmatpush2.bf16.msra.mxu0 0
    %5226 = vmatprep.subr.bf16.mxu0 0
    %5227 = vmatpush2.bf16.msra.mxu0 0
    %5228 = vmatprep.subr.bf16.mxu0 0
    %5229 = vmatpush2.bf16.msra.mxu0 0
    %5230 = vmatprep.subr.bf16.mxu0 0
    %5231 = vmatpush2.bf16.msra.mxu0 0
    %5232 = vmatprep.mubr.bf16.mxu0 0
    %5233 = vmatmul.mubr.bf16.gmra.mxu0 %v5195
    %v5234 = vpop.f32.mrf.mxu0
    %v5235 = vadd.f32 0.0, %v5234
    %v5236 = vpop.f32.mrf.mxu0
    %v5237 = vpop.f32.mrf.mxu0
    %v5238 = vpop.f32.mrf.mxu0
    %5239 = vdwg.mxu0
    %v5241 = vsel %vm4651, %v5088, 0
    %v5244 = vsel %vm5104, %v5072, 0
    %5246 = vmatprep.subr.bf16.mxu0 0
    %5247 = vmatpush1.bf16.msra.mxu0 0
    %5248 = vmatprep.subr.bf16.mxu0 0
    %5249 = vmatpush1.bf16.msra.mxu0 0
    %5250 = vmatprep.subr.bf16.mxu0 0
    %5251 = vmatpush1.bf16.msra.mxu0 0
    %5252 = vmatprep.subr.bf16.mxu0 0
    %5253 = vmatpush1.bf16.msra.mxu0 0
    %5254 = vmatprep.subr.bf16.mxu0 0
    %5255 = vmatpush1.bf16.msra.mxu0 0
    %5256 = vmatprep.subr.bf16.mxu0 0
    %5257 = vmatpush1.bf16.msra.mxu0 0
    %5258 = vmatprep.subr.bf16.mxu0 0
    %5259 = vmatpush1.bf16.msra.mxu0 0
    %5260 = vmatprep.subr.bf16.mxu0 0
    %5261 = vmatpush1.bf16.msra.mxu0 %v5244
    %5262 = vmatprep.subr.bf16.mxu0 0
    %5263 = vmatpush2.bf16.msra.mxu0 0
    %5264 = vmatprep.subr.bf16.mxu0 0
    %5265 = vmatpush2.bf16.msra.mxu0 0
    %5266 = vmatprep.subr.bf16.mxu0 0
    %5267 = vmatpush2.bf16.msra.mxu0 0
    %5268 = vmatprep.subr.bf16.mxu0 0
    %5269 = vmatpush2.bf16.msra.mxu0 0
    %5270 = vmatprep.subr.bf16.mxu0 0
    %5271 = vmatpush2.bf16.msra.mxu0 0
    %5272 = vmatprep.subr.bf16.mxu0 0
    %5273 = vmatpush2.bf16.msra.mxu0 0
    %5274 = vmatprep.subr.bf16.mxu0 0
    %5275 = vmatpush2.bf16.msra.mxu0 0
    %5276 = vmatprep.subr.bf16.mxu0 0
    %5277 = vmatpush2.bf16.msra.mxu0 0
    %5278 = vmatprep.mubr.bf16.mxu0 0
    %5279 = vmatmul.mubr.bf16.gmra.mxu0 %v5241
    %v5280 = vpop.f32.mrf.mxu0
    %v5281 = vadd.f32 0.0, %v5280
    %v5282 = vpop.f32.mrf.mxu0
    %v5283 = vpop.f32.mrf.mxu0
    %v5284 = vpop.f32.mrf.mxu0
    %5285 = vdwg.mxu0
    %v5287 = vsel %vm4651, %v5089, 0
    %v5290 = vsel %vm5104, %v5073, 0
    %5292 = vmatprep.subr.bf16.mxu0 0
    %5293 = vmatpush1.bf16.msra.mxu0 0
    %5294 = vmatprep.subr.bf16.mxu0 0
    %5295 = vmatpush1.bf16.msra.mxu0 0
    %5296 = vmatprep.subr.bf16.mxu0 0
    %5297 = vmatpush1.bf16.msra.mxu0 0
    %5298 = vmatprep.subr.bf16.mxu0 0
    %5299 = vmatpush1.bf16.msra.mxu0 0
    %5300 = vmatprep.subr.bf16.mxu0 0
    %5301 = vmatpush1.bf16.msra.mxu0 0
    %5302 = vmatprep.subr.bf16.mxu0 0
    %5303 = vmatpush1.bf16.msra.mxu0 0
    %5304 = vmatprep.subr.bf16.mxu0 0
    %5305 = vmatpush1.bf16.msra.mxu0 0
    %5306 = vmatprep.subr.bf16.mxu0 0
    %5307 = vmatpush1.bf16.msra.mxu0 %v5290
    %5308 = vmatprep.subr.bf16.mxu0 0
    %5309 = vmatpush2.bf16.msra.mxu0 0
    %5310 = vmatprep.subr.bf16.mxu0 0
    %5311 = vmatpush2.bf16.msra.mxu0 0
    %5312 = vmatprep.subr.bf16.mxu0 0
    %5313 = vmatpush2.bf16.msra.mxu0 0
    %5314 = vmatprep.subr.bf16.mxu0 0
    %5315 = vmatpush2.bf16.msra.mxu0 0
    %5316 = vmatprep.subr.bf16.mxu0 0
    %5317 = vmatpush2.bf16.msra.mxu0 0
    %5318 = vmatprep.subr.bf16.mxu0 0
    %5319 = vmatpush2.bf16.msra.mxu0 0
    %5320 = vmatprep.subr.bf16.mxu0 0
    %5321 = vmatpush2.bf16.msra.mxu0 0
    %5322 = vmatprep.subr.bf16.mxu0 0
    %5323 = vmatpush2.bf16.msra.mxu0 0
    %5324 = vmatprep.mubr.bf16.mxu0 0
    %5325 = vmatmul.mubr.bf16.gmra.mxu0 %v5287
    %v5326 = vpop.f32.mrf.mxu0
    %v5327 = vadd.f32 0.0, %v5326
    %v5328 = vpop.f32.mrf.mxu0
    %v5329 = vpop.f32.mrf.mxu0
    %v5330 = vpop.f32.mrf.mxu0
    %5331 = vdwg.mxu0
    %v5333 = vsel %vm4651, %v5090, 0
    %v5336 = vsel %vm5104, %v5074, 0
    %5338 = vmatprep.subr.bf16.mxu0 0
    %5339 = vmatpush1.bf16.msra.mxu0 0
    %5340 = vmatprep.subr.bf16.mxu0 0
    %5341 = vmatpush1.bf16.msra.mxu0 0
    %5342 = vmatprep.subr.bf16.mxu0 0
    %5343 = vmatpush1.bf16.msra.mxu0 0
    %5344 = vmatprep.subr.bf16.mxu0 0
    %5345 = vmatpush1.bf16.msra.mxu0 0
    %5346 = vmatprep.subr.bf16.mxu0 0
    %5347 = vmatpush1.bf16.msra.mxu0 0
    %5348 = vmatprep.subr.bf16.mxu0 0
    %5349 = vmatpush1.bf16.msra.mxu0 0
    %5350 = vmatprep.subr.bf16.mxu0 0
    %5351 = vmatpush1.bf16.msra.mxu0 0
    %5352 = vmatprep.subr.bf16.mxu0 0
    %5353 = vmatpush1.bf16.msra.mxu0 %v5336
    %5354 = vmatprep.subr.bf16.mxu0 0
    %5355 = vmatpush2.bf16.msra.mxu0 0
    %5356 = vmatprep.subr.bf16.mxu0 0
    %5357 = vmatpush2.bf16.msra.mxu0 0
    %5358 = vmatprep.subr.bf16.mxu0 0
    %5359 = vmatpush2.bf16.msra.mxu0 0
    %5360 = vmatprep.subr.bf16.mxu0 0
    %5361 = vmatpush2.bf16.msra.mxu0 0
    %5362 = vmatprep.subr.bf16.mxu0 0
    %5363 = vmatpush2.bf16.msra.mxu0 0
    %5364 = vmatprep.subr.bf16.mxu0 0
    %5365 = vmatpush2.bf16.msra.mxu0 0
    %5366 = vmatprep.subr.bf16.mxu0 0
    %5367 = vmatpush2.bf16.msra.mxu0 0
    %5368 = vmatprep.subr.bf16.mxu0 0
    %5369 = vmatpush2.bf16.msra.mxu0 0
    %5370 = vmatprep.mubr.bf16.mxu0 0
    %5371 = vmatmul.mubr.bf16.gmra.mxu0 %v5333
    %v5372 = vpop.f32.mrf.mxu0
    %v5373 = vadd.f32 0.0, %v5372
    %v5374 = vpop.f32.mrf.mxu0
    %v5375 = vpop.f32.mrf.mxu0
    %v5376 = vpop.f32.mrf.mxu0
    %5377 = vdwg.mxu0
    %v5379 = vsel %vm4651, %v5091, 0
    %v5382 = vsel %vm5104, %v5075, 0
    %5384 = vmatprep.subr.bf16.mxu0 0
    %5385 = vmatpush1.bf16.msra.mxu0 0
    %5386 = vmatprep.subr.bf16.mxu0 0
    %5387 = vmatpush1.bf16.msra.mxu0 0
    %5388 = vmatprep.subr.bf16.mxu0 0
    %5389 = vmatpush1.bf16.msra.mxu0 0
    %5390 = vmatprep.subr.bf16.mxu0 0
    %5391 = vmatpush1.bf16.msra.mxu0 0
    %5392 = vmatprep.subr.bf16.mxu0 0
    %5393 = vmatpush1.bf16.msra.mxu0 0
    %5394 = vmatprep.subr.bf16.mxu0 0
    %5395 = vmatpush1.bf16.msra.mxu0 0
    %5396 = vmatprep.subr.bf16.mxu0 0
    %5397 = vmatpush1.bf16.msra.mxu0 0
    %5398 = vmatprep.subr.bf16.mxu0 0
    %5399 = vmatpush1.bf16.msra.mxu0 %v5382
    %5400 = vmatprep.subr.bf16.mxu0 0
    %5401 = vmatpush2.bf16.msra.mxu0 0
    %5402 = vmatprep.subr.bf16.mxu0 0
    %5403 = vmatpush2.bf16.msra.mxu0 0
    %5404 = vmatprep.subr.bf16.mxu0 0
    %5405 = vmatpush2.bf16.msra.mxu0 0
    %5406 = vmatprep.subr.bf16.mxu0 0
    %5407 = vmatpush2.bf16.msra.mxu0 0
    %5408 = vmatprep.subr.bf16.mxu0 0
    %5409 = vmatpush2.bf16.msra.mxu0 0
    %5410 = vmatprep.subr.bf16.mxu0 0
    %5411 = vmatpush2.bf16.msra.mxu0 0
    %5412 = vmatprep.subr.bf16.mxu0 0
    %5413 = vmatpush2.bf16.msra.mxu0 0
    %5414 = vmatprep.subr.bf16.mxu0 0
    %5415 = vmatpush2.bf16.msra.mxu0 0
    %5416 = vmatprep.mubr.bf16.mxu0 0
    %5417 = vmatmul.mubr.bf16.gmra.mxu0 %v5379
    %v5418 = vpop.f32.mrf.mxu0
    %v5419 = vadd.f32 0.0, %v5418
    %v5420 = vpop.f32.mrf.mxu0
    %v5421 = vpop.f32.mrf.mxu0
    %v5422 = vpop.f32.mrf.mxu0
    %5423 = vdwg.mxu0
    %v5425 = vsel %vm4651, %v5092, 0
    %v5428 = vsel %vm5104, %v5076, 0
    %5430 = vmatprep.subr.bf16.mxu0 0
    %5431 = vmatpush1.bf16.msra.mxu0 0
    %5432 = vmatprep.subr.bf16.mxu0 0
    %5433 = vmatpush1.bf16.msra.mxu0 0
    %5434 = vmatprep.subr.bf16.mxu0 0
    %5435 = vmatpush1.bf16.msra.mxu0 0
    %5436 = vmatprep.subr.bf16.mxu0 0
    %5437 = vmatpush1.bf16.msra.mxu0 0
    %5438 = vmatprep.subr.bf16.mxu0 0
    %5439 = vmatpush1.bf16.msra.mxu0 0
    %5440 = vmatprep.subr.bf16.mxu0 0
    %5441 = vmatpush1.bf16.msra.mxu0 0
    %5442 = vmatprep.subr.bf16.mxu0 0
    %5443 = vmatpush1.bf16.msra.mxu0 0
    %5444 = vmatprep.subr.bf16.mxu0 0
    %5445 = vmatpush1.bf16.msra.mxu0 %v5428
    %5446 = vmatprep.subr.bf16.mxu0 0
    %5447 = vmatpush2.bf16.msra.mxu0 0
    %5448 = vmatprep.subr.bf16.mxu0 0
    %5449 = vmatpush2.bf16.msra.mxu0 0
    %5450 = vmatprep.subr.bf16.mxu0 0
    %5451 = vmatpush2.bf16.msra.mxu0 0
    %5452 = vmatprep.subr.bf16.mxu0 0
    %5453 = vmatpush2.bf16.msra.mxu0 0
    %5454 = vmatprep.subr.bf16.mxu0 0
    %5455 = vmatpush2.bf16.msra.mxu0 0
    %5456 = vmatprep.subr.bf16.mxu0 0
    %5457 = vmatpush2.bf16.msra.mxu0 0
    %5458 = vmatprep.subr.bf16.mxu0 0
    %5459 = vmatpush2.bf16.msra.mxu0 0
    %5460 = vmatprep.subr.bf16.mxu0 0
    %5461 = vmatpush2.bf16.msra.mxu0 0
    %5462 = vmatprep.mubr.bf16.mxu0 0
    %5463 = vmatmul.mubr.bf16.gmra.mxu0 %v5425
    %v5464 = vpop.f32.mrf.mxu0
    %v5465 = vadd.f32 0.0, %v5464
    %v5466 = vpop.f32.mrf.mxu0
    %v5467 = vpop.f32.mrf.mxu0
    %v5468 = vpop.f32.mrf.mxu0
    %5469 = vdwg.mxu0
    %v5471 = vsel %vm4651, %v5093, 0
    %v5474 = vsel %vm5104, %v5077, 0
    %5476 = vmatprep.subr.bf16.mxu0 0
    %5477 = vmatpush1.bf16.msra.mxu0 0
    %5478 = vmatprep.subr.bf16.mxu0 0
    %5479 = vmatpush1.bf16.msra.mxu0 0
    %5480 = vmatprep.subr.bf16.mxu0 0
    %5481 = vmatpush1.bf16.msra.mxu0 0
    %5482 = vmatprep.subr.bf16.mxu0 0
    %5483 = vmatpush1.bf16.msra.mxu0 0
    %5484 = vmatprep.subr.bf16.mxu0 0
    %5485 = vmatpush1.bf16.msra.mxu0 0
    %5486 = vmatprep.subr.bf16.mxu0 0
    %5487 = vmatpush1.bf16.msra.mxu0 0
    %5488 = vmatprep.subr.bf16.mxu0 0
    %5489 = vmatpush1.bf16.msra.mxu0 0
    %5490 = vmatprep.subr.bf16.mxu0 0
    %5491 = vmatpush1.bf16.msra.mxu0 %v5474
    %5492 = vmatprep.subr.bf16.mxu0 0
    %5493 = vmatpush2.bf16.msra.mxu0 0
    %5494 = vmatprep.subr.bf16.mxu0 0
    %5495 = vmatpush2.bf16.msra.mxu0 0
    %5496 = vmatprep.subr.bf16.mxu0 0
    %5497 = vmatpush2.bf16.msra.mxu0 0
    %5498 = vmatprep.subr.bf16.mxu0 0
    %5499 = vmatpush2.bf16.msra.mxu0 0
    %5500 = vmatprep.subr.bf16.mxu0 0
    %5501 = vmatpush2.bf16.msra.mxu0 0
    %5502 = vmatprep.subr.bf16.mxu0 0
    %5503 = vmatpush2.bf16.msra.mxu0 0
    %5504 = vmatprep.subr.bf16.mxu0 0
    %5505 = vmatpush2.bf16.msra.mxu0 0
    %5506 = vmatprep.subr.bf16.mxu0 0
    %5507 = vmatpush2.bf16.msra.mxu0 0
    %5508 = vmatprep.mubr.bf16.mxu0 0
    %5509 = vmatmul.mubr.bf16.gmra.mxu0 %v5471
    %v5510 = vpop.f32.mrf.mxu0
    %v5511 = vadd.f32 0.0, %v5510
    %v5512 = vpop.f32.mrf.mxu0
    %v5513 = vpop.f32.mrf.mxu0
    %v5514 = vpop.f32.mrf.mxu0
    %5515 = vdwg.mxu0
    %v5517 = vsel %vm4651, %v5094, 0
    %v5520 = vsel %vm5104, %v5078, 0
    %5522 = vmatprep.subr.bf16.mxu0 0
    %5523 = vmatpush1.bf16.msra.mxu0 0
    %5524 = vmatprep.subr.bf16.mxu0 0
    %5525 = vmatpush1.bf16.msra.mxu0 0
    %5526 = vmatprep.subr.bf16.mxu0 0
    %5527 = vmatpush1.bf16.msra.mxu0 0
    %5528 = vmatprep.subr.bf16.mxu0 0
    %5529 = vmatpush1.bf16.msra.mxu0 0
    %5530 = vmatprep.subr.bf16.mxu0 0
    %5531 = vmatpush1.bf16.msra.mxu0 0
    %5532 = vmatprep.subr.bf16.mxu0 0
    %5533 = vmatpush1.bf16.msra.mxu0 0
    %5534 = vmatprep.subr.bf16.mxu0 0
    %5535 = vmatpush1.bf16.msra.mxu0 0
    %5536 = vmatprep.subr.bf16.mxu0 0
    %5537 = vmatpush1.bf16.msra.mxu0 %v5520
    %5538 = vmatprep.subr.bf16.mxu0 0
    %5539 = vmatpush2.bf16.msra.mxu0 0
    %5540 = vmatprep.subr.bf16.mxu0 0
    %5541 = vmatpush2.bf16.msra.mxu0 0
    %5542 = vmatprep.subr.bf16.mxu0 0
    %5543 = vmatpush2.bf16.msra.mxu0 0
    %5544 = vmatprep.subr.bf16.mxu0 0
    %5545 = vmatpush2.bf16.msra.mxu0 0
    %5546 = vmatprep.subr.bf16.mxu0 0
    %5547 = vmatpush2.bf16.msra.mxu0 0
    %5548 = vmatprep.subr.bf16.mxu0 0
    %5549 = vmatpush2.bf16.msra.mxu0 0
    %5550 = vmatprep.subr.bf16.mxu0 0
    %5551 = vmatpush2.bf16.msra.mxu0 0
    %5552 = vmatprep.subr.bf16.mxu0 0
    %5553 = vmatpush2.bf16.msra.mxu0 0
    %5554 = vmatprep.mubr.bf16.mxu0 0
    %5555 = vmatmul.mubr.bf16.gmra.mxu0 %v5517
    %v5556 = vpop.f32.mrf.mxu0
    %v5557 = vadd.f32 0.0, %v5556
    %v5558 = vpop.f32.mrf.mxu0
    %v5559 = vpop.f32.mrf.mxu0
    %v5560 = vpop.f32.mrf.mxu0
    %5561 = vdwg.mxu0
    %v5563 = vsel %vm4651, %v5095, 0
    %v5566 = vsel %vm5104, %v5079, 0
    %5568 = vmatprep.subr.bf16.mxu0 0
    %5569 = vmatpush1.bf16.msra.mxu0 0
    %5570 = vmatprep.subr.bf16.mxu0 0
    %5571 = vmatpush1.bf16.msra.mxu0 0
    %5572 = vmatprep.subr.bf16.mxu0 0
    %5573 = vmatpush1.bf16.msra.mxu0 0
    %5574 = vmatprep.subr.bf16.mxu0 0
    %5575 = vmatpush1.bf16.msra.mxu0 0
    %5576 = vmatprep.subr.bf16.mxu0 0
    %5577 = vmatpush1.bf16.msra.mxu0 0
    %5578 = vmatprep.subr.bf16.mxu0 0
    %5579 = vmatpush1.bf16.msra.mxu0 0
    %5580 = vmatprep.subr.bf16.mxu0 0
    %5581 = vmatpush1.bf16.msra.mxu0 0
    %5582 = vmatprep.subr.bf16.mxu0 0
    %5583 = vmatpush1.bf16.msra.mxu0 %v5566
    %5584 = vmatprep.subr.bf16.mxu0 0
    %5585 = vmatpush2.bf16.msra.mxu0 0
    %5586 = vmatprep.subr.bf16.mxu0 0
    %5587 = vmatpush2.bf16.msra.mxu0 0
    %5588 = vmatprep.subr.bf16.mxu0 0
    %5589 = vmatpush2.bf16.msra.mxu0 0
    %5590 = vmatprep.subr.bf16.mxu0 0
    %5591 = vmatpush2.bf16.msra.mxu0 0
    %5592 = vmatprep.subr.bf16.mxu0 0
    %5593 = vmatpush2.bf16.msra.mxu0 0
    %5594 = vmatprep.subr.bf16.mxu0 0
    %5595 = vmatpush2.bf16.msra.mxu0 0
    %5596 = vmatprep.subr.bf16.mxu0 0
    %5597 = vmatpush2.bf16.msra.mxu0 0
    %5598 = vmatprep.subr.bf16.mxu0 0
    %5599 = vmatpush2.bf16.msra.mxu0 0
    %5600 = vmatprep.mubr.bf16.mxu0 0
    %5601 = vmatmul.mubr.bf16.gmra.mxu0 %v5563
    %v5602 = vpop.f32.mrf.mxu0
    %v5603 = vadd.f32 0.0, %v5602
    %v5604 = vpop.f32.mrf.mxu0
    %v5605 = vpop.f32.mrf.mxu0
    %v5606 = vpop.f32.mrf.mxu0
    %5607 = vdwg.mxu0
    %v5609 = vsel %vm4651, %v5096, 0
    %v5612 = vsel %vm5104, %v5080, 0
    %5614 = vmatprep.subr.bf16.mxu0 0
    %5615 = vmatpush1.bf16.msra.mxu0 0
    %5616 = vmatprep.subr.bf16.mxu0 0
    %5617 = vmatpush1.bf16.msra.mxu0 0
    %5618 = vmatprep.subr.bf16.mxu0 0
    %5619 = vmatpush1.bf16.msra.mxu0 0
    %5620 = vmatprep.subr.bf16.mxu0 0
    %5621 = vmatpush1.bf16.msra.mxu0 0
    %5622 = vmatprep.subr.bf16.mxu0 0
    %5623 = vmatpush1.bf16.msra.mxu0 0
    %5624 = vmatprep.subr.bf16.mxu0 0
    %5625 = vmatpush1.bf16.msra.mxu0 0
    %5626 = vmatprep.subr.bf16.mxu0 0
    %5627 = vmatpush1.bf16.msra.mxu0 0
    %5628 = vmatprep.subr.bf16.mxu0 0
    %5629 = vmatpush1.bf16.msra.mxu0 %v5612
    %5630 = vmatprep.subr.bf16.mxu0 0
    %5631 = vmatpush2.bf16.msra.mxu0 0
    %5632 = vmatprep.subr.bf16.mxu0 0
    %5633 = vmatpush2.bf16.msra.mxu0 0
    %5634 = vmatprep.subr.bf16.mxu0 0
    %5635 = vmatpush2.bf16.msra.mxu0 0
    %5636 = vmatprep.subr.bf16.mxu0 0
    %5637 = vmatpush2.bf16.msra.mxu0 0
    %5638 = vmatprep.subr.bf16.mxu0 0
    %5639 = vmatpush2.bf16.msra.mxu0 0
    %5640 = vmatprep.subr.bf16.mxu0 0
    %5641 = vmatpush2.bf16.msra.mxu0 0
    %5642 = vmatprep.subr.bf16.mxu0 0
    %5643 = vmatpush2.bf16.msra.mxu0 0
    %5644 = vmatprep.subr.bf16.mxu0 0
    %5645 = vmatpush2.bf16.msra.mxu0 0
    %5646 = vmatprep.mubr.bf16.mxu0 0
    %5647 = vmatmul.mubr.bf16.gmra.mxu0 %v5609
    %v5648 = vpop.f32.mrf.mxu0
    %v5649 = vadd.f32 0.0, %v5648
    %v5650 = vpop.f32.mrf.mxu0
    %v5651 = vpop.f32.mrf.mxu0
    %v5652 = vpop.f32.mrf.mxu0
    %5653 = vdwg.mxu0
    %v5655 = vsel %vm4651, %v5097, 0
    %v5658 = vsel %vm5104, %v5081, 0
    %5660 = vmatprep.subr.bf16.mxu0 0
    %5661 = vmatpush1.bf16.msra.mxu0 0
    %5662 = vmatprep.subr.bf16.mxu0 0
    %5663 = vmatpush1.bf16.msra.mxu0 0
    %5664 = vmatprep.subr.bf16.mxu0 0
    %5665 = vmatpush1.bf16.msra.mxu0 0
    %5666 = vmatprep.subr.bf16.mxu0 0
    %5667 = vmatpush1.bf16.msra.mxu0 0
    %5668 = vmatprep.subr.bf16.mxu0 0
    %5669 = vmatpush1.bf16.msra.mxu0 0
    %5670 = vmatprep.subr.bf16.mxu0 0
    %5671 = vmatpush1.bf16.msra.mxu0 0
    %5672 = vmatprep.subr.bf16.mxu0 0
    %5673 = vmatpush1.bf16.msra.mxu0 0
    %5674 = vmatprep.subr.bf16.mxu0 0
    %5675 = vmatpush1.bf16.msra.mxu0 %v5658
    %5676 = vmatprep.subr.bf16.mxu0 0
    %5677 = vmatpush2.bf16.msra.mxu0 0
    %5678 = vmatprep.subr.bf16.mxu0 0
    %5679 = vmatpush2.bf16.msra.mxu0 0
    %5680 = vmatprep.subr.bf16.mxu0 0
    %5681 = vmatpush2.bf16.msra.mxu0 0
    %5682 = vmatprep.subr.bf16.mxu0 0
    %5683 = vmatpush2.bf16.msra.mxu0 0
    %5684 = vmatprep.subr.bf16.mxu0 0
    %5685 = vmatpush2.bf16.msra.mxu0 0
    %5686 = vmatprep.subr.bf16.mxu0 0
    %5687 = vmatpush2.bf16.msra.mxu0 0
    %5688 = vmatprep.subr.bf16.mxu0 0
    %5689 = vmatpush2.bf16.msra.mxu0 0
    %5690 = vmatprep.subr.bf16.mxu0 0
    %5691 = vmatpush2.bf16.msra.mxu0 0
    %5692 = vmatprep.mubr.bf16.mxu0 0
    %5693 = vmatmul.mubr.bf16.gmra.mxu0 %v5655
    %v5694 = vpop.f32.mrf.mxu0
    %v5695 = vadd.f32 0.0, %v5694
    %v5696 = vpop.f32.mrf.mxu0
    %v5697 = vpop.f32.mrf.mxu0
    %v5698 = vpop.f32.mrf.mxu0
    %5699 = vdwg.mxu0
    %v5701 = vsel %vm4651, %v5098, 0
    %v5704 = vsel %vm5104, %v5082, 0
    %5706 = vmatprep.subr.bf16.mxu0 0
    %5707 = vmatpush1.bf16.msra.mxu0 0
    %5708 = vmatprep.subr.bf16.mxu0 0
    %5709 = vmatpush1.bf16.msra.mxu0 0
    %5710 = vmatprep.subr.bf16.mxu0 0
    %5711 = vmatpush1.bf16.msra.mxu0 0
    %5712 = vmatprep.subr.bf16.mxu0 0
    %5713 = vmatpush1.bf16.msra.mxu0 0
    %5714 = vmatprep.subr.bf16.mxu0 0
    %5715 = vmatpush1.bf16.msra.mxu0 0
    %5716 = vmatprep.subr.bf16.mxu0 0
    %5717 = vmatpush1.bf16.msra.mxu0 0
    %5718 = vmatprep.subr.bf16.mxu0 0
    %5719 = vmatpush1.bf16.msra.mxu0 0
    %5720 = vmatprep.subr.bf16.mxu0 0
    %5721 = vmatpush1.bf16.msra.mxu0 %v5704
    %5722 = vmatprep.subr.bf16.mxu0 0
    %5723 = vmatpush2.bf16.msra.mxu0 0
    %5724 = vmatprep.subr.bf16.mxu0 0
    %5725 = vmatpush2.bf16.msra.mxu0 0
    %5726 = vmatprep.subr.bf16.mxu0 0
    %5727 = vmatpush2.bf16.msra.mxu0 0
    %5728 = vmatprep.subr.bf16.mxu0 0
    %5729 = vmatpush2.bf16.msra.mxu0 0
    %5730 = vmatprep.subr.bf16.mxu0 0
    %5731 = vmatpush2.bf16.msra.mxu0 0
    %5732 = vmatprep.subr.bf16.mxu0 0
    %5733 = vmatpush2.bf16.msra.mxu0 0
    %5734 = vmatprep.subr.bf16.mxu0 0
    %5735 = vmatpush2.bf16.msra.mxu0 0
    %5736 = vmatprep.subr.bf16.mxu0 0
    %5737 = vmatpush2.bf16.msra.mxu0 0
    %5738 = vmatprep.mubr.bf16.mxu0 0
    %5739 = vmatmul.mubr.bf16.gmra.mxu0 %v5701
    %v5740 = vpop.f32.mrf.mxu0
    %v5741 = vadd.f32 0.0, %v5740
    %v5742 = vpop.f32.mrf.mxu0
    %v5743 = vpop.f32.mrf.mxu0
    %v5744 = vpop.f32.mrf.mxu0
    %5745 = vdwg.mxu0
    %v5747 = vsel %vm4651, %v5099, 0
    %v5750 = vsel %vm5104, %v5083, 0
    %5752 = vmatprep.subr.bf16.mxu0 0
    %5753 = vmatpush1.bf16.msra.mxu0 0
    %5754 = vmatprep.subr.bf16.mxu0 0
    %5755 = vmatpush1.bf16.msra.mxu0 0
    %5756 = vmatprep.subr.bf16.mxu0 0
    %5757 = vmatpush1.bf16.msra.mxu0 0
    %5758 = vmatprep.subr.bf16.mxu0 0
    %5759 = vmatpush1.bf16.msra.mxu0 0
    %5760 = vmatprep.subr.bf16.mxu0 0
    %5761 = vmatpush1.bf16.msra.mxu0 0
    %5762 = vmatprep.subr.bf16.mxu0 0
    %5763 = vmatpush1.bf16.msra.mxu0 0
    %5764 = vmatprep.subr.bf16.mxu0 0
    %5765 = vmatpush1.bf16.msra.mxu0 0
    %5766 = vmatprep.subr.bf16.mxu0 0
    %5767 = vmatpush1.bf16.msra.mxu0 %v5750
    %5768 = vmatprep.subr.bf16.mxu0 0
    %5769 = vmatpush2.bf16.msra.mxu0 0
    %5770 = vmatprep.subr.bf16.mxu0 0
    %5771 = vmatpush2.bf16.msra.mxu0 0
    %5772 = vmatprep.subr.bf16.mxu0 0
    %5773 = vmatpush2.bf16.msra.mxu0 0
    %5774 = vmatprep.subr.bf16.mxu0 0
    %5775 = vmatpush2.bf16.msra.mxu0 0
    %5776 = vmatprep.subr.bf16.mxu0 0
    %5777 = vmatpush2.bf16.msra.mxu0 0
    %5778 = vmatprep.subr.bf16.mxu0 0
    %5779 = vmatpush2.bf16.msra.mxu0 0
    %5780 = vmatprep.subr.bf16.mxu0 0
    %5781 = vmatpush2.bf16.msra.mxu0 0
    %5782 = vmatprep.subr.bf16.mxu0 0
    %5783 = vmatpush2.bf16.msra.mxu0 0
    %5784 = vmatprep.mubr.bf16.mxu0 0
    %5785 = vmatmul.mubr.bf16.gmra.mxu0 %v5747
    %v5786 = vpop.f32.mrf.mxu0
    %v5787 = vadd.f32 0.0, %v5786
    %v5788 = vpop.f32.mrf.mxu0
    %v5789 = vpop.f32.mrf.mxu0
    %v5790 = vpop.f32.mrf.mxu0
    %5791 = vdwg.mxu0
    %v5793 = vsel %vm4651, %v5100, 0
    %v5796 = vsel %vm5104, %v5084, 0
    %5798 = vmatprep.subr.bf16.mxu0 0
    %5799 = vmatpush1.bf16.msra.mxu0 0
    %5800 = vmatprep.subr.bf16.mxu0 0
    %5801 = vmatpush1.bf16.msra.mxu0 0
    %5802 = vmatprep.subr.bf16.mxu0 0
    %5803 = vmatpush1.bf16.msra.mxu0 0
    %5804 = vmatprep.subr.bf16.mxu0 0
    %5805 = vmatpush1.bf16.msra.mxu0 0
    %5806 = vmatprep.subr.bf16.mxu0 0
    %5807 = vmatpush1.bf16.msra.mxu0 0
    %5808 = vmatprep.subr.bf16.mxu0 0
    %5809 = vmatpush1.bf16.msra.mxu0 0
    %5810 = vmatprep.subr.bf16.mxu0 0
    %5811 = vmatpush1.bf16.msra.mxu0 0
    %5812 = vmatprep.subr.bf16.mxu0 0
    %5813 = vmatpush1.bf16.msra.mxu0 %v5796
    %5814 = vmatprep.subr.bf16.mxu0 0
    %5815 = vmatpush2.bf16.msra.mxu0 0
    %5816 = vmatprep.subr.bf16.mxu0 0
    %5817 = vmatpush2.bf16.msra.mxu0 0
    %5818 = vmatprep.subr.bf16.mxu0 0
    %5819 = vmatpush2.bf16.msra.mxu0 0
    %5820 = vmatprep.subr.bf16.mxu0 0
    %5821 = vmatpush2.bf16.msra.mxu0 0
    %5822 = vmatprep.subr.bf16.mxu0 0
    %5823 = vmatpush2.bf16.msra.mxu0 0
    %5824 = vmatprep.subr.bf16.mxu0 0
    %5825 = vmatpush2.bf16.msra.mxu0 0
    %5826 = vmatprep.subr.bf16.mxu0 0
    %5827 = vmatpush2.bf16.msra.mxu0 0
    %5828 = vmatprep.subr.bf16.mxu0 0
    %5829 = vmatpush2.bf16.msra.mxu0 0
    %5830 = vmatprep.mubr.bf16.mxu0 0
    %5831 = vmatmul.mubr.bf16.gmra.mxu0 %v5793
    %v5832 = vpop.f32.mrf.mxu0
    %v5833 = vadd.f32 0.0, %v5832
    %v5834 = vpop.f32.mrf.mxu0
    %v5835 = vpop.f32.mrf.mxu0
    %v5836 = vpop.f32.mrf.mxu0
    %5837 = vdwg.mxu0
    %v5838 = vld [vmem:[#allocation10] sm:$0x1]
    %v5839 = vmul.f32 %v5143, %v5143
    %v5840 = vmul.f32 %v5189, %v5189
    %v5841 = vmul.f32 %v5235, %v5235
    %v5842 = vmul.f32 %v5281, %v5281
    %v5843 = vmul.f32 %v5327, %v5327
    %v5844 = vmul.f32 %v5373, %v5373
    %v5845 = vmul.f32 %v5419, %v5419
    %v5846 = vmul.f32 %v5465, %v5465
    %v5847 = vmul.f32 %v5511, %v5511
    %v5848 = vmul.f32 %v5557, %v5557
    %v5849 = vmul.f32 %v5603, %v5603
    %v5850 = vmul.f32 %v5649, %v5649
    %v5851 = vmul.f32 %v5695, %v5695
    %v5852 = vmul.f32 %v5741, %v5741
    %v5853 = vmul.f32 %v5787, %v5787
    %v5854 = vmul.f32 %v5833, %v5833
    %vm5855 = vcmask 523264
    %v5856 = vsel %vm5855, %v5839, 0.0
    %5857 = vadd.xlane.f32.xlu0 %v5856
    %v5858 = vpop.xlane.xlu0 %5857
    %v5859 = vsel %vm5855, %v5840, 0.0
    %5860 = vadd.xlane.f32.xlu0 %v5859
    %v5861 = vpop.xlane.xlu0 %5860
    %v5862 = vsel %vm5855, %v5841, 0.0
    %5863 = vadd.xlane.f32.xlu0 %v5862
    %v5864 = vpop.xlane.xlu0 %5863
    %v5865 = vsel %vm5855, %v5842, 0.0
    %5866 = vadd.xlane.f32.xlu0 %v5865
    %v5867 = vpop.xlane.xlu0 %5866
    %v5868 = vsel %vm5855, %v5843, 0.0
    %5869 = vadd.xlane.f32.xlu0 %v5868
    %v5870 = vpop.xlane.xlu0 %5869
    %v5871 = vsel %vm5855, %v5844, 0.0
    %5872 = vadd.xlane.f32.xlu0 %v5871
    %v5873 = vpop.xlane.xlu0 %5872
    %v5874 = vsel %vm5855, %v5845, 0.0
    %5875 = vadd.xlane.f32.xlu0 %v5874
    %v5876 = vpop.xlane.xlu0 %5875
    %v5877 = vsel %vm5855, %v5846, 0.0
    %5878 = vadd.xlane.f32.xlu0 %v5877
    %v5879 = vpop.xlane.xlu0 %5878
    %v5880 = vsel %vm5855, %v5847, 0.0
    %5881 = vadd.xlane.f32.xlu0 %v5880
    %v5882 = vpop.xlane.xlu0 %5881
    %v5883 = vsel %vm5855, %v5848, 0.0
    %5884 = vadd.xlane.f32.xlu0 %v5883
    %v5885 = vpop.xlane.xlu0 %5884
    %v5886 = vsel %vm5855, %v5849, 0.0
    %5887 = vadd.xlane.f32.xlu0 %v5886
    %v5888 = vpop.xlane.xlu0 %5887
    %v5889 = vsel %vm5855, %v5850, 0.0
    %5890 = vadd.xlane.f32.xlu0 %v5889
    %v5891 = vpop.xlane.xlu0 %5890
    %v5892 = vsel %vm5855, %v5851, 0.0
    %5893 = vadd.xlane.f32.xlu0 %v5892
    %v5894 = vpop.xlane.xlu0 %5893
    %v5895 = vsel %vm5855, %v5852, 0.0
    %5896 = vadd.xlane.f32.xlu0 %v5895
    %v5897 = vpop.xlane.xlu0 %5896
    %v5898 = vsel %vm5855, %v5853, 0.0
    %5899 = vadd.xlane.f32.xlu0 %v5898
    %v5900 = vpop.xlane.xlu0 %5899
    %v5901 = vsel %vm5855, %v5854, 0.0
    %5902 = vadd.xlane.f32.xlu0 %v5901
    %v5903 = vpop.xlane.xlu0 %5902
    %v5904 = vrcp.pop 64.0
    %v5905 = vmul.f32 %v5858, %v5904
    %v5906 = vmul.f32 %v5861, %v5904
    %v5907 = vmul.f32 %v5864, %v5904
    %v5908 = vmul.f32 %v5867, %v5904
    %v5909 = vmul.f32 %v5870, %v5904
    %v5910 = vmul.f32 %v5873, %v5904
    %v5911 = vmul.f32 %v5876, %v5904
    %v5912 = vmul.f32 %v5879, %v5904
    %v5913 = vmul.f32 %v5882, %v5904
    %v5914 = vmul.f32 %v5885, %v5904
    %v5915 = vmul.f32 %v5888, %v5904
    %v5916 = vmul.f32 %v5891, %v5904
    %v5917 = vmul.f32 %v5894, %v5904
    %v5918 = vmul.f32 %v5897, %v5904
    %v5919 = vmul.f32 %v5900, %v5904
    %v5920 = vmul.f32 %v5903, %v5904
    %v5921 = vadd.f32 %v5905, 1e-05
    %v5922 = vadd.f32 %v5906, 1e-05
    %v5923 = vadd.f32 %v5907, 1e-05
    %v5924 = vadd.f32 %v5908, 1e-05
    %v5925 = vadd.f32 %v5909, 1e-05
    %v5926 = vadd.f32 %v5910, 1e-05
    %v5927 = vadd.f32 %v5911, 1e-05
    %v5928 = vadd.f32 %v5912, 1e-05
    %v5929 = vadd.f32 %v5913, 1e-05
    %v5930 = vadd.f32 %v5914, 1e-05
    %v5931 = vadd.f32 %v5915, 1e-05
    %v5932 = vadd.f32 %v5916, 1e-05
    %v5933 = vadd.f32 %v5917, 1e-05
    %v5934 = vadd.f32 %v5918, 1e-05
    %v5935 = vadd.f32 %v5919, 1e-05
    %v5936 = vadd.f32 %v5920, 1e-05
    %v5937 = vrsqrt.pop %v5921
    %v5938 = vrsqrt.pop %v5922
    %v5939 = vrsqrt.pop %v5923
    %v5940 = vrsqrt.pop %v5924
    %v5941 = vrsqrt.pop %v5925
    %v5942 = vrsqrt.pop %v5926
    %v5943 = vrsqrt.pop %v5927
    %v5944 = vrsqrt.pop %v5928
    %v5945 = vrsqrt.pop %v5929
    %v5946 = vrsqrt.pop %v5930
    %v5947 = vrsqrt.pop %v5931
    %v5948 = vrsqrt.pop %v5932
    %v5949 = vrsqrt.pop %v5933
    %v5950 = vrsqrt.pop %v5934
    %v5951 = vrsqrt.pop %v5935
    %v5952 = vrsqrt.pop %v5936
    %v5953 = vmul.f32 %v5143, %v5937
    %v5954 = vmul.f32 %v5189, %v5938
    %v5955 = vmul.f32 %v5235, %v5939
    %v5956 = vmul.f32 %v5281, %v5940
    %v5957 = vmul.f32 %v5327, %v5941
    %v5958 = vmul.f32 %v5373, %v5942
    %v5959 = vmul.f32 %v5419, %v5943
    %v5960 = vmul.f32 %v5465, %v5944
    %v5961 = vmul.f32 %v5511, %v5945
    %v5962 = vmul.f32 %v5557, %v5946
    %v5963 = vmul.f32 %v5603, %v5947
    %v5964 = vmul.f32 %v5649, %v5948
    %v5965 = vmul.f32 %v5695, %v5949
    %v5966 = vmul.f32 %v5741, %v5950
    %v5967 = vmul.f32 %v5787, %v5951
    %v5968 = vmul.f32 %v5833, %v5952
    %v5970 = vlaneseq
    %v5971 = vshrl.u32 %v5970, 7
    %v5972 = vsub.s32 0, %v5971
    %v5973 = vrot.slane %v5838, %v5972
    %v5975 = vmul.f32 %v5953, %v5973
    %v5976 = vmul.f32 %v5954, %v5973
    %v5977 = vmul.f32 %v5955, %v5973
    %v5978 = vmul.f32 %v5956, %v5973
    %v5979 = vmul.f32 %v5957, %v5973
    %v5980 = vmul.f32 %v5958, %v5973
    %v5981 = vmul.f32 %v5959, %v5973
    %v5982 = vmul.f32 %v5960, %v5973
    %v5983 = vmul.f32 %v5961, %v5973
    %v5984 = vmul.f32 %v5962, %v5973
    %v5985 = vmul.f32 %v5963, %v5973
    %v5986 = vmul.f32 %v5964, %v5973
    %v5987 = vmul.f32 %v5965, %v5973
    %v5988 = vmul.f32 %v5966, %v5973
    %v5989 = vmul.f32 %v5967, %v5973
    %v5990 = vmul.f32 %v5968, %v5973
    %5993 = vrot.lane.b32.xlu0 %v5977, 64
    %v5994 = vpop.permute.xlu0 %5993
    %5995 = vrot.lane.b32.xlu0 %v5978, 64
    %v5996 = vpop.permute.xlu0 %5995
    %6001 = vrot.lane.b32.xlu0 %v5981, 64
    %v6002 = vpop.permute.xlu0 %6001
    %6003 = vrot.lane.b32.xlu0 %v5982, 64
    %v6004 = vpop.permute.xlu0 %6003
    %6009 = vrot.lane.b32.xlu0 %v5985, 64
    %v6010 = vpop.permute.xlu0 %6009
    %6011 = vrot.lane.b32.xlu0 %v5986, 64
    %v6012 = vpop.permute.xlu0 %6011
    %6017 = vrot.lane.b32.xlu0 %v5989, 64
    %v6018 = vpop.permute.xlu0 %6017
    %6019 = vrot.lane.b32.xlu0 %v5990, 64
    %v6020 = vpop.permute.xlu0 %6019
    %v6023 = vsel %vm5855, %v5975, %v5994
    %v6024 = vsel %vm5855, %v5976, %v5996
    %v6025 = vsel %vm5855, %v5979, %v6002
    %v6026 = vsel %vm5855, %v5980, %v6004
    %v6027 = vsel %vm5855, %v5983, %v6010
    %v6028 = vsel %vm5855, %v5984, %v6012
    %v6029 = vsel %vm5855, %v5987, %v6018
    %v6030 = vsel %vm5855, %v5988, %v6020
    %v6031 = vpack.c.bf16 %v6024, %v6023
    %v6032 = vpack.c.bf16 %v6026, %v6025
    %v6033 = vpack.c.bf16 %v6028, %v6027
    %v6034 = vpack.c.bf16 %v6030, %v6029
    %v6035 = vld [vmem:[#allocation9] sm:$0xff]
    %v6036 = vld [vmem:[#allocation9 + $0x8] sm:$0xff]
    %v6037 = vld [vmem:[#allocation9 + $0x10] sm:$0xff]
    %v6038 = vld [vmem:[#allocation9 + $0x18] sm:$0xff]
    %v6039 = vld [vmem:[#allocation9 + $0x20] sm:$0xff]
    %v6040 = vld [vmem:[#allocation9 + $0x28] sm:$0xff]
    %v6041 = vld [vmem:[#allocation9 + $0x30] sm:$0xff]
    %v6042 = vld [vmem:[#allocation9 + $0x38] sm:$0xff]
    %v6043 = vld [vmem:[#allocation9 + $0x40] sm:$0xff]
    %v6044 = vld [vmem:[#allocation9 + $0x48] sm:$0xff]
    %v6045 = vld [vmem:[#allocation9 + $0x50] sm:$0xff]
    %v6046 = vld [vmem:[#allocation9 + $0x58] sm:$0xff]
    %v6047 = vld [vmem:[#allocation9 + $0x60] sm:$0xff]
    %v6048 = vld [vmem:[#allocation9 + $0x68] sm:$0xff]
    %v6049 = vld [vmem:[#allocation9 + $0x70] sm:$0xff]
    %v6050 = vld [vmem:[#allocation9 + $0x78] sm:$0xff]
    %v6051 = vld [vmem:[#allocation9 + $0x80] sm:$0xff]
    %v6052 = vld [vmem:[#allocation9 + $0x88] sm:$0xff]
    %v6053 = vld [vmem:[#allocation9 + $0x90] sm:$0xff]
    %v6054 = vld [vmem:[#allocation9 + $0x98] sm:$0xff]
    %v6055 = vld [vmem:[#allocation9 + $0xa0] sm:$0xff]
    %v6056 = vld [vmem:[#allocation9 + $0xa8] sm:$0xff]
    %v6057 = vld [vmem:[#allocation9 + $0xb0] sm:$0xff]
    %v6058 = vld [vmem:[#allocation9 + $0xb8] sm:$0xff]
    %v6059 = vld [vmem:[#allocation9 + $0xc0] sm:$0xff]
    %v6060 = vld [vmem:[#allocation9 + $0xc8] sm:$0xff]
    %v6061 = vld [vmem:[#allocation9 + $0xd0] sm:$0xff]
    %v6062 = vld [vmem:[#allocation9 + $0xd8] sm:$0xff]
    %v6063 = vld [vmem:[#allocation9 + $0xe0] sm:$0xff]
    %v6064 = vld [vmem:[#allocation9 + $0xe8] sm:$0xff]
    %v6065 = vld [vmem:[#allocation9 + $0xf0] sm:$0xff]
    %v6066 = vld [vmem:[#allocation9 + $0xf8] sm:$0xff]
    %v6067 = vld [vmem:[#allocation9 + $0x100] sm:$0xff]
    %v6068 = vld [vmem:[#allocation9 + $0x108] sm:$0xff]
    %v6069 = vld [vmem:[#allocation9 + $0x110] sm:$0xff]
    %v6070 = vld [vmem:[#allocation9 + $0x118] sm:$0xff]
    %v6071 = vld [vmem:[#allocation9 + $0x120] sm:$0xff]
    %v6072 = vld [vmem:[#allocation9 + $0x128] sm:$0xff]
    %v6073 = vld [vmem:[#allocation9 + $0x130] sm:$0xff]
    %v6074 = vld [vmem:[#allocation9 + $0x138] sm:$0xff]
    %v6075 = vld [vmem:[#allocation9 + $0x140] sm:$0xff]
    %v6076 = vld [vmem:[#allocation9 + $0x148] sm:$0xff]
    %v6077 = vld [vmem:[#allocation9 + $0x150] sm:$0xff]
    %v6078 = vld [vmem:[#allocation9 + $0x158] sm:$0xff]
    %v6079 = vld [vmem:[#allocation9 + $0x160] sm:$0xff]
    %v6080 = vld [vmem:[#allocation9 + $0x168] sm:$0xff]
    %v6081 = vld [vmem:[#allocation9 + $0x170] sm:$0xff]
    %v6082 = vld [vmem:[#allocation9 + $0x178] sm:$0xff]
    %v6083 = vld [vmem:[#allocation9 + $0x180] sm:$0xff]
    %v6084 = vld [vmem:[#allocation9 + $0x188] sm:$0xff]
    %v6085 = vld [vmem:[#allocation9 + $0x190] sm:$0xff]
    %v6086 = vld [vmem:[#allocation9 + $0x198] sm:$0xff]
    %v6087 = vld [vmem:[#allocation9 + $0x1a0] sm:$0xff]
    %v6088 = vld [vmem:[#allocation9 + $0x1a8] sm:$0xff]
    %v6089 = vld [vmem:[#allocation9 + $0x1b0] sm:$0xff]
    %v6090 = vld [vmem:[#allocation9 + $0x1b8] sm:$0xff]
    %v6091 = vld [vmem:[#allocation9 + $0x1c0] sm:$0xff]
    %v6092 = vld [vmem:[#allocation9 + $0x1c8] sm:$0xff]
    %v6093 = vld [vmem:[#allocation9 + $0x1d0] sm:$0xff]
    %v6094 = vld [vmem:[#allocation9 + $0x1d8] sm:$0xff]
    %v6095 = vld [vmem:[#allocation9 + $0x1e0] sm:$0xff]
    %v6096 = vld [vmem:[#allocation9 + $0x1e8] sm:$0xff]
    %v6097 = vld [vmem:[#allocation9 + $0x1f0] sm:$0xff]
    %v6098 = vld [vmem:[#allocation9 + $0x1f8] sm:$0xff]
    %v6099 = vld [vmem:[#allocation9 + $0x200] sm:$0xff]
    %v6100 = vld [vmem:[#allocation9 + $0x208] sm:$0xff]
    %v6101 = vld [vmem:[#allocation9 + $0x210] sm:$0xff]
    %v6102 = vld [vmem:[#allocation9 + $0x218] sm:$0xff]
    %v6103 = vld [vmem:[#allocation9 + $0x220] sm:$0xff]
    %v6104 = vld [vmem:[#allocation9 + $0x228] sm:$0xff]
    %v6105 = vld [vmem:[#allocation9 + $0x230] sm:$0xff]
    %v6106 = vld [vmem:[#allocation9 + $0x238] sm:$0xff]
    %v6107 = vld [vmem:[#allocation9 + $0x240] sm:$0xff]
    %v6108 = vld [vmem:[#allocation9 + $0x248] sm:$0xff]
    %v6109 = vld [vmem:[#allocation9 + $0x250] sm:$0xff]
    %v6110 = vld [vmem:[#allocation9 + $0x258] sm:$0xff]
    %v6111 = vld [vmem:[#allocation9 + $0x260] sm:$0xff]
    %v6112 = vld [vmem:[#allocation9 + $0x268] sm:$0xff]
    %v6113 = vld [vmem:[#allocation9 + $0x270] sm:$0xff]
    %v6114 = vld [vmem:[#allocation9 + $0x278] sm:$0xff]
    %v6115 = vld [vmem:[#allocation9 + $0x280] sm:$0xff]
    %v6116 = vld [vmem:[#allocation9 + $0x288] sm:$0xff]
    %v6117 = vld [vmem:[#allocation9 + $0x290] sm:$0xff]
    %v6118 = vld [vmem:[#allocation9 + $0x298] sm:$0xff]
    %v6119 = vld [vmem:[#allocation9 + $0x2a0] sm:$0xff]
    %v6120 = vld [vmem:[#allocation9 + $0x2a8] sm:$0xff]
    %v6121 = vld [vmem:[#allocation9 + $0x2b0] sm:$0xff]
    %v6122 = vld [vmem:[#allocation9 + $0x2b8] sm:$0xff]
    %v6123 = vld [vmem:[#allocation9 + $0x2c0] sm:$0xff]
    %v6124 = vld [vmem:[#allocation9 + $0x2c8] sm:$0xff]
    %v6125 = vld [vmem:[#allocation9 + $0x2d0] sm:$0xff]
    %v6126 = vld [vmem:[#allocation9 + $0x2d8] sm:$0xff]
    %v6127 = vld [vmem:[#allocation9 + $0x2e0] sm:$0xff]
    %v6128 = vld [vmem:[#allocation9 + $0x2e8] sm:$0xff]
    %v6129 = vld [vmem:[#allocation9 + $0x2f0] sm:$0xff]
    %v6130 = vld [vmem:[#allocation9 + $0x2f8] sm:$0xff]
    %v6131 = vld [vmem:[#allocation9 + $0x300] sm:$0xff]
    %v6132 = vld [vmem:[#allocation9 + $0x308] sm:$0xff]
    %v6133 = vld [vmem:[#allocation9 + $0x310] sm:$0xff]
    %v6134 = vld [vmem:[#allocation9 + $0x318] sm:$0xff]
    %v6135 = vld [vmem:[#allocation9 + $0x320] sm:$0xff]
    %v6136 = vld [vmem:[#allocation9 + $0x328] sm:$0xff]
    %v6137 = vld [vmem:[#allocation9 + $0x330] sm:$0xff]
    %v6138 = vld [vmem:[#allocation9 + $0x338] sm:$0xff]
    %v6139 = vld [vmem:[#allocation9 + $0x340] sm:$0xff]
    %v6140 = vld [vmem:[#allocation9 + $0x348] sm:$0xff]
    %v6141 = vld [vmem:[#allocation9 + $0x350] sm:$0xff]
    %v6142 = vld [vmem:[#allocation9 + $0x358] sm:$0xff]
    %v6143 = vld [vmem:[#allocation9 + $0x360] sm:$0xff]
    %v6144 = vld [vmem:[#allocation9 + $0x368] sm:$0xff]
    %v6145 = vld [vmem:[#allocation9 + $0x370] sm:$0xff]
    %v6146 = vld [vmem:[#allocation9 + $0x378] sm:$0xff]
    %v6147 = vld [vmem:[#allocation9 + $0x380] sm:$0xff]
    %v6148 = vld [vmem:[#allocation9 + $0x388] sm:$0xff]
    %v6149 = vld [vmem:[#allocation9 + $0x390] sm:$0xff]
    %v6150 = vld [vmem:[#allocation9 + $0x398] sm:$0xff]
    %v6151 = vld [vmem:[#allocation9 + $0x3a0] sm:$0xff]
    %v6152 = vld [vmem:[#allocation9 + $0x3a8] sm:$0xff]
    %v6153 = vld [vmem:[#allocation9 + $0x3b0] sm:$0xff]
    %v6154 = vld [vmem:[#allocation9 + $0x3b8] sm:$0xff]
    %v6155 = vld [vmem:[#allocation9 + $0x3c0] sm:$0xff]
    %v6156 = vld [vmem:[#allocation9 + $0x3c8] sm:$0xff]
    %v6157 = vld [vmem:[#allocation9 + $0x3d0] sm:$0xff]
    %v6158 = vld [vmem:[#allocation9 + $0x3d8] sm:$0xff]
    %v6159 = vld [vmem:[#allocation9 + $0x3e0] sm:$0xff]
    %v6160 = vld [vmem:[#allocation9 + $0x3e8] sm:$0xff]
    %v6161 = vld [vmem:[#allocation9 + $0x3f0] sm:$0xff]
    %v6162 = vld [vmem:[#allocation9 + $0x3f8] sm:$0xff]
    %v6291 = vunpack.c.l.b16 %v6035
    %v6292 = vunpack.c.h.b16 %v6035
    %v6293 = vunpack.c.l.b16 %v6036
    %v6294 = vunpack.c.h.b16 %v6036
    %v6295 = vunpack.c.l.b16 %v6037
    %v6296 = vunpack.c.h.b16 %v6037
    %v6297 = vunpack.c.l.b16 %v6038
    %v6298 = vunpack.c.h.b16 %v6038
    %v6299 = vunpack.c.l.b16 %v6039
    %v6300 = vunpack.c.h.b16 %v6039
    %v6301 = vunpack.c.l.b16 %v6040
    %v6302 = vunpack.c.h.b16 %v6040
    %v6303 = vunpack.c.l.b16 %v6041
    %v6304 = vunpack.c.h.b16 %v6041
    %v6305 = vunpack.c.l.b16 %v6042
    %v6306 = vunpack.c.h.b16 %v6042
    %v6307 = vunpack.c.l.b16 %v6043
    %v6308 = vunpack.c.h.b16 %v6043
    %v6309 = vunpack.c.l.b16 %v6044
    %v6310 = vunpack.c.h.b16 %v6044
    %v6311 = vunpack.c.l.b16 %v6045
    %v6312 = vunpack.c.h.b16 %v6045
    %v6313 = vunpack.c.l.b16 %v6046
    %v6314 = vunpack.c.h.b16 %v6046
    %v6315 = vunpack.c.l.b16 %v6047
    %v6316 = vunpack.c.h.b16 %v6047
    %v6317 = vunpack.c.l.b16 %v6048
    %v6318 = vunpack.c.h.b16 %v6048
    %v6319 = vunpack.c.l.b16 %v6049
    %v6320 = vunpack.c.h.b16 %v6049
    %v6321 = vunpack.c.l.b16 %v6050
    %v6322 = vunpack.c.h.b16 %v6050
    %v6323 = vunpack.c.l.b16 %v6051
    %v6324 = vunpack.c.h.b16 %v6051
    %v6325 = vunpack.c.l.b16 %v6052
    %v6326 = vunpack.c.h.b16 %v6052
    %v6327 = vunpack.c.l.b16 %v6053
    %v6328 = vunpack.c.h.b16 %v6053
    %v6329 = vunpack.c.l.b16 %v6054
    %v6330 = vunpack.c.h.b16 %v6054
    %v6331 = vunpack.c.l.b16 %v6055
    %v6332 = vunpack.c.h.b16 %v6055
    %v6333 = vunpack.c.l.b16 %v6056
    %v6334 = vunpack.c.h.b16 %v6056
    %v6335 = vunpack.c.l.b16 %v6057
    %v6336 = vunpack.c.h.b16 %v6057
    %v6337 = vunpack.c.l.b16 %v6058
    %v6338 = vunpack.c.h.b16 %v6058
    %v6339 = vunpack.c.l.b16 %v6059
    %v6340 = vunpack.c.h.b16 %v6059
    %v6341 = vunpack.c.l.b16 %v6060
    %v6342 = vunpack.c.h.b16 %v6060
    %v6343 = vunpack.c.l.b16 %v6061
    %v6344 = vunpack.c.h.b16 %v6061
    %v6345 = vunpack.c.l.b16 %v6062
    %v6346 = vunpack.c.h.b16 %v6062
    %v6347 = vunpack.c.l.b16 %v6063
    %v6348 = vunpack.c.h.b16 %v6063
    %v6349 = vunpack.c.l.b16 %v6064
    %v6350 = vunpack.c.h.b16 %v6064
    %v6351 = vunpack.c.l.b16 %v6065
    %v6352 = vunpack.c.h.b16 %v6065
    %v6353 = vunpack.c.l.b16 %v6066
    %v6354 = vunpack.c.h.b16 %v6066
    %v6355 = vunpack.c.l.b16 %v6067
    %v6356 = vunpack.c.h.b16 %v6067
    %v6357 = vunpack.c.l.b16 %v6068
    %v6358 = vunpack.c.h.b16 %v6068
    %v6359 = vunpack.c.l.b16 %v6069
    %v6360 = vunpack.c.h.b16 %v6069
    %v6361 = vunpack.c.l.b16 %v6070
    %v6362 = vunpack.c.h.b16 %v6070
    %v6363 = vunpack.c.l.b16 %v6071
    %v6364 = vunpack.c.h.b16 %v6071
    %v6365 = vunpack.c.l.b16 %v6072
    %v6366 = vunpack.c.h.b16 %v6072
    %v6367 = vunpack.c.l.b16 %v6073
    %v6368 = vunpack.c.h.b16 %v6073
    %v6369 = vunpack.c.l.b16 %v6074
    %v6370 = vunpack.c.h.b16 %v6074
    %v6371 = vunpack.c.l.b16 %v6075
    %v6372 = vunpack.c.h.b16 %v6075
    %v6373 = vunpack.c.l.b16 %v6076
    %v6374 = vunpack.c.h.b16 %v6076
    %v6375 = vunpack.c.l.b16 %v6077
    %v6376 = vunpack.c.h.b16 %v6077
    %v6377 = vunpack.c.l.b16 %v6078
    %v6378 = vunpack.c.h.b16 %v6078
    %v6379 = vunpack.c.l.b16 %v6079
    %v6380 = vunpack.c.h.b16 %v6079
    %v6381 = vunpack.c.l.b16 %v6080
    %v6382 = vunpack.c.h.b16 %v6080
    %v6383 = vunpack.c.l.b16 %v6081
    %v6384 = vunpack.c.h.b16 %v6081
    %v6385 = vunpack.c.l.b16 %v6082
    %v6386 = vunpack.c.h.b16 %v6082
    %v6387 = vunpack.c.l.b16 %v6083
    %v6388 = vunpack.c.h.b16 %v6083
    %v6389 = vunpack.c.l.b16 %v6084
    %v6390 = vunpack.c.h.b16 %v6084
    %v6391 = vunpack.c.l.b16 %v6085
    %v6392 = vunpack.c.h.b16 %v6085
    %v6393 = vunpack.c.l.b16 %v6086
    %v6394 = vunpack.c.h.b16 %v6086
    %v6395 = vunpack.c.l.b16 %v6087
    %v6396 = vunpack.c.h.b16 %v6087
    %v6397 = vunpack.c.l.b16 %v6088
    %v6398 = vunpack.c.h.b16 %v6088
    %v6399 = vunpack.c.l.b16 %v6089
    %v6400 = vunpack.c.h.b16 %v6089
    %v6401 = vunpack.c.l.b16 %v6090
    %v6402 = vunpack.c.h.b16 %v6090
    %v6403 = vunpack.c.l.b16 %v6091
    %v6404 = vunpack.c.h.b16 %v6091
    %v6405 = vunpack.c.l.b16 %v6092
    %v6406 = vunpack.c.h.b16 %v6092
    %v6407 = vunpack.c.l.b16 %v6093
    %v6408 = vunpack.c.h.b16 %v6093
    %v6409 = vunpack.c.l.b16 %v6094
    %v6410 = vunpack.c.h.b16 %v6094
    %v6411 = vunpack.c.l.b16 %v6095
    %v6412 = vunpack.c.h.b16 %v6095
    %v6413 = vunpack.c.l.b16 %v6096
    %v6414 = vunpack.c.h.b16 %v6096
    %v6415 = vunpack.c.l.b16 %v6097
    %v6416 = vunpack.c.h.b16 %v6097
    %v6417 = vunpack.c.l.b16 %v6098
    %v6418 = vunpack.c.h.b16 %v6098
    %v6419 = vunpack.c.l.b16 %v6099
    %v6420 = vunpack.c.h.b16 %v6099
    %v6421 = vunpack.c.l.b16 %v6100
    %v6422 = vunpack.c.h.b16 %v6100
    %v6423 = vunpack.c.l.b16 %v6101
    %v6424 = vunpack.c.h.b16 %v6101
    %v6425 = vunpack.c.l.b16 %v6102
    %v6426 = vunpack.c.h.b16 %v6102
    %v6427 = vunpack.c.l.b16 %v6103
    %v6428 = vunpack.c.h.b16 %v6103
    %v6429 = vunpack.c.l.b16 %v6104
    %v6430 = vunpack.c.h.b16 %v6104
    %v6431 = vunpack.c.l.b16 %v6105
    %v6432 = vunpack.c.h.b16 %v6105
    %v6433 = vunpack.c.l.b16 %v6106
    %v6434 = vunpack.c.h.b16 %v6106
    %v6435 = vunpack.c.l.b16 %v6107
    %v6436 = vunpack.c.h.b16 %v6107
    %v6437 = vunpack.c.l.b16 %v6108
    %v6438 = vunpack.c.h.b16 %v6108
    %v6439 = vunpack.c.l.b16 %v6109
    %v6440 = vunpack.c.h.b16 %v6109
    %v6441 = vunpack.c.l.b16 %v6110
    %v6442 = vunpack.c.h.b16 %v6110
    %v6443 = vunpack.c.l.b16 %v6111
    %v6444 = vunpack.c.h.b16 %v6111
    %v6445 = vunpack.c.l.b16 %v6112
    %v6446 = vunpack.c.h.b16 %v6112
    %v6447 = vunpack.c.l.b16 %v6113
    %v6448 = vunpack.c.h.b16 %v6113
    %v6449 = vunpack.c.l.b16 %v6114
    %v6450 = vunpack.c.h.b16 %v6114
    %v6451 = vunpack.c.l.b16 %v6115
    %v6452 = vunpack.c.h.b16 %v6115
    %v6453 = vunpack.c.l.b16 %v6116
    %v6454 = vunpack.c.h.b16 %v6116
    %v6455 = vunpack.c.l.b16 %v6117
    %v6456 = vunpack.c.h.b16 %v6117
    %v6457 = vunpack.c.l.b16 %v6118
    %v6458 = vunpack.c.h.b16 %v6118
    %v6459 = vunpack.c.l.b16 %v6119
    %v6460 = vunpack.c.h.b16 %v6119
    %v6461 = vunpack.c.l.b16 %v6120
    %v6462 = vunpack.c.h.b16 %v6120
    %v6463 = vunpack.c.l.b16 %v6121
    %v6464 = vunpack.c.h.b16 %v6121
    %v6465 = vunpack.c.l.b16 %v6122
    %v6466 = vunpack.c.h.b16 %v6122
    %v6467 = vunpack.c.l.b16 %v6123
    %v6468 = vunpack.c.h.b16 %v6123
    %v6469 = vunpack.c.l.b16 %v6124
    %v6470 = vunpack.c.h.b16 %v6124
    %v6471 = vunpack.c.l.b16 %v6125
    %v6472 = vunpack.c.h.b16 %v6125
    %v6473 = vunpack.c.l.b16 %v6126
    %v6474 = vunpack.c.h.b16 %v6126
    %v6475 = vunpack.c.l.b16 %v6127
    %v6476 = vunpack.c.h.b16 %v6127
    %v6477 = vunpack.c.l.b16 %v6128
    %v6478 = vunpack.c.h.b16 %v6128
    %v6479 = vunpack.c.l.b16 %v6129
    %v6480 = vunpack.c.h.b16 %v6129
    %v6481 = vunpack.c.l.b16 %v6130
    %v6482 = vunpack.c.h.b16 %v6130
    %v6483 = vunpack.c.l.b16 %v6131
    %v6484 = vunpack.c.h.b16 %v6131
    %v6485 = vunpack.c.l.b16 %v6132
    %v6486 = vunpack.c.h.b16 %v6132
    %v6487 = vunpack.c.l.b16 %v6133
    %v6488 = vunpack.c.h.b16 %v6133
    %v6489 = vunpack.c.l.b16 %v6134
    %v6490 = vunpack.c.h.b16 %v6134
    %v6491 = vunpack.c.l.b16 %v6135
    %v6492 = vunpack.c.h.b16 %v6135
    %v6493 = vunpack.c.l.b16 %v6136
    %v6494 = vunpack.c.h.b16 %v6136
    %v6495 = vunpack.c.l.b16 %v6137
    %v6496 = vunpack.c.h.b16 %v6137
    %v6497 = vunpack.c.l.b16 %v6138
    %v6498 = vunpack.c.h.b16 %v6138
    %v6499 = vunpack.c.l.b16 %v6139
    %v6500 = vunpack.c.h.b16 %v6139
    %v6501 = vunpack.c.l.b16 %v6140
    %v6502 = vunpack.c.h.b16 %v6140
    %v6503 = vunpack.c.l.b16 %v6141
    %v6504 = vunpack.c.h.b16 %v6141
    %v6505 = vunpack.c.l.b16 %v6142
    %v6506 = vunpack.c.h.b16 %v6142
    %v6507 = vunpack.c.l.b16 %v6143
    %v6508 = vunpack.c.h.b16 %v6143
    %v6509 = vunpack.c.l.b16 %v6144
    %v6510 = vunpack.c.h.b16 %v6144
    %v6511 = vunpack.c.l.b16 %v6145
    %v6512 = vunpack.c.h.b16 %v6145
    %v6513 = vunpack.c.l.b16 %v6146
    %v6514 = vunpack.c.h.b16 %v6146
    %v6515 = vunpack.c.l.b16 %v6147
    %v6516 = vunpack.c.h.b16 %v6147
    %v6517 = vunpack.c.l.b16 %v6148
    %v6518 = vunpack.c.h.b16 %v6148
    %v6519 = vunpack.c.l.b16 %v6149
    %v6520 = vunpack.c.h.b16 %v6149
    %v6521 = vunpack.c.l.b16 %v6150
    %v6522 = vunpack.c.h.b16 %v6150
    %v6523 = vunpack.c.l.b16 %v6151
    %v6524 = vunpack.c.h.b16 %v6151
    %v6525 = vunpack.c.l.b16 %v6152
    %v6526 = vunpack.c.h.b16 %v6152
    %v6527 = vunpack.c.l.b16 %v6153
    %v6528 = vunpack.c.h.b16 %v6153
    %v6529 = vunpack.c.l.b16 %v6154
    %v6530 = vunpack.c.h.b16 %v6154
    %v6531 = vunpack.c.l.b16 %v6155
    %v6532 = vunpack.c.h.b16 %v6155
    %v6533 = vunpack.c.l.b16 %v6156
    %v6534 = vunpack.c.h.b16 %v6156
    %v6535 = vunpack.c.l.b16 %v6157
    %v6536 = vunpack.c.h.b16 %v6157
    %v6537 = vunpack.c.l.b16 %v6158
    %v6538 = vunpack.c.h.b16 %v6158
    %v6539 = vunpack.c.l.b16 %v6159
    %v6540 = vunpack.c.h.b16 %v6159
    %v6541 = vunpack.c.l.b16 %v6160
    %v6542 = vunpack.c.h.b16 %v6160
    %v6543 = vunpack.c.l.b16 %v6161
    %v6544 = vunpack.c.h.b16 %v6161
    %v6545 = vunpack.c.l.b16 %v6162
    %v6546 = vunpack.c.h.b16 %v6162
    %v6547 = vpack.c.b16 %v6295, %v6291
    %v6548 = vpack.c.b16 %v6296, %v6292
    %v6549 = vpack.c.b16 %v6297, %v6293
    %v6550 = vpack.c.b16 %v6298, %v6294
    %v6551 = vpack.c.b16 %v6303, %v6299
    %v6552 = vpack.c.b16 %v6304, %v6300
    %v6553 = vpack.c.b16 %v6305, %v6301
    %v6554 = vpack.c.b16 %v6306, %v6302
    %v6555 = vpack.c.b16 %v6311, %v6307
    %v6556 = vpack.c.b16 %v6312, %v6308
    %v6557 = vpack.c.b16 %v6313, %v6309
    %v6558 = vpack.c.b16 %v6314, %v6310
    %v6559 = vpack.c.b16 %v6319, %v6315
    %v6560 = vpack.c.b16 %v6320, %v6316
    %v6561 = vpack.c.b16 %v6321, %v6317
    %v6562 = vpack.c.b16 %v6322, %v6318
    %v6563 = vpack.c.b16 %v6327, %v6323
    %v6564 = vpack.c.b16 %v6328, %v6324
    %v6565 = vpack.c.b16 %v6329, %v6325
    %v6566 = vpack.c.b16 %v6330, %v6326
    %v6567 = vpack.c.b16 %v6335, %v6331
    %v6568 = vpack.c.b16 %v6336, %v6332
    %v6569 = vpack.c.b16 %v6337, %v6333
    %v6570 = vpack.c.b16 %v6338, %v6334
    %v6571 = vpack.c.b16 %v6343, %v6339
    %v6572 = vpack.c.b16 %v6344, %v6340
    %v6573 = vpack.c.b16 %v6345, %v6341
    %v6574 = vpack.c.b16 %v6346, %v6342
    %v6575 = vpack.c.b16 %v6351, %v6347
    %v6576 = vpack.c.b16 %v6352, %v6348
    %v6577 = vpack.c.b16 %v6353, %v6349
    %v6578 = vpack.c.b16 %v6354, %v6350
    %v6579 = vpack.c.b16 %v6359, %v6355
    %v6580 = vpack.c.b16 %v6360, %v6356
    %v6581 = vpack.c.b16 %v6361, %v6357
    %v6582 = vpack.c.b16 %v6362, %v6358
    %v6583 = vpack.c.b16 %v6367, %v6363
    %v6584 = vpack.c.b16 %v6368, %v6364
    %v6585 = vpack.c.b16 %v6369, %v6365
    %v6586 = vpack.c.b16 %v6370, %v6366
    %v6587 = vpack.c.b16 %v6375, %v6371
    %v6588 = vpack.c.b16 %v6376, %v6372
    %v6589 = vpack.c.b16 %v6377, %v6373
    %v6590 = vpack.c.b16 %v6378, %v6374
    %v6591 = vpack.c.b16 %v6383, %v6379
    %v6592 = vpack.c.b16 %v6384, %v6380
    %v6593 = vpack.c.b16 %v6385, %v6381
    %v6594 = vpack.c.b16 %v6386, %v6382
    %v6595 = vpack.c.b16 %v6391, %v6387
    %v6596 = vpack.c.b16 %v6392, %v6388
    %v6597 = vpack.c.b16 %v6393, %v6389
    %v6598 = vpack.c.b16 %v6394, %v6390
    %v6599 = vpack.c.b16 %v6399, %v6395
    %v6600 = vpack.c.b16 %v6400, %v6396
    %v6601 = vpack.c.b16 %v6401, %v6397
    %v6602 = vpack.c.b16 %v6402, %v6398
    %v6603 = vpack.c.b16 %v6407, %v6403
    %v6604 = vpack.c.b16 %v6408, %v6404
    %v6605 = vpack.c.b16 %v6409, %v6405
    %v6606 = vpack.c.b16 %v6410, %v6406
    %v6607 = vpack.c.b16 %v6415, %v6411
    %v6608 = vpack.c.b16 %v6416, %v6412
    %v6609 = vpack.c.b16 %v6417, %v6413
    %v6610 = vpack.c.b16 %v6418, %v6414
    %v6611 = vpack.c.b16 %v6423, %v6419
    %v6612 = vpack.c.b16 %v6424, %v6420
    %v6613 = vpack.c.b16 %v6425, %v6421
    %v6614 = vpack.c.b16 %v6426, %v6422
    %v6615 = vpack.c.b16 %v6431, %v6427
    %v6616 = vpack.c.b16 %v6432, %v6428
    %v6617 = vpack.c.b16 %v6433, %v6429
    %v6618 = vpack.c.b16 %v6434, %v6430
    %v6619 = vpack.c.b16 %v6439, %v6435
    %v6620 = vpack.c.b16 %v6440, %v6436
    %v6621 = vpack.c.b16 %v6441, %v6437
    %v6622 = vpack.c.b16 %v6442, %v6438
    %v6623 = vpack.c.b16 %v6447, %v6443
    %v6624 = vpack.c.b16 %v6448, %v6444
    %v6625 = vpack.c.b16 %v6449, %v6445
    %v6626 = vpack.c.b16 %v6450, %v6446
    %v6627 = vpack.c.b16 %v6455, %v6451
    %v6628 = vpack.c.b16 %v6456, %v6452
    %v6629 = vpack.c.b16 %v6457, %v6453
    %v6630 = vpack.c.b16 %v6458, %v6454
    %v6631 = vpack.c.b16 %v6463, %v6459
    %v6632 = vpack.c.b16 %v6464, %v6460
    %v6633 = vpack.c.b16 %v6465, %v6461
    %v6634 = vpack.c.b16 %v6466, %v6462
    %v6635 = vpack.c.b16 %v6471, %v6467
    %v6636 = vpack.c.b16 %v6472, %v6468
    %v6637 = vpack.c.b16 %v6473, %v6469
    %v6638 = vpack.c.b16 %v6474, %v6470
    %v6639 = vpack.c.b16 %v6479, %v6475
    %v6640 = vpack.c.b16 %v6480, %v6476
    %v6641 = vpack.c.b16 %v6481, %v6477
    %v6642 = vpack.c.b16 %v6482, %v6478
    %v6643 = vpack.c.b16 %v6487, %v6483
    %v6644 = vpack.c.b16 %v6488, %v6484
    %v6645 = vpack.c.b16 %v6489, %v6485
    %v6646 = vpack.c.b16 %v6490, %v6486
    %v6647 = vpack.c.b16 %v6495, %v6491
    %v6648 = vpack.c.b16 %v6496, %v6492
    %v6649 = vpack.c.b16 %v6497, %v6493
    %v6650 = vpack.c.b16 %v6498, %v6494
    %v6651 = vpack.c.b16 %v6503, %v6499
    %v6652 = vpack.c.b16 %v6504, %v6500
    %v6653 = vpack.c.b16 %v6505, %v6501
    %v6654 = vpack.c.b16 %v6506, %v6502
    %v6655 = vpack.c.b16 %v6511, %v6507
    %v6656 = vpack.c.b16 %v6512, %v6508
    %v6657 = vpack.c.b16 %v6513, %v6509
    %v6658 = vpack.c.b16 %v6514, %v6510
    %v6659 = vpack.c.b16 %v6519, %v6515
    %v6660 = vpack.c.b16 %v6520, %v6516
    %v6661 = vpack.c.b16 %v6521, %v6517
    %v6662 = vpack.c.b16 %v6522, %v6518
    %v6663 = vpack.c.b16 %v6527, %v6523
    %v6664 = vpack.c.b16 %v6528, %v6524
    %v6665 = vpack.c.b16 %v6529, %v6525
    %v6666 = vpack.c.b16 %v6530, %v6526
    %v6667 = vpack.c.b16 %v6535, %v6531
    %v6668 = vpack.c.b16 %v6536, %v6532
    %v6669 = vpack.c.b16 %v6537, %v6533
    %v6670 = vpack.c.b16 %v6538, %v6534
    %v6671 = vpack.c.b16 %v6543, %v6539
    %v6672 = vpack.c.b16 %v6544, %v6540
    %v6673 = vpack.c.b16 %v6545, %v6541
    %v6674 = vpack.c.b16 %v6546, %v6542
    %6803 = vmatprep.subr.bf16.mxu0 %v6576
    %6804 = vmatpush1.bf16.msra.mxu0 %v6575
    %6805 = vmatprep.subr.bf16.mxu0 %v6572
    %6806 = vmatpush1.bf16.msra.mxu0 %v6571
    %6807 = vmatprep.subr.bf16.mxu0 %v6568
    %6808 = vmatpush1.bf16.msra.mxu0 %v6567
    %6809 = vmatprep.subr.bf16.mxu0 %v6564
    %6810 = vmatpush1.bf16.msra.mxu0 %v6563
    %6811 = vmatprep.subr.bf16.mxu0 %v6560
    %6812 = vmatpush1.bf16.msra.mxu0 %v6559
    %6813 = vmatprep.subr.bf16.mxu0 %v6556
    %6814 = vmatpush1.bf16.msra.mxu0 %v6555
    %6815 = vmatprep.subr.bf16.mxu0 %v6552
    %6816 = vmatpush1.bf16.msra.mxu0 %v6551
    %6817 = vmatprep.subr.bf16.mxu0 %v6548
    %6818 = vmatpush1.bf16.msra.mxu0 %v6547
    %6819 = vmatprep.subr.bf16.mxu0 %v6608
    %6820 = vmatpush2.bf16.msra.mxu0 %v6607
    %6821 = vmatprep.subr.bf16.mxu0 %v6604
    %6822 = vmatpush2.bf16.msra.mxu0 %v6603
    %6823 = vmatprep.subr.bf16.mxu0 %v6600
    %6824 = vmatpush2.bf16.msra.mxu0 %v6599
    %6825 = vmatprep.subr.bf16.mxu0 %v6596
    %6826 = vmatpush2.bf16.msra.mxu0 %v6595
    %6827 = vmatprep.subr.bf16.mxu0 %v6592
    %6828 = vmatpush2.bf16.msra.mxu0 %v6591
    %6829 = vmatprep.subr.bf16.mxu0 %v6588
    %6830 = vmatpush2.bf16.msra.mxu0 %v6587
    %6831 = vmatprep.subr.bf16.mxu0 %v6584
    %6832 = vmatpush2.bf16.msra.mxu0 %v6583
    %6833 = vmatprep.subr.bf16.mxu0 %v6580
    %6834 = vmatpush2.bf16.msra.mxu0 %v6579
    %6835 = vmatprep.mubr.bf16.mxu0 %v6032
    %6836 = vmatmul.mubr.bf16.gmra.mxu0 %v6031
    %v6837 = vpop.f32.mrf.mxu0
    %v6838 = vadd.f32 %v122, %v6837
    %v6839 = vpop.f32.mrf.mxu0
    %v6840 = vadd.f32 %v123, %v6839
    %v6841 = vpop.f32.mrf.mxu0
    %v6842 = vadd.f32 %v126, %v6841
    %v6843 = vpop.f32.mrf.mxu0
    %v6844 = vadd.f32 %v127, %v6843
    %6845 = vdwg.mxu0
    %6846 = vmatprep.subr.bf16.mxu0 %v6640
    %6847 = vmatpush1.bf16.msra.mxu0 %v6639
    %6848 = vmatprep.subr.bf16.mxu0 %v6636
    %6849 = vmatpush1.bf16.msra.mxu0 %v6635
    %6850 = vmatprep.subr.bf16.mxu0 %v6632
    %6851 = vmatpush1.bf16.msra.mxu0 %v6631
    %6852 = vmatprep.subr.bf16.mxu0 %v6628
    %6853 = vmatpush1.bf16.msra.mxu0 %v6627
    %6854 = vmatprep.subr.bf16.mxu0 %v6624
    %6855 = vmatpush1.bf16.msra.mxu0 %v6623
    %6856 = vmatprep.subr.bf16.mxu0 %v6620
    %6857 = vmatpush1.bf16.msra.mxu0 %v6619
    %6858 = vmatprep.subr.bf16.mxu0 %v6616
    %6859 = vmatpush1.bf16.msra.mxu0 %v6615
    %6860 = vmatprep.subr.bf16.mxu0 %v6612
    %6861 = vmatpush1.bf16.msra.mxu0 %v6611
    %6862 = vmatprep.subr.bf16.mxu0 %v6672
    %6863 = vmatpush2.bf16.msra.mxu0 %v6671
    %6864 = vmatprep.subr.bf16.mxu0 %v6668
    %6865 = vmatpush2.bf16.msra.mxu0 %v6667
    %6866 = vmatprep.subr.bf16.mxu0 %v6664
    %6867 = vmatpush2.bf16.msra.mxu0 %v6663
    %6868 = vmatprep.subr.bf16.mxu0 %v6660
    %6869 = vmatpush2.bf16.msra.mxu0 %v6659
    %6870 = vmatprep.subr.bf16.mxu0 %v6656
    %6871 = vmatpush2.bf16.msra.mxu0 %v6655
    %6872 = vmatprep.subr.bf16.mxu0 %v6652
    %6873 = vmatpush2.bf16.msra.mxu0 %v6651
    %6874 = vmatprep.subr.bf16.mxu0 %v6648
    %6875 = vmatpush2.bf16.msra.mxu0 %v6647
    %6876 = vmatprep.subr.bf16.mxu0 %v6644
    %6877 = vmatpush2.bf16.msra.mxu0 %v6643
    %6878 = vmatprep.mubr.bf16.mxu0 %v6034
    %6879 = vmatmul.mubr.bf16.gmra.mxu0 %v6033
    %v6880 = vpop.f32.mrf.mxu0
    %v6881 = vadd.f32 %v6838, %v6880
    %v6882 = vpop.f32.mrf.mxu0
    %v6883 = vadd.f32 %v6840, %v6882
    %v6884 = vpop.f32.mrf.mxu0
    %v6885 = vadd.f32 %v6842, %v6884
    %v6886 = vpop.f32.mrf.mxu0
    %v6887 = vadd.f32 %v6844, %v6886
    %6888 = vdwg.mxu0
    %6889 = vmatprep.subr.bf16.mxu0 %v6578
    %6890 = vmatpush1.bf16.msra.mxu0 %v6577
    %6891 = vmatprep.subr.bf16.mxu0 %v6574
    %6892 = vmatpush1.bf16.msra.mxu0 %v6573
    %6893 = vmatprep.subr.bf16.mxu0 %v6570
    %6894 = vmatpush1.bf16.msra.mxu0 %v6569
    %6895 = vmatprep.subr.bf16.mxu0 %v6566
    %6896 = vmatpush1.bf16.msra.mxu0 %v6565
    %6897 = vmatprep.subr.bf16.mxu0 %v6562
    %6898 = vmatpush1.bf16.msra.mxu0 %v6561
    %6899 = vmatprep.subr.bf16.mxu0 %v6558
    %6900 = vmatpush1.bf16.msra.mxu0 %v6557
    %6901 = vmatprep.subr.bf16.mxu0 %v6554
    %6902 = vmatpush1.bf16.msra.mxu0 %v6553
    %6903 = vmatprep.subr.bf16.mxu0 %v6550
    %6904 = vmatpush1.bf16.msra.mxu0 %v6549
    %6905 = vmatprep.subr.bf16.mxu0 %v6610
    %6906 = vmatpush2.bf16.msra.mxu0 %v6609
    %6907 = vmatprep.subr.bf16.mxu0 %v6606
    %6908 = vmatpush2.bf16.msra.mxu0 %v6605
    %6909 = vmatprep.subr.bf16.mxu0 %v6602
    %6910 = vmatpush2.bf16.msra.mxu0 %v6601
    %6911 = vmatprep.subr.bf16.mxu0 %v6598
    %6912 = vmatpush2.bf16.msra.mxu0 %v6597
    %6913 = vmatprep.subr.bf16.mxu0 %v6594
    %6914 = vmatpush2.bf16.msra.mxu0 %v6593
    %6915 = vmatprep.subr.bf16.mxu0 %v6590
    %6916 = vmatpush2.bf16.msra.mxu0 %v6589
    %6917 = vmatprep.subr.bf16.mxu0 %v6586
    %6918 = vmatpush2.bf16.msra.mxu0 %v6585
    %6919 = vmatprep.subr.bf16.mxu0 %v6582
    %6920 = vmatpush2.bf16.msra.mxu0 %v6581
    %6921 = vmatprep.mubr.bf16.mxu0 %v6032
    %6922 = vmatmul.mubr.bf16.gmra.mxu0 %v6031
    %v6923 = vpop.f32.mrf.mxu0
    %v6924 = vadd.f32 %v124, %v6923
    %v6925 = vpop.f32.mrf.mxu0
    %v6926 = vadd.f32 %v125, %v6925
    %v6927 = vpop.f32.mrf.mxu0
    %v6928 = vadd.f32 %v128, %v6927
    %v6929 = vpop.f32.mrf.mxu0
    %v6930 = vadd.f32 %v129, %v6929
    %6931 = vdwg.mxu0
    %6932 = vmatprep.subr.bf16.mxu0 %v6642
    %6933 = vmatpush1.bf16.msra.mxu0 %v6641
    %6934 = vmatprep.subr.bf16.mxu0 %v6638
    %6935 = vmatpush1.bf16.msra.mxu0 %v6637
    %6936 = vmatprep.subr.bf16.mxu0 %v6634
    %6937 = vmatpush1.bf16.msra.mxu0 %v6633
    %6938 = vmatprep.subr.bf16.mxu0 %v6630
    %6939 = vmatpush1.bf16.msra.mxu0 %v6629
    %6940 = vmatprep.subr.bf16.mxu0 %v6626
    %6941 = vmatpush1.bf16.msra.mxu0 %v6625
    %6942 = vmatprep.subr.bf16.mxu0 %v6622
    %6943 = vmatpush1.bf16.msra.mxu0 %v6621
    %6944 = vmatprep.subr.bf16.mxu0 %v6618
    %6945 = vmatpush1.bf16.msra.mxu0 %v6617
    %6946 = vmatprep.subr.bf16.mxu0 %v6614
    %6947 = vmatpush1.bf16.msra.mxu0 %v6613
    %6948 = vmatprep.subr.bf16.mxu0 %v6674
    %6949 = vmatpush2.bf16.msra.mxu0 %v6673
    %6950 = vmatprep.subr.bf16.mxu0 %v6670
    %6951 = vmatpush2.bf16.msra.mxu0 %v6669
    %6952 = vmatprep.subr.bf16.mxu0 %v6666
    %6953 = vmatpush2.bf16.msra.mxu0 %v6665
    %6954 = vmatprep.subr.bf16.mxu0 %v6662
    %6955 = vmatpush2.bf16.msra.mxu0 %v6661
    %6956 = vmatprep.subr.bf16.mxu0 %v6658
    %6957 = vmatpush2.bf16.msra.mxu0 %v6657
    %6958 = vmatprep.subr.bf16.mxu0 %v6654
    %6959 = vmatpush2.bf16.msra.mxu0 %v6653
    %6960 = vmatprep.subr.bf16.mxu0 %v6650
    %6961 = vmatpush2.bf16.msra.mxu0 %v6649
    %6962 = vmatprep.subr.bf16.mxu0 %v6646
    %6963 = vmatpush2.bf16.msra.mxu0 %v6645
    %6964 = vmatprep.mubr.bf16.mxu0 %v6034
    %6965 = vmatmul.mubr.bf16.gmra.mxu0 %v6033
    %v6966 = vpop.f32.mrf.mxu0
    %v6967 = vadd.f32 %v6924, %v6966
    %v6968 = vpop.f32.mrf.mxu0
    %v6969 = vadd.f32 %v6926, %v6968
    %v6970 = vpop.f32.mrf.mxu0
    %v6971 = vadd.f32 %v6928, %v6970
    %v6972 = vpop.f32.mrf.mxu0
    %v6973 = vadd.f32 %v6930, %v6972
    %6974 = vdwg.mxu0
    %v6975 = vpack.c.bf16 %v6885, %v6881
    %v6976 = vpack.c.bf16 %v6887, %v6883
    %v6977 = vpack.c.bf16 %v6971, %v6967
    %v6978 = vpack.c.bf16 %v6973, %v6969
    %v6979 = vld [vmem:[#allocation12] sm:$0xff]
    %v6980 = vld [vmem:[#allocation12 + $0x8] sm:$0xff]
    %v6981 = vld [vmem:[#allocation12 + $0x10] sm:$0xff]
    %v6982 = vld [vmem:[#allocation12 + $0x18] sm:$0xff]
    %v6983 = vld [vmem:[#allocation12 + $0x20] sm:$0xff]
    %v6984 = vld [vmem:[#allocation12 + $0x28] sm:$0xff]
    %v6985 = vld [vmem:[#allocation12 + $0x30] sm:$0xff]
    %v6986 = vld [vmem:[#allocation12 + $0x38] sm:$0xff]
    %v6987 = vld [vmem:[#allocation12 + $0x40] sm:$0xff]
    %v6988 = vld [vmem:[#allocation12 + $0x48] sm:$0xff]
    %v6989 = vld [vmem:[#allocation12 + $0x50] sm:$0xff]
    %v6990 = vld [vmem:[#allocation12 + $0x58] sm:$0xff]
    %v6991 = vld [vmem:[#allocation12 + $0x60] sm:$0xff]
    %v6992 = vld [vmem:[#allocation12 + $0x68] sm:$0xff]
    %v6993 = vld [vmem:[#allocation12 + $0x70] sm:$0xff]
    %v6994 = vld [vmem:[#allocation12 + $0x78] sm:$0xff]
    %v6995 = vld [vmem:[#allocation12 + $0x80] sm:$0xff]
    %v6996 = vld [vmem:[#allocation12 + $0x88] sm:$0xff]
    %v6997 = vld [vmem:[#allocation12 + $0x90] sm:$0xff]
    %v6998 = vld [vmem:[#allocation12 + $0x98] sm:$0xff]
    %v6999 = vld [vmem:[#allocation12 + $0xa0] sm:$0xff]
    %v7000 = vld [vmem:[#allocation12 + $0xa8] sm:$0xff]
    %v7001 = vld [vmem:[#allocation12 + $0xb0] sm:$0xff]
    %v7002 = vld [vmem:[#allocation12 + $0xb8] sm:$0xff]
    %v7003 = vld [vmem:[#allocation12 + $0xc0] sm:$0xff]
    %v7004 = vld [vmem:[#allocation12 + $0xc8] sm:$0xff]
    %v7005 = vld [vmem:[#allocation12 + $0xd0] sm:$0xff]
    %v7006 = vld [vmem:[#allocation12 + $0xd8] sm:$0xff]
    %v7007 = vld [vmem:[#allocation12 + $0xe0] sm:$0xff]
    %v7008 = vld [vmem:[#allocation12 + $0xe8] sm:$0xff]
    %v7009 = vld [vmem:[#allocation12 + $0xf0] sm:$0xff]
    %v7010 = vld [vmem:[#allocation12 + $0xf8] sm:$0xff]
    %v7011 = vld [vmem:[#allocation12 + $0x100] sm:$0xff]
    %v7012 = vld [vmem:[#allocation12 + $0x108] sm:$0xff]
    %v7013 = vld [vmem:[#allocation12 + $0x110] sm:$0xff]
    %v7014 = vld [vmem:[#allocation12 + $0x118] sm:$0xff]
    %v7015 = vld [vmem:[#allocation12 + $0x120] sm:$0xff]
    %v7016 = vld [vmem:[#allocation12 + $0x128] sm:$0xff]
    %v7017 = vld [vmem:[#allocation12 + $0x130] sm:$0xff]
    %v7018 = vld [vmem:[#allocation12 + $0x138] sm:$0xff]
    %v7019 = vld [vmem:[#allocation12 + $0x140] sm:$0xff]
    %v7020 = vld [vmem:[#allocation12 + $0x148] sm:$0xff]
    %v7021 = vld [vmem:[#allocation12 + $0x150] sm:$0xff]
    %v7022 = vld [vmem:[#allocation12 + $0x158] sm:$0xff]
    %v7023 = vld [vmem:[#allocation12 + $0x160] sm:$0xff]
    %v7024 = vld [vmem:[#allocation12 + $0x168] sm:$0xff]
    %v7025 = vld [vmem:[#allocation12 + $0x170] sm:$0xff]
    %v7026 = vld [vmem:[#allocation12 + $0x178] sm:$0xff]
    %v7027 = vld [vmem:[#allocation12 + $0x180] sm:$0xff]
    %v7028 = vld [vmem:[#allocation12 + $0x188] sm:$0xff]
    %v7029 = vld [vmem:[#allocation12 + $0x190] sm:$0xff]
    %v7030 = vld [vmem:[#allocation12 + $0x198] sm:$0xff]
    %v7031 = vld [vmem:[#allocation12 + $0x1a0] sm:$0xff]
    %v7032 = vld [vmem:[#allocation12 + $0x1a8] sm:$0xff]
    %v7033 = vld [vmem:[#allocation12 + $0x1b0] sm:$0xff]
    %v7034 = vld [vmem:[#allocation12 + $0x1b8] sm:$0xff]
    %v7035 = vld [vmem:[#allocation12 + $0x1c0] sm:$0xff]
    %v7036 = vld [vmem:[#allocation12 + $0x1c8] sm:$0xff]
    %v7037 = vld [vmem:[#allocation12 + $0x1d0] sm:$0xff]
    %v7038 = vld [vmem:[#allocation12 + $0x1d8] sm:$0xff]
    %v7039 = vld [vmem:[#allocation12 + $0x1e0] sm:$0xff]
    %v7040 = vld [vmem:[#allocation12 + $0x1e8] sm:$0xff]
    %v7041 = vld [vmem:[#allocation12 + $0x1f0] sm:$0xff]
    %v7042 = vld [vmem:[#allocation12 + $0x1f8] sm:$0xff]
    %v7043 = vld [vmem:[#allocation12 + $0x200] sm:$0xff]
    %v7044 = vld [vmem:[#allocation12 + $0x208] sm:$0xff]
    %v7045 = vld [vmem:[#allocation12 + $0x210] sm:$0xff]
    %v7046 = vld [vmem:[#allocation12 + $0x218] sm:$0xff]
    %v7047 = vld [vmem:[#allocation12 + $0x220] sm:$0xff]
    %v7048 = vld [vmem:[#allocation12 + $0x228] sm:$0xff]
    %v7049 = vld [vmem:[#allocation12 + $0x230] sm:$0xff]
    %v7050 = vld [vmem:[#allocation12 + $0x238] sm:$0xff]
    %v7051 = vld [vmem:[#allocation12 + $0x240] sm:$0xff]
    %v7052 = vld [vmem:[#allocation12 + $0x248] sm:$0xff]
    %v7053 = vld [vmem:[#allocation12 + $0x250] sm:$0xff]
    %v7054 = vld [vmem:[#allocation12 + $0x258] sm:$0xff]
    %v7055 = vld [vmem:[#allocation12 + $0x260] sm:$0xff]
    %v7056 = vld [vmem:[#allocation12 + $0x268] sm:$0xff]
    %v7057 = vld [vmem:[#allocation12 + $0x270] sm:$0xff]
    %v7058 = vld [vmem:[#allocation12 + $0x278] sm:$0xff]
    %v7059 = vld [vmem:[#allocation12 + $0x280] sm:$0xff]
    %v7060 = vld [vmem:[#allocation12 + $0x288] sm:$0xff]
    %v7061 = vld [vmem:[#allocation12 + $0x290] sm:$0xff]
    %v7062 = vld [vmem:[#allocation12 + $0x298] sm:$0xff]
    %v7063 = vld [vmem:[#allocation12 + $0x2a0] sm:$0xff]
    %v7064 = vld [vmem:[#allocation12 + $0x2a8] sm:$0xff]
    %v7065 = vld [vmem:[#allocation12 + $0x2b0] sm:$0xff]
    %v7066 = vld [vmem:[#allocation12 + $0x2b8] sm:$0xff]
    %v7067 = vld [vmem:[#allocation12 + $0x2c0] sm:$0xff]
    %v7068 = vld [vmem:[#allocation12 + $0x2c8] sm:$0xff]
    %v7069 = vld [vmem:[#allocation12 + $0x2d0] sm:$0xff]
    %v7070 = vld [vmem:[#allocation12 + $0x2d8] sm:$0xff]
    %v7071 = vld [vmem:[#allocation12 + $0x2e0] sm:$0xff]
    %v7072 = vld [vmem:[#allocation12 + $0x2e8] sm:$0xff]
    %v7073 = vld [vmem:[#allocation12 + $0x2f0] sm:$0xff]
    %v7074 = vld [vmem:[#allocation12 + $0x2f8] sm:$0xff]
    %v7075 = vld [vmem:[#allocation12 + $0x300] sm:$0xff]
    %v7076 = vld [vmem:[#allocation12 + $0x308] sm:$0xff]
    %v7077 = vld [vmem:[#allocation12 + $0x310] sm:$0xff]
    %v7078 = vld [vmem:[#allocation12 + $0x318] sm:$0xff]
    %v7079 = vld [vmem:[#allocation12 + $0x320] sm:$0xff]
    %v7080 = vld [vmem:[#allocation12 + $0x328] sm:$0xff]
    %v7081 = vld [vmem:[#allocation12 + $0x330] sm:$0xff]
    %v7082 = vld [vmem:[#allocation12 + $0x338] sm:$0xff]
    %v7083 = vld [vmem:[#allocation12 + $0x340] sm:$0xff]
    %v7084 = vld [vmem:[#allocation12 + $0x348] sm:$0xff]
    %v7085 = vld [vmem:[#allocation12 + $0x350] sm:$0xff]
    %v7086 = vld [vmem:[#allocation12 + $0x358] sm:$0xff]
    %v7087 = vld [vmem:[#allocation12 + $0x360] sm:$0xff]
    %v7088 = vld [vmem:[#allocation12 + $0x368] sm:$0xff]
    %v7089 = vld [vmem:[#allocation12 + $0x370] sm:$0xff]
    %v7090 = vld [vmem:[#allocation12 + $0x378] sm:$0xff]
    %v7091 = vld [vmem:[#allocation12 + $0x380] sm:$0xff]
    %v7092 = vld [vmem:[#allocation12 + $0x388] sm:$0xff]
    %v7093 = vld [vmem:[#allocation12 + $0x390] sm:$0xff]
    %v7094 = vld [vmem:[#allocation12 + $0x398] sm:$0xff]
    %v7095 = vld [vmem:[#allocation12 + $0x3a0] sm:$0xff]
    %v7096 = vld [vmem:[#allocation12 + $0x3a8] sm:$0xff]
    %v7097 = vld [vmem:[#allocation12 + $0x3b0] sm:$0xff]
    %v7098 = vld [vmem:[#allocation12 + $0x3b8] sm:$0xff]
    %v7099 = vld [vmem:[#allocation12 + $0x3c0] sm:$0xff]
    %v7100 = vld [vmem:[#allocation12 + $0x3c8] sm:$0xff]
    %v7101 = vld [vmem:[#allocation12 + $0x3d0] sm:$0xff]
    %v7102 = vld [vmem:[#allocation12 + $0x3d8] sm:$0xff]
    %v7103 = vld [vmem:[#allocation12 + $0x3e0] sm:$0xff]
    %v7104 = vld [vmem:[#allocation12 + $0x3e8] sm:$0xff]
    %v7105 = vld [vmem:[#allocation12 + $0x3f0] sm:$0xff]
    %v7106 = vld [vmem:[#allocation12 + $0x3f8] sm:$0xff]
    %v7107 = vld [vmem:[#allocation12 + $0x400] sm:$0xff]
    %v7108 = vld [vmem:[#allocation12 + $0x408] sm:$0xff]
    %v7109 = vld [vmem:[#allocation12 + $0x410] sm:$0xff]
    %v7110 = vld [vmem:[#allocation12 + $0x418] sm:$0xff]
    %v7111 = vld [vmem:[#allocation12 + $0x420] sm:$0xff]
    %v7112 = vld [vmem:[#allocation12 + $0x428] sm:$0xff]
    %v7113 = vld [vmem:[#allocation12 + $0x430] sm:$0xff]
    %v7114 = vld [vmem:[#allocation12 + $0x438] sm:$0xff]
    %v7115 = vld [vmem:[#allocation12 + $0x440] sm:$0xff]
    %v7116 = vld [vmem:[#allocation12 + $0x448] sm:$0xff]
    %v7117 = vld [vmem:[#allocation12 + $0x450] sm:$0xff]
    %v7118 = vld [vmem:[#allocation12 + $0x458] sm:$0xff]
    %v7119 = vld [vmem:[#allocation12 + $0x460] sm:$0xff]
    %v7120 = vld [vmem:[#allocation12 + $0x468] sm:$0xff]
    %v7121 = vld [vmem:[#allocation12 + $0x470] sm:$0xff]
    %v7122 = vld [vmem:[#allocation12 + $0x478] sm:$0xff]
    %v7123 = vld [vmem:[#allocation12 + $0x480] sm:$0xff]
    %v7124 = vld [vmem:[#allocation12 + $0x488] sm:$0xff]
    %v7125 = vld [vmem:[#allocation12 + $0x490] sm:$0xff]
    %v7126 = vld [vmem:[#allocation12 + $0x498] sm:$0xff]
    %v7127 = vld [vmem:[#allocation12 + $0x4a0] sm:$0xff]
    %v7128 = vld [vmem:[#allocation12 + $0x4a8] sm:$0xff]
    %v7129 = vld [vmem:[#allocation12 + $0x4b0] sm:$0xff]
    %v7130 = vld [vmem:[#allocation12 + $0x4b8] sm:$0xff]
    %v7131 = vld [vmem:[#allocation12 + $0x4c0] sm:$0xff]
    %v7132 = vld [vmem:[#allocation12 + $0x4c8] sm:$0xff]
    %v7133 = vld [vmem:[#allocation12 + $0x4d0] sm:$0xff]
    %v7134 = vld [vmem:[#allocation12 + $0x4d8] sm:$0xff]
    %v7135 = vld [vmem:[#allocation12 + $0x4e0] sm:$0xff]
    %v7136 = vld [vmem:[#allocation12 + $0x4e8] sm:$0xff]
    %v7137 = vld [vmem:[#allocation12 + $0x4f0] sm:$0xff]
    %v7138 = vld [vmem:[#allocation12 + $0x4f8] sm:$0xff]
    %v7139 = vld [vmem:[#allocation12 + $0x500] sm:$0xff]
    %v7140 = vld [vmem:[#allocation12 + $0x508] sm:$0xff]
    %v7141 = vld [vmem:[#allocation12 + $0x510] sm:$0xff]
    %v7142 = vld [vmem:[#allocation12 + $0x518] sm:$0xff]
    %v7143 = vld [vmem:[#allocation12 + $0x520] sm:$0xff]
    %v7144 = vld [vmem:[#allocation12 + $0x528] sm:$0xff]
    %v7145 = vld [vmem:[#allocation12 + $0x530] sm:$0xff]
    %v7146 = vld [vmem:[#allocation12 + $0x538] sm:$0xff]
    %v7147 = vld [vmem:[#allocation12 + $0x540] sm:$0xff]
    %v7148 = vld [vmem:[#allocation12 + $0x548] sm:$0xff]
    %v7149 = vld [vmem:[#allocation12 + $0x550] sm:$0xff]
    %v7150 = vld [vmem:[#allocation12 + $0x558] sm:$0xff]
    %v7151 = vld [vmem:[#allocation12 + $0x560] sm:$0xff]
    %v7152 = vld [vmem:[#allocation12 + $0x568] sm:$0xff]
    %v7153 = vld [vmem:[#allocation12 + $0x570] sm:$0xff]
    %v7154 = vld [vmem:[#allocation12 + $0x578] sm:$0xff]
    %v7155 = vld [vmem:[#allocation12 + $0x580] sm:$0xff]
    %v7156 = vld [vmem:[#allocation12 + $0x588] sm:$0xff]
    %v7157 = vld [vmem:[#allocation12 + $0x590] sm:$0xff]
    %v7158 = vld [vmem:[#allocation12 + $0x598] sm:$0xff]
    %v7159 = vld [vmem:[#allocation12 + $0x5a0] sm:$0xff]
    %v7160 = vld [vmem:[#allocation12 + $0x5a8] sm:$0xff]
    %v7161 = vld [vmem:[#allocation12 + $0x5b0] sm:$0xff]
    %v7162 = vld [vmem:[#allocation12 + $0x5b8] sm:$0xff]
    %v7163 = vld [vmem:[#allocation12 + $0x5c0] sm:$0xff]
    %v7164 = vld [vmem:[#allocation12 + $0x5c8] sm:$0xff]
    %v7165 = vld [vmem:[#allocation12 + $0x5d0] sm:$0xff]
    %v7166 = vld [vmem:[#allocation12 + $0x5d8] sm:$0xff]
    %v7167 = vld [vmem:[#allocation12 + $0x5e0] sm:$0xff]
    %v7168 = vld [vmem:[#allocation12 + $0x5e8] sm:$0xff]
    %v7169 = vld [vmem:[#allocation12 + $0x5f0] sm:$0xff]
    %v7170 = vld [vmem:[#allocation12 + $0x5f8] sm:$0xff]
    %v7171 = vld [vmem:[#allocation12 + $0x600] sm:$0xff]
    %v7172 = vld [vmem:[#allocation12 + $0x608] sm:$0xff]
    %v7173 = vld [vmem:[#allocation12 + $0x610] sm:$0xff]
    %v7174 = vld [vmem:[#allocation12 + $0x618] sm:$0xff]
    %v7175 = vld [vmem:[#allocation12 + $0x620] sm:$0xff]
    %v7176 = vld [vmem:[#allocation12 + $0x628] sm:$0xff]
    %v7177 = vld [vmem:[#allocation12 + $0x630] sm:$0xff]
    %v7178 = vld [vmem:[#allocation12 + $0x638] sm:$0xff]
    %v7179 = vld [vmem:[#allocation12 + $0x640] sm:$0xff]
    %v7180 = vld [vmem:[#allocation12 + $0x648] sm:$0xff]
    %v7181 = vld [vmem:[#allocation12 + $0x650] sm:$0xff]
    %v7182 = vld [vmem:[#allocation12 + $0x658] sm:$0xff]
    %v7183 = vld [vmem:[#allocation12 + $0x660] sm:$0xff]
    %v7184 = vld [vmem:[#allocation12 + $0x668] sm:$0xff]
    %v7185 = vld [vmem:[#allocation12 + $0x670] sm:$0xff]
    %v7186 = vld [vmem:[#allocation12 + $0x678] sm:$0xff]
    %v7187 = vld [vmem:[#allocation12 + $0x680] sm:$0xff]
    %v7188 = vld [vmem:[#allocation12 + $0x688] sm:$0xff]
    %v7189 = vld [vmem:[#allocation12 + $0x690] sm:$0xff]
    %v7190 = vld [vmem:[#allocation12 + $0x698] sm:$0xff]
    %v7191 = vld [vmem:[#allocation12 + $0x6a0] sm:$0xff]
    %v7192 = vld [vmem:[#allocation12 + $0x6a8] sm:$0xff]
    %v7193 = vld [vmem:[#allocation12 + $0x6b0] sm:$0xff]
    %v7194 = vld [vmem:[#allocation12 + $0x6b8] sm:$0xff]
    %v7195 = vld [vmem:[#allocation12 + $0x6c0] sm:$0xff]
    %v7196 = vld [vmem:[#allocation12 + $0x6c8] sm:$0xff]
    %v7197 = vld [vmem:[#allocation12 + $0x6d0] sm:$0xff]
    %v7198 = vld [vmem:[#allocation12 + $0x6d8] sm:$0xff]
    %v7199 = vld [vmem:[#allocation12 + $0x6e0] sm:$0xff]
    %v7200 = vld [vmem:[#allocation12 + $0x6e8] sm:$0xff]
    %v7201 = vld [vmem:[#allocation12 + $0x6f0] sm:$0xff]
    %v7202 = vld [vmem:[#allocation12 + $0x6f8] sm:$0xff]
    %v7203 = vld [vmem:[#allocation12 + $0x700] sm:$0xff]
    %v7204 = vld [vmem:[#allocation12 + $0x708] sm:$0xff]
    %v7205 = vld [vmem:[#allocation12 + $0x710] sm:$0xff]
    %v7206 = vld [vmem:[#allocation12 + $0x718] sm:$0xff]
    %v7207 = vld [vmem:[#allocation12 + $0x720] sm:$0xff]
    %v7208 = vld [vmem:[#allocation12 + $0x728] sm:$0xff]
    %v7209 = vld [vmem:[#allocation12 + $0x730] sm:$0xff]
    %v7210 = vld [vmem:[#allocation12 + $0x738] sm:$0xff]
    %v7211 = vld [vmem:[#allocation12 + $0x740] sm:$0xff]
    %v7212 = vld [vmem:[#allocation12 + $0x748] sm:$0xff]
    %v7213 = vld [vmem:[#allocation12 + $0x750] sm:$0xff]
    %v7214 = vld [vmem:[#allocation12 + $0x758] sm:$0xff]
    %v7215 = vld [vmem:[#allocation12 + $0x760] sm:$0xff]
    %v7216 = vld [vmem:[#allocation12 + $0x768] sm:$0xff]
    %v7217 = vld [vmem:[#allocation12 + $0x770] sm:$0xff]
    %v7218 = vld [vmem:[#allocation12 + $0x778] sm:$0xff]
    %v7219 = vld [vmem:[#allocation12 + $0x780] sm:$0xff]
    %v7220 = vld [vmem:[#allocation12 + $0x788] sm:$0xff]
    %v7221 = vld [vmem:[#allocation12 + $0x790] sm:$0xff]
    %v7222 = vld [vmem:[#allocation12 + $0x798] sm:$0xff]
    %v7223 = vld [vmem:[#allocation12 + $0x7a0] sm:$0xff]
    %v7224 = vld [vmem:[#allocation12 + $0x7a8] sm:$0xff]
    %v7225 = vld [vmem:[#allocation12 + $0x7b0] sm:$0xff]
    %v7226 = vld [vmem:[#allocation12 + $0x7b8] sm:$0xff]
    %v7227 = vld [vmem:[#allocation12 + $0x7c0] sm:$0xff]
    %v7228 = vld [vmem:[#allocation12 + $0x7c8] sm:$0xff]
    %v7229 = vld [vmem:[#allocation12 + $0x7d0] sm:$0xff]
    %v7230 = vld [vmem:[#allocation12 + $0x7d8] sm:$0xff]
    %v7231 = vld [vmem:[#allocation12 + $0x7e0] sm:$0xff]
    %v7232 = vld [vmem:[#allocation12 + $0x7e8] sm:$0xff]
    %v7233 = vld [vmem:[#allocation12 + $0x7f0] sm:$0xff]
    %v7234 = vld [vmem:[#allocation12 + $0x7f8] sm:$0xff]
    %v7491 = vunpack.c.l.b16 %v6979
    %v7492 = vunpack.c.h.b16 %v6979
    %v7493 = vunpack.c.l.b16 %v6980
    %v7494 = vunpack.c.h.b16 %v6980
    %v7495 = vunpack.c.l.b16 %v6981
    %v7496 = vunpack.c.h.b16 %v6981
    %v7497 = vunpack.c.l.b16 %v6982
    %v7498 = vunpack.c.h.b16 %v6982
    %v7499 = vunpack.c.l.b16 %v6983
    %v7500 = vunpack.c.h.b16 %v6983
    %v7501 = vunpack.c.l.b16 %v6984
    %v7502 = vunpack.c.h.b16 %v6984
    %v7503 = vunpack.c.l.b16 %v6985
    %v7504 = vunpack.c.h.b16 %v6985
    %v7505 = vunpack.c.l.b16 %v6986
    %v7506 = vunpack.c.h.b16 %v6986
    %v7507 = vunpack.c.l.b16 %v6987
    %v7508 = vunpack.c.h.b16 %v6987
    %v7509 = vunpack.c.l.b16 %v6988
    %v7510 = vunpack.c.h.b16 %v6988
    %v7511 = vunpack.c.l.b16 %v6989
    %v7512 = vunpack.c.h.b16 %v6989
    %v7513 = vunpack.c.l.b16 %v6990
    %v7514 = vunpack.c.h.b16 %v6990
    %v7515 = vunpack.c.l.b16 %v6991
    %v7516 = vunpack.c.h.b16 %v6991
    %v7517 = vunpack.c.l.b16 %v6992
    %v7518 = vunpack.c.h.b16 %v6992
    %v7519 = vunpack.c.l.b16 %v6993
    %v7520 = vunpack.c.h.b16 %v6993
    %v7521 = vunpack.c.l.b16 %v6994
    %v7522 = vunpack.c.h.b16 %v6994
    %v7523 = vunpack.c.l.b16 %v6995
    %v7524 = vunpack.c.h.b16 %v6995
    %v7525 = vunpack.c.l.b16 %v6996
    %v7526 = vunpack.c.h.b16 %v6996
    %v7527 = vunpack.c.l.b16 %v6997
    %v7528 = vunpack.c.h.b16 %v6997
    %v7529 = vunpack.c.l.b16 %v6998
    %v7530 = vunpack.c.h.b16 %v6998
    %v7531 = vunpack.c.l.b16 %v6999
    %v7532 = vunpack.c.h.b16 %v6999
    %v7533 = vunpack.c.l.b16 %v7000
    %v7534 = vunpack.c.h.b16 %v7000
    %v7535 = vunpack.c.l.b16 %v7001
    %v7536 = vunpack.c.h.b16 %v7001
    %v7537 = vunpack.c.l.b16 %v7002
    %v7538 = vunpack.c.h.b16 %v7002
    %v7539 = vunpack.c.l.b16 %v7003
    %v7540 = vunpack.c.h.b16 %v7003
    %v7541 = vunpack.c.l.b16 %v7004
    %v7542 = vunpack.c.h.b16 %v7004
    %v7543 = vunpack.c.l.b16 %v7005
    %v7544 = vunpack.c.h.b16 %v7005
    %v7545 = vunpack.c.l.b16 %v7006
    %v7546 = vunpack.c.h.b16 %v7006
    %v7547 = vunpack.c.l.b16 %v7007
    %v7548 = vunpack.c.h.b16 %v7007
    %v7549 = vunpack.c.l.b16 %v7008
    %v7550 = vunpack.c.h.b16 %v7008
    %v7551 = vunpack.c.l.b16 %v7009
    %v7552 = vunpack.c.h.b16 %v7009
    %v7553 = vunpack.c.l.b16 %v7010
    %v7554 = vunpack.c.h.b16 %v7010
    %v7555 = vunpack.c.l.b16 %v7011
    %v7556 = vunpack.c.h.b16 %v7011
    %v7557 = vunpack.c.l.b16 %v7012
    %v7558 = vunpack.c.h.b16 %v7012
    %v7559 = vunpack.c.l.b16 %v7013
    %v7560 = vunpack.c.h.b16 %v7013
    %v7561 = vunpack.c.l.b16 %v7014
    %v7562 = vunpack.c.h.b16 %v7014
    %v7563 = vunpack.c.l.b16 %v7015
    %v7564 = vunpack.c.h.b16 %v7015
    %v7565 = vunpack.c.l.b16 %v7016
    %v7566 = vunpack.c.h.b16 %v7016
    %v7567 = vunpack.c.l.b16 %v7017
    %v7568 = vunpack.c.h.b16 %v7017
    %v7569 = vunpack.c.l.b16 %v7018
    %v7570 = vunpack.c.h.b16 %v7018
    %v7571 = vunpack.c.l.b16 %v7019
    %v7572 = vunpack.c.h.b16 %v7019
    %v7573 = vunpack.c.l.b16 %v7020
    %v7574 = vunpack.c.h.b16 %v7020
    %v7575 = vunpack.c.l.b16 %v7021
    %v7576 = vunpack.c.h.b16 %v7021
    %v7577 = vunpack.c.l.b16 %v7022
    %v7578 = vunpack.c.h.b16 %v7022
    %v7579 = vunpack.c.l.b16 %v7023
    %v7580 = vunpack.c.h.b16 %v7023
    %v7581 = vunpack.c.l.b16 %v7024
    %v7582 = vunpack.c.h.b16 %v7024
    %v7583 = vunpack.c.l.b16 %v7025
    %v7584 = vunpack.c.h.b16 %v7025
    %v7585 = vunpack.c.l.b16 %v7026
    %v7586 = vunpack.c.h.b16 %v7026
    %v7587 = vunpack.c.l.b16 %v7027
    %v7588 = vunpack.c.h.b16 %v7027
    %v7589 = vunpack.c.l.b16 %v7028
    %v7590 = vunpack.c.h.b16 %v7028
    %v7591 = vunpack.c.l.b16 %v7029
    %v7592 = vunpack.c.h.b16 %v7029
    %v7593 = vunpack.c.l.b16 %v7030
    %v7594 = vunpack.c.h.b16 %v7030
    %v7595 = vunpack.c.l.b16 %v7031
    %v7596 = vunpack.c.h.b16 %v7031
    %v7597 = vunpack.c.l.b16 %v7032
    %v7598 = vunpack.c.h.b16 %v7032
    %v7599 = vunpack.c.l.b16 %v7033
    %v7600 = vunpack.c.h.b16 %v7033
    %v7601 = vunpack.c.l.b16 %v7034
    %v7602 = vunpack.c.h.b16 %v7034
    %v7603 = vunpack.c.l.b16 %v7035
    %v7604 = vunpack.c.h.b16 %v7035
    %v7605 = vunpack.c.l.b16 %v7036
    %v7606 = vunpack.c.h.b16 %v7036
    %v7607 = vunpack.c.l.b16 %v7037
    %v7608 = vunpack.c.h.b16 %v7037
    %v7609 = vunpack.c.l.b16 %v7038
    %v7610 = vunpack.c.h.b16 %v7038
    %v7611 = vunpack.c.l.b16 %v7039
    %v7612 = vunpack.c.h.b16 %v7039
    %v7613 = vunpack.c.l.b16 %v7040
    %v7614 = vunpack.c.h.b16 %v7040
    %v7615 = vunpack.c.l.b16 %v7041
    %v7616 = vunpack.c.h.b16 %v7041
    %v7617 = vunpack.c.l.b16 %v7042
    %v7618 = vunpack.c.h.b16 %v7042
    %v7619 = vunpack.c.l.b16 %v7043
    %v7620 = vunpack.c.h.b16 %v7043
    %v7621 = vunpack.c.l.b16 %v7044
    %v7622 = vunpack.c.h.b16 %v7044
    %v7623 = vunpack.c.l.b16 %v7045
    %v7624 = vunpack.c.h.b16 %v7045
    %v7625 = vunpack.c.l.b16 %v7046
    %v7626 = vunpack.c.h.b16 %v7046
    %v7627 = vunpack.c.l.b16 %v7047
    %v7628 = vunpack.c.h.b16 %v7047
    %v7629 = vunpack.c.l.b16 %v7048
    %v7630 = vunpack.c.h.b16 %v7048
    %v7631 = vunpack.c.l.b16 %v7049
    %v7632 = vunpack.c.h.b16 %v7049
    %v7633 = vunpack.c.l.b16 %v7050
    %v7634 = vunpack.c.h.b16 %v7050
    %v7635 = vunpack.c.l.b16 %v7051
    %v7636 = vunpack.c.h.b16 %v7051
    %v7637 = vunpack.c.l.b16 %v7052
    %v7638 = vunpack.c.h.b16 %v7052
    %v7639 = vunpack.c.l.b16 %v7053
    %v7640 = vunpack.c.h.b16 %v7053
    %v7641 = vunpack.c.l.b16 %v7054
    %v7642 = vunpack.c.h.b16 %v7054
    %v7643 = vunpack.c.l.b16 %v7055
    %v7644 = vunpack.c.h.b16 %v7055
    %v7645 = vunpack.c.l.b16 %v7056
    %v7646 = vunpack.c.h.b16 %v7056
    %v7647 = vunpack.c.l.b16 %v7057
    %v7648 = vunpack.c.h.b16 %v7057
    %v7649 = vunpack.c.l.b16 %v7058
    %v7650 = vunpack.c.h.b16 %v7058
    %v7651 = vunpack.c.l.b16 %v7059
    %v7652 = vunpack.c.h.b16 %v7059
    %v7653 = vunpack.c.l.b16 %v7060
    %v7654 = vunpack.c.h.b16 %v7060
    %v7655 = vunpack.c.l.b16 %v7061
    %v7656 = vunpack.c.h.b16 %v7061
    %v7657 = vunpack.c.l.b16 %v7062
    %v7658 = vunpack.c.h.b16 %v7062
    %v7659 = vunpack.c.l.b16 %v7063
    %v7660 = vunpack.c.h.b16 %v7063
    %v7661 = vunpack.c.l.b16 %v7064
    %v7662 = vunpack.c.h.b16 %v7064
    %v7663 = vunpack.c.l.b16 %v7065
    %v7664 = vunpack.c.h.b16 %v7065
    %v7665 = vunpack.c.l.b16 %v7066
    %v7666 = vunpack.c.h.b16 %v7066
    %v7667 = vunpack.c.l.b16 %v7067
    %v7668 = vunpack.c.h.b16 %v7067
    %v7669 = vunpack.c.l.b16 %v7068
    %v7670 = vunpack.c.h.b16 %v7068
    %v7671 = vunpack.c.l.b16 %v7069
    %v7672 = vunpack.c.h.b16 %v7069
    %v7673 = vunpack.c.l.b16 %v7070
    %v7674 = vunpack.c.h.b16 %v7070
    %v7675 = vunpack.c.l.b16 %v7071
    %v7676 = vunpack.c.h.b16 %v7071
    %v7677 = vunpack.c.l.b16 %v7072
    %v7678 = vunpack.c.h.b16 %v7072
    %v7679 = vunpack.c.l.b16 %v7073
    %v7680 = vunpack.c.h.b16 %v7073
    %v7681 = vunpack.c.l.b16 %v7074
    %v7682 = vunpack.c.h.b16 %v7074
    %v7683 = vunpack.c.l.b16 %v7075
    %v7684 = vunpack.c.h.b16 %v7075
    %v7685 = vunpack.c.l.b16 %v7076
    %v7686 = vunpack.c.h.b16 %v7076
    %v7687 = vunpack.c.l.b16 %v7077
    %v7688 = vunpack.c.h.b16 %v7077
    %v7689 = vunpack.c.l.b16 %v7078
    %v7690 = vunpack.c.h.b16 %v7078
    %v7691 = vunpack.c.l.b16 %v7079
    %v7692 = vunpack.c.h.b16 %v7079
    %v7693 = vunpack.c.l.b16 %v7080
    %v7694 = vunpack.c.h.b16 %v7080
    %v7695 = vunpack.c.l.b16 %v7081
    %v7696 = vunpack.c.h.b16 %v7081
    %v7697 = vunpack.c.l.b16 %v7082
    %v7698 = vunpack.c.h.b16 %v7082
    %v7699 = vunpack.c.l.b16 %v7083
    %v7700 = vunpack.c.h.b16 %v7083
    %v7701 = vunpack.c.l.b16 %v7084
    %v7702 = vunpack.c.h.b16 %v7084
    %v7703 = vunpack.c.l.b16 %v7085
    %v7704 = vunpack.c.h.b16 %v7085
    %v7705 = vunpack.c.l.b16 %v7086
    %v7706 = vunpack.c.h.b16 %v7086
    %v7707 = vunpack.c.l.b16 %v7087
    %v7708 = vunpack.c.h.b16 %v7087
    %v7709 = vunpack.c.l.b16 %v7088
    %v7710 = vunpack.c.h.b16 %v7088
    %v7711 = vunpack.c.l.b16 %v7089
    %v7712 = vunpack.c.h.b16 %v7089
    %v7713 = vunpack.c.l.b16 %v7090
    %v7714 = vunpack.c.h.b16 %v7090
    %v7715 = vunpack.c.l.b16 %v7091
    %v7716 = vunpack.c.h.b16 %v7091
    %v7717 = vunpack.c.l.b16 %v7092
    %v7718 = vunpack.c.h.b16 %v7092
    %v7719 = vunpack.c.l.b16 %v7093
    %v7720 = vunpack.c.h.b16 %v7093
    %v7721 = vunpack.c.l.b16 %v7094
    %v7722 = vunpack.c.h.b16 %v7094
    %v7723 = vunpack.c.l.b16 %v7095
    %v7724 = vunpack.c.h.b16 %v7095
    %v7725 = vunpack.c.l.b16 %v7096
    %v7726 = vunpack.c.h.b16 %v7096
    %v7727 = vunpack.c.l.b16 %v7097
    %v7728 = vunpack.c.h.b16 %v7097
    %v7729 = vunpack.c.l.b16 %v7098
    %v7730 = vunpack.c.h.b16 %v7098
    %v7731 = vunpack.c.l.b16 %v7099
    %v7732 = vunpack.c.h.b16 %v7099
    %v7733 = vunpack.c.l.b16 %v7100
    %v7734 = vunpack.c.h.b16 %v7100
    %v7735 = vunpack.c.l.b16 %v7101
    %v7736 = vunpack.c.h.b16 %v7101
    %v7737 = vunpack.c.l.b16 %v7102
    %v7738 = vunpack.c.h.b16 %v7102
    %v7739 = vunpack.c.l.b16 %v7103
    %v7740 = vunpack.c.h.b16 %v7103
    %v7741 = vunpack.c.l.b16 %v7104
    %v7742 = vunpack.c.h.b16 %v7104
    %v7743 = vunpack.c.l.b16 %v7105
    %v7744 = vunpack.c.h.b16 %v7105
    %v7745 = vunpack.c.l.b16 %v7106
    %v7746 = vunpack.c.h.b16 %v7106
    %v7747 = vunpack.c.l.b16 %v7107
    %v7748 = vunpack.c.h.b16 %v7107
    %v7749 = vunpack.c.l.b16 %v7108
    %v7750 = vunpack.c.h.b16 %v7108
    %v7751 = vunpack.c.l.b16 %v7109
    %v7752 = vunpack.c.h.b16 %v7109
    %v7753 = vunpack.c.l.b16 %v7110
    %v7754 = vunpack.c.h.b16 %v7110
    %v7755 = vunpack.c.l.b16 %v7111
    %v7756 = vunpack.c.h.b16 %v7111
    %v7757 = vunpack.c.l.b16 %v7112
    %v7758 = vunpack.c.h.b16 %v7112
    %v7759 = vunpack.c.l.b16 %v7113
    %v7760 = vunpack.c.h.b16 %v7113
    %v7761 = vunpack.c.l.b16 %v7114
    %v7762 = vunpack.c.h.b16 %v7114
    %v7763 = vunpack.c.l.b16 %v7115
    %v7764 = vunpack.c.h.b16 %v7115
    %v7765 = vunpack.c.l.b16 %v7116
    %v7766 = vunpack.c.h.b16 %v7116
    %v7767 = vunpack.c.l.b16 %v7117
    %v7768 = vunpack.c.h.b16 %v7117
    %v7769 = vunpack.c.l.b16 %v7118
    %v7770 = vunpack.c.h.b16 %v7118
    %v7771 = vunpack.c.l.b16 %v7119
    %v7772 = vunpack.c.h.b16 %v7119
    %v7773 = vunpack.c.l.b16 %v7120
    %v7774 = vunpack.c.h.b16 %v7120
    %v7775 = vunpack.c.l.b16 %v7121
    %v7776 = vunpack.c.h.b16 %v7121
    %v7777 = vunpack.c.l.b16 %v7122
    %v7778 = vunpack.c.h.b16 %v7122
    %v7779 = vunpack.c.l.b16 %v7123
    %v7780 = vunpack.c.h.b16 %v7123
    %v7781 = vunpack.c.l.b16 %v7124
    %v7782 = vunpack.c.h.b16 %v7124
    %v7783 = vunpack.c.l.b16 %v7125
    %v7784 = vunpack.c.h.b16 %v7125
    %v7785 = vunpack.c.l.b16 %v7126
    %v7786 = vunpack.c.h.b16 %v7126
    %v7787 = vunpack.c.l.b16 %v7127
    %v7788 = vunpack.c.h.b16 %v7127
    %v7789 = vunpack.c.l.b16 %v7128
    %v7790 = vunpack.c.h.b16 %v7128
    %v7791 = vunpack.c.l.b16 %v7129
    %v7792 = vunpack.c.h.b16 %v7129
    %v7793 = vunpack.c.l.b16 %v7130
    %v7794 = vunpack.c.h.b16 %v7130
    %v7795 = vunpack.c.l.b16 %v7131
    %v7796 = vunpack.c.h.b16 %v7131
    %v7797 = vunpack.c.l.b16 %v7132
    %v7798 = vunpack.c.h.b16 %v7132
    %v7799 = vunpack.c.l.b16 %v7133
    %v7800 = vunpack.c.h.b16 %v7133
    %v7801 = vunpack.c.l.b16 %v7134
    %v7802 = vunpack.c.h.b16 %v7134
    %v7803 = vunpack.c.l.b16 %v7135
    %v7804 = vunpack.c.h.b16 %v7135
    %v7805 = vunpack.c.l.b16 %v7136
    %v7806 = vunpack.c.h.b16 %v7136
    %v7807 = vunpack.c.l.b16 %v7137
    %v7808 = vunpack.c.h.b16 %v7137
    %v7809 = vunpack.c.l.b16 %v7138
    %v7810 = vunpack.c.h.b16 %v7138
    %v7811 = vunpack.c.l.b16 %v7139
    %v7812 = vunpack.c.h.b16 %v7139
    %v7813 = vunpack.c.l.b16 %v7140
    %v7814 = vunpack.c.h.b16 %v7140
    %v7815 = vunpack.c.l.b16 %v7141
    %v7816 = vunpack.c.h.b16 %v7141
    %v7817 = vunpack.c.l.b16 %v7142
    %v7818 = vunpack.c.h.b16 %v7142
    %v7819 = vunpack.c.l.b16 %v7143
    %v7820 = vunpack.c.h.b16 %v7143
    %v7821 = vunpack.c.l.b16 %v7144
    %v7822 = vunpack.c.h.b16 %v7144
    %v7823 = vunpack.c.l.b16 %v7145
    %v7824 = vunpack.c.h.b16 %v7145
    %v7825 = vunpack.c.l.b16 %v7146
    %v7826 = vunpack.c.h.b16 %v7146
    %v7827 = vunpack.c.l.b16 %v7147
    %v7828 = vunpack.c.h.b16 %v7147
    %v7829 = vunpack.c.l.b16 %v7148
    %v7830 = vunpack.c.h.b16 %v7148
    %v7831 = vunpack.c.l.b16 %v7149
    %v7832 = vunpack.c.h.b16 %v7149
    %v7833 = vunpack.c.l.b16 %v7150
    %v7834 = vunpack.c.h.b16 %v7150
    %v7835 = vunpack.c.l.b16 %v7151
    %v7836 = vunpack.c.h.b16 %v7151
    %v7837 = vunpack.c.l.b16 %v7152
    %v7838 = vunpack.c.h.b16 %v7152
    %v7839 = vunpack.c.l.b16 %v7153
    %v7840 = vunpack.c.h.b16 %v7153
    %v7841 = vunpack.c.l.b16 %v7154
    %v7842 = vunpack.c.h.b16 %v7154
    %v7843 = vunpack.c.l.b16 %v7155
    %v7844 = vunpack.c.h.b16 %v7155
    %v7845 = vunpack.c.l.b16 %v7156
    %v7846 = vunpack.c.h.b16 %v7156
    %v7847 = vunpack.c.l.b16 %v7157
    %v7848 = vunpack.c.h.b16 %v7157
    %v7849 = vunpack.c.l.b16 %v7158
    %v7850 = vunpack.c.h.b16 %v7158
    %v7851 = vunpack.c.l.b16 %v7159
    %v7852 = vunpack.c.h.b16 %v7159
    %v7853 = vunpack.c.l.b16 %v7160
    %v7854 = vunpack.c.h.b16 %v7160
    %v7855 = vunpack.c.l.b16 %v7161
    %v7856 = vunpack.c.h.b16 %v7161
    %v7857 = vunpack.c.l.b16 %v7162
    %v7858 = vunpack.c.h.b16 %v7162
    %v7859 = vunpack.c.l.b16 %v7163
    %v7860 = vunpack.c.h.b16 %v7163
    %v7861 = vunpack.c.l.b16 %v7164
    %v7862 = vunpack.c.h.b16 %v7164
    %v7863 = vunpack.c.l.b16 %v7165
    %v7864 = vunpack.c.h.b16 %v7165
    %v7865 = vunpack.c.l.b16 %v7166
    %v7866 = vunpack.c.h.b16 %v7166
    %v7867 = vunpack.c.l.b16 %v7167
    %v7868 = vunpack.c.h.b16 %v7167
    %v7869 = vunpack.c.l.b16 %v7168
    %v7870 = vunpack.c.h.b16 %v7168
    %v7871 = vunpack.c.l.b16 %v7169
    %v7872 = vunpack.c.h.b16 %v7169
    %v7873 = vunpack.c.l.b16 %v7170
    %v7874 = vunpack.c.h.b16 %v7170
    %v7875 = vunpack.c.l.b16 %v7171
    %v7876 = vunpack.c.h.b16 %v7171
    %v7877 = vunpack.c.l.b16 %v7172
    %v7878 = vunpack.c.h.b16 %v7172
    %v7879 = vunpack.c.l.b16 %v7173
    %v7880 = vunpack.c.h.b16 %v7173
    %v7881 = vunpack.c.l.b16 %v7174
    %v7882 = vunpack.c.h.b16 %v7174
    %v7883 = vunpack.c.l.b16 %v7175
    %v7884 = vunpack.c.h.b16 %v7175
    %v7885 = vunpack.c.l.b16 %v7176
    %v7886 = vunpack.c.h.b16 %v7176
    %v7887 = vunpack.c.l.b16 %v7177
    %v7888 = vunpack.c.h.b16 %v7177
    %v7889 = vunpack.c.l.b16 %v7178
    %v7890 = vunpack.c.h.b16 %v7178
    %v7891 = vunpack.c.l.b16 %v7179
    %v7892 = vunpack.c.h.b16 %v7179
    %v7893 = vunpack.c.l.b16 %v7180
    %v7894 = vunpack.c.h.b16 %v7180
    %v7895 = vunpack.c.l.b16 %v7181
    %v7896 = vunpack.c.h.b16 %v7181
    %v7897 = vunpack.c.l.b16 %v7182
    %v7898 = vunpack.c.h.b16 %v7182
    %v7899 = vunpack.c.l.b16 %v7183
    %v7900 = vunpack.c.h.b16 %v7183
    %v7901 = vunpack.c.l.b16 %v7184
    %v7902 = vunpack.c.h.b16 %v7184
    %v7903 = vunpack.c.l.b16 %v7185
    %v7904 = vunpack.c.h.b16 %v7185
    %v7905 = vunpack.c.l.b16 %v7186
    %v7906 = vunpack.c.h.b16 %v7186
    %v7907 = vunpack.c.l.b16 %v7187
    %v7908 = vunpack.c.h.b16 %v7187
    %v7909 = vunpack.c.l.b16 %v7188
    %v7910 = vunpack.c.h.b16 %v7188
    %v7911 = vunpack.c.l.b16 %v7189
    %v7912 = vunpack.c.h.b16 %v7189
    %v7913 = vunpack.c.l.b16 %v7190
    %v7914 = vunpack.c.h.b16 %v7190
    %v7915 = vunpack.c.l.b16 %v7191
    %v7916 = vunpack.c.h.b16 %v7191
    %v7917 = vunpack.c.l.b16 %v7192
    %v7918 = vunpack.c.h.b16 %v7192
    %v7919 = vunpack.c.l.b16 %v7193
    %v7920 = vunpack.c.h.b16 %v7193
    %v7921 = vunpack.c.l.b16 %v7194
    %v7922 = vunpack.c.h.b16 %v7194
    %v7923 = vunpack.c.l.b16 %v7195
    %v7924 = vunpack.c.h.b16 %v7195
    %v7925 = vunpack.c.l.b16 %v7196
    %v7926 = vunpack.c.h.b16 %v7196
    %v7927 = vunpack.c.l.b16 %v7197
    %v7928 = vunpack.c.h.b16 %v7197
    %v7929 = vunpack.c.l.b16 %v7198
    %v7930 = vunpack.c.h.b16 %v7198
    %v7931 = vunpack.c.l.b16 %v7199
    %v7932 = vunpack.c.h.b16 %v7199
    %v7933 = vunpack.c.l.b16 %v7200
    %v7934 = vunpack.c.h.b16 %v7200
    %v7935 = vunpack.c.l.b16 %v7201
    %v7936 = vunpack.c.h.b16 %v7201
    %v7937 = vunpack.c.l.b16 %v7202
    %v7938 = vunpack.c.h.b16 %v7202
    %v7939 = vunpack.c.l.b16 %v7203
    %v7940 = vunpack.c.h.b16 %v7203
    %v7941 = vunpack.c.l.b16 %v7204
    %v7942 = vunpack.c.h.b16 %v7204
    %v7943 = vunpack.c.l.b16 %v7205
    %v7944 = vunpack.c.h.b16 %v7205
    %v7945 = vunpack.c.l.b16 %v7206
    %v7946 = vunpack.c.h.b16 %v7206
    %v7947 = vunpack.c.l.b16 %v7207
    %v7948 = vunpack.c.h.b16 %v7207
    %v7949 = vunpack.c.l.b16 %v7208
    %v7950 = vunpack.c.h.b16 %v7208
    %v7951 = vunpack.c.l.b16 %v7209
    %v7952 = vunpack.c.h.b16 %v7209
    %v7953 = vunpack.c.l.b16 %v7210
    %v7954 = vunpack.c.h.b16 %v7210
    %v7955 = vunpack.c.l.b16 %v7211
    %v7956 = vunpack.c.h.b16 %v7211
    %v7957 = vunpack.c.l.b16 %v7212
    %v7958 = vunpack.c.h.b16 %v7212
    %v7959 = vunpack.c.l.b16 %v7213
    %v7960 = vunpack.c.h.b16 %v7213
    %v7961 = vunpack.c.l.b16 %v7214
    %v7962 = vunpack.c.h.b16 %v7214
    %v7963 = vunpack.c.l.b16 %v7215
    %v7964 = vunpack.c.h.b16 %v7215
    %v7965 = vunpack.c.l.b16 %v7216
    %v7966 = vunpack.c.h.b16 %v7216
    %v7967 = vunpack.c.l.b16 %v7217
    %v7968 = vunpack.c.h.b16 %v7217
    %v7969 = vunpack.c.l.b16 %v7218
    %v7970 = vunpack.c.h.b16 %v7218
    %v7971 = vunpack.c.l.b16 %v7219
    %v7972 = vunpack.c.h.b16 %v7219
    %v7973 = vunpack.c.l.b16 %v7220
    %v7974 = vunpack.c.h.b16 %v7220
    %v7975 = vunpack.c.l.b16 %v7221
    %v7976 = vunpack.c.h.b16 %v7221
    %v7977 = vunpack.c.l.b16 %v7222
    %v7978 = vunpack.c.h.b16 %v7222
    %v7979 = vunpack.c.l.b16 %v7223
    %v7980 = vunpack.c.h.b16 %v7223
    %v7981 = vunpack.c.l.b16 %v7224
    %v7982 = vunpack.c.h.b16 %v7224
    %v7983 = vunpack.c.l.b16 %v7225
    %v7984 = vunpack.c.h.b16 %v7225
    %v7985 = vunpack.c.l.b16 %v7226
    %v7986 = vunpack.c.h.b16 %v7226
    %v7987 = vunpack.c.l.b16 %v7227
    %v7988 = vunpack.c.h.b16 %v7227
    %v7989 = vunpack.c.l.b16 %v7228
    %v7990 = vunpack.c.h.b16 %v7228
    %v7991 = vunpack.c.l.b16 %v7229
    %v7992 = vunpack.c.h.b16 %v7229
    %v7993 = vunpack.c.l.b16 %v7230
    %v7994 = vunpack.c.h.b16 %v7230
    %v7995 = vunpack.c.l.b16 %v7231
    %v7996 = vunpack.c.h.b16 %v7231
    %v7997 = vunpack.c.l.b16 %v7232
    %v7998 = vunpack.c.h.b16 %v7232
    %v7999 = vunpack.c.l.b16 %v7233
    %v8000 = vunpack.c.h.b16 %v7233
    %v8001 = vunpack.c.l.b16 %v7234
    %v8002 = vunpack.c.h.b16 %v7234
    %v8003 = vpack.c.b16 %v7499, %v7491
    %v8004 = vpack.c.b16 %v7500, %v7492
    %v8005 = vpack.c.b16 %v7501, %v7493
    %v8006 = vpack.c.b16 %v7502, %v7494
    %v8007 = vpack.c.b16 %v7503, %v7495
    %v8008 = vpack.c.b16 %v7504, %v7496
    %v8009 = vpack.c.b16 %v7505, %v7497
    %v8010 = vpack.c.b16 %v7506, %v7498
    %v8011 = vpack.c.b16 %v7515, %v7507
    %v8012 = vpack.c.b16 %v7516, %v7508
    %v8013 = vpack.c.b16 %v7517, %v7509
    %v8014 = vpack.c.b16 %v7518, %v7510
    %v8015 = vpack.c.b16 %v7519, %v7511
    %v8016 = vpack.c.b16 %v7520, %v7512
    %v8017 = vpack.c.b16 %v7521, %v7513
    %v8018 = vpack.c.b16 %v7522, %v7514
    %v8019 = vpack.c.b16 %v7531, %v7523
    %v8020 = vpack.c.b16 %v7532, %v7524
    %v8021 = vpack.c.b16 %v7533, %v7525
    %v8022 = vpack.c.b16 %v7534, %v7526
    %v8023 = vpack.c.b16 %v7535, %v7527
    %v8024 = vpack.c.b16 %v7536, %v7528
    %v8025 = vpack.c.b16 %v7537, %v7529
    %v8026 = vpack.c.b16 %v7538, %v7530
    %v8027 = vpack.c.b16 %v7547, %v7539
    %v8028 = vpack.c.b16 %v7548, %v7540
    %v8029 = vpack.c.b16 %v7549, %v7541
    %v8030 = vpack.c.b16 %v7550, %v7542
    %v8031 = vpack.c.b16 %v7551, %v7543
    %v8032 = vpack.c.b16 %v7552, %v7544
    %v8033 = vpack.c.b16 %v7553, %v7545
    %v8034 = vpack.c.b16 %v7554, %v7546
    %v8035 = vpack.c.b16 %v7563, %v7555
    %v8036 = vpack.c.b16 %v7564, %v7556
    %v8037 = vpack.c.b16 %v7565, %v7557
    %v8038 = vpack.c.b16 %v7566, %v7558
    %v8039 = vpack.c.b16 %v7567, %v7559
    %v8040 = vpack.c.b16 %v7568, %v7560
    %v8041 = vpack.c.b16 %v7569, %v7561
    %v8042 = vpack.c.b16 %v7570, %v7562
    %v8043 = vpack.c.b16 %v7579, %v7571
    %v8044 = vpack.c.b16 %v7580, %v7572
    %v8045 = vpack.c.b16 %v7581, %v7573
    %v8046 = vpack.c.b16 %v7582, %v7574
    %v8047 = vpack.c.b16 %v7583, %v7575
    %v8048 = vpack.c.b16 %v7584, %v7576
    %v8049 = vpack.c.b16 %v7585, %v7577
    %v8050 = vpack.c.b16 %v7586, %v7578
    %v8051 = vpack.c.b16 %v7595, %v7587
    %v8052 = vpack.c.b16 %v7596, %v7588
    %v8053 = vpack.c.b16 %v7597, %v7589
    %v8054 = vpack.c.b16 %v7598, %v7590
    %v8055 = vpack.c.b16 %v7599, %v7591
    %v8056 = vpack.c.b16 %v7600, %v7592
    %v8057 = vpack.c.b16 %v7601, %v7593
    %v8058 = vpack.c.b16 %v7602, %v7594
    %v8059 = vpack.c.b16 %v7611, %v7603
    %v8060 = vpack.c.b16 %v7612, %v7604
    %v8061 = vpack.c.b16 %v7613, %v7605
    %v8062 = vpack.c.b16 %v7614, %v7606
    %v8063 = vpack.c.b16 %v7615, %v7607
    %v8064 = vpack.c.b16 %v7616, %v7608
    %v8065 = vpack.c.b16 %v7617, %v7609
    %v8066 = vpack.c.b16 %v7618, %v7610
    %v8067 = vpack.c.b16 %v7627, %v7619
    %v8068 = vpack.c.b16 %v7628, %v7620
    %v8069 = vpack.c.b16 %v7629, %v7621
    %v8070 = vpack.c.b16 %v7630, %v7622
    %v8071 = vpack.c.b16 %v7631, %v7623
    %v8072 = vpack.c.b16 %v7632, %v7624
    %v8073 = vpack.c.b16 %v7633, %v7625
    %v8074 = vpack.c.b16 %v7634, %v7626
    %v8075 = vpack.c.b16 %v7643, %v7635
    %v8076 = vpack.c.b16 %v7644, %v7636
    %v8077 = vpack.c.b16 %v7645, %v7637
    %v8078 = vpack.c.b16 %v7646, %v7638
    %v8079 = vpack.c.b16 %v7647, %v7639
    %v8080 = vpack.c.b16 %v7648, %v7640
    %v8081 = vpack.c.b16 %v7649, %v7641
    %v8082 = vpack.c.b16 %v7650, %v7642
    %v8083 = vpack.c.b16 %v7659, %v7651
    %v8084 = vpack.c.b16 %v7660, %v7652
    %v8085 = vpack.c.b16 %v7661, %v7653
    %v8086 = vpack.c.b16 %v7662, %v7654
    %v8087 = vpack.c.b16 %v7663, %v7655
    %v8088 = vpack.c.b16 %v7664, %v7656
    %v8089 = vpack.c.b16 %v7665, %v7657
    %v8090 = vpack.c.b16 %v7666, %v7658
    %v8091 = vpack.c.b16 %v7675, %v7667
    %v8092 = vpack.c.b16 %v7676, %v7668
    %v8093 = vpack.c.b16 %v7677, %v7669
    %v8094 = vpack.c.b16 %v7678, %v7670
    %v8095 = vpack.c.b16 %v7679, %v7671
    %v8096 = vpack.c.b16 %v7680, %v7672
    %v8097 = vpack.c.b16 %v7681, %v7673
    %v8098 = vpack.c.b16 %v7682, %v7674
    %v8099 = vpack.c.b16 %v7691, %v7683
    %v8100 = vpack.c.b16 %v7692, %v7684
    %v8101 = vpack.c.b16 %v7693, %v7685
    %v8102 = vpack.c.b16 %v7694, %v7686
    %v8103 = vpack.c.b16 %v7695, %v7687
    %v8104 = vpack.c.b16 %v7696, %v7688
    %v8105 = vpack.c.b16 %v7697, %v7689
    %v8106 = vpack.c.b16 %v7698, %v7690
    %v8107 = vpack.c.b16 %v7707, %v7699
    %v8108 = vpack.c.b16 %v7708, %v7700
    %v8109 = vpack.c.b16 %v7709, %v7701
    %v8110 = vpack.c.b16 %v7710, %v7702
    %v8111 = vpack.c.b16 %v7711, %v7703
    %v8112 = vpack.c.b16 %v7712, %v7704
    %v8113 = vpack.c.b16 %v7713, %v7705
    %v8114 = vpack.c.b16 %v7714, %v7706
    %v8115 = vpack.c.b16 %v7723, %v7715
    %v8116 = vpack.c.b16 %v7724, %v7716
    %v8117 = vpack.c.b16 %v7725, %v7717
    %v8118 = vpack.c.b16 %v7726, %v7718
    %v8119 = vpack.c.b16 %v7727, %v7719
    %v8120 = vpack.c.b16 %v7728, %v7720
    %v8121 = vpack.c.b16 %v7729, %v7721
    %v8122 = vpack.c.b16 %v7730, %v7722
    %v8123 = vpack.c.b16 %v7739, %v7731
    %v8124 = vpack.c.b16 %v7740, %v7732
    %v8125 = vpack.c.b16 %v7741, %v7733
    %v8126 = vpack.c.b16 %v7742, %v7734
    %v8127 = vpack.c.b16 %v7743, %v7735
    %v8128 = vpack.c.b16 %v7744, %v7736
    %v8129 = vpack.c.b16 %v7745, %v7737
    %v8130 = vpack.c.b16 %v7746, %v7738
    %v8131 = vpack.c.b16 %v7755, %v7747
    %v8132 = vpack.c.b16 %v7756, %v7748
    %v8133 = vpack.c.b16 %v7757, %v7749
    %v8134 = vpack.c.b16 %v7758, %v7750
    %v8135 = vpack.c.b16 %v7759, %v7751
    %v8136 = vpack.c.b16 %v7760, %v7752
    %v8137 = vpack.c.b16 %v7761, %v7753
    %v8138 = vpack.c.b16 %v7762, %v7754
    %v8139 = vpack.c.b16 %v7771, %v7763
    %v8140 = vpack.c.b16 %v7772, %v7764
    %v8141 = vpack.c.b16 %v7773, %v7765
    %v8142 = vpack.c.b16 %v7774, %v7766
    %v8143 = vpack.c.b16 %v7775, %v7767
    %v8144 = vpack.c.b16 %v7776, %v7768
    %v8145 = vpack.c.b16 %v7777, %v7769
    %v8146 = vpack.c.b16 %v7778, %v7770
    %v8147 = vpack.c.b16 %v7787, %v7779
    %v8148 = vpack.c.b16 %v7788, %v7780
    %v8149 = vpack.c.b16 %v7789, %v7781
    %v8150 = vpack.c.b16 %v7790, %v7782
    %v8151 = vpack.c.b16 %v7791, %v7783
    %v8152 = vpack.c.b16 %v7792, %v7784
    %v8153 = vpack.c.b16 %v7793, %v7785
    %v8154 = vpack.c.b16 %v7794, %v7786
    %v8155 = vpack.c.b16 %v7803, %v7795
    %v8156 = vpack.c.b16 %v7804, %v7796
    %v8157 = vpack.c.b16 %v7805, %v7797
    %v8158 = vpack.c.b16 %v7806, %v7798
    %v8159 = vpack.c.b16 %v7807, %v7799
    %v8160 = vpack.c.b16 %v7808, %v7800
    %v8161 = vpack.c.b16 %v7809, %v7801
    %v8162 = vpack.c.b16 %v7810, %v7802
    %v8163 = vpack.c.b16 %v7819, %v7811
    %v8164 = vpack.c.b16 %v7820, %v7812
    %v8165 = vpack.c.b16 %v7821, %v7813
    %v8166 = vpack.c.b16 %v7822, %v7814
    %v8167 = vpack.c.b16 %v7823, %v7815
    %v8168 = vpack.c.b16 %v7824, %v7816
    %v8169 = vpack.c.b16 %v7825, %v7817
    %v8170 = vpack.c.b16 %v7826, %v7818
    %v8171 = vpack.c.b16 %v7835, %v7827
    %v8172 = vpack.c.b16 %v7836, %v7828
    %v8173 = vpack.c.b16 %v7837, %v7829
    %v8174 = vpack.c.b16 %v7838, %v7830
    %v8175 = vpack.c.b16 %v7839, %v7831
    %v8176 = vpack.c.b16 %v7840, %v7832
    %v8177 = vpack.c.b16 %v7841, %v7833
    %v8178 = vpack.c.b16 %v7842, %v7834
    %v8179 = vpack.c.b16 %v7851, %v7843
    %v8180 = vpack.c.b16 %v7852, %v7844
    %v8181 = vpack.c.b16 %v7853, %v7845
    %v8182 = vpack.c.b16 %v7854, %v7846
    %v8183 = vpack.c.b16 %v7855, %v7847
    %v8184 = vpack.c.b16 %v7856, %v7848
    %v8185 = vpack.c.b16 %v7857, %v7849
    %v8186 = vpack.c.b16 %v7858, %v7850
    %v8187 = vpack.c.b16 %v7867, %v7859
    %v8188 = vpack.c.b16 %v7868, %v7860
    %v8189 = vpack.c.b16 %v7869, %v7861
    %v8190 = vpack.c.b16 %v7870, %v7862
    %v8191 = vpack.c.b16 %v7871, %v7863
    %v8192 = vpack.c.b16 %v7872, %v7864
    %v8193 = vpack.c.b16 %v7873, %v7865
    %v8194 = vpack.c.b16 %v7874, %v7866
    %v8195 = vpack.c.b16 %v7883, %v7875
    %v8196 = vpack.c.b16 %v7884, %v7876
    %v8197 = vpack.c.b16 %v7885, %v7877
    %v8198 = vpack.c.b16 %v7886, %v7878
    %v8199 = vpack.c.b16 %v7887, %v7879
    %v8200 = vpack.c.b16 %v7888, %v7880
    %v8201 = vpack.c.b16 %v7889, %v7881
    %v8202 = vpack.c.b16 %v7890, %v7882
    %v8203 = vpack.c.b16 %v7899, %v7891
    %v8204 = vpack.c.b16 %v7900, %v7892
    %v8205 = vpack.c.b16 %v7901, %v7893
    %v8206 = vpack.c.b16 %v7902, %v7894
    %v8207 = vpack.c.b16 %v7903, %v7895
    %v8208 = vpack.c.b16 %v7904, %v7896
    %v8209 = vpack.c.b16 %v7905, %v7897
    %v8210 = vpack.c.b16 %v7906, %v7898
    %v8211 = vpack.c.b16 %v7915, %v7907
    %v8212 = vpack.c.b16 %v7916, %v7908
    %v8213 = vpack.c.b16 %v7917, %v7909
    %v8214 = vpack.c.b16 %v7918, %v7910
    %v8215 = vpack.c.b16 %v7919, %v7911
    %v8216 = vpack.c.b16 %v7920, %v7912
    %v8217 = vpack.c.b16 %v7921, %v7913
    %v8218 = vpack.c.b16 %v7922, %v7914
    %v8219 = vpack.c.b16 %v7931, %v7923
    %v8220 = vpack.c.b16 %v7932, %v7924
    %v8221 = vpack.c.b16 %v7933, %v7925
    %v8222 = vpack.c.b16 %v7934, %v7926
    %v8223 = vpack.c.b16 %v7935, %v7927
    %v8224 = vpack.c.b16 %v7936, %v7928
    %v8225 = vpack.c.b16 %v7937, %v7929
    %v8226 = vpack.c.b16 %v7938, %v7930
    %v8227 = vpack.c.b16 %v7947, %v7939
    %v8228 = vpack.c.b16 %v7948, %v7940
    %v8229 = vpack.c.b16 %v7949, %v7941
    %v8230 = vpack.c.b16 %v7950, %v7942
    %v8231 = vpack.c.b16 %v7951, %v7943
    %v8232 = vpack.c.b16 %v7952, %v7944
    %v8233 = vpack.c.b16 %v7953, %v7945
    %v8234 = vpack.c.b16 %v7954, %v7946
    %v8235 = vpack.c.b16 %v7963, %v7955
    %v8236 = vpack.c.b16 %v7964, %v7956
    %v8237 = vpack.c.b16 %v7965, %v7957
    %v8238 = vpack.c.b16 %v7966, %v7958
    %v8239 = vpack.c.b16 %v7967, %v7959
    %v8240 = vpack.c.b16 %v7968, %v7960
    %v8241 = vpack.c.b16 %v7969, %v7961
    %v8242 = vpack.c.b16 %v7970, %v7962
    %v8243 = vpack.c.b16 %v7979, %v7971
    %v8244 = vpack.c.b16 %v7980, %v7972
    %v8245 = vpack.c.b16 %v7981, %v7973
    %v8246 = vpack.c.b16 %v7982, %v7974
    %v8247 = vpack.c.b16 %v7983, %v7975
    %v8248 = vpack.c.b16 %v7984, %v7976
    %v8249 = vpack.c.b16 %v7985, %v7977
    %v8250 = vpack.c.b16 %v7986, %v7978
    %v8251 = vpack.c.b16 %v7995, %v7987
    %v8252 = vpack.c.b16 %v7996, %v7988
    %v8253 = vpack.c.b16 %v7997, %v7989
    %v8254 = vpack.c.b16 %v7998, %v7990
    %v8255 = vpack.c.b16 %v7999, %v7991
    %v8256 = vpack.c.b16 %v8000, %v7992
    %v8257 = vpack.c.b16 %v8001, %v7993
    %v8258 = vpack.c.b16 %v8002, %v7994
    %8515 = vmatprep.subr.bf16.mxu0 %v8060
    %8516 = vmatpush1.bf16.msra.mxu0 %v8059
    %8517 = vmatprep.subr.bf16.mxu0 %v8052
    %8518 = vmatpush1.bf16.msra.mxu0 %v8051
    %8519 = vmatprep.subr.bf16.mxu0 %v8044
    %8520 = vmatpush1.bf16.msra.mxu0 %v8043
    %8521 = vmatprep.subr.bf16.mxu0 %v8036
    %8522 = vmatpush1.bf16.msra.mxu0 %v8035
    %8523 = vmatprep.subr.bf16.mxu0 %v8028
    %8524 = vmatpush1.bf16.msra.mxu0 %v8027
    %8525 = vmatprep.subr.bf16.mxu0 %v8020
    %8526 = vmatpush1.bf16.msra.mxu0 %v8019
    %8527 = vmatprep.subr.bf16.mxu0 %v8012
    %8528 = vmatpush1.bf16.msra.mxu0 %v8011
    %8529 = vmatprep.subr.bf16.mxu0 %v8004
    %8530 = vmatpush1.bf16.msra.mxu0 %v8003
    %8531 = vmatprep.subr.bf16.mxu0 %v8124
    %8532 = vmatpush2.bf16.msra.mxu0 %v8123
    %8533 = vmatprep.subr.bf16.mxu0 %v8116
    %8534 = vmatpush2.bf16.msra.mxu0 %v8115
    %8535 = vmatprep.subr.bf16.mxu0 %v8108
    %8536 = vmatpush2.bf16.msra.mxu0 %v8107
    %8537 = vmatprep.subr.bf16.mxu0 %v8100
    %8538 = vmatpush2.bf16.msra.mxu0 %v8099
    %8539 = vmatprep.subr.bf16.mxu0 %v8092
    %8540 = vmatpush2.bf16.msra.mxu0 %v8091
    %8541 = vmatprep.subr.bf16.mxu0 %v8084
    %8542 = vmatpush2.bf16.msra.mxu0 %v8083
    %8543 = vmatprep.subr.bf16.mxu0 %v8076
    %8544 = vmatpush2.bf16.msra.mxu0 %v8075
    %8545 = vmatprep.subr.bf16.mxu0 %v8068
    %8546 = vmatpush2.bf16.msra.mxu0 %v8067
    %8547 = vmatprep.mubr.bf16.mxu0 %v6976
    %8548 = vmatmul.mubr.bf16.gmra.mxu0 %v6975
    %v8549 = vpop.f32.mrf.mxu0
    %v8550 = vadd.f32 0.0, %v8549
    %v8551 = vpop.f32.mrf.mxu0
    %v8552 = vadd.f32 0.0, %v8551
    %v8553 = vpop.f32.mrf.mxu0
    %v8554 = vadd.f32 0.0, %v8553
    %v8555 = vpop.f32.mrf.mxu0
    %v8556 = vadd.f32 0.0, %v8555
    %8557 = vdwg.mxu0
    %8558 = vmatprep.subr.bf16.mxu0 %v8188
    %8559 = vmatpush1.bf16.msra.mxu0 %v8187
    %8560 = vmatprep.subr.bf16.mxu0 %v8180
    %8561 = vmatpush1.bf16.msra.mxu0 %v8179
    %8562 = vmatprep.subr.bf16.mxu0 %v8172
    %8563 = vmatpush1.bf16.msra.mxu0 %v8171
    %8564 = vmatprep.subr.bf16.mxu0 %v8164
    %8565 = vmatpush1.bf16.msra.mxu0 %v8163
    %8566 = vmatprep.subr.bf16.mxu0 %v8156
    %8567 = vmatpush1.bf16.msra.mxu0 %v8155
    %8568 = vmatprep.subr.bf16.mxu0 %v8148
    %8569 = vmatpush1.bf16.msra.mxu0 %v8147
    %8570 = vmatprep.subr.bf16.mxu0 %v8140
    %8571 = vmatpush1.bf16.msra.mxu0 %v8139
    %8572 = vmatprep.subr.bf16.mxu0 %v8132
    %8573 = vmatpush1.bf16.msra.mxu0 %v8131
    %8574 = vmatprep.subr.bf16.mxu0 %v8252
    %8575 = vmatpush2.bf16.msra.mxu0 %v8251
    %8576 = vmatprep.subr.bf16.mxu0 %v8244
    %8577 = vmatpush2.bf16.msra.mxu0 %v8243
    %8578 = vmatprep.subr.bf16.mxu0 %v8236
    %8579 = vmatpush2.bf16.msra.mxu0 %v8235
    %8580 = vmatprep.subr.bf16.mxu0 %v8228
    %8581 = vmatpush2.bf16.msra.mxu0 %v8227
    %8582 = vmatprep.subr.bf16.mxu0 %v8220
    %8583 = vmatpush2.bf16.msra.mxu0 %v8219
    %8584 = vmatprep.subr.bf16.mxu0 %v8212
    %8585 = vmatpush2.bf16.msra.mxu0 %v8211
    %8586 = vmatprep.subr.bf16.mxu0 %v8204
    %8587 = vmatpush2.bf16.msra.mxu0 %v8203
    %8588 = vmatprep.subr.bf16.mxu0 %v8196
    %8589 = vmatpush2.bf16.msra.mxu0 %v8195
    %8590 = vmatprep.mubr.bf16.mxu0 %v6978
    %8591 = vmatmul.mubr.bf16.gmra.mxu0 %v6977
    %v8592 = vpop.f32.mrf.mxu0
    %v8593 = vadd.f32 %v8550, %v8592
    %v8594 = vpop.f32.mrf.mxu0
    %v8595 = vadd.f32 %v8552, %v8594
    %v8596 = vpop.f32.mrf.mxu0
    %v8597 = vadd.f32 %v8554, %v8596
    %v8598 = vpop.f32.mrf.mxu0
    %v8599 = vadd.f32 %v8556, %v8598
    %8600 = vdwg.mxu0
    %8601 = vmatprep.subr.bf16.mxu0 %v8062
    %8602 = vmatpush1.bf16.msra.mxu0 %v8061
    %8603 = vmatprep.subr.bf16.mxu0 %v8054
    %8604 = vmatpush1.bf16.msra.mxu0 %v8053
    %8605 = vmatprep.subr.bf16.mxu0 %v8046
    %8606 = vmatpush1.bf16.msra.mxu0 %v8045
    %8607 = vmatprep.subr.bf16.mxu0 %v8038
    %8608 = vmatpush1.bf16.msra.mxu0 %v8037
    %8609 = vmatprep.subr.bf16.mxu0 %v8030
    %8610 = vmatpush1.bf16.msra.mxu0 %v8029
    %8611 = vmatprep.subr.bf16.mxu0 %v8022
    %8612 = vmatpush1.bf16.msra.mxu0 %v8021
    %8613 = vmatprep.subr.bf16.mxu0 %v8014
    %8614 = vmatpush1.bf16.msra.mxu0 %v8013
    %8615 = vmatprep.subr.bf16.mxu0 %v8006
    %8616 = vmatpush1.bf16.msra.mxu0 %v8005
    %8617 = vmatprep.subr.bf16.mxu0 %v8126
    %8618 = vmatpush2.bf16.msra.mxu0 %v8125
    %8619 = vmatprep.subr.bf16.mxu0 %v8118
    %8620 = vmatpush2.bf16.msra.mxu0 %v8117
    %8621 = vmatprep.subr.bf16.mxu0 %v8110
    %8622 = vmatpush2.bf16.msra.mxu0 %v8109
    %8623 = vmatprep.subr.bf16.mxu0 %v8102
    %8624 = vmatpush2.bf16.msra.mxu0 %v8101
    %8625 = vmatprep.subr.bf16.mxu0 %v8094
    %8626 = vmatpush2.bf16.msra.mxu0 %v8093
    %8627 = vmatprep.subr.bf16.mxu0 %v8086
    %8628 = vmatpush2.bf16.msra.mxu0 %v8085
    %8629 = vmatprep.subr.bf16.mxu0 %v8078
    %8630 = vmatpush2.bf16.msra.mxu0 %v8077
    %8631 = vmatprep.subr.bf16.mxu0 %v8070
    %8632 = vmatpush2.bf16.msra.mxu0 %v8069
    %8633 = vmatprep.mubr.bf16.mxu0 %v6976
    %8634 = vmatmul.mubr.bf16.gmra.mxu0 %v6975
    %v8635 = vpop.f32.mrf.mxu0
    %v8636 = vadd.f32 0.0, %v8635
    %v8637 = vpop.f32.mrf.mxu0
    %v8638 = vadd.f32 0.0, %v8637
    %v8639 = vpop.f32.mrf.mxu0
    %v8640 = vadd.f32 0.0, %v8639
    %v8641 = vpop.f32.mrf.mxu0
    %v8642 = vadd.f32 0.0, %v8641
    %8643 = vdwg.mxu0
    %8644 = vmatprep.subr.bf16.mxu0 %v8190
    %8645 = vmatpush1.bf16.msra.mxu0 %v8189
    %8646 = vmatprep.subr.bf16.mxu0 %v8182
    %8647 = vmatpush1.bf16.msra.mxu0 %v8181
    %8648 = vmatprep.subr.bf16.mxu0 %v8174
    %8649 = vmatpush1.bf16.msra.mxu0 %v8173
    %8650 = vmatprep.subr.bf16.mxu0 %v8166
    %8651 = vmatpush1.bf16.msra.mxu0 %v8165
    %8652 = vmatprep.subr.bf16.mxu0 %v8158
    %8653 = vmatpush1.bf16.msra.mxu0 %v8157
    %8654 = vmatprep.subr.bf16.mxu0 %v8150
    %8655 = vmatpush1.bf16.msra.mxu0 %v8149
    %8656 = vmatprep.subr.bf16.mxu0 %v8142
    %8657 = vmatpush1.bf16.msra.mxu0 %v8141
    %8658 = vmatprep.subr.bf16.mxu0 %v8134
    %8659 = vmatpush1.bf16.msra.mxu0 %v8133
    %8660 = vmatprep.subr.bf16.mxu0 %v8254
    %8661 = vmatpush2.bf16.msra.mxu0 %v8253
    %8662 = vmatprep.subr.bf16.mxu0 %v8246
    %8663 = vmatpush2.bf16.msra.mxu0 %v8245
    %8664 = vmatprep.subr.bf16.mxu0 %v8238
    %8665 = vmatpush2.bf16.msra.mxu0 %v8237
    %8666 = vmatprep.subr.bf16.mxu0 %v8230
    %8667 = vmatpush2.bf16.msra.mxu0 %v8229
    %8668 = vmatprep.subr.bf16.mxu0 %v8222
    %8669 = vmatpush2.bf16.msra.mxu0 %v8221
    %8670 = vmatprep.subr.bf16.mxu0 %v8214
    %8671 = vmatpush2.bf16.msra.mxu0 %v8213
    %8672 = vmatprep.subr.bf16.mxu0 %v8206
    %8673 = vmatpush2.bf16.msra.mxu0 %v8205
    %8674 = vmatprep.subr.bf16.mxu0 %v8198
    %8675 = vmatpush2.bf16.msra.mxu0 %v8197
    %8676 = vmatprep.mubr.bf16.mxu0 %v6978
    %8677 = vmatmul.mubr.bf16.gmra.mxu0 %v6977
    %v8678 = vpop.f32.mrf.mxu0
    %v8679 = vadd.f32 %v8636, %v8678
    %v8680 = vpop.f32.mrf.mxu0
    %v8681 = vadd.f32 %v8638, %v8680
    %v8682 = vpop.f32.mrf.mxu0
    %v8683 = vadd.f32 %v8640, %v8682
    %v8684 = vpop.f32.mrf.mxu0
    %v8685 = vadd.f32 %v8642, %v8684
    %8686 = vdwg.mxu0
    %8687 = vmatprep.subr.bf16.mxu0 %v8064
    %8688 = vmatpush1.bf16.msra.mxu0 %v8063
    %8689 = vmatprep.subr.bf16.mxu0 %v8056
    %8690 = vmatpush1.bf16.msra.mxu0 %v8055
    %8691 = vmatprep.subr.bf16.mxu0 %v8048
    %8692 = vmatpush1.bf16.msra.mxu0 %v8047
    %8693 = vmatprep.subr.bf16.mxu0 %v8040
    %8694 = vmatpush1.bf16.msra.mxu0 %v8039
    %8695 = vmatprep.subr.bf16.mxu0 %v8032
    %8696 = vmatpush1.bf16.msra.mxu0 %v8031
    %8697 = vmatprep.subr.bf16.mxu0 %v8024
    %8698 = vmatpush1.bf16.msra.mxu0 %v8023
    %8699 = vmatprep.subr.bf16.mxu0 %v8016
    %8700 = vmatpush1.bf16.msra.mxu0 %v8015
    %8701 = vmatprep.subr.bf16.mxu0 %v8008
    %8702 = vmatpush1.bf16.msra.mxu0 %v8007
    %8703 = vmatprep.subr.bf16.mxu0 %v8128
    %8704 = vmatpush2.bf16.msra.mxu0 %v8127
    %8705 = vmatprep.subr.bf16.mxu0 %v8120
    %8706 = vmatpush2.bf16.msra.mxu0 %v8119
    %8707 = vmatprep.subr.bf16.mxu0 %v8112
    %8708 = vmatpush2.bf16.msra.mxu0 %v8111
    %8709 = vmatprep.subr.bf16.mxu0 %v8104
    %8710 = vmatpush2.bf16.msra.mxu0 %v8103
    %8711 = vmatprep.subr.bf16.mxu0 %v8096
    %8712 = vmatpush2.bf16.msra.mxu0 %v8095
    %8713 = vmatprep.subr.bf16.mxu0 %v8088
    %8714 = vmatpush2.bf16.msra.mxu0 %v8087
    %8715 = vmatprep.subr.bf16.mxu0 %v8080
    %8716 = vmatpush2.bf16.msra.mxu0 %v8079
    %8717 = vmatprep.subr.bf16.mxu0 %v8072
    %8718 = vmatpush2.bf16.msra.mxu0 %v8071
    %8719 = vmatprep.mubr.bf16.mxu0 %v6976
    %8720 = vmatmul.mubr.bf16.gmra.mxu0 %v6975
    %v8721 = vpop.f32.mrf.mxu0
    %v8722 = vadd.f32 0.0, %v8721
    %v8723 = vpop.f32.mrf.mxu0
    %v8724 = vadd.f32 0.0, %v8723
    %v8725 = vpop.f32.mrf.mxu0
    %v8726 = vadd.f32 0.0, %v8725
    %v8727 = vpop.f32.mrf.mxu0
    %v8728 = vadd.f32 0.0, %v8727
    %8729 = vdwg.mxu0
    %8730 = vmatprep.subr.bf16.mxu0 %v8192
    %8731 = vmatpush1.bf16.msra.mxu0 %v8191
    %8732 = vmatprep.subr.bf16.mxu0 %v8184
    %8733 = vmatpush1.bf16.msra.mxu0 %v8183
    %8734 = vmatprep.subr.bf16.mxu0 %v8176
    %8735 = vmatpush1.bf16.msra.mxu0 %v8175
    %8736 = vmatprep.subr.bf16.mxu0 %v8168
    %8737 = vmatpush1.bf16.msra.mxu0 %v8167
    %8738 = vmatprep.subr.bf16.mxu0 %v8160
    %8739 = vmatpush1.bf16.msra.mxu0 %v8159
    %8740 = vmatprep.subr.bf16.mxu0 %v8152
    %8741 = vmatpush1.bf16.msra.mxu0 %v8151
    %8742 = vmatprep.subr.bf16.mxu0 %v8144
    %8743 = vmatpush1.bf16.msra.mxu0 %v8143
    %8744 = vmatprep.subr.bf16.mxu0 %v8136
    %8745 = vmatpush1.bf16.msra.mxu0 %v8135
    %8746 = vmatprep.subr.bf16.mxu0 %v8256
    %8747 = vmatpush2.bf16.msra.mxu0 %v8255
    %8748 = vmatprep.subr.bf16.mxu0 %v8248
    %8749 = vmatpush2.bf16.msra.mxu0 %v8247
    %8750 = vmatprep.subr.bf16.mxu0 %v8240
    %8751 = vmatpush2.bf16.msra.mxu0 %v8239
    %8752 = vmatprep.subr.bf16.mxu0 %v8232
    %8753 = vmatpush2.bf16.msra.mxu0 %v8231
    %8754 = vmatprep.subr.bf16.mxu0 %v8224
    %8755 = vmatpush2.bf16.msra.mxu0 %v8223
    %8756 = vmatprep.subr.bf16.mxu0 %v8216
    %8757 = vmatpush2.bf16.msra.mxu0 %v8215
    %8758 = vmatprep.subr.bf16.mxu0 %v8208
    %8759 = vmatpush2.bf16.msra.mxu0 %v8207
    %8760 = vmatprep.subr.bf16.mxu0 %v8200
    %8761 = vmatpush2.bf16.msra.mxu0 %v8199
    %8762 = vmatprep.mubr.bf16.mxu0 %v6978
    %8763 = vmatmul.mubr.bf16.gmra.mxu0 %v6977
    %v8764 = vpop.f32.mrf.mxu0
    %v8765 = vadd.f32 %v8722, %v8764
    %v8766 = vpop.f32.mrf.mxu0
    %v8767 = vadd.f32 %v8724, %v8766
    %v8768 = vpop.f32.mrf.mxu0
    %v8769 = vadd.f32 %v8726, %v8768
    %v8770 = vpop.f32.mrf.mxu0
    %v8771 = vadd.f32 %v8728, %v8770
    %8772 = vdwg.mxu0
    %8773 = vmatprep.subr.bf16.mxu0 %v8066
    %8774 = vmatpush1.bf16.msra.mxu0 %v8065
    %8775 = vmatprep.subr.bf16.mxu0 %v8058
    %8776 = vmatpush1.bf16.msra.mxu0 %v8057
    %8777 = vmatprep.subr.bf16.mxu0 %v8050
    %8778 = vmatpush1.bf16.msra.mxu0 %v8049
    %8779 = vmatprep.subr.bf16.mxu0 %v8042
    %8780 = vmatpush1.bf16.msra.mxu0 %v8041
    %8781 = vmatprep.subr.bf16.mxu0 %v8034
    %8782 = vmatpush1.bf16.msra.mxu0 %v8033
    %8783 = vmatprep.subr.bf16.mxu0 %v8026
    %8784 = vmatpush1.bf16.msra.mxu0 %v8025
    %8785 = vmatprep.subr.bf16.mxu0 %v8018
    %8786 = vmatpush1.bf16.msra.mxu0 %v8017
    %8787 = vmatprep.subr.bf16.mxu0 %v8010
    %8788 = vmatpush1.bf16.msra.mxu0 %v8009
    %8789 = vmatprep.subr.bf16.mxu0 %v8130
    %8790 = vmatpush2.bf16.msra.mxu0 %v8129
    %8791 = vmatprep.subr.bf16.mxu0 %v8122
    %8792 = vmatpush2.bf16.msra.mxu0 %v8121
    %8793 = vmatprep.subr.bf16.mxu0 %v8114
    %8794 = vmatpush2.bf16.msra.mxu0 %v8113
    %8795 = vmatprep.subr.bf16.mxu0 %v8106
    %8796 = vmatpush2.bf16.msra.mxu0 %v8105
    %8797 = vmatprep.subr.bf16.mxu0 %v8098
    %8798 = vmatpush2.bf16.msra.mxu0 %v8097
    %8799 = vmatprep.subr.bf16.mxu0 %v8090
    %8800 = vmatpush2.bf16.msra.mxu0 %v8089
    %8801 = vmatprep.subr.bf16.mxu0 %v8082
    %8802 = vmatpush2.bf16.msra.mxu0 %v8081
    %8803 = vmatprep.subr.bf16.mxu0 %v8074
    %8804 = vmatpush2.bf16.msra.mxu0 %v8073
    %8805 = vmatprep.mubr.bf16.mxu0 %v6976
    %8806 = vmatmul.mubr.bf16.gmra.mxu0 %v6975
    %v8807 = vpop.f32.mrf.mxu0
    %v8808 = vadd.f32 0.0, %v8807
    %v8809 = vpop.f32.mrf.mxu0
    %v8810 = vadd.f32 0.0, %v8809
    %v8811 = vpop.f32.mrf.mxu0
    %v8812 = vadd.f32 0.0, %v8811
    %v8813 = vpop.f32.mrf.mxu0
    %v8814 = vadd.f32 0.0, %v8813
    %8815 = vdwg.mxu0
    %8816 = vmatprep.subr.bf16.mxu0 %v8194
    %8817 = vmatpush1.bf16.msra.mxu0 %v8193
    %8818 = vmatprep.subr.bf16.mxu0 %v8186
    %8819 = vmatpush1.bf16.msra.mxu0 %v8185
    %8820 = vmatprep.subr.bf16.mxu0 %v8178
    %8821 = vmatpush1.bf16.msra.mxu0 %v8177
    %8822 = vmatprep.subr.bf16.mxu0 %v8170
    %8823 = vmatpush1.bf16.msra.mxu0 %v8169
    %8824 = vmatprep.subr.bf16.mxu0 %v8162
    %8825 = vmatpush1.bf16.msra.mxu0 %v8161
    %8826 = vmatprep.subr.bf16.mxu0 %v8154
    %8827 = vmatpush1.bf16.msra.mxu0 %v8153
    %8828 = vmatprep.subr.bf16.mxu0 %v8146
    %8829 = vmatpush1.bf16.msra.mxu0 %v8145
    %8830 = vmatprep.subr.bf16.mxu0 %v8138
    %8831 = vmatpush1.bf16.msra.mxu0 %v8137
    %8832 = vmatprep.subr.bf16.mxu0 %v8258
    %8833 = vmatpush2.bf16.msra.mxu0 %v8257
    %8834 = vmatprep.subr.bf16.mxu0 %v8250
    %8835 = vmatpush2.bf16.msra.mxu0 %v8249
    %8836 = vmatprep.subr.bf16.mxu0 %v8242
    %8837 = vmatpush2.bf16.msra.mxu0 %v8241
    %8838 = vmatprep.subr.bf16.mxu0 %v8234
    %8839 = vmatpush2.bf16.msra.mxu0 %v8233
    %8840 = vmatprep.subr.bf16.mxu0 %v8226
    %8841 = vmatpush2.bf16.msra.mxu0 %v8225
    %8842 = vmatprep.subr.bf16.mxu0 %v8218
    %8843 = vmatpush2.bf16.msra.mxu0 %v8217
    %8844 = vmatprep.subr.bf16.mxu0 %v8210
    %8845 = vmatpush2.bf16.msra.mxu0 %v8209
    %8846 = vmatprep.subr.bf16.mxu0 %v8202
    %8847 = vmatpush2.bf16.msra.mxu0 %v8201
    %8848 = vmatprep.mubr.bf16.mxu0 %v6978
    %8849 = vmatmul.mubr.bf16.gmra.mxu0 %v6977
    %v8850 = vpop.f32.mrf.mxu0
    %v8851 = vadd.f32 %v8808, %v8850
    %v8852 = vpop.f32.mrf.mxu0
    %v8853 = vadd.f32 %v8810, %v8852
    %v8854 = vpop.f32.mrf.mxu0
    %v8855 = vadd.f32 %v8812, %v8854
    %v8856 = vpop.f32.mrf.mxu0
    %v8857 = vadd.f32 %v8814, %v8856
    %8858 = vdwg.mxu0
    %v8859 = vmul.f32 %v8593, %v8765
    %v8860 = vmul.f32 %v8595, %v8767
    %v8861 = vmul.f32 %v8679, %v8851
    %v8862 = vmul.f32 %v8681, %v8853
    %v8863 = vmul.f32 %v8597, %v8769
    %v8864 = vmul.f32 %v8599, %v8771
    %v8865 = vmul.f32 %v8683, %v8855
    %v8866 = vmul.f32 %v8685, %v8857
    %v8867 = vsub.f32 0.0, %v8859
    %v8868 = vsub.f32 0.0, %v8860
    %v8869 = vsub.f32 0.0, %v8861
    %v8870 = vsub.f32 0.0, %v8862
    %v8871 = vsub.f32 0.0, %v8863
    %v8872 = vsub.f32 0.0, %v8864
    %v8873 = vsub.f32 0.0, %v8865
    %v8874 = vsub.f32 0.0, %v8866
    %v8875 = vmul.f32 %v8867, 1.442695
    %v8876 = vpow.pop %v8875
    %v8877 = vmul.f32 %v8868, 1.442695
    %v8878 = vpow.pop %v8877
    %v8879 = vmul.f32 %v8869, 1.442695
    %v8880 = vpow.pop %v8879
    %v8881 = vmul.f32 %v8870, 1.442695
    %v8882 = vpow.pop %v8881
    %v8883 = vmul.f32 %v8871, 1.442695
    %v8884 = vpow.pop %v8883
    %v8885 = vmul.f32 %v8872, 1.442695
    %v8886 = vpow.pop %v8885
    %v8887 = vmul.f32 %v8873, 1.442695
    %v8888 = vpow.pop %v8887
    %v8889 = vmul.f32 %v8874, 1.442695
    %v8890 = vpow.pop %v8889
    %v8891 = vadd.f32 %v8876, 1.0
    %v8892 = vadd.f32 %v8878, 1.0
    %v8893 = vadd.f32 %v8880, 1.0
    %v8894 = vadd.f32 %v8882, 1.0
    %v8895 = vadd.f32 %v8884, 1.0
    %v8896 = vadd.f32 %v8886, 1.0
    %v8897 = vadd.f32 %v8888, 1.0
    %v8898 = vadd.f32 %v8890, 1.0
    %v8899 = vrcp.pop %v8891
    %v8900 = vrcp.pop %v8892
    %v8901 = vrcp.pop %v8893
    %v8902 = vrcp.pop %v8894
    %v8903 = vrcp.pop %v8895
    %v8904 = vrcp.pop %v8896
    %v8905 = vrcp.pop %v8897
    %v8906 = vrcp.pop %v8898
    %v8907 = vmul.f32 %v8859, %v8899
    %v8908 = vmul.f32 %v8860, %v8900
    %v8909 = vmul.f32 %v8861, %v8901
    %v8910 = vmul.f32 %v8862, %v8902
    %v8911 = vmul.f32 %v8863, %v8903
    %v8912 = vmul.f32 %v8864, %v8904
    %v8913 = vmul.f32 %v8865, %v8905
    %v8914 = vmul.f32 %v8866, %v8906
    %v8915 = vpack.c.bf16 %v8911, %v8907
    %v8916 = vpack.c.bf16 %v8912, %v8908
    %v8917 = vpack.c.bf16 %v8913, %v8909
    %v8918 = vpack.c.bf16 %v8914, %v8910
    %v8919 = vld [vmem:[#allocation13] sm:$0xff]
    %v8920 = vld [vmem:[#allocation13 + $0x8] sm:$0xff]
    %v8921 = vld [vmem:[#allocation13 + $0x10] sm:$0xff]
    %v8922 = vld [vmem:[#allocation13 + $0x18] sm:$0xff]
    %v8923 = vld [vmem:[#allocation13 + $0x20] sm:$0xff]
    %v8924 = vld [vmem:[#allocation13 + $0x28] sm:$0xff]
    %v8925 = vld [vmem:[#allocation13 + $0x30] sm:$0xff]
    %v8926 = vld [vmem:[#allocation13 + $0x38] sm:$0xff]
    %v8927 = vld [vmem:[#allocation13 + $0x40] sm:$0xff]
    %v8928 = vld [vmem:[#allocation13 + $0x48] sm:$0xff]
    %v8929 = vld [vmem:[#allocation13 + $0x50] sm:$0xff]
    %v8930 = vld [vmem:[#allocation13 + $0x58] sm:$0xff]
    %v8931 = vld [vmem:[#allocation13 + $0x60] sm:$0xff]
    %v8932 = vld [vmem:[#allocation13 + $0x68] sm:$0xff]
    %v8933 = vld [vmem:[#allocation13 + $0x70] sm:$0xff]
    %v8934 = vld [vmem:[#allocation13 + $0x78] sm:$0xff]
    %v8935 = vld [vmem:[#allocation13 + $0x80] sm:$0xff]
    %v8936 = vld [vmem:[#allocation13 + $0x88] sm:$0xff]
    %v8937 = vld [vmem:[#allocation13 + $0x90] sm:$0xff]
    %v8938 = vld [vmem:[#allocation13 + $0x98] sm:$0xff]
    %v8939 = vld [vmem:[#allocation13 + $0xa0] sm:$0xff]
    %v8940 = vld [vmem:[#allocation13 + $0xa8] sm:$0xff]
    %v8941 = vld [vmem:[#allocation13 + $0xb0] sm:$0xff]
    %v8942 = vld [vmem:[#allocation13 + $0xb8] sm:$0xff]
    %v8943 = vld [vmem:[#allocation13 + $0xc0] sm:$0xff]
    %v8944 = vld [vmem:[#allocation13 + $0xc8] sm:$0xff]
    %v8945 = vld [vmem:[#allocation13 + $0xd0] sm:$0xff]
    %v8946 = vld [vmem:[#allocation13 + $0xd8] sm:$0xff]
    %v8947 = vld [vmem:[#allocation13 + $0xe0] sm:$0xff]
    %v8948 = vld [vmem:[#allocation13 + $0xe8] sm:$0xff]
    %v8949 = vld [vmem:[#allocation13 + $0xf0] sm:$0xff]
    %v8950 = vld [vmem:[#allocation13 + $0xf8] sm:$0xff]
    %v8951 = vld [vmem:[#allocation13 + $0x100] sm:$0xff]
    %v8952 = vld [vmem:[#allocation13 + $0x108] sm:$0xff]
    %v8953 = vld [vmem:[#allocation13 + $0x110] sm:$0xff]
    %v8954 = vld [vmem:[#allocation13 + $0x118] sm:$0xff]
    %v8955 = vld [vmem:[#allocation13 + $0x120] sm:$0xff]
    %v8956 = vld [vmem:[#allocation13 + $0x128] sm:$0xff]
    %v8957 = vld [vmem:[#allocation13 + $0x130] sm:$0xff]
    %v8958 = vld [vmem:[#allocation13 + $0x138] sm:$0xff]
    %v8959 = vld [vmem:[#allocation13 + $0x140] sm:$0xff]
    %v8960 = vld [vmem:[#allocation13 + $0x148] sm:$0xff]
    %v8961 = vld [vmem:[#allocation13 + $0x150] sm:$0xff]
    %v8962 = vld [vmem:[#allocation13 + $0x158] sm:$0xff]
    %v8963 = vld [vmem:[#allocation13 + $0x160] sm:$0xff]
    %v8964 = vld [vmem:[#allocation13 + $0x168] sm:$0xff]
    %v8965 = vld [vmem:[#allocation13 + $0x170] sm:$0xff]
    %v8966 = vld [vmem:[#allocation13 + $0x178] sm:$0xff]
    %v8967 = vld [vmem:[#allocation13 + $0x180] sm:$0xff]
    %v8968 = vld [vmem:[#allocation13 + $0x188] sm:$0xff]
    %v8969 = vld [vmem:[#allocation13 + $0x190] sm:$0xff]
    %v8970 = vld [vmem:[#allocation13 + $0x198] sm:$0xff]
    %v8971 = vld [vmem:[#allocation13 + $0x1a0] sm:$0xff]
    %v8972 = vld [vmem:[#allocation13 + $0x1a8] sm:$0xff]
    %v8973 = vld [vmem:[#allocation13 + $0x1b0] sm:$0xff]
    %v8974 = vld [vmem:[#allocation13 + $0x1b8] sm:$0xff]
    %v8975 = vld [vmem:[#allocation13 + $0x1c0] sm:$0xff]
    %v8976 = vld [vmem:[#allocation13 + $0x1c8] sm:$0xff]
    %v8977 = vld [vmem:[#allocation13 + $0x1d0] sm:$0xff]
    %v8978 = vld [vmem:[#allocation13 + $0x1d8] sm:$0xff]
    %v8979 = vld [vmem:[#allocation13 + $0x1e0] sm:$0xff]
    %v8980 = vld [vmem:[#allocation13 + $0x1e8] sm:$0xff]
    %v8981 = vld [vmem:[#allocation13 + $0x1f0] sm:$0xff]
    %v8982 = vld [vmem:[#allocation13 + $0x1f8] sm:$0xff]
    %v8983 = vld [vmem:[#allocation13 + $0x200] sm:$0xff]
    %v8984 = vld [vmem:[#allocation13 + $0x208] sm:$0xff]
    %v8985 = vld [vmem:[#allocation13 + $0x210] sm:$0xff]
    %v8986 = vld [vmem:[#allocation13 + $0x218] sm:$0xff]
    %v8987 = vld [vmem:[#allocation13 + $0x220] sm:$0xff]
    %v8988 = vld [vmem:[#allocation13 + $0x228] sm:$0xff]
    %v8989 = vld [vmem:[#allocation13 + $0x230] sm:$0xff]
    %v8990 = vld [vmem:[#allocation13 + $0x238] sm:$0xff]
    %v8991 = vld [vmem:[#allocation13 + $0x240] sm:$0xff]
    %v8992 = vld [vmem:[#allocation13 + $0x248] sm:$0xff]
    %v8993 = vld [vmem:[#allocation13 + $0x250] sm:$0xff]
    %v8994 = vld [vmem:[#allocation13 + $0x258] sm:$0xff]
    %v8995 = vld [vmem:[#allocation13 + $0x260] sm:$0xff]
    %v8996 = vld [vmem:[#allocation13 + $0x268] sm:$0xff]
    %v8997 = vld [vmem:[#allocation13 + $0x270] sm:$0xff]
    %v8998 = vld [vmem:[#allocation13 + $0x278] sm:$0xff]
    %v8999 = vld [vmem:[#allocation13 + $0x280] sm:$0xff]
    %v9000 = vld [vmem:[#allocation13 + $0x288] sm:$0xff]
    %v9001 = vld [vmem:[#allocation13 + $0x290] sm:$0xff]
    %v9002 = vld [vmem:[#allocation13 + $0x298] sm:$0xff]
    %v9003 = vld [vmem:[#allocation13 + $0x2a0] sm:$0xff]
    %v9004 = vld [vmem:[#allocation13 + $0x2a8] sm:$0xff]
    %v9005 = vld [vmem:[#allocation13 + $0x2b0] sm:$0xff]
    %v9006 = vld [vmem:[#allocation13 + $0x2b8] sm:$0xff]
    %v9007 = vld [vmem:[#allocation13 + $0x2c0] sm:$0xff]
    %v9008 = vld [vmem:[#allocation13 + $0x2c8] sm:$0xff]
    %v9009 = vld [vmem:[#allocation13 + $0x2d0] sm:$0xff]
    %v9010 = vld [vmem:[#allocation13 + $0x2d8] sm:$0xff]
    %v9011 = vld [vmem:[#allocation13 + $0x2e0] sm:$0xff]
    %v9012 = vld [vmem:[#allocation13 + $0x2e8] sm:$0xff]
    %v9013 = vld [vmem:[#allocation13 + $0x2f0] sm:$0xff]
    %v9014 = vld [vmem:[#allocation13 + $0x2f8] sm:$0xff]
    %v9015 = vld [vmem:[#allocation13 + $0x300] sm:$0xff]
    %v9016 = vld [vmem:[#allocation13 + $0x308] sm:$0xff]
    %v9017 = vld [vmem:[#allocation13 + $0x310] sm:$0xff]
    %v9018 = vld [vmem:[#allocation13 + $0x318] sm:$0xff]
    %v9019 = vld [vmem:[#allocation13 + $0x320] sm:$0xff]
    %v9020 = vld [vmem:[#allocation13 + $0x328] sm:$0xff]
    %v9021 = vld [vmem:[#allocation13 + $0x330] sm:$0xff]
    %v9022 = vld [vmem:[#allocation13 + $0x338] sm:$0xff]
    %v9023 = vld [vmem:[#allocation13 + $0x340] sm:$0xff]
    %v9024 = vld [vmem:[#allocation13 + $0x348] sm:$0xff]
    %v9025 = vld [vmem:[#allocation13 + $0x350] sm:$0xff]
    %v9026 = vld [vmem:[#allocation13 + $0x358] sm:$0xff]
    %v9027 = vld [vmem:[#allocation13 + $0x360] sm:$0xff]
    %v9028 = vld [vmem:[#allocation13 + $0x368] sm:$0xff]
    %v9029 = vld [vmem:[#allocation13 + $0x370] sm:$0xff]
    %v9030 = vld [vmem:[#allocation13 + $0x378] sm:$0xff]
    %v9031 = vld [vmem:[#allocation13 + $0x380] sm:$0xff]
    %v9032 = vld [vmem:[#allocation13 + $0x388] sm:$0xff]
    %v9033 = vld [vmem:[#allocation13 + $0x390] sm:$0xff]
    %v9034 = vld [vmem:[#allocation13 + $0x398] sm:$0xff]
    %v9035 = vld [vmem:[#allocation13 + $0x3a0] sm:$0xff]
    %v9036 = vld [vmem:[#allocation13 + $0x3a8] sm:$0xff]
    %v9037 = vld [vmem:[#allocation13 + $0x3b0] sm:$0xff]
    %v9038 = vld [vmem:[#allocation13 + $0x3b8] sm:$0xff]
    %v9039 = vld [vmem:[#allocation13 + $0x3c0] sm:$0xff]
    %v9040 = vld [vmem:[#allocation13 + $0x3c8] sm:$0xff]
    %v9041 = vld [vmem:[#allocation13 + $0x3d0] sm:$0xff]
    %v9042 = vld [vmem:[#allocation13 + $0x3d8] sm:$0xff]
    %v9043 = vld [vmem:[#allocation13 + $0x3e0] sm:$0xff]
    %v9044 = vld [vmem:[#allocation13 + $0x3e8] sm:$0xff]
    %v9045 = vld [vmem:[#allocation13 + $0x3f0] sm:$0xff]
    %v9046 = vld [vmem:[#allocation13 + $0x3f8] sm:$0xff]
    %v9175 = vunpack.c.l.b16 %v8919
    %v9176 = vunpack.c.h.b16 %v8919
    %v9177 = vunpack.c.l.b16 %v8920
    %v9178 = vunpack.c.h.b16 %v8920
    %v9179 = vunpack.c.l.b16 %v8921
    %v9180 = vunpack.c.h.b16 %v8921
    %v9181 = vunpack.c.l.b16 %v8922
    %v9182 = vunpack.c.h.b16 %v8922
    %v9183 = vunpack.c.l.b16 %v8923
    %v9184 = vunpack.c.h.b16 %v8923
    %v9185 = vunpack.c.l.b16 %v8924
    %v9186 = vunpack.c.h.b16 %v8924
    %v9187 = vunpack.c.l.b16 %v8925
    %v9188 = vunpack.c.h.b16 %v8925
    %v9189 = vunpack.c.l.b16 %v8926
    %v9190 = vunpack.c.h.b16 %v8926
    %v9191 = vunpack.c.l.b16 %v8927
    %v9192 = vunpack.c.h.b16 %v8927
    %v9193 = vunpack.c.l.b16 %v8928
    %v9194 = vunpack.c.h.b16 %v8928
    %v9195 = vunpack.c.l.b16 %v8929
    %v9196 = vunpack.c.h.b16 %v8929
    %v9197 = vunpack.c.l.b16 %v8930
    %v9198 = vunpack.c.h.b16 %v8930
    %v9199 = vunpack.c.l.b16 %v8931
    %v9200 = vunpack.c.h.b16 %v8931
    %v9201 = vunpack.c.l.b16 %v8932
    %v9202 = vunpack.c.h.b16 %v8932
    %v9203 = vunpack.c.l.b16 %v8933
    %v9204 = vunpack.c.h.b16 %v8933
    %v9205 = vunpack.c.l.b16 %v8934
    %v9206 = vunpack.c.h.b16 %v8934
    %v9207 = vunpack.c.l.b16 %v8935
    %v9208 = vunpack.c.h.b16 %v8935
    %v9209 = vunpack.c.l.b16 %v8936
    %v9210 = vunpack.c.h.b16 %v8936
    %v9211 = vunpack.c.l.b16 %v8937
    %v9212 = vunpack.c.h.b16 %v8937
    %v9213 = vunpack.c.l.b16 %v8938
    %v9214 = vunpack.c.h.b16 %v8938
    %v9215 = vunpack.c.l.b16 %v8939
    %v9216 = vunpack.c.h.b16 %v8939
    %v9217 = vunpack.c.l.b16 %v8940
    %v9218 = vunpack.c.h.b16 %v8940
    %v9219 = vunpack.c.l.b16 %v8941
    %v9220 = vunpack.c.h.b16 %v8941
    %v9221 = vunpack.c.l.b16 %v8942
    %v9222 = vunpack.c.h.b16 %v8942
    %v9223 = vunpack.c.l.b16 %v8943
    %v9224 = vunpack.c.h.b16 %v8943
    %v9225 = vunpack.c.l.b16 %v8944
    %v9226 = vunpack.c.h.b16 %v8944
    %v9227 = vunpack.c.l.b16 %v8945
    %v9228 = vunpack.c.h.b16 %v8945
    %v9229 = vunpack.c.l.b16 %v8946
    %v9230 = vunpack.c.h.b16 %v8946
    %v9231 = vunpack.c.l.b16 %v8947
    %v9232 = vunpack.c.h.b16 %v8947
    %v9233 = vunpack.c.l.b16 %v8948
    %v9234 = vunpack.c.h.b16 %v8948
    %v9235 = vunpack.c.l.b16 %v8949
    %v9236 = vunpack.c.h.b16 %v8949
    %v9237 = vunpack.c.l.b16 %v8950
    %v9238 = vunpack.c.h.b16 %v8950
    %v9239 = vunpack.c.l.b16 %v8951
    %v9240 = vunpack.c.h.b16 %v8951
    %v9241 = vunpack.c.l.b16 %v8952
    %v9242 = vunpack.c.h.b16 %v8952
    %v9243 = vunpack.c.l.b16 %v8953
    %v9244 = vunpack.c.h.b16 %v8953
    %v9245 = vunpack.c.l.b16 %v8954
    %v9246 = vunpack.c.h.b16 %v8954
    %v9247 = vunpack.c.l.b16 %v8955
    %v9248 = vunpack.c.h.b16 %v8955
    %v9249 = vunpack.c.l.b16 %v8956
    %v9250 = vunpack.c.h.b16 %v8956
    %v9251 = vunpack.c.l.b16 %v8957
    %v9252 = vunpack.c.h.b16 %v8957
    %v9253 = vunpack.c.l.b16 %v8958
    %v9254 = vunpack.c.h.b16 %v8958
    %v9255 = vunpack.c.l.b16 %v8959
    %v9256 = vunpack.c.h.b16 %v8959
    %v9257 = vunpack.c.l.b16 %v8960
    %v9258 = vunpack.c.h.b16 %v8960
    %v9259 = vunpack.c.l.b16 %v8961
    %v9260 = vunpack.c.h.b16 %v8961
    %v9261 = vunpack.c.l.b16 %v8962
    %v9262 = vunpack.c.h.b16 %v8962
    %v9263 = vunpack.c.l.b16 %v8963
    %v9264 = vunpack.c.h.b16 %v8963
    %v9265 = vunpack.c.l.b16 %v8964
    %v9266 = vunpack.c.h.b16 %v8964
    %v9267 = vunpack.c.l.b16 %v8965
    %v9268 = vunpack.c.h.b16 %v8965
    %v9269 = vunpack.c.l.b16 %v8966
    %v9270 = vunpack.c.h.b16 %v8966
    %v9271 = vunpack.c.l.b16 %v8967
    %v9272 = vunpack.c.h.b16 %v8967
    %v9273 = vunpack.c.l.b16 %v8968
    %v9274 = vunpack.c.h.b16 %v8968
    %v9275 = vunpack.c.l.b16 %v8969
    %v9276 = vunpack.c.h.b16 %v8969
    %v9277 = vunpack.c.l.b16 %v8970
    %v9278 = vunpack.c.h.b16 %v8970
    %v9279 = vunpack.c.l.b16 %v8971
    %v9280 = vunpack.c.h.b16 %v8971
    %v9281 = vunpack.c.l.b16 %v8972
    %v9282 = vunpack.c.h.b16 %v8972
    %v9283 = vunpack.c.l.b16 %v8973
    %v9284 = vunpack.c.h.b16 %v8973
    %v9285 = vunpack.c.l.b16 %v8974
    %v9286 = vunpack.c.h.b16 %v8974
    %v9287 = vunpack.c.l.b16 %v8975
    %v9288 = vunpack.c.h.b16 %v8975
    %v9289 = vunpack.c.l.b16 %v8976
    %v9290 = vunpack.c.h.b16 %v8976
    %v9291 = vunpack.c.l.b16 %v8977
    %v9292 = vunpack.c.h.b16 %v8977
    %v9293 = vunpack.c.l.b16 %v8978
    %v9294 = vunpack.c.h.b16 %v8978
    %v9295 = vunpack.c.l.b16 %v8979
    %v9296 = vunpack.c.h.b16 %v8979
    %v9297 = vunpack.c.l.b16 %v8980
    %v9298 = vunpack.c.h.b16 %v8980
    %v9299 = vunpack.c.l.b16 %v8981
    %v9300 = vunpack.c.h.b16 %v8981
    %v9301 = vunpack.c.l.b16 %v8982
    %v9302 = vunpack.c.h.b16 %v8982
    %v9303 = vunpack.c.l.b16 %v8983
    %v9304 = vunpack.c.h.b16 %v8983
    %v9305 = vunpack.c.l.b16 %v8984
    %v9306 = vunpack.c.h.b16 %v8984
    %v9307 = vunpack.c.l.b16 %v8985
    %v9308 = vunpack.c.h.b16 %v8985
    %v9309 = vunpack.c.l.b16 %v8986
    %v9310 = vunpack.c.h.b16 %v8986
    %v9311 = vunpack.c.l.b16 %v8987
    %v9312 = vunpack.c.h.b16 %v8987
    %v9313 = vunpack.c.l.b16 %v8988
    %v9314 = vunpack.c.h.b16 %v8988
    %v9315 = vunpack.c.l.b16 %v8989
    %v9316 = vunpack.c.h.b16 %v8989
    %v9317 = vunpack.c.l.b16 %v8990
    %v9318 = vunpack.c.h.b16 %v8990
    %v9319 = vunpack.c.l.b16 %v8991
    %v9320 = vunpack.c.h.b16 %v8991
    %v9321 = vunpack.c.l.b16 %v8992
    %v9322 = vunpack.c.h.b16 %v8992
    %v9323 = vunpack.c.l.b16 %v8993
    %v9324 = vunpack.c.h.b16 %v8993
    %v9325 = vunpack.c.l.b16 %v8994
    %v9326 = vunpack.c.h.b16 %v8994
    %v9327 = vunpack.c.l.b16 %v8995
    %v9328 = vunpack.c.h.b16 %v8995
    %v9329 = vunpack.c.l.b16 %v8996
    %v9330 = vunpack.c.h.b16 %v8996
    %v9331 = vunpack.c.l.b16 %v8997
    %v9332 = vunpack.c.h.b16 %v8997
    %v9333 = vunpack.c.l.b16 %v8998
    %v9334 = vunpack.c.h.b16 %v8998
    %v9335 = vunpack.c.l.b16 %v8999
    %v9336 = vunpack.c.h.b16 %v8999
    %v9337 = vunpack.c.l.b16 %v9000
    %v9338 = vunpack.c.h.b16 %v9000
    %v9339 = vunpack.c.l.b16 %v9001
    %v9340 = vunpack.c.h.b16 %v9001
    %v9341 = vunpack.c.l.b16 %v9002
    %v9342 = vunpack.c.h.b16 %v9002
    %v9343 = vunpack.c.l.b16 %v9003
    %v9344 = vunpack.c.h.b16 %v9003
    %v9345 = vunpack.c.l.b16 %v9004
    %v9346 = vunpack.c.h.b16 %v9004
    %v9347 = vunpack.c.l.b16 %v9005
    %v9348 = vunpack.c.h.b16 %v9005
    %v9349 = vunpack.c.l.b16 %v9006
    %v9350 = vunpack.c.h.b16 %v9006
    %v9351 = vunpack.c.l.b16 %v9007
    %v9352 = vunpack.c.h.b16 %v9007
    %v9353 = vunpack.c.l.b16 %v9008
    %v9354 = vunpack.c.h.b16 %v9008
    %v9355 = vunpack.c.l.b16 %v9009
    %v9356 = vunpack.c.h.b16 %v9009
    %v9357 = vunpack.c.l.b16 %v9010
    %v9358 = vunpack.c.h.b16 %v9010
    %v9359 = vunpack.c.l.b16 %v9011
    %v9360 = vunpack.c.h.b16 %v9011
    %v9361 = vunpack.c.l.b16 %v9012
    %v9362 = vunpack.c.h.b16 %v9012
    %v9363 = vunpack.c.l.b16 %v9013
    %v9364 = vunpack.c.h.b16 %v9013
    %v9365 = vunpack.c.l.b16 %v9014
    %v9366 = vunpack.c.h.b16 %v9014
    %v9367 = vunpack.c.l.b16 %v9015
    %v9368 = vunpack.c.h.b16 %v9015
    %v9369 = vunpack.c.l.b16 %v9016
    %v9370 = vunpack.c.h.b16 %v9016
    %v9371 = vunpack.c.l.b16 %v9017
    %v9372 = vunpack.c.h.b16 %v9017
    %v9373 = vunpack.c.l.b16 %v9018
    %v9374 = vunpack.c.h.b16 %v9018
    %v9375 = vunpack.c.l.b16 %v9019
    %v9376 = vunpack.c.h.b16 %v9019
    %v9377 = vunpack.c.l.b16 %v9020
    %v9378 = vunpack.c.h.b16 %v9020
    %v9379 = vunpack.c.l.b16 %v9021
    %v9380 = vunpack.c.h.b16 %v9021
    %v9381 = vunpack.c.l.b16 %v9022
    %v9382 = vunpack.c.h.b16 %v9022
    %v9383 = vunpack.c.l.b16 %v9023
    %v9384 = vunpack.c.h.b16 %v9023
    %v9385 = vunpack.c.l.b16 %v9024
    %v9386 = vunpack.c.h.b16 %v9024
    %v9387 = vunpack.c.l.b16 %v9025
    %v9388 = vunpack.c.h.b16 %v9025
    %v9389 = vunpack.c.l.b16 %v9026
    %v9390 = vunpack.c.h.b16 %v9026
    %v9391 = vunpack.c.l.b16 %v9027
    %v9392 = vunpack.c.h.b16 %v9027
    %v9393 = vunpack.c.l.b16 %v9028
    %v9394 = vunpack.c.h.b16 %v9028
    %v9395 = vunpack.c.l.b16 %v9029
    %v9396 = vunpack.c.h.b16 %v9029
    %v9397 = vunpack.c.l.b16 %v9030
    %v9398 = vunpack.c.h.b16 %v9030
    %v9399 = vunpack.c.l.b16 %v9031
    %v9400 = vunpack.c.h.b16 %v9031
    %v9401 = vunpack.c.l.b16 %v9032
    %v9402 = vunpack.c.h.b16 %v9032
    %v9403 = vunpack.c.l.b16 %v9033
    %v9404 = vunpack.c.h.b16 %v9033
    %v9405 = vunpack.c.l.b16 %v9034
    %v9406 = vunpack.c.h.b16 %v9034
    %v9407 = vunpack.c.l.b16 %v9035
    %v9408 = vunpack.c.h.b16 %v9035
    %v9409 = vunpack.c.l.b16 %v9036
    %v9410 = vunpack.c.h.b16 %v9036
    %v9411 = vunpack.c.l.b16 %v9037
    %v9412 = vunpack.c.h.b16 %v9037
    %v9413 = vunpack.c.l.b16 %v9038
    %v9414 = vunpack.c.h.b16 %v9038
    %v9415 = vunpack.c.l.b16 %v9039
    %v9416 = vunpack.c.h.b16 %v9039
    %v9417 = vunpack.c.l.b16 %v9040
    %v9418 = vunpack.c.h.b16 %v9040
    %v9419 = vunpack.c.l.b16 %v9041
    %v9420 = vunpack.c.h.b16 %v9041
    %v9421 = vunpack.c.l.b16 %v9042
    %v9422 = vunpack.c.h.b16 %v9042
    %v9423 = vunpack.c.l.b16 %v9043
    %v9424 = vunpack.c.h.b16 %v9043
    %v9425 = vunpack.c.l.b16 %v9044
    %v9426 = vunpack.c.h.b16 %v9044
    %v9427 = vunpack.c.l.b16 %v9045
    %v9428 = vunpack.c.h.b16 %v9045
    %v9429 = vunpack.c.l.b16 %v9046
    %v9430 = vunpack.c.h.b16 %v9046
    %v9431 = vpack.c.b16 %v9179, %v9175
    %v9432 = vpack.c.b16 %v9180, %v9176
    %v9433 = vpack.c.b16 %v9181, %v9177
    %v9434 = vpack.c.b16 %v9182, %v9178
    %v9435 = vpack.c.b16 %v9187, %v9183
    %v9436 = vpack.c.b16 %v9188, %v9184
    %v9437 = vpack.c.b16 %v9189, %v9185
    %v9438 = vpack.c.b16 %v9190, %v9186
    %v9439 = vpack.c.b16 %v9195, %v9191
    %v9440 = vpack.c.b16 %v9196, %v9192
    %v9441 = vpack.c.b16 %v9197, %v9193
    %v9442 = vpack.c.b16 %v9198, %v9194
    %v9443 = vpack.c.b16 %v9203, %v9199
    %v9444 = vpack.c.b16 %v9204, %v9200
    %v9445 = vpack.c.b16 %v9205, %v9201
    %v9446 = vpack.c.b16 %v9206, %v9202
    %v9447 = vpack.c.b16 %v9211, %v9207
    %v9448 = vpack.c.b16 %v9212, %v9208
    %v9449 = vpack.c.b16 %v9213, %v9209
    %v9450 = vpack.c.b16 %v9214, %v9210
    %v9451 = vpack.c.b16 %v9219, %v9215
    %v9452 = vpack.c.b16 %v9220, %v9216
    %v9453 = vpack.c.b16 %v9221, %v9217
    %v9454 = vpack.c.b16 %v9222, %v9218
    %v9455 = vpack.c.b16 %v9227, %v9223
    %v9456 = vpack.c.b16 %v9228, %v9224
    %v9457 = vpack.c.b16 %v9229, %v9225
    %v9458 = vpack.c.b16 %v9230, %v9226
    %v9459 = vpack.c.b16 %v9235, %v9231
    %v9460 = vpack.c.b16 %v9236, %v9232
    %v9461 = vpack.c.b16 %v9237, %v9233
    %v9462 = vpack.c.b16 %v9238, %v9234
    %v9463 = vpack.c.b16 %v9243, %v9239
    %v9464 = vpack.c.b16 %v9244, %v9240
    %v9465 = vpack.c.b16 %v9245, %v9241
    %v9466 = vpack.c.b16 %v9246, %v9242
    %v9467 = vpack.c.b16 %v9251, %v9247
    %v9468 = vpack.c.b16 %v9252, %v9248
    %v9469 = vpack.c.b16 %v9253, %v9249
    %v9470 = vpack.c.b16 %v9254, %v9250
    %v9471 = vpack.c.b16 %v9259, %v9255
    %v9472 = vpack.c.b16 %v9260, %v9256
    %v9473 = vpack.c.b16 %v9261, %v9257
    %v9474 = vpack.c.b16 %v9262, %v9258
    %v9475 = vpack.c.b16 %v9267, %v9263
    %v9476 = vpack.c.b16 %v9268, %v9264
    %v9477 = vpack.c.b16 %v9269, %v9265
    %v9478 = vpack.c.b16 %v9270, %v9266
    %v9479 = vpack.c.b16 %v9275, %v9271
    %v9480 = vpack.c.b16 %v9276, %v9272
    %v9481 = vpack.c.b16 %v9277, %v9273
    %v9482 = vpack.c.b16 %v9278, %v9274
    %v9483 = vpack.c.b16 %v9283, %v9279
    %v9484 = vpack.c.b16 %v9284, %v9280
    %v9485 = vpack.c.b16 %v9285, %v9281
    %v9486 = vpack.c.b16 %v9286, %v9282
    %v9487 = vpack.c.b16 %v9291, %v9287
    %v9488 = vpack.c.b16 %v9292, %v9288
    %v9489 = vpack.c.b16 %v9293, %v9289
    %v9490 = vpack.c.b16 %v9294, %v9290
    %v9491 = vpack.c.b16 %v9299, %v9295
    %v9492 = vpack.c.b16 %v9300, %v9296
    %v9493 = vpack.c.b16 %v9301, %v9297
    %v9494 = vpack.c.b16 %v9302, %v9298
    %v9495 = vpack.c.b16 %v9307, %v9303
    %v9496 = vpack.c.b16 %v9308, %v9304
    %v9497 = vpack.c.b16 %v9309, %v9305
    %v9498 = vpack.c.b16 %v9310, %v9306
    %v9499 = vpack.c.b16 %v9315, %v9311
    %v9500 = vpack.c.b16 %v9316, %v9312
    %v9501 = vpack.c.b16 %v9317, %v9313
    %v9502 = vpack.c.b16 %v9318, %v9314
    %v9503 = vpack.c.b16 %v9323, %v9319
    %v9504 = vpack.c.b16 %v9324, %v9320
    %v9505 = vpack.c.b16 %v9325, %v9321
    %v9506 = vpack.c.b16 %v9326, %v9322
    %v9507 = vpack.c.b16 %v9331, %v9327
    %v9508 = vpack.c.b16 %v9332, %v9328
    %v9509 = vpack.c.b16 %v9333, %v9329
    %v9510 = vpack.c.b16 %v9334, %v9330
    %v9511 = vpack.c.b16 %v9339, %v9335
    %v9512 = vpack.c.b16 %v9340, %v9336
    %v9513 = vpack.c.b16 %v9341, %v9337
    %v9514 = vpack.c.b16 %v9342, %v9338
    %v9515 = vpack.c.b16 %v9347, %v9343
    %v9516 = vpack.c.b16 %v9348, %v9344
    %v9517 = vpack.c.b16 %v9349, %v9345
    %v9518 = vpack.c.b16 %v9350, %v9346
    %v9519 = vpack.c.b16 %v9355, %v9351
    %v9520 = vpack.c.b16 %v9356, %v9352
    %v9521 = vpack.c.b16 %v9357, %v9353
    %v9522 = vpack.c.b16 %v9358, %v9354
    %v9523 = vpack.c.b16 %v9363, %v9359
    %v9524 = vpack.c.b16 %v9364, %v9360
    %v9525 = vpack.c.b16 %v9365, %v9361
    %v9526 = vpack.c.b16 %v9366, %v9362
    %v9527 = vpack.c.b16 %v9371, %v9367
    %v9528 = vpack.c.b16 %v9372, %v9368
    %v9529 = vpack.c.b16 %v9373, %v9369
    %v9530 = vpack.c.b16 %v9374, %v9370
    %v9531 = vpack.c.b16 %v9379, %v9375
    %v9532 = vpack.c.b16 %v9380, %v9376
    %v9533 = vpack.c.b16 %v9381, %v9377
    %v9534 = vpack.c.b16 %v9382, %v9378
    %v9535 = vpack.c.b16 %v9387, %v9383
    %v9536 = vpack.c.b16 %v9388, %v9384
    %v9537 = vpack.c.b16 %v9389, %v9385
    %v9538 = vpack.c.b16 %v9390, %v9386
    %v9539 = vpack.c.b16 %v9395, %v9391
    %v9540 = vpack.c.b16 %v9396, %v9392
    %v9541 = vpack.c.b16 %v9397, %v9393
    %v9542 = vpack.c.b16 %v9398, %v9394
    %v9543 = vpack.c.b16 %v9403, %v9399
    %v9544 = vpack.c.b16 %v9404, %v9400
    %v9545 = vpack.c.b16 %v9405, %v9401
    %v9546 = vpack.c.b16 %v9406, %v9402
    %v9547 = vpack.c.b16 %v9411, %v9407
    %v9548 = vpack.c.b16 %v9412, %v9408
    %v9549 = vpack.c.b16 %v9413, %v9409
    %v9550 = vpack.c.b16 %v9414, %v9410
    %v9551 = vpack.c.b16 %v9419, %v9415
    %v9552 = vpack.c.b16 %v9420, %v9416
    %v9553 = vpack.c.b16 %v9421, %v9417
    %v9554 = vpack.c.b16 %v9422, %v9418
    %v9555 = vpack.c.b16 %v9427, %v9423
    %v9556 = vpack.c.b16 %v9428, %v9424
    %v9557 = vpack.c.b16 %v9429, %v9425
    %v9558 = vpack.c.b16 %v9430, %v9426
    %9687 = vmatprep.subr.bf16.mxu0 %v9460
    %9688 = vmatpush1.bf16.msra.mxu0 %v9459
    %9689 = vmatprep.subr.bf16.mxu0 %v9456
    %9690 = vmatpush1.bf16.msra.mxu0 %v9455
    %9691 = vmatprep.subr.bf16.mxu0 %v9452
    %9692 = vmatpush1.bf16.msra.mxu0 %v9451
    %9693 = vmatprep.subr.bf16.mxu0 %v9448
    %9694 = vmatpush1.bf16.msra.mxu0 %v9447
    %9695 = vmatprep.subr.bf16.mxu0 %v9444
    %9696 = vmatpush1.bf16.msra.mxu0 %v9443
    %9697 = vmatprep.subr.bf16.mxu0 %v9440
    %9698 = vmatpush1.bf16.msra.mxu0 %v9439
    %9699 = vmatprep.subr.bf16.mxu0 %v9436
    %9700 = vmatpush1.bf16.msra.mxu0 %v9435
    %9701 = vmatprep.subr.bf16.mxu0 %v9432
    %9702 = vmatpush1.bf16.msra.mxu0 %v9431
    %9703 = vmatprep.subr.bf16.mxu0 %v9492
    %9704 = vmatpush2.bf16.msra.mxu0 %v9491
    %9705 = vmatprep.subr.bf16.mxu0 %v9488
    %9706 = vmatpush2.bf16.msra.mxu0 %v9487
    %9707 = vmatprep.subr.bf16.mxu0 %v9484
    %9708 = vmatpush2.bf16.msra.mxu0 %v9483
    %9709 = vmatprep.subr.bf16.mxu0 %v9480
    %9710 = vmatpush2.bf16.msra.mxu0 %v9479
    %9711 = vmatprep.subr.bf16.mxu0 %v9476
    %9712 = vmatpush2.bf16.msra.mxu0 %v9475
    %9713 = vmatprep.subr.bf16.mxu0 %v9472
    %9714 = vmatpush2.bf16.msra.mxu0 %v9471
    %9715 = vmatprep.subr.bf16.mxu0 %v9468
    %9716 = vmatpush2.bf16.msra.mxu0 %v9467
    %9717 = vmatprep.subr.bf16.mxu0 %v9464
    %9718 = vmatpush2.bf16.msra.mxu0 %v9463
    %9719 = vmatprep.mubr.bf16.mxu0 %v8916
    %9720 = vmatmul.mubr.bf16.gmra.mxu0 %v8915
    %v9721 = vpop.f32.mrf.mxu0
    %v9722 = vadd.f32 0.0, %v9721
    %v9723 = vpop.f32.mrf.mxu0
    %v9724 = vadd.f32 0.0, %v9723
    %v9725 = vpop.f32.mrf.mxu0
    %v9726 = vadd.f32 0.0, %v9725
    %v9727 = vpop.f32.mrf.mxu0
    %v9728 = vadd.f32 0.0, %v9727
    %9729 = vdwg.mxu0
    %9730 = vmatprep.subr.bf16.mxu0 %v9524
    %9731 = vmatpush1.bf16.msra.mxu0 %v9523
    %9732 = vmatprep.subr.bf16.mxu0 %v9520
    %9733 = vmatpush1.bf16.msra.mxu0 %v9519
    %9734 = vmatprep.subr.bf16.mxu0 %v9516
    %9735 = vmatpush1.bf16.msra.mxu0 %v9515
    %9736 = vmatprep.subr.bf16.mxu0 %v9512
    %9737 = vmatpush1.bf16.msra.mxu0 %v9511
    %9738 = vmatprep.subr.bf16.mxu0 %v9508
    %9739 = vmatpush1.bf16.msra.mxu0 %v9507
    %9740 = vmatprep.subr.bf16.mxu0 %v9504
    %9741 = vmatpush1.bf16.msra.mxu0 %v9503
    %9742 = vmatprep.subr.bf16.mxu0 %v9500
    %9743 = vmatpush1.bf16.msra.mxu0 %v9499
    %9744 = vmatprep.subr.bf16.mxu0 %v9496
    %9745 = vmatpush1.bf16.msra.mxu0 %v9495
    %9746 = vmatprep.subr.bf16.mxu0 %v9556
    %9747 = vmatpush2.bf16.msra.mxu0 %v9555
    %9748 = vmatprep.subr.bf16.mxu0 %v9552
    %9749 = vmatpush2.bf16.msra.mxu0 %v9551
    %9750 = vmatprep.subr.bf16.mxu0 %v9548
    %9751 = vmatpush2.bf16.msra.mxu0 %v9547
    %9752 = vmatprep.subr.bf16.mxu0 %v9544
    %9753 = vmatpush2.bf16.msra.mxu0 %v9543
    %9754 = vmatprep.subr.bf16.mxu0 %v9540
    %9755 = vmatpush2.bf16.msra.mxu0 %v9539
    %9756 = vmatprep.subr.bf16.mxu0 %v9536
    %9757 = vmatpush2.bf16.msra.mxu0 %v9535
    %9758 = vmatprep.subr.bf16.mxu0 %v9532
    %9759 = vmatpush2.bf16.msra.mxu0 %v9531
    %9760 = vmatprep.subr.bf16.mxu0 %v9528
    %9761 = vmatpush2.bf16.msra.mxu0 %v9527
    %9762 = vmatprep.mubr.bf16.mxu0 %v8918
    %9763 = vmatmul.mubr.bf16.gmra.mxu0 %v8917
    %v9764 = vpop.f32.mrf.mxu0
    %v9765 = vadd.f32 %v9722, %v9764
    %v9766 = vpop.f32.mrf.mxu0
    %v9767 = vadd.f32 %v9724, %v9766
    %v9768 = vpop.f32.mrf.mxu0
    %v9769 = vadd.f32 %v9726, %v9768
    %v9770 = vpop.f32.mrf.mxu0
    %v9771 = vadd.f32 %v9728, %v9770
    %9772 = vdwg.mxu0
    %9773 = vmatprep.subr.bf16.mxu0 %v9462
    %9774 = vmatpush1.bf16.msra.mxu0 %v9461
    %9775 = vmatprep.subr.bf16.mxu0 %v9458
    %9776 = vmatpush1.bf16.msra.mxu0 %v9457
    %9777 = vmatprep.subr.bf16.mxu0 %v9454
    %9778 = vmatpush1.bf16.msra.mxu0 %v9453
    %9779 = vmatprep.subr.bf16.mxu0 %v9450
    %9780 = vmatpush1.bf16.msra.mxu0 %v9449
    %9781 = vmatprep.subr.bf16.mxu0 %v9446
    %9782 = vmatpush1.bf16.msra.mxu0 %v9445
    %9783 = vmatprep.subr.bf16.mxu0 %v9442
    %9784 = vmatpush1.bf16.msra.mxu0 %v9441
    %9785 = vmatprep.subr.bf16.mxu0 %v9438
    %9786 = vmatpush1.bf16.msra.mxu0 %v9437
    %9787 = vmatprep.subr.bf16.mxu0 %v9434
    %9788 = vmatpush1.bf16.msra.mxu0 %v9433
    %9789 = vmatprep.subr.bf16.mxu0 %v9494
    %9790 = vmatpush2.bf16.msra.mxu0 %v9493
    %9791 = vmatprep.subr.bf16.mxu0 %v9490
    %9792 = vmatpush2.bf16.msra.mxu0 %v9489
    %9793 = vmatprep.subr.bf16.mxu0 %v9486
    %9794 = vmatpush2.bf16.msra.mxu0 %v9485
    %9795 = vmatprep.subr.bf16.mxu0 %v9482
    %9796 = vmatpush2.bf16.msra.mxu0 %v9481
    %9797 = vmatprep.subr.bf16.mxu0 %v9478
    %9798 = vmatpush2.bf16.msra.mxu0 %v9477
    %9799 = vmatprep.subr.bf16.mxu0 %v9474
    %9800 = vmatpush2.bf16.msra.mxu0 %v9473
    %9801 = vmatprep.subr.bf16.mxu0 %v9470
    %9802 = vmatpush2.bf16.msra.mxu0 %v9469
    %9803 = vmatprep.subr.bf16.mxu0 %v9466
    %9804 = vmatpush2.bf16.msra.mxu0 %v9465
    %9805 = vmatprep.mubr.bf16.mxu0 %v8916
    %9806 = vmatmul.mubr.bf16.gmra.mxu0 %v8915
    %v9807 = vpop.f32.mrf.mxu0
    %v9808 = vadd.f32 0.0, %v9807
    %v9809 = vpop.f32.mrf.mxu0
    %v9810 = vadd.f32 0.0, %v9809
    %v9811 = vpop.f32.mrf.mxu0
    %v9812 = vadd.f32 0.0, %v9811
    %v9813 = vpop.f32.mrf.mxu0
    %v9814 = vadd.f32 0.0, %v9813
    %9815 = vdwg.mxu0
    %9816 = vmatprep.subr.bf16.mxu0 %v9526
    %9817 = vmatpush1.bf16.msra.mxu0 %v9525
    %9818 = vmatprep.subr.bf16.mxu0 %v9522
    %9819 = vmatpush1.bf16.msra.mxu0 %v9521
    %9820 = vmatprep.subr.bf16.mxu0 %v9518
    %9821 = vmatpush1.bf16.msra.mxu0 %v9517
    %9822 = vmatprep.subr.bf16.mxu0 %v9514
    %9823 = vmatpush1.bf16.msra.mxu0 %v9513
    %9824 = vmatprep.subr.bf16.mxu0 %v9510
    %9825 = vmatpush1.bf16.msra.mxu0 %v9509
    %9826 = vmatprep.subr.bf16.mxu0 %v9506
    %9827 = vmatpush1.bf16.msra.mxu0 %v9505
    %9828 = vmatprep.subr.bf16.mxu0 %v9502
    %9829 = vmatpush1.bf16.msra.mxu0 %v9501
    %9830 = vmatprep.subr.bf16.mxu0 %v9498
    %9831 = vmatpush1.bf16.msra.mxu0 %v9497
    %9832 = vmatprep.subr.bf16.mxu0 %v9558
    %9833 = vmatpush2.bf16.msra.mxu0 %v9557
    %9834 = vmatprep.subr.bf16.mxu0 %v9554
    %9835 = vmatpush2.bf16.msra.mxu0 %v9553
    %9836 = vmatprep.subr.bf16.mxu0 %v9550
    %9837 = vmatpush2.bf16.msra.mxu0 %v9549
    %9838 = vmatprep.subr.bf16.mxu0 %v9546
    %9839 = vmatpush2.bf16.msra.mxu0 %v9545
    %9840 = vmatprep.subr.bf16.mxu0 %v9542
    %9841 = vmatpush2.bf16.msra.mxu0 %v9541
    %9842 = vmatprep.subr.bf16.mxu0 %v9538
    %9843 = vmatpush2.bf16.msra.mxu0 %v9537
    %9844 = vmatprep.subr.bf16.mxu0 %v9534
    %9845 = vmatpush2.bf16.msra.mxu0 %v9533
    %9846 = vmatprep.subr.bf16.mxu0 %v9530
    %9847 = vmatpush2.bf16.msra.mxu0 %v9529
    %9848 = vmatprep.mubr.bf16.mxu0 %v8918
    %9849 = vmatmul.mubr.bf16.gmra.mxu0 %v8917
    %v9850 = vpop.f32.mrf.mxu0
    %v9851 = vadd.f32 %v9808, %v9850
    %v9852 = vpop.f32.mrf.mxu0
    %v9853 = vadd.f32 %v9810, %v9852
    %v9854 = vpop.f32.mrf.mxu0
    %v9855 = vadd.f32 %v9812, %v9854
    %v9856 = vpop.f32.mrf.mxu0
    %v9857 = vadd.f32 %v9814, %v9856
    %9858 = vdwg.mxu0
    %v9859 = vld [vmem:[#allocation15] sm:$0xf]
    %v9860 = vmul.f32 %v9765, %v9765
    %v9861 = vmul.f32 %v9767, %v9767
    %v9862 = vmul.f32 %v9851, %v9851
    %v9863 = vmul.f32 %v9853, %v9853
    %v9864 = vmul.f32 %v9769, %v9769
    %v9865 = vmul.f32 %v9771, %v9771
    %v9866 = vmul.f32 %v9855, %v9855
    %v9867 = vmul.f32 %v9857, %v9857
    %v9868 = vadd.f32 %v9860, %v9861
    %v9869 = vadd.f32 %v9868, %v9862
    %v9870 = vadd.f32 %v9869, %v9863
    %9871 = vadd.xlane.f32.xlu0 %v9870
    %v9872 = vpop.xlane.xlu0 %9871
    %v9873 = vadd.f32 %v9864, %v9865
    %v9874 = vadd.f32 %v9873, %v9866
    %v9875 = vadd.f32 %v9874, %v9867
    %9876 = vadd.xlane.f32.xlu0 %v9875
    %v9877 = vpop.xlane.xlu0 %9876
    %v9878 = vrcp.pop 512.0
    %v9879 = vmul.f32 %v9872, %v9878
    %v9880 = vmul.f32 %v9877, %v9878
    %v9881 = vadd.f32 %v9879, 1e-05
    %v9882 = vadd.f32 %v9880, 1e-05
    %v9883 = vrsqrt.pop %v9881
    %v9884 = vrsqrt.pop %v9882
    %v9885 = vmul.f32 %v9765, %v9883
    %v9886 = vmul.f32 %v9767, %v9883
    %v9887 = vmul.f32 %v9851, %v9883
    %v9888 = vmul.f32 %v9853, %v9883
    %v9889 = vmul.f32 %v9769, %v9884
    %v9890 = vmul.f32 %v9771, %v9884
    %v9891 = vmul.f32 %v9855, %v9884
    %v9892 = vmul.f32 %v9857, %v9884
    %v9894 = vlaneseq
    %v9895 = vshrl.u32 %v9894, 7
    %v9896 = vsub.s32 0, %v9895
    %v9897 = vrot.slane %v9859, %v9896
    %v9898 = vlaneseq
    %v9899 = vshrl.u32 %v9898, 7
    %v9900 = vsub.s32 1, %v9899
    %v9901 = vrot.slane %v9859, %v9900
    %v9902 = vlaneseq
    %v9903 = vshrl.u32 %v9902, 7
    %v9904 = vsub.s32 2, %v9903
    %v9905 = vrot.slane %v9859, %v9904
    %v9906 = vlaneseq
    %v9907 = vshrl.u32 %v9906, 7
    %v9908 = vsub.s32 3, %v9907
    %v9909 = vrot.slane %v9859, %v9908
    %v9914 = vmul.f32 %v9885, %v9897
    %v9915 = vmul.f32 %v9886, %v9901
    %v9916 = vmul.f32 %v9887, %v9905
    %v9917 = vmul.f32 %v9888, %v9909
    %v9918 = vmul.f32 %v9889, %v9897
    %v9919 = vmul.f32 %v9890, %v9901
    %v9920 = vmul.f32 %v9891, %v9905
    %v9921 = vmul.f32 %v9892, %v9909
    %v9922 = vadd.f32 %v9914, %v6881
    %v9923 = vadd.f32 %v9915, %v6883
    %v9924 = vadd.f32 %v9916, %v6967
    %v9925 = vadd.f32 %v9917, %v6969
    %v9926 = vadd.f32 %v9918, %v6885
    %v9927 = vadd.f32 %v9919, %v6887
    %v9928 = vadd.f32 %v9920, %v6971
    %v9929 = vadd.f32 %v9921, %v6973
    %9930 = vst [vmem:[#allocation16] sm:$0xff] %v9922
    %9931 = vst [vmem:[#allocation16 + $0x8] sm:$0xff] %v9923
    %9932 = vst [vmem:[#allocation16 + $0x10] sm:$0xff] %v9924
    %9933 = vst [vmem:[#allocation16 + $0x18] sm:$0xff] %v9925
    %9934 = vst [vmem:[#allocation16 + $0x20] sm:$0xff] %v9926
    %9935 = vst [vmem:[#allocation16 + $0x28] sm:$0xff] %v9927
    %9936 = vst [vmem:[#allocation16 + $0x30] sm:$0xff] %v9928
    %9937 = vst [vmem:[#allocation16 + $0x38] sm:$0xff] %v9929
    // Predicated region
    $region58: #{block_forward.1} parent=1 // pred_check
      _
    $region59: #{block_forward.1} parent=1 // pred_check_branch
      %9939 = sbr.rel (0) target = $region61
    $region60: #{block_forward.1} parent=1 // pred_region
      %s9941 = ssub.s32 1024, 1024
      %9942 = vsyncadd [#allocation6], %s9941
      %s9943 = sshll.u32 [#allocation16], 4
      %s9944 = int_to_ptr.vmem [resolvable:$true] %s9943
      %9949 = dma.vmem_to_hbm [thread:$0]  %s9944, 1024, %s8, [#allocation6], 512, 512, 32
    $region61: #{block_forward.1} parent=1 // pred_fallthru
      _
    // Predicated region
    $region62: #{block_forward.1} parent=1 // pred_check
      _
    $region63: #{block_forward.1} parent=1 // pred_check_branch
      %9951 = sbr.rel (0) target = $region65
    $region64: #{block_forward.1} parent=1 // pred_region
      %9952 = dma.done [#allocation6], 1024
    $region65: #{block_forward.1} parent=1 // pred_fallthru
      _
    %9953 = vsyncpa [#allocation5], 1
    %9954 = vsyncpa [#allocation8], 1
    %9955 = vsyncpa [#allocation11], 1
    %9956 = vsyncpa [#allocation14], 1
    %9957 = vsyncpa [#allocation6], 1

</llo_original>
